<compile_context>
chip_gen: v6e
topology: v6e:2x2x1
jax: 0.10.0
libtpu: 0.0.40
codegen_flags: <defaults>
</compile_context>

<pallas_src>
import jax
import jax.numpy as jnp
from jax.experimental import pallas as pl
from jax.experimental.pallas import tpu as pltpu

PRIMITIVES = [
    "none", "max_pool_3x3", "avg_pool_3x3", "skip_connect",
    "sep_conv_3x3", "sep_conv_5x5", "dil_conv_3x3", "dil_conv_5x5",
]

_MAX_TP = 256  # max lane-tile (columns of P) per grid step (>=2 tiles at P=512)
_PARALLEL = pltpu.CompilerParams(dimension_semantics=("parallel",))

# tap-index maps of the shared 5x5 / dilation=1 / pad=2 patch block
_TAP5_SEP3 = tuple((i + 1) * 5 + (j + 1) for i in range(3) for j in range(3))
_TAP5_DIL3 = tuple((2 * i) * 5 + (2 * j) for i in range(3) for j in range(3))
_TAP5_FR1 = 2 * 5 + 2      # x[:, :, ::2, ::2]   == tap (2,2)
_TAP5_FR2 = 3 * 5 + 3      # x[:, :, 1::2, 1::2] == tap (3,3)


# ------------------------------ tiling helpers --------------------------------

def _round_up(x, m):
    return (x + m - 1) // m * m


def _col_tile(P):
    """Padded column count Pp (multiple of 128) and tile size tp dividing Pp."""
    Pp = _round_up(P, 128)
    if Pp <= _MAX_TP:
        return Pp, Pp
    for tp in (256, 128):
        if Pp % tp == 0:
            return Pp, tp
    return Pp, 128  # unreachable: Pp is always a multiple of 128


def _pad_cols(x, Pp):
    P = x.shape[-1]
    if P == Pp:
        return x
    pad = [(0, 0)] * (x.ndim - 1) + [(0, Pp - P)]
    return jnp.pad(x, pad)


# ----------------------------- Pallas kernels ---------------------------------

def _mm_kernel(x_ref, w_ref, o_ref):
    # x_ref: (K, tp) bf16 columns; w_ref: (R, K) bf16 -> (R, tp) f32.
    o_ref[...] = jnp.dot(w_ref[...], x_ref[...],
                         preferred_element_type=jnp.float32)


def _mm_relu_kernel(x_ref, w_ref, o_ref):
    # Fused ReLU on the input tile (only used where inputs are not duplicated).
    o_ref[...] = jnp.dot(w_ref[...], jnp.maximum(x_ref[...], 0.0),
                         preferred_element_type=jnp.float32)


def _pool_kernel(p_ref, inv_ref, mx_ref, av_ref):
    # p_ref: (K, C, tp) patches with -inf spatial padding; inv_ref: (1, tp)
    # reciprocal of the valid-element count (count_include_pad=False).
    p = p_ref[...]
    mx_ref[...] = jnp.max(p, axis=0)
    pz = jnp.where(jnp.isfinite(p), p, 0.0)
    av_ref[...] = jnp.sum(pz, axis=0) * inv_ref[...]


def _head_kernel(x_ref, w_ref, b_ref, o_ref):
    # Global average pool over the flattened spatial axis + linear classifier.
    pooled = jnp.mean(x_ref[...], axis=-1)                      # (N, C)
    o_ref[...] = jnp.dot(pooled, w_ref[...],
                         preferred_element_type=jnp.float32) + b_ref[...]


# ------------------------------ kernel wrappers --------------------------------

def matmul_cols(x_cols, w_mat, relu=False):
    """(R, K) @ (K, P) with the pixel axis P on lanes, tiled over P, bf16 MXU."""
    K, P = x_cols.shape
    R = w_mat.shape[0]
    Pp, tp = _col_tile(P)
    xp = _pad_cols(x_cols, Pp).astype(jnp.bfloat16)
    wb = w_mat.astype(jnp.bfloat16)
    kernel = _mm_relu_kernel if relu else _mm_kernel
    out = pl.pallas_call(
        kernel,
        grid=(Pp // tp,),
        in_specs=[pl.BlockSpec((K, tp), lambda i: (0, i)),
                  pl.BlockSpec((R, K), lambda i: (0, 0))],
        out_specs=pl.BlockSpec((R, tp), lambda i: (0, i)),
        out_shape=jax.ShapeDtypeStruct((R, Pp), jnp.float32),
        compiler_params=_PARALLEL,
    )(xp, wb)
    return out[:, :P]


def _block_diag_matmul(cols, weights, relu=False):
    """Batch several independent (Ri, Ki) @ (Ki, P) matmuls (same P) into ONE
    pallas_call with a block-diagonal weight; returns the stacked (sum Ri, P)."""
    ks = [c.shape[0] for c in cols]
    Ktot = sum(ks)
    x_cols = jnp.concatenate(cols, axis=0) if len(cols) > 1 else cols[0]
    wrows, off = [], 0
    for w, k in zip(weights, ks):
        r = w.shape[0]
        parts = []
        if off:
            parts.append(jnp.zeros((r, off), jnp.float32))
        parts.append(w.astype(jnp.float32))
        if Ktot - off - k:
            parts.append(jnp.zeros((r, Ktot - off - k), jnp.float32))
        wrows.append(jnp.concatenate(parts, axis=1) if len(parts) > 1 else parts[0])
        off += k
    w_mat = jnp.concatenate(wrows, axis=0) if len(wrows) > 1 else wrows[0]
    return matmul_cols(x_cols, w_mat, relu=relu)


def _im2col_cp(x, kh, kw, stride, padding, dilation=1, pad_value=0.0):
    # x: (C, N, H, W) -> patches (kh*kw, C, N*Ho*Wo)
    C, N, H, W = x.shape
    xp = jnp.pad(x, ((0, 0), (0, 0), (padding, padding), (padding, padding)),
                 constant_values=pad_value)
    Ho = (H + 2 * padding - dilation * (kh - 1) - 1) // stride + 1
    Wo = (W + 2 * padding - dilation * (kw - 1) - 1) // stride + 1
    cols = []
    for i in range(kh):
        for j in range(kw):
            hs, ws = i * dilation, j * dilation
            cols.append(xp[:, :, hs:hs + stride * (Ho - 1) + 1:stride,
                              ws:ws + stride * (Wo - 1) + 1:stride])
    patches = jnp.stack(cols, axis=0).reshape(kh * kw, C, N * Ho * Wo)
    return patches, Ho, Wo


def conv2d_im2col(x, w_mat, k, stride, padding, relu=False):
    # full convolution via im2col; w_mat: (Cout, k*k*Cin); x: (C, N, H, W)
    patches, Ho, Wo = _im2col_cp(x, k, k, stride, padding)
    K, C, P = patches.shape
    out = matmul_cols(patches.reshape(K * C, P), w_mat, relu=relu)
    return out.reshape(-1, x.shape[1], Ho, Wo)


# --------------------------------- glue ---------------------------------------

def _bn(x, gamma=None, beta=None, eps=1e-5):
    # Train-mode BatchNorm2d (batch statistics, biased variance); x: (C, N, H, W).
    mean = jnp.mean(x, axis=(1, 2, 3), keepdims=True)
    var = jnp.mean(jnp.square(x - mean), axis=(1, 2, 3), keepdims=True)
    y = (x - mean) * jax.lax.rsqrt(var + eps)
    if gamma is not None:
        y = y * gamma[:, None, None, None] + beta[:, None, None, None]
    return y


def _fold_dw_pw(dw, pw):
    # dw: (k*k, C) depthwise taps; pw: (Cout, C) pointwise -> (Cout, k*k, C).
    return pw[:, None, :] * dw[None, :, :]


def _place_taps(folded, tap_idx, C):
    # Scatter a (Cout, k2, C) folded weight into a (Cout, 25*C) block whose
    # columns follow the shared 5x5/d=1 patch layout (tap-major, channel-minor).
    Cout, k2, _ = folded.shape
    if k2 == 25:
        return folded.reshape(Cout, 25 * C)
    w = jnp.zeros((Cout, 25, C), jnp.float32)
    w = w.at[:, list(tap_idx), :].set(folded)
    return w.reshape(Cout, 25 * C)


# ---------------------- per-(input, stride) edge context -----------------------

def _make_ctx(h, stride):
    """Patch tensors shared by every MixedOp edge that consumes (h, stride)."""
    C, N, H, W = h.shape
    rx = jnp.maximum(h, 0.0)                          # ReLU once on the source
    p5d1, Ho, Wo = _im2col_cp(rx, 5, 5, stride, 2, dilation=1)
    p5d2, _, _ = _im2col_cp(rx, 5, 5, stride, 4, dilation=2)
    P = N * Ho * Wo
    return {"C": C, "N": N, "Ho": Ho, "Wo": Wo, "P": P,
            "p5d1": p5d1.reshape(25 * C, P).astype(jnp.bfloat16),
            "p5d2": p5d2.reshape(25 * C, P).astype(jnp.bfloat16)}


def _get_ctx(cache, h, stride):
    key = (id(h), stride)
    if key not in cache:
        cache[key] = _make_ctx(h, stride)
    return cache[key]


def _avg_pool_inv_count(N, H, W, stride):
    # Analytic divisor for AvgPool2d(3, stride, padding=1, count_include_pad=False).
    Ho = (H - 1) // stride + 1
    Wo = (W - 1) // stride + 1
    oh = jnp.arange(Ho) * stride
    ow = jnp.arange(Wo) * stride
    ch = jnp.minimum(oh + 1, H - 1) - jnp.maximum(oh - 1, 0) + 1
    cw = jnp.minimum(ow + 1, W - 1) - jnp.maximum(ow - 1, 0) + 1
    cnt = (ch[:, None] * cw[None, :]).astype(jnp.float32)
    return jnp.broadcast_to(1.0 / cnt, (N, Ho, Wo)).reshape(1, -1)


def _ctx_pools(h, stride):
    """max_pool_3x3 + avg_pool_3x3 (+ their affine=False BNs) in one kernel."""
    C, N, H, W = h.shape
    patches, Ho, Wo = _im2col_cp(h, 3, 3, stride, 1, pad_value=-jnp.inf)
    K, _, P = patches.shape
    inv = _avg_pool_inv_count(N, H, W, stride)
    Pp, tp = _col_tile(P)
    pp = _pad_cols(patches, Pp)
    invp = _pad_cols(inv, Pp)
    mx, av = pl.pallas_call(
        _pool_kernel,
        grid=(Pp // tp,),
        in_specs=[pl.BlockSpec((K, C, tp), lambda i: (0, 0, i)),
                  pl.BlockSpec((1, tp), lambda i: (0, i))],
        out_specs=[pl.BlockSpec((C, tp), lambda i: (0, i)),
                   pl.BlockSpec((C, tp), lambda i: (0, i))],
        out_shape=(jax.ShapeDtypeStruct((C, Pp), jnp.float32),
                   jax.ShapeDtypeStruct((C, Pp), jnp.float32)),
        compiler_params=_PARALLEL,
    )(pp, invp)
    mx = mx[:, :P].reshape(C, N, Ho, Wo)
    av = av[:, :P].reshape(C, N, Ho, Wo)
    return _bn(mx), _bn(av)


# ------------------------------ DARTS edge ops ---------------------------------

def _edge_stage1(ctx, edge_p, stride, on):
    """ONE batched matmul for all first-stage convs of a MixedOp edge:
    sep3/sep5 stage-1, dil3, dil5, and FactorizedReduce (skip, stride 2)."""
    C = ctx["C"]
    entries = []                       # (prim, rows, w_d1 | None, w_d2 | None)
    if on.get("sep_conv_3x3"):
        f = _fold_dw_pw(edge_p["sep_conv_3x3"]["dw1"], edge_p["sep_conv_3x3"]["pw1"])
        entries.append(("sep_conv_3x3", C, _place_taps(f, _TAP5_SEP3, C), None))
    if on.get("sep_conv_5x5"):
        f = _fold_dw_pw(edge_p["sep_conv_5x5"]["dw1"], edge_p["sep_conv_5x5"]["pw1"])
        entries.append(("sep_conv_5x5", C, f.reshape(C, 25 * C), None))
    if on.get("dil_conv_3x3"):
        f = _fold_dw_pw(edge_p["dil_conv_3x3"]["dw"], edge_p["dil_conv_3x3"]["pw"])
        entries.append(("dil_conv_3x3", C, _place_taps(f, _TAP5_DIL3, C), None))
    if on.get("dil_conv_5x5"):
        f = _fold_dw_pw(edge_p["dil_conv_5x5"]["dw"], edge_p["dil_conv_5x5"]["pw"])
        entries.append(("dil_conv_5x5", C, None, f.reshape(C, 25 * C)))
    if on.get("skip_connect") and stride != 1:
        # FactorizedReduce: two stride-2 1x1 convs == two single taps of p5d1.
        w1, w2 = edge_p["skip_connect"]["w1"], edge_p["skip_connect"]["w2"]
        half = w1.shape[0]
        wfr = jnp.zeros((2 * half, 25, C), jnp.float32)
        wfr = wfr.at[:half, _TAP5_FR1, :].set(w1)
        wfr = wfr.at[half:, _TAP5_FR2, :].set(w2)
        entries.append(("skip_connect", 2 * half, wfr.reshape(2 * half, 25 * C), None))
    if not entries:
        return {}

    use_d1 = any(e[2] is not None for e in entries)
    use_d2 = any(e[3] is not None for e in entries)
    if use_d1 and use_d2:
        if "p5all" not in ctx:
            ctx["p5all"] = jnp.concatenate([ctx["p5d1"], ctx["p5d2"]], axis=0)
        x_cols = ctx["p5all"]
    elif use_d1:
        x_cols = ctx["p5d1"]
    else:
        x_cols = ctx["p5d2"]

    wrows = []
    for prim, rows, wd1, wd2 in entries:
        parts = []
        if use_d1:
            parts.append(wd1 if wd1 is not None
                         else jnp.zeros((rows, 25 * C), jnp.float32))
        if use_d2:
            parts.append(wd2 if wd2 is not None
                         else jnp.zeros((rows, 25 * C), jnp.float32))
        wrows.append(jnp.concatenate(parts, axis=1) if len(parts) > 1 else parts[0])
    w_mat = jnp.concatenate(wrows, axis=0)

    out = matmul_cols(x_cols, w_mat)                  # (sum rows, P)
    outs, r0 = {}, 0
    for prim, rows, _, _ in entries:
        outs[prim] = out[r0:r0 + rows].reshape(rows, ctx["N"], ctx["Ho"], ctx["Wo"])
        r0 += rows
    return outs


def _edge_stage2(ctx, edge_p, on, y1bn):
    """ONE block-diagonal matmul for the stage-2 depthwise+pointwise convs of
    the switched-on sep_convs (ReLU applied before im2col)."""
    C, N = ctx["C"], ctx["N"]
    cols, wts, prims = [], [], []
    if on.get("sep_conv_3x3") and "sep_conv_3x3" in y1bn:
        p = edge_p["sep_conv_3x3"]
        patches, Ho, Wo = _im2col_cp(jnp.maximum(y1bn["sep_conv_3x3"], 0.0), 3, 3, 1, 1)
        cols.append(patches.reshape(9 * C, -1))
        wts.append(_fold_dw_pw(p["dw2"], p["pw2"]).reshape(C, 9 * C))
        prims.append(("sep_conv_3x3", Ho, Wo))
    if on.get("sep_conv_5x5") and "sep_conv_5x5" in y1bn:
        p = edge_p["sep_conv_5x5"]
        patches, Ho, Wo = _im2col_cp(jnp.maximum(y1bn["sep_conv_5x5"], 0.0), 5, 5, 1, 2)
        cols.append(patches.reshape(25 * C, -1))
        wts.append(_fold_dw_pw(p["dw2"], p["pw2"]).reshape(C, 25 * C))
        prims.append(("sep_conv_5x5", Ho, Wo))
    if not cols:
        return {}
    out = _block_diag_matmul(cols, wts)
    outs = {}
    for r, (prim, Ho, Wo) in enumerate(prims):
        outs[prim] = out[r * C:(r + 1) * C].reshape(C, N, Ho, Wo)
    return outs


def _mixed_op(ctx_cache, h, edge_p, stride, w_row, switch_row):
    on = {prim: bool(sw) for prim, sw in zip(PRIMITIVES, switch_row)}
    ctx = _get_ctx(ctx_cache, h, stride)

    y1 = _edge_stage1(ctx, edge_p, stride, on)
    y1bn = {p: _bn(v) for p, v in y1.items()}
    y2 = _edge_stage2(ctx, edge_p, on, y1bn)
    y2bn = {p: _bn(v) for p, v in y2.items()}

    if (on.get("max_pool_3x3") or on.get("avg_pool_3x3")) and ctx.get("pools") is None:
        ctx["pools"] = _ctx_pools(h, stride)   # parameter-free -> shared per ctx

    # Weight index runs over switched-on ops only, matching the reference zip.
    acc, wi = None, 0
    for idx, prim in enumerate(PRIMITIVES):
        if not switch_row[idx]:
            continue
        w = w_row[wi]
        wi += 1
        if prim == "none":
            continue                           # contributes exactly w * 0 == 0
        if prim == "max_pool_3x3":
            y = ctx["pools"][0]
        elif prim == "avg_pool_3x3":
            y = ctx["pools"][1]
        elif prim == "skip_connect":
            y = h if stride == 1 else y1bn["skip_connect"]
        elif prim in ("sep_conv_3x3", "sep_conv_5x5"):
            y = y2bn[prim]
        else:                                   # dil_conv_3x3 / dil_conv_5x5
            y = y1bn[prim]
        acc = w * y if acc is None else acc + w * y
    if acc is None:                             # only the "none" op switched on
        z = h if stride == 1 else h[:, :, ::stride, ::stride]
        acc = jnp.zeros_like(z)
    return acc


# ------------------------------- cell / network --------------------------------

def _preprocess(s0, s1, cp):
    """Batched cell preprocessing: (FactorizedReduce | ReLUConvBN)(s0) and
    ReLUConvBN(s1) in ONE fused ReLU-matmul (their P columns always match)."""
    C0, N, H0, W0 = s0.shape
    C1, _, H1, W1 = s1.shape
    if cp["cfg"]["reduction_prev"]:
        a = s0[:, :, ::2, ::2]
        b = s0[:, :, 1::2, 1::2]
        Ho, Wo = a.shape[2], a.shape[3]
        cols = [a.reshape(C0, N * Ho * Wo), b.reshape(C0, N * Ho * Wo),
                s1.reshape(C1, N * H1 * W1)]
        w1, w2, wp = cp["pre0"]["w1"], cp["pre0"]["w2"], cp["pre1"]["w"]
        out = _block_diag_matmul(cols, [w1, w2, wp], relu=True)
        c_fr = w1.shape[0] + w2.shape[0]
        o0 = out[:c_fr].reshape(c_fr, N, Ho, Wo)
        o1 = out[c_fr:].reshape(-1, N, H1, W1)
    else:
        cols = [s0.reshape(C0, N * H0 * W0), s1.reshape(C1, N * H1 * W1)]
        w0, wp = cp["pre0"]["w"], cp["pre1"]["w"]
        out = _block_diag_matmul(cols, [w0, wp], relu=True)
        Cn = w0.shape[0]
        o0 = out[:Cn].reshape(Cn, N, H0, W0)
        o1 = out[Cn:].reshape(-1, N, H1, W1)
    return _bn(o0), _bn(o1)


def _cell_forward(s0, s1, cp, weights, steps, multiplier, switches):
    s0, s1 = _preprocess(s0, s1, cp)
    states = [s0, s1]
    ctx_cache = {}
    offset = 0
    for i in range(steps):
        s = None
        for j, h in enumerate(states):
            stride = 2 if (cp["cfg"]["reduction"] and j < 2) else 1
            y = _mixed_op(ctx_cache, h, cp["edges"][offset + j], stride,
                          weights[offset + j], switches[offset + j])
            s = y if s is None else s + y
        offset += len(states)
        states.append(s)
    return jnp.concatenate(states[-multiplier:], axis=0)        # channel axis


def network_forward(params, x_nchw, cfg):
    # NCHW -> channel-major (C, N, H, W) so pixels land on the lane axis.
    x = jnp.transpose(x_nchw, (1, 0, 2, 3)).astype(jnp.float32)
    s = conv2d_im2col(x, params["stem_w"], 3, 1, 1)
    s = _bn(s, params["stem_gamma"], params["stem_beta"])
    s0 = s1 = s
    for cp in params["cells"]:
        alphas = (params["alphas_reduce"] if cp["cfg"]["reduction"]
                  else params["alphas_normal"])
        axis = 0 if alphas.shape[1] == 1 else -1
        weights = jax.nn.softmax(alphas, axis=axis)
        switches = (cfg["switches_reduce"] if cp["cfg"]["reduction"]
                    else cfg["switches_normal"])
        s0, s1 = s1, _cell_forward(s0, s1, cp, weights,
                                   cfg["steps"], cfg["multiplier"], switches)
    C, N, H, W = s1.shape
    ncls = params["cls_w"].shape[1]
    x_head = jnp.transpose(s1.reshape(C, N, H * W), (1, 0, 2))   # (N, C, H*W)
    logits = pl.pallas_call(
        _head_kernel,
        grid=(1,),
        in_specs=[pl.BlockSpec((N, C, H * W), lambda i: (0, 0, 0)),
                  pl.BlockSpec((C, ncls), lambda i: (0, 0)),
                  pl.BlockSpec((1, ncls), lambda i: (0, 0))],
        out_specs=pl.BlockSpec((N, ncls), lambda i: (0, 0)),
        out_shape=jax.ShapeDtypeStruct((N, ncls), jnp.float32),
    )(x_head, params["cls_w"], params["cls_b"])
    return logits


# --------------------------- parameter construction ---------------------------

class _Init:
    def __init__(self, seed):
        self.key = jax.random.PRNGKey(seed)
        self.n = 0

    def __call__(self, shape, scale=0.1):
        k = jax.random.fold_in(self.key, self.n)
        self.n += 1
        return (scale * jax.random.normal(k, shape)).astype(jnp.float32)


def _make_edge_params(pinit, C, stride):
    ep = {}
    for prim in PRIMITIVES:
        if prim == "none" or "pool" in prim:
            ep[prim] = {}
        elif prim == "skip_connect":
            ep[prim] = ({} if stride == 1 else
                        {"w1": pinit((C // 2, C)), "w2": pinit((C // 2, C))})
        elif prim.startswith("sep_conv"):
            k = 3 if "3x3" in prim else 5
            ep[prim] = {"dw1": pinit((k * k, C)), "pw1": pinit((C, C)),
                        "dw2": pinit((k * k, C)), "pw2": pinit((C, C))}
        elif prim.startswith("dil_conv"):
            k = 3 if "3x3" in prim else 5
            ep[prim] = {"dw": pinit((k * k, C)), "pw": pinit((C, C))}
    return ep


def _make_cell_params(pinit, Cpp, Cp, C, reduction, reduction_prev, steps):
    cp = {"cfg": {"reduction": reduction, "reduction_prev": reduction_prev}}
    if reduction_prev:
        cp["pre0"] = {"w1": pinit((C // 2, Cpp)), "w2": pinit((C // 2, Cpp))}
    else:
        cp["pre0"] = {"w": pinit((C, Cpp))}
    cp["pre1"] = {"w": pinit((C, Cp))}
    edges = []
    for i in range(steps):
        for j in range(2 + i):
            stride = 2 if (reduction and j < 2) else 1
            edges.append(_make_edge_params(pinit, C, stride))
    cp["edges"] = edges
    return cp


def make_network(C=4, num_classes=10, layers=3, steps=2, multiplier=2,
                 stem_multiplier=3, seed=1):
    pinit = _Init(seed)
    k_edges = sum(1 for i in range(steps) for _ in range(2 + i))
    switches = [[True] * len(PRIMITIVES) for _ in range(k_edges)]
    params = {}
    C_curr = stem_multiplier * C
    params["stem_w"] = pinit((C_curr, 3 * 3 * 3))          # (Cout, k*k*Cin)
    params["stem_gamma"] = jnp.ones((C_curr,), jnp.float32)
    params["stem_beta"] = jnp.zeros((C_curr,), jnp.float32)
    Cpp, Cp, C_curr = C_curr, C_curr, C
    cells, reduction_prev = [], False
    for i in range(layers):
        if i in [layers // 3, 2 * layers // 3]:
            C_curr *= 2
            reduction = True
        else:
            reduction = False
        cells.append(_make_cell_params(pinit, Cpp, Cp, C_curr,
                                       reduction, reduction_prev, steps))
        reduction_prev = reduction
        Cpp, Cp = Cp, multiplier * C_curr
    params["cells"] = cells
    num_ops = len(PRIMITIVES)                 # switch_on: all switches are on
    params["alphas_normal"] = 0.001 * jax.random.normal(
        jax.random.fold_in(jax.random.PRNGKey(seed), 10001), (k_edges, num_ops))
    params["alphas_reduce"] = 0.001 * jax.random.normal(
        jax.random.fold_in(jax.random.PRNGKey(seed), 10002), (k_edges, num_ops))
    params["cls_w"] = pinit((Cp, num_classes))
    params["cls_b"] = pinit((1, num_classes))
    cfg = {"steps": steps, "multiplier": multiplier,
           "switches_normal": switches, "switches_reduce": switches}
    return params, cfg


# ----------------------------------- main --------------------------------------

if __name__ == "__main__":
    params, cfg = make_network(C=4, num_classes=10, layers=3,
                               steps=2, multiplier=2, stem_multiplier=3)
    x = jax.random.normal(jax.random.PRNGKey(0), (2, 3, 16, 16), jnp.float32)  # NCHW
    fwd = jax.jit(lambda inp: network_forward(params, inp, cfg))
    logits = jax.block_until_ready(fwd(x))
    assert logits.shape == (2, 10)
    assert bool(jnp.all(jnp.isfinite(logits)))
    print("KERNEL_OK")
</pallas_src>

<mosaic_0001>
module attributes {stable_mosaic.version = 11 : i64} {
  func.func @_mm_kernel(%arg0: i32, %arg1: memref<27x256xbf16, #tpu.memory_space<vmem>>, %arg2: memref<12x27xbf16, #tpu.memory_space<vmem>>, %arg3: memref<12x256xf32, #tpu.memory_space<vmem>>) attributes {dimension_semantics = [#tpu.dimension_semantics<parallel>], iteration_bounds = array<i64: 2>, scalar_prefetch = 0 : i64, scratch_operands = 0 : i64, tpu.core_type = #tpu.core_type<tc>, window_params = [{transform_indices = @transform_0, window_bounds = array<i64: 27, 256>}, {pipeline_mode = #tpu.pipeline_mode<synchronous>, transform_indices = @transform_1, window_bounds = array<i64: 12, 27>}, {transform_indices = @transform_2, window_bounds = array<i64: 12, 256>}]} {
    %c0 = arith.constant 0 : index
    %c0_0 = arith.constant 0 : index
    %0 = vector.load %arg2[%c0, %c0_0] : memref<12x27xbf16, #tpu.memory_space<vmem>>, vector<12x27xbf16>
    %c0_1 = arith.constant 0 : index
    %c0_2 = arith.constant 0 : index
    %1 = vector.load %arg1[%c0_1, %c0_2] : memref<27x256xbf16, #tpu.memory_space<vmem>>, vector<27x256xbf16>
    %cst = arith.constant dense<0.000000e+00> : vector<12x256xf32>
    %2 = tpu.matmul %0, %1, %cst {dimension_numbers = #tpu.dot_dimension_numbers<[1], [0], [0], [1], [0, 0, 1, 1], [], []>} : vector<12x27xbf16>, vector<27x256xbf16>, vector<12x256xf32> -> vector<12x256xf32>
    %c0_3 = arith.constant 0 : index
    %c0_4 = arith.constant 0 : index
    %3 = vector.load %arg3[%c0_3, %c0_4] : memref<12x256xf32, #tpu.memory_space<vmem>>, vector<12x256xf32>
    tpu.vector_store %arg3[%c0_3, %c0_4], %2 {strides = array<i32>} : memref<12x256xf32, #tpu.memory_space<vmem>>, vector<12x256xf32>,
    return
  }
  func.func @transform_0(%arg0: i32) -> (i32, i32) {
    %c0_i32 = arith.constant 0 : i32
    %c0_i32_0 = arith.constant 0 : i32
    return %c0_i32, %arg0 : i32, i32
  }
  func.func @transform_1(%arg0: i32) -> (i32, i32) {
    %c0_i32 = arith.constant 0 : i32
    %c0_i32_0 = arith.constant 0 : i32
    %c0_i32_1 = arith.constant 0 : i32
    return %c0_i32, %c0_i32_0 : i32, i32
  }
  func.func @transform_2(%arg0: i32) -> (i32, i32) {
    %c0_i32 = arith.constant 0 : i32
    %c0_i32_0 = arith.constant 0 : i32
    return %c0_i32, %arg0 : i32, i32
  }
}

module attributes {stable_mosaic.version = 11 : i64} {
  func.func @_mm_relu_kernel(%arg0: i32, %arg1: memref<24x256xbf16, #tpu.memory_space<vmem>>, %arg2: memref<8x24xbf16, #tpu.memory_space<vmem>>, %arg3: memref<8x256xf32, #tpu.memory_space<vmem>>) attributes {dimension_semantics = [#tpu.dimension_semantics<parallel>], iteration_bounds = array<i64: 2>, scalar_prefetch = 0 : i64, scratch_operands = 0 : i64, tpu.core_type = #tpu.core_type<tc>, window_params = [{transform_indices = @transform_0, window_bounds = array<i64: 24, 256>}, {pipeline_mode = #tpu.pipeline_mode<synchronous>, transform_indices = @transform_1, window_bounds = array<i64: 8, 24>}, {transform_indices = @transform_2, window_bounds = array<i64: 8, 256>}]} {
    %c0 = arith.constant 0 : index
    %c0_0 = arith.constant 0 : index
    %0 = vector.load %arg2[%c0, %c0_0] : memref<8x24xbf16, #tpu.memory_space<vmem>>, vector<8x24xbf16>
    %c0_1 = arith.constant 0 : index
    %c0_2 = arith.constant 0 : index
    %1 = vector.load %arg1[%c0_1, %c0_2] : memref<24x256xbf16, #tpu.memory_space<vmem>>, vector<24x256xbf16>
    %cst = arith.constant 0.000000e+00 : bf16
    %2 = vector.broadcast %cst : bf16 to vector<24x256xbf16>
    %3 = arith.maximumf %1, %2 : vector<24x256xbf16>
    %cst_3 = arith.constant dense<0.000000e+00> : vector<8x256xf32>
    %4 = tpu.matmul %0, %3, %cst_3 {dimension_numbers = #tpu.dot_dimension_numbers<[1], [0], [0], [1], [0, 0, 1, 1], [], []>} : vector<8x24xbf16>, vector<24x256xbf16>, vector<8x256xf32> -> vector<8x256xf32>
    %c0_4 = arith.constant 0 : index
    %c0_5 = arith.constant 0 : index
    %5 = vector.load %arg3[%c0_4, %c0_5] : memref<8x256xf32, #tpu.memory_space<vmem>>, vector<8x256xf32>
    tpu.vector_store %arg3[%c0_4, %c0_5], %4 {strides = array<i32>} : memref<8x256xf32, #tpu.memory_space<vmem>>, vector<8x256xf32>,
    return
  }
  func.func @transform_0(%arg0: i32) -> (i32, i32) {
    %c0_i32 = arith.constant 0 : i32
    %c0_i32_0 = arith.constant 0 : i32
    return %c0_i32, %arg0 : i32, i32
  }
  func.func @transform_1(%arg0: i32) -> (i32, i32) {
    %c0_i32 = arith.constant 0 : i32
    %c0_i32_0 = arith.constant 0 : i32
    %c0_i32_1 = arith.constant 0 : i32
    return %c0_i32, %c0_i32_0 : i32, i32
  }
  func.func @transform_2(%arg0: i32) -> (i32, i32) {
    %c0_i32 = arith.constant 0 : i32
    %c0_i32_0 = arith.constant 0 : i32
    return %c0_i32, %arg0 : i32, i32
  }
}

module attributes {stable_mosaic.version = 11 : i64} {
  func.func @_mm_kernel(%arg0: i32, %arg1: memref<200x256xbf16, #tpu.memory_space<vmem>>, %arg2: memref<16x200xbf16, #tpu.memory_space<vmem>>, %arg3: memref<16x256xf32, #tpu.memory_space<vmem>>) attributes {dimension_semantics = [#tpu.dimension_semantics<parallel>], iteration_bounds = array<i64: 2>, scalar_prefetch = 0 : i64, scratch_operands = 0 : i64, tpu.core_type = #tpu.core_type<tc>, window_params = [{transform_indices = @transform_0, window_bounds = array<i64: 200, 256>}, {pipeline_mode = #tpu.pipeline_mode<synchronous>, transform_indices = @transform_1, window_bounds = array<i64: 16, 200>}, {transform_indices = @transform_2, window_bounds = array<i64: 16, 256>}]} {
    %c0 = arith.constant 0 : index
    %c0_0 = arith.constant 0 : index
    %0 = vector.load %arg2[%c0, %c0_0] : memref<16x200xbf16, #tpu.memory_space<vmem>>, vector<16x200xbf16>
    %c0_1 = arith.constant 0 : index
    %c0_2 = arith.constant 0 : index
    %1 = vector.load %arg1[%c0_1, %c0_2] : memref<200x256xbf16, #tpu.memory_space<vmem>>, vector<200x256xbf16>
    %cst = arith.constant dense<0.000000e+00> : vector<16x256xf32>
    %2 = tpu.matmul %0, %1, %cst {dimension_numbers = #tpu.dot_dimension_numbers<[1], [0], [0], [1], [0, 0, 1, 1], [], []>} : vector<16x200xbf16>, vector<200x256xbf16>, vector<16x256xf32> -> vector<16x256xf32>
    %c0_3 = arith.constant 0 : index
    %c0_4 = arith.constant 0 : index
    %3 = vector.load %arg3[%c0_3, %c0_4] : memref<16x256xf32, #tpu.memory_space<vmem>>, vector<16x256xf32>
    tpu.vector_store %arg3[%c0_3, %c0_4], %2 {strides = array<i32>} : memref<16x256xf32, #tpu.memory_space<vmem>>, vector<16x256xf32>,
    return
  }
  func.func @transform_0(%arg0: i32) -> (i32, i32) {
    %c0_i32 = arith.constant 0 : i32
    %c0_i32_0 = arith.constant 0 : i32
    return %c0_i32, %arg0 : i32, i32
  }
  func.func @transform_1(%arg0: i32) -> (i32, i32) {
    %c0_i32 = arith.constant 0 : i32
    %c0_i32_0 = arith.constant 0 : i32
    %c0_i32_1 = arith.constant 0 : i32
    return %c0_i32, %c0_i32_0 : i32, i32
  }
  func.func @transform_2(%arg0: i32) -> (i32, i32) {
    %c0_i32 = arith.constant 0 : i32
    %c0_i32_0 = arith.constant 0 : i32
    return %c0_i32, %arg0 : i32, i32
  }
}

module attributes {stable_mosaic.version = 11 : i64} {
  func.func @_mm_kernel(%arg0: i32, %arg1: memref<136x256xbf16, #tpu.memory_space<vmem>>, %arg2: memref<8x136xbf16, #tpu.memory_space<vmem>>, %arg3: memref<8x256xf32, #tpu.memory_space<vmem>>) attributes {dimension_semantics = [#tpu.dimension_semantics<parallel>], iteration_bounds = array<i64: 2>, scalar_prefetch = 0 : i64, scratch_operands = 0 : i64, tpu.core_type = #tpu.core_type<tc>, window_params = [{transform_indices = @transform_0, window_bounds = array<i64: 136, 256>}, {pipeline_mode = #tpu.pipeline_mode<synchronous>, transform_indices = @transform_1, window_bounds = array<i64: 8, 136>}, {transform_indices = @transform_2, window_bounds = array<i64: 8, 256>}]} {
    %c0 = arith.constant 0 : index
    %c0_0 = arith.constant 0 : index
    %0 = vector.load %arg2[%c0, %c0_0] : memref<8x136xbf16, #tpu.memory_space<vmem>>, vector<8x136xbf16>
    %c0_1 = arith.constant 0 : index
    %c0_2 = arith.constant 0 : index
    %1 = vector.load %arg1[%c0_1, %c0_2] : memref<136x256xbf16, #tpu.memory_space<vmem>>, vector<136x256xbf16>
    %cst = arith.constant dense<0.000000e+00> : vector<8x256xf32>
    %2 = tpu.matmul %0, %1, %cst {dimension_numbers = #tpu.dot_dimension_numbers<[1], [0], [0], [1], [0, 0, 1, 1], [], []>} : vector<8x136xbf16>, vector<136x256xbf16>, vector<8x256xf32> -> vector<8x256xf32>
    %c0_3 = arith.constant 0 : index
    %c0_4 = arith.constant 0 : index
    %3 = vector.load %arg3[%c0_3, %c0_4] : memref<8x256xf32, #tpu.memory_space<vmem>>, vector<8x256xf32>
    tpu.vector_store %arg3[%c0_3, %c0_4], %2 {strides = array<i32>} : memref<8x256xf32, #tpu.memory_space<vmem>>, vector<8x256xf32>,
    return
  }
  func.func @transform_0(%arg0: i32) -> (i32, i32) {
    %c0_i32 = arith.constant 0 : i32
    %c0_i32_0 = arith.constant 0 : i32
    return %c0_i32, %arg0 : i32, i32
  }
  func.func @transform_1(%arg0: i32) -> (i32, i32) {
    %c0_i32 = arith.constant 0 : i32
    %c0_i32_0 = arith.constant 0 : i32
    %c0_i32_1 = arith.constant 0 : i32
    return %c0_i32, %c0_i32_0 : i32, i32
  }
  func.func @transform_2(%arg0: i32) -> (i32, i32) {
    %c0_i32 = arith.constant 0 : i32
    %c0_i32_0 = arith.constant 0 : i32
    return %c0_i32, %arg0 : i32, i32
  }
}

module attributes {stable_mosaic.version = 11 : i64} {
  func.func @_pool_kernel(%arg0: i32, %arg1: memref<9x4x256xf32, #tpu.memory_space<vmem>>, %arg2: memref<1x256xf32, #tpu.memory_space<vmem>>, %arg3: memref<4x256xf32, #tpu.memory_space<vmem>>, %arg4: memref<4x256xf32, #tpu.memory_space<vmem>>) attributes {dimension_semantics = [#tpu.dimension_semantics<parallel>], iteration_bounds = array<i64: 2>, scalar_prefetch = 0 : i64, scratch_operands = 0 : i64, tpu.core_type = #tpu.core_type<tc>, window_params = [{transform_indices = @transform_0, window_bounds = array<i64: 9, 4, 256>}, {transform_indices = @transform_1, window_bounds = array<i64: 1, 256>}, {transform_indices = @transform_2, window_bounds = array<i64: 4, 256>}, {transform_indices = @transform_3, window_bounds = array<i64: 4, 256>}]} {
    %c0 = arith.constant 0 : index
    %c0_0 = arith.constant 0 : index
    %c0_1 = arith.constant 0 : index
    %0 = vector.load %arg1[%c0, %c0_0, %c0_1] : memref<9x4x256xf32, #tpu.memory_space<vmem>>, vector<9x4x256xf32>
    %cst = arith.constant dense<0xFF800000> : vector<4x256xf32>
    %1 = vector.multi_reduction <maximumf>, %0, %cst [0] : vector<9x4x256xf32> to vector<4x256xf32>
    %c0_2 = arith.constant 0 : index
    %c0_3 = arith.constant 0 : index
    %2 = vector.load %arg3[%c0_2, %c0_3] : memref<4x256xf32, #tpu.memory_space<vmem>>, vector<4x256xf32>
    tpu.vector_store %arg3[%c0_2, %c0_3], %1 {strides = array<i32>} : memref<4x256xf32, #tpu.memory_space<vmem>>, vector<4x256xf32>,
    %3 = tpu.weird %0 : vector<9x4x256xf32> -> vector<9x4x256xi1>
    %cst_4 = arith.constant dense<true> : vector<9x4x256xi1>
    %4 = arith.xori %3, %cst_4 : vector<9x4x256xi1>
    %cst_5 = arith.constant 0.000000e+00 : f32
    %5 = vector.broadcast %cst_5 : f32 to vector<9x4x256xf32>
    %6 = arith.select %4, %0, %5 : vector<9x4x256xi1>, vector<9x4x256xf32>
    %cst_6 = arith.constant dense<0.000000e+00> : vector<4x256xf32>
    %7 = vector.multi_reduction <add>, %6, %cst_6 [0] : vector<9x4x256xf32> to vector<4x256xf32>
    %c0_7 = arith.constant 0 : index
    %c0_8 = arith.constant 0 : index
    %8 = vector.load %arg2[%c0_7, %c0_8] : memref<1x256xf32, #tpu.memory_space<vmem>>, vector<1x256xf32>
    %9 = vector.broadcast %8 : vector<1x256xf32> to vector<4x256xf32>
    %10 = arith.mulf %7, %9 : vector<4x256xf32>
    %c0_9 = arith.constant 0 : index
    %c0_10 = arith.constant 0 : index
    %11 = vector.load %arg4[%c0_9, %c0_10] : memref<4x256xf32, #tpu.memory_space<vmem>>, vector<4x256xf32>
    tpu.vector_store %arg4[%c0_9, %c0_10], %10 {strides = array<i32>} : memref<4x256xf32, #tpu.memory_space<vmem>>, vector<4x256xf32>,
    return
  }
  func.func @transform_0(%arg0: i32) -> (i32, i32, i32) {
    %c0_i32 = arith.constant 0 : i32
    %c0_i32_0 = arith.constant 0 : i32
    %c0_i32_1 = arith.constant 0 : i32
    return %c0_i32, %c0_i32_0, %arg0 : i32, i32, i32
  }
  func.func @transform_1(%arg0: i32) -> (i32, i32) {
    %c0_i32 = arith.constant 0 : i32
    %c0_i32_0 = arith.constant 0 : i32
    return %c0_i32, %arg0 : i32, i32
  }
  func.func @transform_2(%arg0: i32) -> (i32, i32) {
    %c0_i32 = arith.constant 0 : i32
    %c0_i32_0 = arith.constant 0 : i32
    return %c0_i32, %arg0 : i32, i32
  }
  func.func @transform_3(%arg0: i32) -> (i32, i32) {
    %c0_i32 = arith.constant 0 : i32
    %c0_i32_0 = arith.constant 0 : i32
    return %c0_i32, %arg0 : i32, i32
  }
}

module attributes {stable_mosaic.version = 11 : i64} {
  func.func @_mm_relu_kernel(%arg0: i32, %arg1: memref<20x256xbf16, #tpu.memory_space<vmem>>, %arg2: memref<16x20xbf16, #tpu.memory_space<vmem>>, %arg3: memref<16x256xf32, #tpu.memory_space<vmem>>) attributes {dimension_semantics = [#tpu.dimension_semantics<parallel>], iteration_bounds = array<i64: 2>, scalar_prefetch = 0 : i64, scratch_operands = 0 : i64, tpu.core_type = #tpu.core_type<tc>, window_params = [{transform_indices = @transform_0, window_bounds = array<i64: 20, 256>}, {pipeline_mode = #tpu.pipeline_mode<synchronous>, transform_indices = @transform_1, window_bounds = array<i64: 16, 20>}, {transform_indices = @transform_2, window_bounds = array<i64: 16, 256>}]} {
    %c0 = arith.constant 0 : index
    %c0_0 = arith.constant 0 : index
    %0 = vector.load %arg2[%c0, %c0_0] : memref<16x20xbf16, #tpu.memory_space<vmem>>, vector<16x20xbf16>
    %c0_1 = arith.constant 0 : index
    %c0_2 = arith.constant 0 : index
    %1 = vector.load %arg1[%c0_1, %c0_2] : memref<20x256xbf16, #tpu.memory_space<vmem>>, vector<20x256xbf16>
    %cst = arith.constant 0.000000e+00 : bf16
    %2 = vector.broadcast %cst : bf16 to vector<20x256xbf16>
    %3 = arith.maximumf %1, %2 : vector<20x256xbf16>
    %cst_3 = arith.constant dense<0.000000e+00> : vector<16x256xf32>
    %4 = tpu.matmul %0, %3, %cst_3 {dimension_numbers = #tpu.dot_dimension_numbers<[1], [0], [0], [1], [0, 0, 1, 1], [], []>} : vector<16x20xbf16>, vector<20x256xbf16>, vector<16x256xf32> -> vector<16x256xf32>
    %c0_4 = arith.constant 0 : index
    %c0_5 = arith.constant 0 : index
    %5 = vector.load %arg3[%c0_4, %c0_5] : memref<16x256xf32, #tpu.memory_space<vmem>>, vector<16x256xf32>
    tpu.vector_store %arg3[%c0_4, %c0_5], %4 {strides = array<i32>} : memref<16x256xf32, #tpu.memory_space<vmem>>, vector<16x256xf32>,
    return
  }
  func.func @transform_0(%arg0: i32) -> (i32, i32) {
    %c0_i32 = arith.constant 0 : i32
    %c0_i32_0 = arith.constant 0 : i32
    return %c0_i32, %arg0 : i32, i32
  }
  func.func @transform_1(%arg0: i32) -> (i32, i32) {
    %c0_i32 = arith.constant 0 : i32
    %c0_i32_0 = arith.constant 0 : i32
    %c0_i32_1 = arith.constant 0 : i32
    return %c0_i32, %c0_i32_0 : i32, i32
  }
  func.func @transform_2(%arg0: i32) -> (i32, i32) {
    %c0_i32 = arith.constant 0 : i32
    %c0_i32_0 = arith.constant 0 : i32
    return %c0_i32, %arg0 : i32, i32
  }
}

module attributes {stable_mosaic.version = 11 : i64} {
  func.func @_mm_kernel(%arg0: i32, %arg1: memref<400x128xbf16, #tpu.memory_space<vmem>>, %arg2: memref<40x400xbf16, #tpu.memory_space<vmem>>, %arg3: memref<40x128xf32, #tpu.memory_space<vmem>>) attributes {dimension_semantics = [#tpu.dimension_semantics<parallel>], iteration_bounds = array<i64: 1>, scalar_prefetch = 0 : i64, scratch_operands = 0 : i64, tpu.core_type = #tpu.core_type<tc>, window_params = [{transform_indices = @transform_0, window_bounds = array<i64: 400, 128>}, {pipeline_mode = #tpu.pipeline_mode<synchronous>, transform_indices = @transform_1, window_bounds = array<i64: 40, 400>}, {transform_indices = @transform_2, window_bounds = array<i64: 40, 128>}]} {
    %c0 = arith.constant 0 : index
    %c0_0 = arith.constant 0 : index
    %0 = vector.load %arg2[%c0, %c0_0] : memref<40x400xbf16, #tpu.memory_space<vmem>>, vector<40x400xbf16>
    %c0_1 = arith.constant 0 : index
    %c0_2 = arith.constant 0 : index
    %1 = vector.load %arg1[%c0_1, %c0_2] : memref<400x128xbf16, #tpu.memory_space<vmem>>, vector<400x128xbf16>
    %cst = arith.constant dense<0.000000e+00> : vector<40x128xf32>
    %2 = tpu.matmul %0, %1, %cst {dimension_numbers = #tpu.dot_dimension_numbers<[1], [0], [0], [1], [0, 0, 1, 1], [], []>} : vector<40x400xbf16>, vector<400x128xbf16>, vector<40x128xf32> -> vector<40x128xf32>
    %c0_3 = arith.constant 0 : index
    %c0_4 = arith.constant 0 : index
    %3 = vector.load %arg3[%c0_3, %c0_4] : memref<40x128xf32, #tpu.memory_space<vmem>>, vector<40x128xf32>
    tpu.vector_store %arg3[%c0_3, %c0_4], %2 {strides = array<i32>} : memref<40x128xf32, #tpu.memory_space<vmem>>, vector<40x128xf32>,
    return
  }
  func.func @transform_0(%arg0: i32) -> (i32, i32) {
    %c0_i32 = arith.constant 0 : i32
    %c0_i32_0 = arith.constant 0 : i32
    return %c0_i32, %arg0 : i32, i32
  }
  func.func @transform_1(%arg0: i32) -> (i32, i32) {
    %c0_i32 = arith.constant 0 : i32
    %c0_i32_0 = arith.constant 0 : i32
    %c0_i32_1 = arith.constant 0 : i32
    return %c0_i32, %c0_i32_0 : i32, i32
  }
  func.func @transform_2(%arg0: i32) -> (i32, i32) {
    %c0_i32 = arith.constant 0 : i32
    %c0_i32_0 = arith.constant 0 : i32
    return %c0_i32, %arg0 : i32, i32
  }
}

module attributes {stable_mosaic.version = 11 : i64} {
  func.func @_mm_kernel(%arg0: i32, %arg1: memref<272x128xbf16, #tpu.memory_space<vmem>>, %arg2: memref<16x272xbf16, #tpu.memory_space<vmem>>, %arg3: memref<16x128xf32, #tpu.memory_space<vmem>>) attributes {dimension_semantics = [#tpu.dimension_semantics<parallel>], iteration_bounds = array<i64: 1>, scalar_prefetch = 0 : i64, scratch_operands = 0 : i64, tpu.core_type = #tpu.core_type<tc>, window_params = [{transform_indices = @transform_0, window_bounds = array<i64: 272, 128>}, {pipeline_mode = #tpu.pipeline_mode<synchronous>, transform_indices = @transform_1, window_bounds = array<i64: 16, 272>}, {transform_indices = @transform_2, window_bounds = array<i64: 16, 128>}]} {
    %c0 = arith.constant 0 : index
    %c0_0 = arith.constant 0 : index
    %0 = vector.load %arg2[%c0, %c0_0] : memref<16x272xbf16, #tpu.memory_space<vmem>>, vector<16x272xbf16>
    %c0_1 = arith.constant 0 : index
    %c0_2 = arith.constant 0 : index
    %1 = vector.load %arg1[%c0_1, %c0_2] : memref<272x128xbf16, #tpu.memory_space<vmem>>, vector<272x128xbf16>
    %cst = arith.constant dense<0.000000e+00> : vector<16x128xf32>
    %2 = tpu.matmul %0, %1, %cst {dimension_numbers = #tpu.dot_dimension_numbers<[1], [0], [0], [1], [0, 0, 1, 1], [], []>} : vector<16x272xbf16>, vector<272x128xbf16>, vector<16x128xf32> -> vector<16x128xf32>
    %c0_3 = arith.constant 0 : index
    %c0_4 = arith.constant 0 : index
    %3 = vector.load %arg3[%c0_3, %c0_4] : memref<16x128xf32, #tpu.memory_space<vmem>>, vector<16x128xf32>
    tpu.vector_store %arg3[%c0_3, %c0_4], %2 {strides = array<i32>} : memref<16x128xf32, #tpu.memory_space<vmem>>, vector<16x128xf32>,
    return
  }
  func.func @transform_0(%arg0: i32) -> (i32, i32) {
    %c0_i32 = arith.constant 0 : i32
    %c0_i32_0 = arith.constant 0 : i32
    return %c0_i32, %arg0 : i32, i32
  }
  func.func @transform_1(%arg0: i32) -> (i32, i32) {
    %c0_i32 = arith.constant 0 : i32
    %c0_i32_0 = arith.constant 0 : i32
    %c0_i32_1 = arith.constant 0 : i32
    return %c0_i32, %c0_i32_0 : i32, i32
  }
  func.func @transform_2(%arg0: i32) -> (i32, i32) {
    %c0_i32 = arith.constant 0 : i32
    %c0_i32_0 = arith.constant 0 : i32
    return %c0_i32, %arg0 : i32, i32
  }
}

module attributes {stable_mosaic.version = 11 : i64} {
  func.func @_pool_kernel(%arg0: i32, %arg1: memref<9x8x128xf32, #tpu.memory_space<vmem>>, %arg2: memref<1x128xf32, #tpu.memory_space<vmem>>, %arg3: memref<8x128xf32, #tpu.memory_space<vmem>>, %arg4: memref<8x128xf32, #tpu.memory_space<vmem>>) attributes {dimension_semantics = [#tpu.dimension_semantics<parallel>], iteration_bounds = array<i64: 1>, scalar_prefetch = 0 : i64, scratch_operands = 0 : i64, tpu.core_type = #tpu.core_type<tc>, window_params = [{transform_indices = @transform_0, window_bounds = array<i64: 9, 8, 128>}, {transform_indices = @transform_1, window_bounds = array<i64: 1, 128>}, {transform_indices = @transform_2, window_bounds = array<i64: 8, 128>}, {transform_indices = @transform_3, window_bounds = array<i64: 8, 128>}]} {
    %c0 = arith.constant 0 : index
    %c0_0 = arith.constant 0 : index
    %c0_1 = arith.constant 0 : index
    %0 = vector.load %arg1[%c0, %c0_0, %c0_1] : memref<9x8x128xf32, #tpu.memory_space<vmem>>, vector<9x8x128xf32>
    %cst = arith.constant dense<0xFF800000> : vector<8x128xf32>
    %1 = vector.multi_reduction <maximumf>, %0, %cst [0] : vector<9x8x128xf32> to vector<8x128xf32>
    %c0_2 = arith.constant 0 : index
    %c0_3 = arith.constant 0 : index
    %2 = vector.load %arg3[%c0_2, %c0_3] : memref<8x128xf32, #tpu.memory_space<vmem>>, vector<8x128xf32>
    tpu.vector_store %arg3[%c0_2, %c0_3], %1 {strides = array<i32>} : memref<8x128xf32, #tpu.memory_space<vmem>>, vector<8x128xf32>,
    %3 = tpu.weird %0 : vector<9x8x128xf32> -> vector<9x8x128xi1>
    %cst_4 = arith.constant dense<true> : vector<9x8x128xi1>
    %4 = arith.xori %3, %cst_4 : vector<9x8x128xi1>
    %cst_5 = arith.constant 0.000000e+00 : f32
    %5 = vector.broadcast %cst_5 : f32 to vector<9x8x128xf32>
    %6 = arith.select %4, %0, %5 : vector<9x8x128xi1>, vector<9x8x128xf32>
    %cst_6 = arith.constant dense<0.000000e+00> : vector<8x128xf32>
    %7 = vector.multi_reduction <add>, %6, %cst_6 [0] : vector<9x8x128xf32> to vector<8x128xf32>
    %c0_7 = arith.constant 0 : index
    %c0_8 = arith.constant 0 : index
    %8 = vector.load %arg2[%c0_7, %c0_8] : memref<1x128xf32, #tpu.memory_space<vmem>>, vector<1x128xf32>
    %9 = vector.broadcast %8 : vector<1x128xf32> to vector<8x128xf32>
    %10 = arith.mulf %7, %9 : vector<8x128xf32>
    %c0_9 = arith.constant 0 : index
    %c0_10 = arith.constant 0 : index
    %11 = vector.load %arg4[%c0_9, %c0_10] : memref<8x128xf32, #tpu.memory_space<vmem>>, vector<8x128xf32>
    tpu.vector_store %arg4[%c0_9, %c0_10], %10 {strides = array<i32>} : memref<8x128xf32, #tpu.memory_space<vmem>>, vector<8x128xf32>,
    return
  }
  func.func @transform_0(%arg0: i32) -> (i32, i32, i32) {
    %c0_i32 = arith.constant 0 : i32
    %c0_i32_0 = arith.constant 0 : i32
    %c0_i32_1 = arith.constant 0 : i32
    return %c0_i32, %c0_i32_0, %arg0 : i32, i32, i32
  }
  func.func @transform_1(%arg0: i32) -> (i32, i32) {
    %c0_i32 = arith.constant 0 : i32
    %c0_i32_0 = arith.constant 0 : i32
    return %c0_i32, %arg0 : i32, i32
  }
  func.func @transform_2(%arg0: i32) -> (i32, i32) {
    %c0_i32 = arith.constant 0 : i32
    %c0_i32_0 = arith.constant 0 : i32
    return %c0_i32, %arg0 : i32, i32
  }
  func.func @transform_3(%arg0: i32) -> (i32, i32) {
    %c0_i32 = arith.constant 0 : i32
    %c0_i32_0 = arith.constant 0 : i32
    return %c0_i32, %arg0 : i32, i32
  }
}

module attributes {stable_mosaic.version = 11 : i64} {
  func.func @_mm_kernel(%arg0: i32, %arg1: memref<400x128xbf16, #tpu.memory_space<vmem>>, %arg2: memref<32x400xbf16, #tpu.memory_space<vmem>>, %arg3: memref<32x128xf32, #tpu.memory_space<vmem>>) attributes {dimension_semantics = [#tpu.dimension_semantics<parallel>], iteration_bounds = array<i64: 1>, scalar_prefetch = 0 : i64, scratch_operands = 0 : i64, tpu.core_type = #tpu.core_type<tc>, window_params = [{transform_indices = @transform_0, window_bounds = array<i64: 400, 128>}, {pipeline_mode = #tpu.pipeline_mode<synchronous>, transform_indices = @transform_1, window_bounds = array<i64: 32, 400>}, {transform_indices = @transform_2, window_bounds = array<i64: 32, 128>}]} {
    %c0 = arith.constant 0 : index
    %c0_0 = arith.constant 0 : index
    %0 = vector.load %arg2[%c0, %c0_0] : memref<32x400xbf16, #tpu.memory_space<vmem>>, vector<32x400xbf16>
    %c0_1 = arith.constant 0 : index
    %c0_2 = arith.constant 0 : index
    %1 = vector.load %arg1[%c0_1, %c0_2] : memref<400x128xbf16, #tpu.memory_space<vmem>>, vector<400x128xbf16>
    %cst = arith.constant dense<0.000000e+00> : vector<32x128xf32>
    %2 = tpu.matmul %0, %1, %cst {dimension_numbers = #tpu.dot_dimension_numbers<[1], [0], [0], [1], [0, 0, 1, 1], [], []>} : vector<32x400xbf16>, vector<400x128xbf16>, vector<32x128xf32> -> vector<32x128xf32>
    %c0_3 = arith.constant 0 : index
    %c0_4 = arith.constant 0 : index
    %3 = vector.load %arg3[%c0_3, %c0_4] : memref<32x128xf32, #tpu.memory_space<vmem>>, vector<32x128xf32>
    tpu.vector_store %arg3[%c0_3, %c0_4], %2 {strides = array<i32>} : memref<32x128xf32, #tpu.memory_space<vmem>>, vector<32x128xf32>,
    return
  }
  func.func @transform_0(%arg0: i32) -> (i32, i32) {
    %c0_i32 = arith.constant 0 : i32
    %c0_i32_0 = arith.constant 0 : i32
    return %c0_i32, %arg0 : i32, i32
  }
  func.func @transform_1(%arg0: i32) -> (i32, i32) {
    %c0_i32 = arith.constant 0 : i32
    %c0_i32_0 = arith.constant 0 : i32
    %c0_i32_1 = arith.constant 0 : i32
    return %c0_i32, %c0_i32_0 : i32, i32
  }
  func.func @transform_2(%arg0: i32) -> (i32, i32) {
    %c0_i32 = arith.constant 0 : i32
    %c0_i32_0 = arith.constant 0 : i32
    return %c0_i32, %arg0 : i32, i32
  }
}

module attributes {stable_mosaic.version = 11 : i64} {
  func.func @_mm_relu_kernel(%arg0: i32, %arg1: memref<32x128xbf16, #tpu.memory_space<vmem>>, %arg2: memref<32x32xbf16, #tpu.memory_space<vmem>>, %arg3: memref<32x128xf32, #tpu.memory_space<vmem>>) attributes {dimension_semantics = [#tpu.dimension_semantics<parallel>], iteration_bounds = array<i64: 1>, scalar_prefetch = 0 : i64, scratch_operands = 0 : i64, tpu.core_type = #tpu.core_type<tc>, window_params = [{transform_indices = @transform_0, window_bounds = array<i64: 32, 128>}, {pipeline_mode = #tpu.pipeline_mode<synchronous>, transform_indices = @transform_1, window_bounds = array<i64: 32, 32>}, {transform_indices = @transform_2, window_bounds = array<i64: 32, 128>}]} {
    %c0 = arith.constant 0 : index
    %c0_0 = arith.constant 0 : index
    %0 = vector.load %arg2[%c0, %c0_0] : memref<32x32xbf16, #tpu.memory_space<vmem>>, vector<32x32xbf16>
    %c0_1 = arith.constant 0 : index
    %c0_2 = arith.constant 0 : index
    %1 = vector.load %arg1[%c0_1, %c0_2] : memref<32x128xbf16, #tpu.memory_space<vmem>>, vector<32x128xbf16>
    %cst = arith.constant 0.000000e+00 : bf16
    %2 = vector.broadcast %cst : bf16 to vector<32x128xbf16>
    %3 = arith.maximumf %1, %2 : vector<32x128xbf16>
    %cst_3 = arith.constant dense<0.000000e+00> : vector<32x128xf32>
    %4 = tpu.matmul %0, %3, %cst_3 {dimension_numbers = #tpu.dot_dimension_numbers<[1], [0], [0], [1], [0, 0, 1, 1], [], []>} : vector<32x32xbf16>, vector<32x128xbf16>, vector<32x128xf32> -> vector<32x128xf32>
    %c0_4 = arith.constant 0 : index
    %c0_5 = arith.constant 0 : index
    %5 = vector.load %arg3[%c0_4, %c0_5] : memref<32x128xf32, #tpu.memory_space<vmem>>, vector<32x128xf32>
    tpu.vector_store %arg3[%c0_4, %c0_5], %4 {strides = array<i32>} : memref<32x128xf32, #tpu.memory_space<vmem>>, vector<32x128xf32>,
    return
  }
  func.func @transform_0(%arg0: i32) -> (i32, i32) {
    %c0_i32 = arith.constant 0 : i32
    %c0_i32_0 = arith.constant 0 : i32
    return %c0_i32, %arg0 : i32, i32
  }
  func.func @transform_1(%arg0: i32) -> (i32, i32) {
    %c0_i32 = arith.constant 0 : i32
    %c0_i32_0 = arith.constant 0 : i32
    %c0_i32_1 = arith.constant 0 : i32
    return %c0_i32, %c0_i32_0 : i32, i32
  }
  func.func @transform_2(%arg0: i32) -> (i32, i32) {
    %c0_i32 = arith.constant 0 : i32
    %c0_i32_0 = arith.constant 0 : i32
    return %c0_i32, %arg0 : i32, i32
  }
}

module attributes {stable_mosaic.version = 11 : i64} {
  func.func @_mm_kernel(%arg0: i32, %arg1: memref<800x128xbf16, #tpu.memory_space<vmem>>, %arg2: memref<80x800xbf16, #tpu.memory_space<vmem>>, %arg3: memref<80x128xf32, #tpu.memory_space<vmem>>) attributes {dimension_semantics = [#tpu.dimension_semantics<parallel>], iteration_bounds = array<i64: 1>, scalar_prefetch = 0 : i64, scratch_operands = 0 : i64, tpu.core_type = #tpu.core_type<tc>, window_params = [{transform_indices = @transform_0, window_bounds = array<i64: 800, 128>}, {pipeline_mode = #tpu.pipeline_mode<synchronous>, transform_indices = @transform_1, window_bounds = array<i64: 80, 800>}, {transform_indices = @transform_2, window_bounds = array<i64: 80, 128>}]} {
    %c0 = arith.constant 0 : index
    %c0_0 = arith.constant 0 : index
    %0 = vector.load %arg2[%c0, %c0_0] : memref<80x800xbf16, #tpu.memory_space<vmem>>, vector<80x800xbf16>
    %c0_1 = arith.constant 0 : index
    %c0_2 = arith.constant 0 : index
    %1 = vector.load %arg1[%c0_1, %c0_2] : memref<800x128xbf16, #tpu.memory_space<vmem>>, vector<800x128xbf16>
    %cst = arith.constant dense<0.000000e+00> : vector<80x128xf32>
    %2 = tpu.matmul %0, %1, %cst {dimension_numbers = #tpu.dot_dimension_numbers<[1], [0], [0], [1], [0, 0, 1, 1], [], []>} : vector<80x800xbf16>, vector<800x128xbf16>, vector<80x128xf32> -> vector<80x128xf32>
    %c0_3 = arith.constant 0 : index
    %c0_4 = arith.constant 0 : index
    %3 = vector.load %arg3[%c0_3, %c0_4] : memref<80x128xf32, #tpu.memory_space<vmem>>, vector<80x128xf32>
    tpu.vector_store %arg3[%c0_3, %c0_4], %2 {strides = array<i32>} : memref<80x128xf32, #tpu.memory_space<vmem>>, vector<80x128xf32>,
    return
  }
  func.func @transform_0(%arg0: i32) -> (i32, i32) {
    %c0_i32 = arith.constant 0 : i32
    %c0_i32_0 = arith.constant 0 : i32
    return %c0_i32, %arg0 : i32, i32
  }
  func.func @transform_1(%arg0: i32) -> (i32, i32) {
    %c0_i32 = arith.constant 0 : i32
    %c0_i32_0 = arith.constant 0 : i32
    %c0_i32_1 = arith.constant 0 : i32
    return %c0_i32, %c0_i32_0 : i32, i32
  }
  func.func @transform_2(%arg0: i32) -> (i32, i32) {
    %c0_i32 = arith.constant 0 : i32
    %c0_i32_0 = arith.constant 0 : i32
    return %c0_i32, %arg0 : i32, i32
  }
}

module attributes {stable_mosaic.version = 11 : i64} {
  func.func @_pool_kernel(%arg0: i32, %arg1: memref<9x16x128xf32, #tpu.memory_space<vmem>>, %arg2: memref<1x128xf32, #tpu.memory_space<vmem>>, %arg3: memref<16x128xf32, #tpu.memory_space<vmem>>, %arg4: memref<16x128xf32, #tpu.memory_space<vmem>>) attributes {dimension_semantics = [#tpu.dimension_semantics<parallel>], iteration_bounds = array<i64: 1>, scalar_prefetch = 0 : i64, scratch_operands = 0 : i64, tpu.core_type = #tpu.core_type<tc>, window_params = [{transform_indices = @transform_0, window_bounds = array<i64: 9, 16, 128>}, {transform_indices = @transform_1, window_bounds = array<i64: 1, 128>}, {transform_indices = @transform_2, window_bounds = array<i64: 16, 128>}, {transform_indices = @transform_3, window_bounds = array<i64: 16, 128>}]} {
    %c0 = arith.constant 0 : index
    %c0_0 = arith.constant 0 : index
    %c0_1 = arith.constant 0 : index
    %0 = vector.load %arg1[%c0, %c0_0, %c0_1] : memref<9x16x128xf32, #tpu.memory_space<vmem>>, vector<9x16x128xf32>
    %cst = arith.constant dense<0xFF800000> : vector<16x128xf32>
    %1 = vector.multi_reduction <maximumf>, %0, %cst [0] : vector<9x16x128xf32> to vector<16x128xf32>
    %c0_2 = arith.constant 0 : index
    %c0_3 = arith.constant 0 : index
    %2 = vector.load %arg3[%c0_2, %c0_3] : memref<16x128xf32, #tpu.memory_space<vmem>>, vector<16x128xf32>
    tpu.vector_store %arg3[%c0_2, %c0_3], %1 {strides = array<i32>} : memref<16x128xf32, #tpu.memory_space<vmem>>, vector<16x128xf32>,
    %3 = tpu.weird %0 : vector<9x16x128xf32> -> vector<9x16x128xi1>
    %cst_4 = arith.constant dense<true> : vector<9x16x128xi1>
    %4 = arith.xori %3, %cst_4 : vector<9x16x128xi1>
    %cst_5 = arith.constant 0.000000e+00 : f32
    %5 = vector.broadcast %cst_5 : f32 to vector<9x16x128xf32>
    %6 = arith.select %4, %0, %5 : vector<9x16x128xi1>, vector<9x16x128xf32>
    %cst_6 = arith.constant dense<0.000000e+00> : vector<16x128xf32>
    %7 = vector.multi_reduction <add>, %6, %cst_6 [0] : vector<9x16x128xf32> to vector<16x128xf32>
    %c0_7 = arith.constant 0 : index
    %c0_8 = arith.constant 0 : index
    %8 = vector.load %arg2[%c0_7, %c0_8] : memref<1x128xf32, #tpu.memory_space<vmem>>, vector<1x128xf32>
    %9 = vector.broadcast %8 : vector<1x128xf32> to vector<16x128xf32>
    %10 = arith.mulf %7, %9 : vector<16x128xf32>
    %c0_9 = arith.constant 0 : index
    %c0_10 = arith.constant 0 : index
    %11 = vector.load %arg4[%c0_9, %c0_10] : memref<16x128xf32, #tpu.memory_space<vmem>>, vector<16x128xf32>
    tpu.vector_store %arg4[%c0_9, %c0_10], %10 {strides = array<i32>} : memref<16x128xf32, #tpu.memory_space<vmem>>, vector<16x128xf32>,
    return
  }
  func.func @transform_0(%arg0: i32) -> (i32, i32, i32) {
    %c0_i32 = arith.constant 0 : i32
    %c0_i32_0 = arith.constant 0 : i32
    %c0_i32_1 = arith.constant 0 : i32
    return %c0_i32, %c0_i32_0, %arg0 : i32, i32, i32
  }
  func.func @transform_1(%arg0: i32) -> (i32, i32) {
    %c0_i32 = arith.constant 0 : i32
    %c0_i32_0 = arith.constant 0 : i32
    return %c0_i32, %arg0 : i32, i32
  }
  func.func @transform_2(%arg0: i32) -> (i32, i32) {
    %c0_i32 = arith.constant 0 : i32
    %c0_i32_0 = arith.constant 0 : i32
    return %c0_i32, %arg0 : i32, i32
  }
  func.func @transform_3(%arg0: i32) -> (i32, i32) {
    %c0_i32 = arith.constant 0 : i32
    %c0_i32_0 = arith.constant 0 : i32
    return %c0_i32, %arg0 : i32, i32
  }
}

module attributes {stable_mosaic.version = 11 : i64} {
  func.func @_mm_kernel(%arg0: i32, %arg1: memref<544x128xbf16, #tpu.memory_space<vmem>>, %arg2: memref<32x544xbf16, #tpu.memory_space<vmem>>, %arg3: memref<32x128xf32, #tpu.memory_space<vmem>>) attributes {dimension_semantics = [#tpu.dimension_semantics<parallel>], iteration_bounds = array<i64: 1>, scalar_prefetch = 0 : i64, scratch_operands = 0 : i64, tpu.core_type = #tpu.core_type<tc>, window_params = [{transform_indices = @transform_0, window_bounds = array<i64: 544, 128>}, {pipeline_mode = #tpu.pipeline_mode<synchronous>, transform_indices = @transform_1, window_bounds = array<i64: 32, 544>}, {transform_indices = @transform_2, window_bounds = array<i64: 32, 128>}]} {
    %c0 = arith.constant 0 : index
    %c0_0 = arith.constant 0 : index
    %0 = vector.load %arg2[%c0, %c0_0] : memref<32x544xbf16, #tpu.memory_space<vmem>>, vector<32x544xbf16>
    %c0_1 = arith.constant 0 : index
    %c0_2 = arith.constant 0 : index
    %1 = vector.load %arg1[%c0_1, %c0_2] : memref<544x128xbf16, #tpu.memory_space<vmem>>, vector<544x128xbf16>
    %cst = arith.constant dense<0.000000e+00> : vector<32x128xf32>
    %2 = tpu.matmul %0, %1, %cst {dimension_numbers = #tpu.dot_dimension_numbers<[1], [0], [0], [1], [0, 0, 1, 1], [], []>} : vector<32x544xbf16>, vector<544x128xbf16>, vector<32x128xf32> -> vector<32x128xf32>
    %c0_3 = arith.constant 0 : index
    %c0_4 = arith.constant 0 : index
    %3 = vector.load %arg3[%c0_3, %c0_4] : memref<32x128xf32, #tpu.memory_space<vmem>>, vector<32x128xf32>
    tpu.vector_store %arg3[%c0_3, %c0_4], %2 {strides = array<i32>} : memref<32x128xf32, #tpu.memory_space<vmem>>, vector<32x128xf32>,
    return
  }
  func.func @transform_0(%arg0: i32) -> (i32, i32) {
    %c0_i32 = arith.constant 0 : i32
    %c0_i32_0 = arith.constant 0 : i32
    return %c0_i32, %arg0 : i32, i32
  }
  func.func @transform_1(%arg0: i32) -> (i32, i32) {
    %c0_i32 = arith.constant 0 : i32
    %c0_i32_0 = arith.constant 0 : i32
    %c0_i32_1 = arith.constant 0 : i32
    return %c0_i32, %c0_i32_0 : i32, i32
  }
  func.func @transform_2(%arg0: i32) -> (i32, i32) {
    %c0_i32 = arith.constant 0 : i32
    %c0_i32_0 = arith.constant 0 : i32
    return %c0_i32, %arg0 : i32, i32
  }
}

module attributes {stable_mosaic.version = 11 : i64} {
  func.func @_mm_kernel(%arg0: i32, %arg1: memref<800x128xbf16, #tpu.memory_space<vmem>>, %arg2: memref<64x800xbf16, #tpu.memory_space<vmem>>, %arg3: memref<64x128xf32, #tpu.memory_space<vmem>>) attributes {dimension_semantics = [#tpu.dimension_semantics<parallel>], iteration_bounds = array<i64: 1>, scalar_prefetch = 0 : i64, scratch_operands = 0 : i64, tpu.core_type = #tpu.core_type<tc>, window_params = [{transform_indices = @transform_0, window_bounds = array<i64: 800, 128>}, {pipeline_mode = #tpu.pipeline_mode<synchronous>, transform_indices = @transform_1, window_bounds = array<i64: 64, 800>}, {transform_indices = @transform_2, window_bounds = array<i64: 64, 128>}]} {
    %c0 = arith.constant 0 : index
    %c0_0 = arith.constant 0 : index
    %0 = vector.load %arg2[%c0, %c0_0] : memref<64x800xbf16, #tpu.memory_space<vmem>>, vector<64x800xbf16>
    %c0_1 = arith.constant 0 : index
    %c0_2 = arith.constant 0 : index
    %1 = vector.load %arg1[%c0_1, %c0_2] : memref<800x128xbf16, #tpu.memory_space<vmem>>, vector<800x128xbf16>
    %cst = arith.constant dense<0.000000e+00> : vector<64x128xf32>
    %2 = tpu.matmul %0, %1, %cst {dimension_numbers = #tpu.dot_dimension_numbers<[1], [0], [0], [1], [0, 0, 1, 1], [], []>} : vector<64x800xbf16>, vector<800x128xbf16>, vector<64x128xf32> -> vector<64x128xf32>
    %c0_3 = arith.constant 0 : index
    %c0_4 = arith.constant 0 : index
    %3 = vector.load %arg3[%c0_3, %c0_4] : memref<64x128xf32, #tpu.memory_space<vmem>>, vector<64x128xf32>
    tpu.vector_store %arg3[%c0_3, %c0_4], %2 {strides = array<i32>} : memref<64x128xf32, #tpu.memory_space<vmem>>, vector<64x128xf32>,
    return
  }
  func.func @transform_0(%arg0: i32) -> (i32, i32) {
    %c0_i32 = arith.constant 0 : i32
    %c0_i32_0 = arith.constant 0 : i32
    return %c0_i32, %arg0 : i32, i32
  }
  func.func @transform_1(%arg0: i32) -> (i32, i32) {
    %c0_i32 = arith.constant 0 : i32
    %c0_i32_0 = arith.constant 0 : i32
    %c0_i32_1 = arith.constant 0 : i32
    return %c0_i32, %c0_i32_0 : i32, i32
  }
  func.func @transform_2(%arg0: i32) -> (i32, i32) {
    %c0_i32 = arith.constant 0 : i32
    %c0_i32_0 = arith.constant 0 : i32
    return %c0_i32, %arg0 : i32, i32
  }
}

module attributes {stable_mosaic.version = 11 : i64} {
  func.func @_head_kernel(%arg0: i32, %arg1: memref<2x32x16xf32, #tpu.memory_space<vmem>>, %arg2: memref<32x10xf32, #tpu.memory_space<vmem>>, %arg3: memref<1x10xf32, #tpu.memory_space<vmem>>, %arg4: memref<2x10xf32, #tpu.memory_space<vmem>>) attributes {dimension_semantics = [#tpu.dimension_semantics<arbitrary>], iteration_bounds = array<i64: 1>, scalar_prefetch = 0 : i64, scratch_operands = 0 : i64, tpu.core_type = #tpu.core_type<tc>, window_params = [{pipeline_mode = #tpu.pipeline_mode<synchronous>, transform_indices = @transform_0, window_bounds = array<i64: 2, 32, 16>}, {pipeline_mode = #tpu.pipeline_mode<synchronous>, transform_indices = @transform_1, window_bounds = array<i64: 32, 10>}, {pipeline_mode = #tpu.pipeline_mode<synchronous>, transform_indices = @transform_2, window_bounds = array<i64: 1, 10>}, {pipeline_mode = #tpu.pipeline_mode<synchronous>, transform_indices = @transform_3, window_bounds = array<i64: 2, 10>}]} {
    %c0 = arith.constant 0 : index
    %c0_0 = arith.constant 0 : index
    %c0_1 = arith.constant 0 : index
    %0 = vector.load %arg1[%c0, %c0_0, %c0_1] : memref<2x32x16xf32, #tpu.memory_space<vmem>>, vector<2x32x16xf32>
    %cst = arith.constant dense<0.000000e+00> : vector<2x32xf32>
    %1 = vector.multi_reduction <add>, %0, %cst [2] : vector<2x32x16xf32> to vector<2x32xf32>
    %cst_2 = arith.constant 1.600000e+01 : f32
    %2 = vector.broadcast %cst_2 : f32 to vector<2x32xf32>
    %3 = arith.divf %1, %2 : vector<2x32xf32>
    %c0_3 = arith.constant 0 : index
    %c0_4 = arith.constant 0 : index
    %4 = vector.load %arg2[%c0_3, %c0_4] : memref<32x10xf32, #tpu.memory_space<vmem>>, vector<32x10xf32>
    %cst_5 = arith.constant dense<0.000000e+00> : vector<2x10xf32>
    %5 = tpu.matmul %3, %4, %cst_5 {dimension_numbers = #tpu.dot_dimension_numbers<[1], [0], [0], [1], [0, 0, 1, 1], [], []>} : vector<2x32xf32>, vector<32x10xf32>, vector<2x10xf32> -> vector<2x10xf32>
    %c0_6 = arith.constant 0 : index
    %c0_7 = arith.constant 0 : index
    %6 = vector.load %arg3[%c0_6, %c0_7] : memref<1x10xf32, #tpu.memory_space<vmem>>, vector<1x10xf32>
    %7 = vector.broadcast %6 : vector<1x10xf32> to vector<2x10xf32>
    %8 = arith.addf %5, %7 : vector<2x10xf32>
    %c0_8 = arith.constant 0 : index
    %c0_9 = arith.constant 0 : index
    %9 = vector.load %arg4[%c0_8, %c0_9] : memref<2x10xf32, #tpu.memory_space<vmem>>, vector<2x10xf32>
    tpu.vector_store %arg4[%c0_8, %c0_9], %8 {strides = array<i32>} : memref<2x10xf32, #tpu.memory_space<vmem>>, vector<2x10xf32>,
    return
  }
  func.func @transform_0(%arg0: i32) -> (i32, i32, i32) {
    %c0_i32 = arith.constant 0 : i32
    %c0_i32_0 = arith.constant 0 : i32
    %c0_i32_1 = arith.constant 0 : i32
    %c0_i32_2 = arith.constant 0 : i32
    return %c0_i32, %c0_i32_0, %c0_i32_1 : i32, i32, i32
  }
  func.func @transform_1(%arg0: i32) -> (i32, i32) {
    %c0_i32 = arith.constant 0 : i32
    %c0_i32_0 = arith.constant 0 : i32
    %c0_i32_1 = arith.constant 0 : i32
    return %c0_i32, %c0_i32_0 : i32, i32
  }
  func.func @transform_2(%arg0: i32) -> (i32, i32) {
    %c0_i32 = arith.constant 0 : i32
    %c0_i32_0 = arith.constant 0 : i32
    %c0_i32_1 = arith.constant 0 : i32
    return %c0_i32, %c0_i32_0 : i32, i32
  }
  func.func @transform_3(%arg0: i32) -> (i32, i32) {
    %c0_i32 = arith.constant 0 : i32
    %c0_i32_0 = arith.constant 0 : i32
    %c0_i32_1 = arith.constant 0 : i32
    return %c0_i32, %c0_i32_0 : i32, i32
  }
}

</mosaic_0001>

<llo_original>
// kernel: _lambda_.45
$region0: #{_lambda_.45}
  #allocation0 [shape = 'u32[]', space=smem, size = 0x4, offset = 0x4, fixed_abs, tag = 'smem constant byte address 0x4 - core index']
  #allocation1 [shape = 'u32[144,128]{1,0:T(1,128)}', space=vmem, size = 0x12000, scoped, tag = 'internal scratch']
  %s0 = inlined_call_operand.vmem [shape: bf16[24,512], index: 0, kind: input, shape index: {}]
  %s1 = inlined_call_operand.vmem [shape: bf16[8,24], index: 1, kind: input, shape index: {}]
  %s2 = inlined_call_operand.vmem [shape: f32[8,512], index: 2, kind: output, shape index: {}]
  %s3 = sld [smem:[#allocation0]]
  $region79: #{_lambda_.45} parent=0
    _
  %s5 = ssub.s32 1, %s3
  %s6 = scalar_select 0, %s5, %s3
  $region1: #{_lambda_.45} parent=0
    #allocation2 [shape = 'u8[24576]{0}', space=vmem, size = 0x6000, scoped, tag = 'input window, operand 0']
    loop: start=0, step=1, limit=4
    $region2: #{_lambda_.45} parent=1 // loop_pre_header
      _
    $region3: #{_lambda_.45} parent=1 // loop_header
      %s8 = sphi 0, %s12
      %p9 = scmp.ge.s32.totalorder %s8, 4
      %s18 = sphi 0, %s20
      %s21 = sphi 0, %s18
      %s22 = sphi 0, %s21
      %s38 = sphi 0, %s22
      %s42 = sphi 0, %s42
      %s44 = sphi 0, %s42
      %s45 = sphi 0, %s44
      %s59 = sphi 0, %s45
      %s65 = sphi 0, %s67
      %s68 = sphi 0, %s65
      %s69 = sphi 0, %s68
      %s85 = sphi 0, %s69
    $region4: #{_lambda_.45} parent=1 // loop_header_branch
      %11 = sbr.rel (%p9) target = $region8
    $region5: #{_lambda_.45} parent=1 // loop_body
      %s13 = ssub.s32 %s8, 1
      %s14 = ssub.s32 %s8, 2
      %s15 = sadd.s32 %s8, 1
      %s16 = ssub.s32 %s8, %s15
      %p17 = scmp.eq.s32.totalorder %s16, 0
      %s19 = sadd.s32 %s18, 1
      %s20 = scalar_select %p17, %s18, %s19
      %p23 = pneg %p17
      %p24 = scmp.eq.s32.totalorder %s8, 1
      %p25 = por %p23, %p24
      %p26 = scmp.ne.s32.totalorder %s18, %s21
      %p27 = scmp.eq.s32.totalorder %s8, 0
      %p28 = por %p26, %p27
      %p29 = scmp.ne.s32.totalorder %s18, %s21
      %p30 = scmp.eq.s32.totalorder %s13, 1
      %p31 = por %p29, %p30
      %p32 = scmp.ne.s32.totalorder %s21, %s22
      %p33 = scmp.eq.s32.totalorder %s13, 0
      %p34 = por %p32, %p33
      %p35 = scmp.ne.s32.totalorder %s21, %s22
      %p36 = scmp.eq.s32.totalorder %s14, 1
      %p37 = por %p35, %p36
      %p39 = scmp.ne.s32.totalorder %s22, %s38
      %p40 = scmp.eq.s32.totalorder %s14, 0
      %p41 = por %p39, %p40
      %s43 = sadd.s32 %s42, 1
      %p46 = scmp.eq.s32.totalorder %s8, 1
      %p47 = scmp.ne.s32.totalorder %s42, %s44
      %p48 = scmp.eq.s32.totalorder %s8, 0
      %p49 = por %p47, %p48
      %p50 = scmp.ne.s32.totalorder %s42, %s44
      %p51 = scmp.eq.s32.totalorder %s13, 1
      %p52 = por %p50, %p51
      %p53 = scmp.ne.s32.totalorder %s44, %s45
      %p54 = scmp.eq.s32.totalorder %s13, 0
      %p55 = por %p53, %p54
      %p56 = scmp.ne.s32.totalorder %s44, %s45
      %p57 = scmp.eq.s32.totalorder %s14, 1
      %p58 = por %p56, %p57
      %p60 = scmp.ne.s32.totalorder %s45, %s59
      %p61 = scmp.eq.s32.totalorder %s14, 0
      %p62 = por %p60, %p61
      %s63 = ssub.s32 %s8, %s15
      %p64 = scmp.eq.s32.totalorder %s63, 0
      %s66 = sadd.s32 %s65, 1
      %s67 = scalar_select %p64, %s65, %s66
      %p70 = pneg %p64
      %p71 = scmp.eq.s32.totalorder %s8, 1
      %p72 = por %p70, %p71
      %p73 = scmp.ne.s32.totalorder %s65, %s68
      %p74 = scmp.eq.s32.totalorder %s8, 0
      %p75 = por %p73, %p74
      %p76 = scmp.ne.s32.totalorder %s65, %s68
      %p77 = scmp.eq.s32.totalorder %s13, 1
      %p78 = por %p76, %p77
      %p79 = scmp.ne.s32.totalorder %s68, %s69
      %p80 = scmp.eq.s32.totalorder %s13, 0
      %p81 = por %p79, %p80
      %p82 = scmp.ne.s32.totalorder %s68, %s69
      %p83 = scmp.eq.s32.totalorder %s14, 1
      %p84 = por %p82, %p83
      %p86 = scmp.ne.s32.totalorder %s69, %s85
      %p87 = scmp.eq.s32.totalorder %s14, 0
      %p88 = por %p86, %p87
      %p89 = scmp.le.s32.totalorder 1, %s8
      %p90 = scmp.lt.s32.totalorder %s8, 3
      %p91 = pnand %p89, %p90
      %p92 = pneg %p91
      // Predicated region
      $region9: #{_lambda_.45} parent=5 // pred_check
        _
      $region10: #{_lambda_.45} parent=5 // pred_check_branch
        %94 = sbr.rel (%p91) target = $region12
      $region11: #{_lambda_.45} parent=5 // pred_region
        %s95 = ssub.s32 %s8, 1
        // Predicated region
        $region13: #{_lambda_.45} parent=11 // pred_check
          %p96 = pneg %p55
        $region14: #{_lambda_.45} parent=11 // pred_check_branch
          %98 = sbr.rel (%p96) target = $region16
        $region15: #{_lambda_.45} parent=11 // pred_region
          _
        $region16: #{_lambda_.45} parent=11 // pred_fallthru
          _
      $region12: #{_lambda_.45} parent=5 // pred_fallthru
        _
      %p99 = scmp.lt.s32.totalorder %s8, 2
      // Predicated region
      $region17: #{_lambda_.45} parent=5 // pred_check
        %p100 = pneg %p99
      $region18: #{_lambda_.45} parent=5 // pred_check_branch
        %102 = sbr.rel (%p100) target = $region20
      $region19: #{_lambda_.45} parent=5 // pred_region
        // Predicated region
        $region21: #{_lambda_.45} parent=19 // pred_check
          %p103 = pneg %p28
        $region22: #{_lambda_.45} parent=19 // pred_check_branch
          %105 = sbr.rel (%p103) target = $region24
        $region23: #{_lambda_.45} parent=19 // pred_region
          %s106 = sand.u32 %s18, 1
          %s107 = sand.u32 %s18, 1
          %s108 = smul.addr %s107, 24
          %s109 = scalar_lea.vmem [#allocation2], %s108
          %s110 = smul.u32 2, %s8
          %s111 = smul.addr %s110, 4
          %s112 = scalar_lea.vmem %s0, %s111
          // Predicated region
          $region25: #{_lambda_.45} parent=23 // pred_check
            _
          $region26: #{_lambda_.45} parent=23 // pred_check_branch
            %114 = sbr.rel (0) target = $region28
          $region27: #{_lambda_.45} parent=23 // pred_region
            // Predicated region
            $region29: #{_lambda_.45} parent=27 // pred_check
              _
            $region30: #{_lambda_.45} parent=27 // pred_check_branch
              %116 = sbr.rel (0) target = $region32
            $region31: #{_lambda_.45} parent=27 // pred_region
              // Predicated region
              $region44: #{_lambda_.45} parent=31 // pred_check
                _
              $region45: #{_lambda_.45} parent=31 // pred_check_branch
                %136 = sbr.rel (0) target = $region47
              $region46: #{_lambda_.45} parent=31 // pred_region
                loop: start=0, step=1, limit=1
                $region48: #{_lambda_.45} parent=46 // loop_pre_header
                  _
                $region49: #{_lambda_.45} parent=46 // loop_header
                  %s138 = sphi 0, %s142
                  %p139 = scmp.ge.s32.totalorder %s138, 1
                  %s143 = sphi %s112, %s112
                  %s144 = sphi %s109, %s109
                $region50: #{_lambda_.45} parent=46 // loop_header_branch
                  %141 = sbr.rel (%p139) target = $region54
                $region51: #{_lambda_.45} parent=46 // loop_body
                  %v145 = vld [vmem:[%s143] sm:$0xff]
                  %146 = vst [vmem:[%s144] sm:$0xff] %v145
                  %v147 = vld [vmem:[%s143 + $0x10] sm:$0xff]
                  %148 = vst [vmem:[%s144 + $0x8] sm:$0xff] %v147
                  %v149 = vld [vmem:[%s143 + $0x20] sm:$0xff]
                  %150 = vst [vmem:[%s144 + $0x10] sm:$0xff] %v149
                $region52: #{_lambda_.45} parent=46 // loop_footer
                  %s142 = sadd.s32 1, %s138
                $region53: #{_lambda_.45} parent=46 // loop_footer_branch
                  %137 = sbr.rel target = $region49
                $region54: #{_lambda_.45} parent=46 // loop_exit
                  _
              $region47: #{_lambda_.45} parent=31 // pred_fallthru
                _
              // Predicated region
              $region55: #{_lambda_.45} parent=31 // pred_check
                _
              $region56: #{_lambda_.45} parent=31 // pred_check_branch
                %152 = sbr.rel target = $region58
              $region57: #{_lambda_.45} parent=31 // pred_region
                _
              $region58: #{_lambda_.45} parent=31 // pred_fallthru
                _
            $region32: #{_lambda_.45} parent=27 // pred_fallthru
              _
            // Predicated region
            $region33: #{_lambda_.45} parent=27 // pred_check
              _
            $region34: #{_lambda_.45} parent=27 // pred_check_branch
              %118 = sbr.rel target = $region36
            $region35: #{_lambda_.45} parent=27 // pred_region
              %s120 = ssub.s32 256, 1
              loop: start=0, step=1, limit=1
              $region37: #{_lambda_.45} parent=35 // loop_pre_header
                _
              $region38: #{_lambda_.45} parent=35 // loop_header
                %s122 = sphi 0, %s126
                %p123 = scmp.ge.s32.totalorder %s122, 1
                %s127 = sphi %s112, %s112
                %s128 = sphi %s109, %s109
              $region39: #{_lambda_.45} parent=35 // loop_header_branch
                %125 = sbr.rel (%p123) target = $region43
              $region40: #{_lambda_.45} parent=35 // loop_body
                %v129 = vld [vmem:[%s127] sm:%s120]
                %130 = vst [vmem:[%s128] sm:%s120] %v129
                %v131 = vld [vmem:[%s127 + $0x10] sm:%s120]
                %132 = vst [vmem:[%s128 + $0x8] sm:%s120] %v131
                %v133 = vld [vmem:[%s127 + $0x20] sm:%s120]
                %134 = vst [vmem:[%s128 + $0x10] sm:%s120] %v133
              $region41: #{_lambda_.45} parent=35 // loop_footer
                %s126 = sadd.s32 1, %s122
              $region42: #{_lambda_.45} parent=35 // loop_footer_branch
                %121 = sbr.rel target = $region38
              $region43: #{_lambda_.45} parent=35 // loop_exit
                _
            $region36: #{_lambda_.45} parent=27 // pred_fallthru
              _
          $region28: #{_lambda_.45} parent=23 // pred_fallthru
            _
          %153 = vnop
        $region24: #{_lambda_.45} parent=19 // pred_fallthru
          _
      $region20: #{_lambda_.45} parent=5 // pred_fallthru
        _
      %p154 = scmp.le.s32.totalorder 1, %s8
      %p155 = scmp.lt.s32.totalorder %s8, 3
      %p156 = pnand %p154, %p155
      %p157 = pneg %p156
      // Predicated region
      $region59: #{_lambda_.45} parent=5 // pred_check
        _
      $region60: #{_lambda_.45} parent=5 // pred_check_branch
        %159 = sbr.rel (%p156) target = $region62
      $region61: #{_lambda_.45} parent=5 // pred_region
        %s160 = ssub.s32 %s8, 1
        %s161 = sand.u32 %s21, 1
        %s162 = sand.u32 %s21, 1
        %s163 = smul.addr %s162, 24
        %s164 = scalar_lea.vmem [#allocation2], %s163
        // Predicated region
        $region63: #{_lambda_.45} parent=61 // pred_check
          %p165 = pneg %p34
        $region64: #{_lambda_.45} parent=61 // pred_check_branch
          %167 = sbr.rel (%p165) target = $region66
        $region65: #{_lambda_.45} parent=61 // pred_region
          _
        $region66: #{_lambda_.45} parent=61 // pred_fallthru
          _
        %s168 = sand.u32 %s21, 1
        %s169 = sand.u32 %s21, 1
        %s170 = smul.addr %s169, 24
        %s171 = scalar_lea.vmem [#allocation2], %s170
        %p172 = pneg %p34
        %p173 = pneg %p31
        %p174 = pneg %p55
        %p175 = pneg %p52
        %p176 = pneg %p81
        %p177 = pneg %p78
        %s178 = smul.u32 2, %s13
        %p179 = scmp.lt.s32.totalorder %s178, 3
        %s180 = scalar_select %p179, %s178, 3
        %s181 = smul.addr %s180, 8
        %s182 = scalar_lea.vmem %s2, %s181
        %s183 = smul.u32 2, %s13
        %s184 = smul.u32 2, %s13
        %p185 = scmp.lt.s32.totalorder %s184, 3
        %s186 = scalar_select %p185, %s184, 3
        %s187 = smul.addr %s186, 8
        %s188 = scalar_lea.vmem %s2, %s187
        %s189 = smul.u32 2, %s13
        %v191 = vld [vmem:[%s1] sm:$0xf]
        %v192 = vld [vmem:[%s164] sm:$0xff]
        %v193 = vld [vmem:[%s164 + $0x8] sm:$0xff]
        %v194 = vld [vmem:[%s164 + $0x10] sm:$0xff]
        %v195 = vmax.bf16 %v192, 0
        %v196 = vmax.bf16 %v193, 0
        %v197 = vmax.bf16 %v194, 0
        %v201 = vunpack.c.l.b16 %v195
        %v202 = vunpack.c.h.b16 %v195
        %v203 = vunpack.c.l.b16 %v196
        %v204 = vunpack.c.h.b16 %v196
        %v205 = vunpack.c.l.b16 %v197
        %v206 = vunpack.c.h.b16 %v197
        %v207 = vpack.c.b16 %v203, %v201
        %v208 = vpack.c.b16 %v204, %v202
        %v209 = vpack.c.b16 %v205, %v205
        %v210 = vpack.c.b16 %v206, %v206
        %vm213 = vcmask 195584
        %v215 = vsel %vm213, %v191, 0
        %vm217 = vcmask 1043456
        %v219 = vsel %vm217, %v209, 0
        %v222 = vsel %vm217, %v210, 0
        %224 = vmatprep.subr.bf16.mxu0 0
        %225 = vmatpush1.bf16.msra.mxu0 0
        %226 = vmatprep.subr.bf16.mxu0 0
        %227 = vmatpush1.bf16.msra.mxu0 0
        %228 = vmatprep.subr.bf16.mxu0 0
        %229 = vmatpush1.bf16.msra.mxu0 0
        %230 = vmatprep.subr.bf16.mxu0 0
        %231 = vmatpush1.bf16.msra.mxu0 0
        %232 = vmatprep.subr.bf16.mxu0 0
        %233 = vmatpush1.bf16.msra.mxu0 0
        %234 = vmatprep.subr.bf16.mxu0 0
        %235 = vmatpush1.bf16.msra.mxu0 0
        %236 = vmatprep.subr.bf16.mxu0 %v222
        %237 = vmatpush1.bf16.msra.mxu0 %v219
        %238 = vmatprep.subr.bf16.mxu0 %v208
        %239 = vmatpush1.bf16.msra.mxu0 %v207
        %240 = vmatprep.subr.bf16.mxu0 0
        %241 = vmatpush2.bf16.msra.mxu0 0
        %242 = vmatprep.subr.bf16.mxu0 0
        %243 = vmatpush2.bf16.msra.mxu0 0
        %244 = vmatprep.subr.bf16.mxu0 0
        %245 = vmatpush2.bf16.msra.mxu0 0
        %246 = vmatprep.subr.bf16.mxu0 0
        %247 = vmatpush2.bf16.msra.mxu0 0
        %248 = vmatprep.subr.bf16.mxu0 0
        %249 = vmatpush2.bf16.msra.mxu0 0
        %250 = vmatprep.subr.bf16.mxu0 0
        %251 = vmatpush2.bf16.msra.mxu0 0
        %252 = vmatprep.subr.bf16.mxu0 0
        %253 = vmatpush2.bf16.msra.mxu0 0
        %254 = vmatprep.subr.bf16.mxu0 0
        %255 = vmatpush2.bf16.msra.mxu0 0
        %256 = vmatprep.mubr.bf16.mxu0 0
        %257 = vmatmul.mubr.bf16.gmra.mxu0 %v215
        %v258 = vpop.f32.mrf.mxu0
        %v259 = vadd.f32 0.0, %v258
        %v260 = vpop.f32.mrf.mxu0
        %v261 = vadd.f32 0.0, %v260
        %v262 = vpop.f32.mrf.mxu0
        %v263 = vpop.f32.mrf.mxu0
        %264 = vdwg.mxu0
        %265 = vst [vmem:[%s188] sm:$0xff] %v259
        %266 = vst [vmem:[%s188 + $0x8] sm:$0xff] %v261
        %s267 = smul.u32 2, %s13
        %p268 = scmp.lt.s32.totalorder %s267, 3
        %s269 = scalar_select %p268, %s267, 3
        %s270 = smul.addr %s269, 8
        %s271 = scalar_lea.vmem %s2, %s270
        // Predicated region
        $region67: #{_lambda_.45} parent=61 // pred_check
          %p272 = pneg %p78
        $region68: #{_lambda_.45} parent=61 // pred_check_branch
          %274 = sbr.rel (%p272) target = $region70
        $region69: #{_lambda_.45} parent=61 // pred_region
          %s275 = smul.u32 2, %s13
        $region70: #{_lambda_.45} parent=61 // pred_fallthru
          _
      $region62: #{_lambda_.45} parent=5 // pred_fallthru
        _
      %p276 = scmp.le.s32.totalorder 2, %s8
      // Predicated region
      $region71: #{_lambda_.45} parent=5 // pred_check
        %p277 = pneg %p276
      $region72: #{_lambda_.45} parent=5 // pred_check_branch
        %279 = sbr.rel (%p277) target = $region74
      $region73: #{_lambda_.45} parent=5 // pred_region
        %s280 = ssub.s32 %s8, 2
        // Predicated region
        $region75: #{_lambda_.45} parent=73 // pred_check
          %p281 = pneg %p84
        $region76: #{_lambda_.45} parent=73 // pred_check_branch
          %283 = sbr.rel (%p281) target = $region78
        $region77: #{_lambda_.45} parent=73 // pred_region
          %s284 = smul.u32 2, %s14
          %p285 = scmp.lt.s32.totalorder %s284, 3
          %s286 = scalar_select %p285, %s284, 3
          %s287 = smul.addr %s286, 8
          %s288 = scalar_lea.vmem %s2, %s287
        $region78: #{_lambda_.45} parent=73 // pred_fallthru
          _
      $region74: #{_lambda_.45} parent=5 // pred_fallthru
        _
    $region6: #{_lambda_.45} parent=1 // loop_footer
      %s12 = sadd.s32 1, %s8
    $region7: #{_lambda_.45} parent=1 // loop_footer_branch
      %7 = sbr.rel target = $region3
    $region8: #{_lambda_.45} parent=1 // loop_exit
      _

// kernel: _lambda_.44
$region0: #{_lambda_.44}
  #allocation0 [shape = 'u32[]', space=smem, size = 0x4, offset = 0x4, fixed_abs, tag = 'smem constant byte address 0x4 - core index']
  #allocation1 [shape = 'u32[144,128]{1,0:T(1,128)}', space=vmem, size = 0x12000, scoped, tag = 'internal scratch']
  %s0 = inlined_call_operand.vmem [shape: bf16[27,512], index: 0, kind: input, shape index: {}]
  %s1 = inlined_call_operand.vmem [shape: bf16[12,27], index: 1, kind: input, shape index: {}]
  %s2 = inlined_call_operand.vmem [shape: f32[12,512], index: 2, kind: output, shape index: {}]
  %s3 = sld [smem:[#allocation0]]
  $region98: #{_lambda_.44} parent=0
    _
  %s5 = ssub.s32 1, %s3
  %s6 = scalar_select 0, %s5, %s3
  $region1: #{_lambda_.44} parent=0
    #allocation2 [shape = 'u8[32768]{0}', space=vmem, size = 0x8000, scoped, tag = 'input window, operand 0']
    #allocation3 [shape = 'u8[32768]{0}', space=vmem, size = 0x8000, scoped, tag = 'output window, operand 0']
    loop: start=0, step=1, limit=4
    $region2: #{_lambda_.44} parent=1 // loop_pre_header
      _
    $region3: #{_lambda_.44} parent=1 // loop_header
      %s8 = sphi 0, %s12
      %p9 = scmp.ge.s32.totalorder %s8, 4
      %s18 = sphi 0, %s20
      %s21 = sphi 0, %s18
      %s22 = sphi 0, %s21
      %s38 = sphi 0, %s22
      %s42 = sphi 0, %s42
      %s44 = sphi 0, %s42
      %s45 = sphi 0, %s44
      %s59 = sphi 0, %s45
      %s65 = sphi 0, %s67
      %s68 = sphi 0, %s65
      %s69 = sphi 0, %s68
      %s85 = sphi 0, %s69
    $region4: #{_lambda_.44} parent=1 // loop_header_branch
      %11 = sbr.rel (%p9) target = $region8
    $region5: #{_lambda_.44} parent=1 // loop_body
      %s13 = ssub.s32 %s8, 1
      %s14 = ssub.s32 %s8, 2
      %s15 = sadd.s32 %s8, 1
      %s16 = ssub.s32 %s8, %s15
      %p17 = scmp.eq.s32.totalorder %s16, 0
      %s19 = sadd.s32 %s18, 1
      %s20 = scalar_select %p17, %s18, %s19
      %p23 = pneg %p17
      %p24 = scmp.eq.s32.totalorder %s8, 1
      %p25 = por %p23, %p24
      %p26 = scmp.ne.s32.totalorder %s18, %s21
      %p27 = scmp.eq.s32.totalorder %s8, 0
      %p28 = por %p26, %p27
      %p29 = scmp.ne.s32.totalorder %s18, %s21
      %p30 = scmp.eq.s32.totalorder %s13, 1
      %p31 = por %p29, %p30
      %p32 = scmp.ne.s32.totalorder %s21, %s22
      %p33 = scmp.eq.s32.totalorder %s13, 0
      %p34 = por %p32, %p33
      %p35 = scmp.ne.s32.totalorder %s21, %s22
      %p36 = scmp.eq.s32.totalorder %s14, 1
      %p37 = por %p35, %p36
      %p39 = scmp.ne.s32.totalorder %s22, %s38
      %p40 = scmp.eq.s32.totalorder %s14, 0
      %p41 = por %p39, %p40
      %s43 = sadd.s32 %s42, 1
      %p46 = scmp.eq.s32.totalorder %s8, 1
      %p47 = scmp.ne.s32.totalorder %s42, %s44
      %p48 = scmp.eq.s32.totalorder %s8, 0
      %p49 = por %p47, %p48
      %p50 = scmp.ne.s32.totalorder %s42, %s44
      %p51 = scmp.eq.s32.totalorder %s13, 1
      %p52 = por %p50, %p51
      %p53 = scmp.ne.s32.totalorder %s44, %s45
      %p54 = scmp.eq.s32.totalorder %s13, 0
      %p55 = por %p53, %p54
      %p56 = scmp.ne.s32.totalorder %s44, %s45
      %p57 = scmp.eq.s32.totalorder %s14, 1
      %p58 = por %p56, %p57
      %p60 = scmp.ne.s32.totalorder %s45, %s59
      %p61 = scmp.eq.s32.totalorder %s14, 0
      %p62 = por %p60, %p61
      %s63 = ssub.s32 %s8, %s15
      %p64 = scmp.eq.s32.totalorder %s63, 0
      %s66 = sadd.s32 %s65, 1
      %s67 = scalar_select %p64, %s65, %s66
      %p70 = pneg %p64
      %p71 = scmp.eq.s32.totalorder %s8, 1
      %p72 = por %p70, %p71
      %p73 = scmp.ne.s32.totalorder %s65, %s68
      %p74 = scmp.eq.s32.totalorder %s8, 0
      %p75 = por %p73, %p74
      %p76 = scmp.ne.s32.totalorder %s65, %s68
      %p77 = scmp.eq.s32.totalorder %s13, 1
      %p78 = por %p76, %p77
      %p79 = scmp.ne.s32.totalorder %s68, %s69
      %p80 = scmp.eq.s32.totalorder %s13, 0
      %p81 = por %p79, %p80
      %p82 = scmp.ne.s32.totalorder %s68, %s69
      %p83 = scmp.eq.s32.totalorder %s14, 1
      %p84 = por %p82, %p83
      %p86 = scmp.ne.s32.totalorder %s69, %s85
      %p87 = scmp.eq.s32.totalorder %s14, 0
      %p88 = por %p86, %p87
      %p89 = scmp.le.s32.totalorder 1, %s8
      %p90 = scmp.lt.s32.totalorder %s8, 3
      %p91 = pnand %p89, %p90
      %p92 = pneg %p91
      // Predicated region
      $region9: #{_lambda_.44} parent=5 // pred_check
        _
      $region10: #{_lambda_.44} parent=5 // pred_check_branch
        %94 = sbr.rel (%p91) target = $region12
      $region11: #{_lambda_.44} parent=5 // pred_region
        %s95 = ssub.s32 %s8, 1
        // Predicated region
        $region13: #{_lambda_.44} parent=11 // pred_check
          %p96 = pneg %p55
        $region14: #{_lambda_.44} parent=11 // pred_check_branch
          %98 = sbr.rel (%p96) target = $region16
        $region15: #{_lambda_.44} parent=11 // pred_region
          _
        $region16: #{_lambda_.44} parent=11 // pred_fallthru
          _
      $region12: #{_lambda_.44} parent=5 // pred_fallthru
        _
      %p99 = scmp.lt.s32.totalorder %s8, 2
      // Predicated region
      $region17: #{_lambda_.44} parent=5 // pred_check
        %p100 = pneg %p99
      $region18: #{_lambda_.44} parent=5 // pred_check_branch
        %102 = sbr.rel (%p100) target = $region20
      $region19: #{_lambda_.44} parent=5 // pred_region
        // Predicated region
        $region21: #{_lambda_.44} parent=19 // pred_check
          %p103 = pneg %p28
        $region22: #{_lambda_.44} parent=19 // pred_check_branch
          %105 = sbr.rel (%p103) target = $region24
        $region23: #{_lambda_.44} parent=19 // pred_region
          %s106 = sand.u32 %s18, 1
          %s107 = sand.u32 %s18, 1
          %s108 = smul.addr %s107, 32
          %s109 = scalar_lea.vmem [#allocation2], %s108
          %s110 = smul.u32 2, %s8
          %s111 = smul.addr %s110, 4
          %s112 = scalar_lea.vmem %s0, %s111
          // Predicated region
          $region25: #{_lambda_.44} parent=23 // pred_check
            _
          $region26: #{_lambda_.44} parent=23 // pred_check_branch
            %114 = sbr.rel (0) target = $region28
          $region27: #{_lambda_.44} parent=23 // pred_region
            // Predicated region
            $region29: #{_lambda_.44} parent=27 // pred_check
              _
            $region30: #{_lambda_.44} parent=27 // pred_check_branch
              %116 = sbr.rel (0) target = $region32
            $region31: #{_lambda_.44} parent=27 // pred_region
              // Predicated region
              $region44: #{_lambda_.44} parent=31 // pred_check
                _
              $region45: #{_lambda_.44} parent=31 // pred_check_branch
                %138 = sbr.rel (0) target = $region47
              $region46: #{_lambda_.44} parent=31 // pred_region
                loop: start=0, step=1, limit=1
                $region48: #{_lambda_.44} parent=46 // loop_pre_header
                  _
                $region49: #{_lambda_.44} parent=46 // loop_header
                  %s140 = sphi 0, %s144
                  %p141 = scmp.ge.s32.totalorder %s140, 1
                  %s145 = sphi %s112, %s112
                  %s146 = sphi %s109, %s109
                $region50: #{_lambda_.44} parent=46 // loop_header_branch
                  %143 = sbr.rel (%p141) target = $region54
                $region51: #{_lambda_.44} parent=46 // loop_body
                  %v147 = vld [vmem:[%s145] sm:$0xff]
                  %148 = vst [vmem:[%s146] sm:$0xff] %v147
                  %v149 = vld [vmem:[%s145 + $0x10] sm:$0xff]
                  %150 = vst [vmem:[%s146 + $0x8] sm:$0xff] %v149
                  %v151 = vld [vmem:[%s145 + $0x20] sm:$0xff]
                  %152 = vst [vmem:[%s146 + $0x10] sm:$0xff] %v151
                  %v153 = vld [vmem:[%s145 + $0x30] sm:$0xff]
                  %154 = vst [vmem:[%s146 + $0x18] sm:$0xff] %v153
                $region52: #{_lambda_.44} parent=46 // loop_footer
                  %s144 = sadd.s32 1, %s140
                $region53: #{_lambda_.44} parent=46 // loop_footer_branch
                  %139 = sbr.rel target = $region49
                $region54: #{_lambda_.44} parent=46 // loop_exit
                  _
              $region47: #{_lambda_.44} parent=31 // pred_fallthru
                _
              // Predicated region
              $region55: #{_lambda_.44} parent=31 // pred_check
                _
              $region56: #{_lambda_.44} parent=31 // pred_check_branch
                %156 = sbr.rel target = $region58
              $region57: #{_lambda_.44} parent=31 // pred_region
                _
              $region58: #{_lambda_.44} parent=31 // pred_fallthru
                _
            $region32: #{_lambda_.44} parent=27 // pred_fallthru
              _
            // Predicated region
            $region33: #{_lambda_.44} parent=27 // pred_check
              _
            $region34: #{_lambda_.44} parent=27 // pred_check_branch
              %118 = sbr.rel target = $region36
            $region35: #{_lambda_.44} parent=27 // pred_region
              %s120 = ssub.s32 256, 1
              loop: start=0, step=1, limit=1
              $region37: #{_lambda_.44} parent=35 // loop_pre_header
                _
              $region38: #{_lambda_.44} parent=35 // loop_header
                %s122 = sphi 0, %s126
                %p123 = scmp.ge.s32.totalorder %s122, 1
                %s127 = sphi %s112, %s112
                %s128 = sphi %s109, %s109
              $region39: #{_lambda_.44} parent=35 // loop_header_branch
                %125 = sbr.rel (%p123) target = $region43
              $region40: #{_lambda_.44} parent=35 // loop_body
                %v129 = vld [vmem:[%s127] sm:%s120]
                %130 = vst [vmem:[%s128] sm:%s120] %v129
                %v131 = vld [vmem:[%s127 + $0x10] sm:%s120]
                %132 = vst [vmem:[%s128 + $0x8] sm:%s120] %v131
                %v133 = vld [vmem:[%s127 + $0x20] sm:%s120]
                %134 = vst [vmem:[%s128 + $0x10] sm:%s120] %v133
                %v135 = vld [vmem:[%s127 + $0x30] sm:%s120]
                %136 = vst [vmem:[%s128 + $0x18] sm:%s120] %v135
              $region41: #{_lambda_.44} parent=35 // loop_footer
                %s126 = sadd.s32 1, %s122
              $region42: #{_lambda_.44} parent=35 // loop_footer_branch
                %121 = sbr.rel target = $region38
              $region43: #{_lambda_.44} parent=35 // loop_exit
                _
            $region36: #{_lambda_.44} parent=27 // pred_fallthru
              _
          $region28: #{_lambda_.44} parent=23 // pred_fallthru
            _
          %157 = vnop
        $region24: #{_lambda_.44} parent=19 // pred_fallthru
          _
      $region20: #{_lambda_.44} parent=5 // pred_fallthru
        _
      %p158 = scmp.le.s32.totalorder 1, %s8
      %p159 = scmp.lt.s32.totalorder %s8, 3
      %p160 = pnand %p158, %p159
      %p161 = pneg %p160
      // Predicated region
      $region59: #{_lambda_.44} parent=5 // pred_check
        _
      $region60: #{_lambda_.44} parent=5 // pred_check_branch
        %163 = sbr.rel (%p160) target = $region62
      $region61: #{_lambda_.44} parent=5 // pred_region
        %s164 = ssub.s32 %s8, 1
        %s165 = sand.u32 %s21, 1
        %s166 = sand.u32 %s21, 1
        %s167 = smul.addr %s166, 32
        %s168 = scalar_lea.vmem [#allocation2], %s167
        // Predicated region
        $region63: #{_lambda_.44} parent=61 // pred_check
          %p169 = pneg %p34
        $region64: #{_lambda_.44} parent=61 // pred_check_branch
          %171 = sbr.rel (%p169) target = $region66
        $region65: #{_lambda_.44} parent=61 // pred_region
          _
        $region66: #{_lambda_.44} parent=61 // pred_fallthru
          _
        %s172 = sand.u32 %s21, 1
        %s173 = sand.u32 %s21, 1
        %s174 = smul.addr %s173, 32
        %s175 = scalar_lea.vmem [#allocation2], %s174
        %p176 = pneg %p34
        %p177 = pneg %p31
        %p178 = pneg %p55
        %p179 = pneg %p52
        %p180 = pneg %p81
        %p181 = pneg %p78
        %s182 = sand.u32 %s68, 1
        %s183 = sand.u32 %s68, 1
        %s184 = smul.addr %s183, 32
        %s185 = scalar_lea.vmem [#allocation3], %s184
        %s186 = smul.u32 2, %s13
        %s187 = smul.u32 2, %s13
        %v189 = vld [vmem:[%s1] sm:$0xf]
        %v190 = vld [vmem:[%s1 + $0x4] sm:$0x3]
        %v191 = vld [vmem:[%s168] sm:$0xff]
        %v192 = vld [vmem:[%s168 + $0x8] sm:$0xff]
        %v193 = vld [vmem:[%s168 + $0x10] sm:$0xff]
        %v194 = vld [vmem:[%s168 + $0x18] sm:$0x33]
        %v197 = vunpack.c.l.b16 %v189
        %v198 = vunpack.c.l.b16 %v190
        %v199 = vpack.c.b16 %v198, %v197
        %v204 = vunpack.c.l.b16 %v191
        %v205 = vunpack.c.h.b16 %v191
        %v206 = vunpack.c.l.b16 %v192
        %v207 = vunpack.c.h.b16 %v192
        %v208 = vunpack.c.l.b16 %v193
        %v209 = vunpack.c.h.b16 %v193
        %v210 = vunpack.c.l.b16 %v194
        %v211 = vunpack.c.h.b16 %v194
        %v212 = vpack.c.b16 %v206, %v204
        %v213 = vpack.c.b16 %v207, %v205
        %v214 = vpack.c.b16 %v210, %v208
        %v215 = vpack.c.b16 %v211, %v209
        %vm218 = vcmask 220160
        %v220 = vsel %vm218, %v199, 0
        %vm222 = vcmask 1044480
        %vm223 = vcmask 1045504
        %v224 = vsel %vm222, 4294967295, 65535
        %v225 = vsel %vm223, %v224, 0
        %v227 = vand.u32 %v214, %v225
        %v230 = vand.u32 %v215, %v225
        %232 = vmatprep.subr.bf16.mxu0 0
        %233 = vmatpush1.bf16.msra.mxu0 0
        %234 = vmatprep.subr.bf16.mxu0 0
        %235 = vmatpush1.bf16.msra.mxu0 0
        %236 = vmatprep.subr.bf16.mxu0 0
        %237 = vmatpush1.bf16.msra.mxu0 0
        %238 = vmatprep.subr.bf16.mxu0 0
        %239 = vmatpush1.bf16.msra.mxu0 0
        %240 = vmatprep.subr.bf16.mxu0 0
        %241 = vmatpush1.bf16.msra.mxu0 0
        %242 = vmatprep.subr.bf16.mxu0 0
        %243 = vmatpush1.bf16.msra.mxu0 0
        %244 = vmatprep.subr.bf16.mxu0 %v230
        %245 = vmatpush1.bf16.msra.mxu0 %v227
        %246 = vmatprep.subr.bf16.mxu0 %v213
        %247 = vmatpush1.bf16.msra.mxu0 %v212
        %248 = vmatprep.subr.bf16.mxu0 0
        %249 = vmatpush2.bf16.msra.mxu0 0
        %250 = vmatprep.subr.bf16.mxu0 0
        %251 = vmatpush2.bf16.msra.mxu0 0
        %252 = vmatprep.subr.bf16.mxu0 0
        %253 = vmatpush2.bf16.msra.mxu0 0
        %254 = vmatprep.subr.bf16.mxu0 0
        %255 = vmatpush2.bf16.msra.mxu0 0
        %256 = vmatprep.subr.bf16.mxu0 0
        %257 = vmatpush2.bf16.msra.mxu0 0
        %258 = vmatprep.subr.bf16.mxu0 0
        %259 = vmatpush2.bf16.msra.mxu0 0
        %260 = vmatprep.subr.bf16.mxu0 0
        %261 = vmatpush2.bf16.msra.mxu0 0
        %262 = vmatprep.subr.bf16.mxu0 0
        %263 = vmatpush2.bf16.msra.mxu0 0
        %264 = vmatprep.mubr.bf16.mxu0 0
        %265 = vmatmul.mubr.bf16.gmra.mxu0 %v220
        %v266 = vpop.f32.mrf.mxu0
        %v267 = vadd.f32 0.0, %v266
        %v268 = vpop.f32.mrf.mxu0
        %v269 = vadd.f32 0.0, %v268
        %v270 = vpop.f32.mrf.mxu0
        %v271 = vadd.f32 0.0, %v270
        %v272 = vpop.f32.mrf.mxu0
        %v273 = vadd.f32 0.0, %v272
        %274 = vdwg.mxu0
        %275 = vst [vmem:[%s185] sm:$0xff] %v267
        %276 = vst [vmem:[%s185 + $0x8] sm:$0xff] %v269
        %277 = vst [vmem:[%s185 + $0x10] sm:$0xf] %v271
        %278 = vst [vmem:[%s185 + $0x18] sm:$0xf] %v273
        %s279 = sand.u32 %s68, 1
        %s280 = sand.u32 %s68, 1
        %s281 = smul.addr %s280, 32
        %s282 = scalar_lea.vmem [#allocation3], %s281
        // Predicated region
        $region67: #{_lambda_.44} parent=61 // pred_check
          %p283 = pneg %p78
        $region68: #{_lambda_.44} parent=61 // pred_check_branch
          %285 = sbr.rel (%p283) target = $region70
        $region69: #{_lambda_.44} parent=61 // pred_region
          %s286 = smul.u32 2, %s13
          %s287 = smul.addr %s286, 8
          %s288 = scalar_lea.vmem %s2, %s287
          // Predicated region
          $region71: #{_lambda_.44} parent=69 // pred_check
            _
          $region72: #{_lambda_.44} parent=69 // pred_check_branch
            %290 = sbr.rel (0) target = $region74
          $region73: #{_lambda_.44} parent=69 // pred_region
            // Predicated region
            $region75: #{_lambda_.44} parent=73 // pred_check
              _
            $region76: #{_lambda_.44} parent=73 // pred_check_branch
              %292 = sbr.rel (0) target = $region78
            $region77: #{_lambda_.44} parent=73 // pred_region
              loop: start=0, step=1, limit=1
              $region79: #{_lambda_.44} parent=77 // loop_pre_header
                _
              $region80: #{_lambda_.44} parent=77 // loop_header
                %s294 = sphi 0, %s298
                %p295 = scmp.ge.s32.totalorder %s294, 1
                %s299 = sphi %s282, %s282
                %s300 = sphi %s288, %s288
              $region81: #{_lambda_.44} parent=77 // loop_header_branch
                %297 = sbr.rel (%p295) target = $region85
              $region82: #{_lambda_.44} parent=77 // loop_body
                %v301 = vld [vmem:[%s299] sm:$0xff]
                %302 = vst [vmem:[%s300] sm:$0xff] %v301
                %v303 = vld [vmem:[%s299 + $0x8] sm:$0xff]
                %304 = vst [vmem:[%s300 + $0x8] sm:$0xff] %v303
                %v305 = vld [vmem:[%s299 + $0x10] sm:$0xff]
                %306 = vst [vmem:[%s300 + $0x20] sm:$0xff] %v305
                %v307 = vld [vmem:[%s299 + $0x18] sm:$0xff]
                %308 = vst [vmem:[%s300 + $0x28] sm:$0xff] %v307
              $region83: #{_lambda_.44} parent=77 // loop_footer
                %s298 = sadd.s32 1, %s294
              $region84: #{_lambda_.44} parent=77 // loop_footer_branch
                %293 = sbr.rel target = $region80
              $region85: #{_lambda_.44} parent=77 // loop_exit
                _
            $region78: #{_lambda_.44} parent=73 // pred_fallthru
              _
            // Predicated region
            $region86: #{_lambda_.44} parent=73 // pred_check
              _
            $region87: #{_lambda_.44} parent=73 // pred_check_branch
              %310 = sbr.rel target = $region89
            $region88: #{_lambda_.44} parent=73 // pred_region
              _
            $region89: #{_lambda_.44} parent=73 // pred_fallthru
              _
          $region74: #{_lambda_.44} parent=69 // pred_fallthru
            _
          %311 = vnop
        $region70: #{_lambda_.44} parent=61 // pred_fallthru
          _
      $region62: #{_lambda_.44} parent=5 // pred_fallthru
        _
      %p312 = scmp.le.s32.totalorder 2, %s8
      // Predicated region
      $region90: #{_lambda_.44} parent=5 // pred_check
        %p313 = pneg %p312
      $region91: #{_lambda_.44} parent=5 // pred_check_branch
        %315 = sbr.rel (%p313) target = $region93
      $region92: #{_lambda_.44} parent=5 // pred_region
        %s316 = ssub.s32 %s8, 2
        // Predicated region
        $region94: #{_lambda_.44} parent=92 // pred_check
          %p317 = pneg %p84
        $region95: #{_lambda_.44} parent=92 // pred_check_branch
          %319 = sbr.rel (%p317) target = $region97
        $region96: #{_lambda_.44} parent=92 // pred_region
          %s320 = sand.u32 %s69, 1
          %s321 = sand.u32 %s69, 1
          %s322 = smul.addr %s321, 32
          %s323 = scalar_lea.vmem [#allocation3], %s322
        $region97: #{_lambda_.44} parent=92 // pred_fallthru
          _
      $region93: #{_lambda_.44} parent=5 // pred_fallthru
        _
    $region6: #{_lambda_.44} parent=1 // loop_footer
      %s12 = sadd.s32 1, %s8
    $region7: #{_lambda_.44} parent=1 // loop_footer_branch
      %7 = sbr.rel target = $region3
    $region8: #{_lambda_.44} parent=1 // loop_exit
      _

// kernel: _lambda_.52
$region0: #{_lambda_.52}
  #allocation0 [shape = 'u32[]', space=smem, size = 0x4, offset = 0x4, fixed_abs, tag = 'smem constant byte address 0x4 - core index']
  #allocation1 [shape = 'u32[144,128]{1,0:T(1,128)}', space=vmem, size = 0x12000, scoped, tag = 'internal scratch']
  %s0 = inlined_call_operand.vmem [shape: bf16[200,512], index: 0, kind: input, shape index: {}]
  %s1 = inlined_call_operand.vmem [shape: bf16[16,200], index: 1, kind: input, shape index: {}]
  %s2 = inlined_call_operand.vmem [shape: f32[16,512], index: 2, kind: output, shape index: {}]
  %s3 = sld [smem:[#allocation0]]
  $region98: #{_lambda_.52} parent=0
    _
  %s5 = ssub.s32 1, %s3
  %s6 = scalar_select 0, %s5, %s3
  $region1: #{_lambda_.52} parent=0
    #allocation2 [shape = 'u8[204800]{0}', space=vmem, size = 0x32000, scoped, tag = 'input window, operand 0']
    #allocation3 [shape = 'u8[32768]{0}', space=vmem, size = 0x8000, scoped, tag = 'output window, operand 0']
    loop: start=0, step=1, limit=4
    $region2: #{_lambda_.52} parent=1 // loop_pre_header
      _
    $region3: #{_lambda_.52} parent=1 // loop_header
      %s8 = sphi 0, %s12
      %p9 = scmp.ge.s32.totalorder %s8, 4
      %s18 = sphi 0, %s20
      %s21 = sphi 0, %s18
      %s22 = sphi 0, %s21
      %s38 = sphi 0, %s22
      %s42 = sphi 0, %s42
      %s44 = sphi 0, %s42
      %s45 = sphi 0, %s44
      %s59 = sphi 0, %s45
      %s65 = sphi 0, %s67
      %s68 = sphi 0, %s65
      %s69 = sphi 0, %s68
      %s85 = sphi 0, %s69
    $region4: #{_lambda_.52} parent=1 // loop_header_branch
      %11 = sbr.rel (%p9) target = $region8
    $region5: #{_lambda_.52} parent=1 // loop_body
      %s13 = ssub.s32 %s8, 1
      %s14 = ssub.s32 %s8, 2
      %s15 = sadd.s32 %s8, 1
      %s16 = ssub.s32 %s8, %s15
      %p17 = scmp.eq.s32.totalorder %s16, 0
      %s19 = sadd.s32 %s18, 1
      %s20 = scalar_select %p17, %s18, %s19
      %p23 = pneg %p17
      %p24 = scmp.eq.s32.totalorder %s8, 1
      %p25 = por %p23, %p24
      %p26 = scmp.ne.s32.totalorder %s18, %s21
      %p27 = scmp.eq.s32.totalorder %s8, 0
      %p28 = por %p26, %p27
      %p29 = scmp.ne.s32.totalorder %s18, %s21
      %p30 = scmp.eq.s32.totalorder %s13, 1
      %p31 = por %p29, %p30
      %p32 = scmp.ne.s32.totalorder %s21, %s22
      %p33 = scmp.eq.s32.totalorder %s13, 0
      %p34 = por %p32, %p33
      %p35 = scmp.ne.s32.totalorder %s21, %s22
      %p36 = scmp.eq.s32.totalorder %s14, 1
      %p37 = por %p35, %p36
      %p39 = scmp.ne.s32.totalorder %s22, %s38
      %p40 = scmp.eq.s32.totalorder %s14, 0
      %p41 = por %p39, %p40
      %s43 = sadd.s32 %s42, 1
      %p46 = scmp.eq.s32.totalorder %s8, 1
      %p47 = scmp.ne.s32.totalorder %s42, %s44
      %p48 = scmp.eq.s32.totalorder %s8, 0
      %p49 = por %p47, %p48
      %p50 = scmp.ne.s32.totalorder %s42, %s44
      %p51 = scmp.eq.s32.totalorder %s13, 1
      %p52 = por %p50, %p51
      %p53 = scmp.ne.s32.totalorder %s44, %s45
      %p54 = scmp.eq.s32.totalorder %s13, 0
      %p55 = por %p53, %p54
      %p56 = scmp.ne.s32.totalorder %s44, %s45
      %p57 = scmp.eq.s32.totalorder %s14, 1
      %p58 = por %p56, %p57
      %p60 = scmp.ne.s32.totalorder %s45, %s59
      %p61 = scmp.eq.s32.totalorder %s14, 0
      %p62 = por %p60, %p61
      %s63 = ssub.s32 %s8, %s15
      %p64 = scmp.eq.s32.totalorder %s63, 0
      %s66 = sadd.s32 %s65, 1
      %s67 = scalar_select %p64, %s65, %s66
      %p70 = pneg %p64
      %p71 = scmp.eq.s32.totalorder %s8, 1
      %p72 = por %p70, %p71
      %p73 = scmp.ne.s32.totalorder %s65, %s68
      %p74 = scmp.eq.s32.totalorder %s8, 0
      %p75 = por %p73, %p74
      %p76 = scmp.ne.s32.totalorder %s65, %s68
      %p77 = scmp.eq.s32.totalorder %s13, 1
      %p78 = por %p76, %p77
      %p79 = scmp.ne.s32.totalorder %s68, %s69
      %p80 = scmp.eq.s32.totalorder %s13, 0
      %p81 = por %p79, %p80
      %p82 = scmp.ne.s32.totalorder %s68, %s69
      %p83 = scmp.eq.s32.totalorder %s14, 1
      %p84 = por %p82, %p83
      %p86 = scmp.ne.s32.totalorder %s69, %s85
      %p87 = scmp.eq.s32.totalorder %s14, 0
      %p88 = por %p86, %p87
      %p89 = scmp.le.s32.totalorder 1, %s8
      %p90 = scmp.lt.s32.totalorder %s8, 3
      %p91 = pnand %p89, %p90
      %p92 = pneg %p91
      // Predicated region
      $region9: #{_lambda_.52} parent=5 // pred_check
        _
      $region10: #{_lambda_.52} parent=5 // pred_check_branch
        %94 = sbr.rel (%p91) target = $region12
      $region11: #{_lambda_.52} parent=5 // pred_region
        %s95 = ssub.s32 %s8, 1
        // Predicated region
        $region13: #{_lambda_.52} parent=11 // pred_check
          %p96 = pneg %p55
        $region14: #{_lambda_.52} parent=11 // pred_check_branch
          %98 = sbr.rel (%p96) target = $region16
        $region15: #{_lambda_.52} parent=11 // pred_region
          _
        $region16: #{_lambda_.52} parent=11 // pred_fallthru
          _
      $region12: #{_lambda_.52} parent=5 // pred_fallthru
        _
      %p99 = scmp.lt.s32.totalorder %s8, 2
      // Predicated region
      $region17: #{_lambda_.52} parent=5 // pred_check
        %p100 = pneg %p99
      $region18: #{_lambda_.52} parent=5 // pred_check_branch
        %102 = sbr.rel (%p100) target = $region20
      $region19: #{_lambda_.52} parent=5 // pred_region
        // Predicated region
        $region21: #{_lambda_.52} parent=19 // pred_check
          %p103 = pneg %p28
        $region22: #{_lambda_.52} parent=19 // pred_check_branch
          %105 = sbr.rel (%p103) target = $region24
        $region23: #{_lambda_.52} parent=19 // pred_region
          %s106 = sand.u32 %s18, 1
          %s107 = sand.u32 %s18, 1
          %s108 = smul.addr %s107, 200
          %s109 = scalar_lea.vmem [#allocation2], %s108
          %s110 = smul.u32 2, %s8
          %s111 = smul.addr %s110, 4
          %s112 = scalar_lea.vmem %s0, %s111
          // Predicated region
          $region25: #{_lambda_.52} parent=23 // pred_check
            _
          $region26: #{_lambda_.52} parent=23 // pred_check_branch
            %114 = sbr.rel (0) target = $region28
          $region27: #{_lambda_.52} parent=23 // pred_region
            // Predicated region
            $region29: #{_lambda_.52} parent=27 // pred_check
              _
            $region30: #{_lambda_.52} parent=27 // pred_check_branch
              %116 = sbr.rel (0) target = $region32
            $region31: #{_lambda_.52} parent=27 // pred_region
              // Predicated region
              $region44: #{_lambda_.52} parent=31 // pred_check
                _
              $region45: #{_lambda_.52} parent=31 // pred_check_branch
                %180 = sbr.rel (0) target = $region47
              $region46: #{_lambda_.52} parent=31 // pred_region
                loop: start=0, step=1, limit=1
                $region48: #{_lambda_.52} parent=46 // loop_pre_header
                  _
                $region49: #{_lambda_.52} parent=46 // loop_header
                  %s182 = sphi 0, %s186
                  %p183 = scmp.ge.s32.totalorder %s182, 1
                  %s187 = sphi %s112, %s112
                  %s188 = sphi %s109, %s109
                $region50: #{_lambda_.52} parent=46 // loop_header_branch
                  %185 = sbr.rel (%p183) target = $region54
                $region51: #{_lambda_.52} parent=46 // loop_body
                  %v189 = vld [vmem:[%s187] sm:$0xff]
                  %190 = vst [vmem:[%s188] sm:$0xff] %v189
                  %v191 = vld [vmem:[%s187 + $0x10] sm:$0xff]
                  %192 = vst [vmem:[%s188 + $0x8] sm:$0xff] %v191
                  %v193 = vld [vmem:[%s187 + $0x20] sm:$0xff]
                  %194 = vst [vmem:[%s188 + $0x10] sm:$0xff] %v193
                  %v195 = vld [vmem:[%s187 + $0x30] sm:$0xff]
                  %196 = vst [vmem:[%s188 + $0x18] sm:$0xff] %v195
                  %v197 = vld [vmem:[%s187 + $0x40] sm:$0xff]
                  %198 = vst [vmem:[%s188 + $0x20] sm:$0xff] %v197
                  %v199 = vld [vmem:[%s187 + $0x50] sm:$0xff]
                  %200 = vst [vmem:[%s188 + $0x28] sm:$0xff] %v199
                  %v201 = vld [vmem:[%s187 + $0x60] sm:$0xff]
                  %202 = vst [vmem:[%s188 + $0x30] sm:$0xff] %v201
                  %v203 = vld [vmem:[%s187 + $0x70] sm:$0xff]
                  %204 = vst [vmem:[%s188 + $0x38] sm:$0xff] %v203
                  %v205 = vld [vmem:[%s187 + $0x80] sm:$0xff]
                  %206 = vst [vmem:[%s188 + $0x40] sm:$0xff] %v205
                  %v207 = vld [vmem:[%s187 + $0x90] sm:$0xff]
                  %208 = vst [vmem:[%s188 + $0x48] sm:$0xff] %v207
                  %v209 = vld [vmem:[%s187 + $0xa0] sm:$0xff]
                  %210 = vst [vmem:[%s188 + $0x50] sm:$0xff] %v209
                  %v211 = vld [vmem:[%s187 + $0xb0] sm:$0xff]
                  %212 = vst [vmem:[%s188 + $0x58] sm:$0xff] %v211
                  %v213 = vld [vmem:[%s187 + $0xc0] sm:$0xff]
                  %214 = vst [vmem:[%s188 + $0x60] sm:$0xff] %v213
                  %v215 = vld [vmem:[%s187 + $0xd0] sm:$0xff]
                  %216 = vst [vmem:[%s188 + $0x68] sm:$0xff] %v215
                  %v217 = vld [vmem:[%s187 + $0xe0] sm:$0xff]
                  %218 = vst [vmem:[%s188 + $0x70] sm:$0xff] %v217
                  %v219 = vld [vmem:[%s187 + $0xf0] sm:$0xff]
                  %220 = vst [vmem:[%s188 + $0x78] sm:$0xff] %v219
                  %v221 = vld [vmem:[%s187 + $0x100] sm:$0xff]
                  %222 = vst [vmem:[%s188 + $0x80] sm:$0xff] %v221
                  %v223 = vld [vmem:[%s187 + $0x110] sm:$0xff]
                  %224 = vst [vmem:[%s188 + $0x88] sm:$0xff] %v223
                  %v225 = vld [vmem:[%s187 + $0x120] sm:$0xff]
                  %226 = vst [vmem:[%s188 + $0x90] sm:$0xff] %v225
                  %v227 = vld [vmem:[%s187 + $0x130] sm:$0xff]
                  %228 = vst [vmem:[%s188 + $0x98] sm:$0xff] %v227
                  %v229 = vld [vmem:[%s187 + $0x140] sm:$0xff]
                  %230 = vst [vmem:[%s188 + $0xa0] sm:$0xff] %v229
                  %v231 = vld [vmem:[%s187 + $0x150] sm:$0xff]
                  %232 = vst [vmem:[%s188 + $0xa8] sm:$0xff] %v231
                  %v233 = vld [vmem:[%s187 + $0x160] sm:$0xff]
                  %234 = vst [vmem:[%s188 + $0xb0] sm:$0xff] %v233
                  %v235 = vld [vmem:[%s187 + $0x170] sm:$0xff]
                  %236 = vst [vmem:[%s188 + $0xb8] sm:$0xff] %v235
                  %v237 = vld [vmem:[%s187 + $0x180] sm:$0xff]
                  %238 = vst [vmem:[%s188 + $0xc0] sm:$0xff] %v237
                $region52: #{_lambda_.52} parent=46 // loop_footer
                  %s186 = sadd.s32 1, %s182
                $region53: #{_lambda_.52} parent=46 // loop_footer_branch
                  %181 = sbr.rel target = $region49
                $region54: #{_lambda_.52} parent=46 // loop_exit
                  _
              $region47: #{_lambda_.52} parent=31 // pred_fallthru
                _
              // Predicated region
              $region55: #{_lambda_.52} parent=31 // pred_check
                _
              $region56: #{_lambda_.52} parent=31 // pred_check_branch
                %240 = sbr.rel target = $region58
              $region57: #{_lambda_.52} parent=31 // pred_region
                _
              $region58: #{_lambda_.52} parent=31 // pred_fallthru
                _
            $region32: #{_lambda_.52} parent=27 // pred_fallthru
              _
            // Predicated region
            $region33: #{_lambda_.52} parent=27 // pred_check
              _
            $region34: #{_lambda_.52} parent=27 // pred_check_branch
              %118 = sbr.rel target = $region36
            $region35: #{_lambda_.52} parent=27 // pred_region
              %s120 = ssub.s32 256, 1
              loop: start=0, step=1, limit=1
              $region37: #{_lambda_.52} parent=35 // loop_pre_header
                _
              $region38: #{_lambda_.52} parent=35 // loop_header
                %s122 = sphi 0, %s126
                %p123 = scmp.ge.s32.totalorder %s122, 1
                %s127 = sphi %s112, %s112
                %s128 = sphi %s109, %s109
              $region39: #{_lambda_.52} parent=35 // loop_header_branch
                %125 = sbr.rel (%p123) target = $region43
              $region40: #{_lambda_.52} parent=35 // loop_body
                %v129 = vld [vmem:[%s127] sm:%s120]
                %130 = vst [vmem:[%s128] sm:%s120] %v129
                %v131 = vld [vmem:[%s127 + $0x10] sm:%s120]
                %132 = vst [vmem:[%s128 + $0x8] sm:%s120] %v131
                %v133 = vld [vmem:[%s127 + $0x20] sm:%s120]
                %134 = vst [vmem:[%s128 + $0x10] sm:%s120] %v133
                %v135 = vld [vmem:[%s127 + $0x30] sm:%s120]
                %136 = vst [vmem:[%s128 + $0x18] sm:%s120] %v135
                %v137 = vld [vmem:[%s127 + $0x40] sm:%s120]
                %138 = vst [vmem:[%s128 + $0x20] sm:%s120] %v137
                %v139 = vld [vmem:[%s127 + $0x50] sm:%s120]
                %140 = vst [vmem:[%s128 + $0x28] sm:%s120] %v139
                %v141 = vld [vmem:[%s127 + $0x60] sm:%s120]
                %142 = vst [vmem:[%s128 + $0x30] sm:%s120] %v141
                %v143 = vld [vmem:[%s127 + $0x70] sm:%s120]
                %144 = vst [vmem:[%s128 + $0x38] sm:%s120] %v143
                %v145 = vld [vmem:[%s127 + $0x80] sm:%s120]
                %146 = vst [vmem:[%s128 + $0x40] sm:%s120] %v145
                %v147 = vld [vmem:[%s127 + $0x90] sm:%s120]
                %148 = vst [vmem:[%s128 + $0x48] sm:%s120] %v147
                %v149 = vld [vmem:[%s127 + $0xa0] sm:%s120]
                %150 = vst [vmem:[%s128 + $0x50] sm:%s120] %v149
                %v151 = vld [vmem:[%s127 + $0xb0] sm:%s120]
                %152 = vst [vmem:[%s128 + $0x58] sm:%s120] %v151
                %v153 = vld [vmem:[%s127 + $0xc0] sm:%s120]
                %154 = vst [vmem:[%s128 + $0x60] sm:%s120] %v153
                %v155 = vld [vmem:[%s127 + $0xd0] sm:%s120]
                %156 = vst [vmem:[%s128 + $0x68] sm:%s120] %v155
                %v157 = vld [vmem:[%s127 + $0xe0] sm:%s120]
                %158 = vst [vmem:[%s128 + $0x70] sm:%s120] %v157
                %v159 = vld [vmem:[%s127 + $0xf0] sm:%s120]
                %160 = vst [vmem:[%s128 + $0x78] sm:%s120] %v159
                %v161 = vld [vmem:[%s127 + $0x100] sm:%s120]
                %162 = vst [vmem:[%s128 + $0x80] sm:%s120] %v161
                %v163 = vld [vmem:[%s127 + $0x110] sm:%s120]
                %164 = vst [vmem:[%s128 + $0x88] sm:%s120] %v163
                %v165 = vld [vmem:[%s127 + $0x120] sm:%s120]
                %166 = vst [vmem:[%s128 + $0x90] sm:%s120] %v165
                %v167 = vld [vmem:[%s127 + $0x130] sm:%s120]
                %168 = vst [vmem:[%s128 + $0x98] sm:%s120] %v167
                %v169 = vld [vmem:[%s127 + $0x140] sm:%s120]
                %170 = vst [vmem:[%s128 + $0xa0] sm:%s120] %v169
                %v171 = vld [vmem:[%s127 + $0x150] sm:%s120]
                %172 = vst [vmem:[%s128 + $0xa8] sm:%s120] %v171
                %v173 = vld [vmem:[%s127 + $0x160] sm:%s120]
                %174 = vst [vmem:[%s128 + $0xb0] sm:%s120] %v173
                %v175 = vld [vmem:[%s127 + $0x170] sm:%s120]
                %176 = vst [vmem:[%s128 + $0xb8] sm:%s120] %v175
                %v177 = vld [vmem:[%s127 + $0x180] sm:%s120]
                %178 = vst [vmem:[%s128 + $0xc0] sm:%s120] %v177
              $region41: #{_lambda_.52} parent=35 // loop_footer
                %s126 = sadd.s32 1, %s122
              $region42: #{_lambda_.52} parent=35 // loop_footer_branch
                %121 = sbr.rel target = $region38
              $region43: #{_lambda_.52} parent=35 // loop_exit
                _
            $region36: #{_lambda_.52} parent=27 // pred_fallthru
              _
          $region28: #{_lambda_.52} parent=23 // pred_fallthru
            _
          %241 = vnop
        $region24: #{_lambda_.52} parent=19 // pred_fallthru
          _
      $region20: #{_lambda_.52} parent=5 // pred_fallthru
        _
      %p242 = scmp.le.s32.totalorder 1, %s8
      %p243 = scmp.lt.s32.totalorder %s8, 3
      %p244 = pnand %p242, %p243
      %p245 = pneg %p244
      // Predicated region
      $region59: #{_lambda_.52} parent=5 // pred_check
        _
      $region60: #{_lambda_.52} parent=5 // pred_check_branch
        %247 = sbr.rel (%p244) target = $region62
      $region61: #{_lambda_.52} parent=5 // pred_region
        %s248 = ssub.s32 %s8, 1
        %s249 = sand.u32 %s21, 1
        %s250 = sand.u32 %s21, 1
        %s251 = smul.addr %s250, 200
        %s252 = scalar_lea.vmem [#allocation2], %s251
        // Predicated region
        $region63: #{_lambda_.52} parent=61 // pred_check
          %p253 = pneg %p34
        $region64: #{_lambda_.52} parent=61 // pred_check_branch
          %255 = sbr.rel (%p253) target = $region66
        $region65: #{_lambda_.52} parent=61 // pred_region
          _
        $region66: #{_lambda_.52} parent=61 // pred_fallthru
          _
        %s256 = sand.u32 %s21, 1
        %s257 = sand.u32 %s21, 1
        %s258 = smul.addr %s257, 200
        %s259 = scalar_lea.vmem [#allocation2], %s258
        %p260 = pneg %p34
        %p261 = pneg %p31
        %p262 = pneg %p55
        %p263 = pneg %p52
        %p264 = pneg %p81
        %p265 = pneg %p78
        %s266 = sand.u32 %s68, 1
        %s267 = sand.u32 %s68, 1
        %s268 = smul.addr %s267, 32
        %s269 = scalar_lea.vmem [#allocation3], %s268
        %s270 = smul.u32 2, %s13
        %s271 = smul.u32 2, %s13
        %v273 = vld [vmem:[%s1] sm:$0xff]
        %v274 = vld [vmem:[%s1 + $0x8] sm:$0xff]
        %v275 = vld [vmem:[%s252] sm:$0xff]
        %v276 = vld [vmem:[%s252 + $0x8] sm:$0xff]
        %v277 = vld [vmem:[%s252 + $0x10] sm:$0xff]
        %v278 = vld [vmem:[%s252 + $0x18] sm:$0xff]
        %v279 = vld [vmem:[%s252 + $0x20] sm:$0xff]
        %v280 = vld [vmem:[%s252 + $0x28] sm:$0xff]
        %v281 = vld [vmem:[%s252 + $0x30] sm:$0xff]
        %v282 = vld [vmem:[%s252 + $0x38] sm:$0xff]
        %v283 = vld [vmem:[%s252 + $0x40] sm:$0xff]
        %v284 = vld [vmem:[%s252 + $0x48] sm:$0xff]
        %v285 = vld [vmem:[%s252 + $0x50] sm:$0xff]
        %v286 = vld [vmem:[%s252 + $0x58] sm:$0xff]
        %v287 = vld [vmem:[%s252 + $0x60] sm:$0xff]
        %v288 = vld [vmem:[%s252 + $0x68] sm:$0xff]
        %v289 = vld [vmem:[%s252 + $0x70] sm:$0xff]
        %v290 = vld [vmem:[%s252 + $0x78] sm:$0xff]
        %v291 = vld [vmem:[%s252 + $0x80] sm:$0xff]
        %v292 = vld [vmem:[%s252 + $0x88] sm:$0xff]
        %v293 = vld [vmem:[%s252 + $0x90] sm:$0xff]
        %v294 = vld [vmem:[%s252 + $0x98] sm:$0xff]
        %v295 = vld [vmem:[%s252 + $0xa0] sm:$0xff]
        %v296 = vld [vmem:[%s252 + $0xa8] sm:$0xff]
        %v297 = vld [vmem:[%s252 + $0xb0] sm:$0xff]
        %v298 = vld [vmem:[%s252 + $0xb8] sm:$0xff]
        %v299 = vld [vmem:[%s252 + $0xc0] sm:$0xff]
        %v302 = vunpack.c.l.b16 %v273
        %v303 = vunpack.c.h.b16 %v273
        %v304 = vunpack.c.l.b16 %v274
        %v305 = vunpack.c.h.b16 %v274
        %v306 = vpack.c.b16 %v304, %v302
        %v307 = vpack.c.b16 %v305, %v303
        %v334 = vunpack.c.l.b16 %v275
        %v335 = vunpack.c.h.b16 %v275
        %v336 = vunpack.c.l.b16 %v276
        %v337 = vunpack.c.h.b16 %v276
        %v338 = vunpack.c.l.b16 %v277
        %v339 = vunpack.c.h.b16 %v277
        %v340 = vunpack.c.l.b16 %v278
        %v341 = vunpack.c.h.b16 %v278
        %v342 = vunpack.c.l.b16 %v279
        %v343 = vunpack.c.h.b16 %v279
        %v344 = vunpack.c.l.b16 %v280
        %v345 = vunpack.c.h.b16 %v280
        %v346 = vunpack.c.l.b16 %v281
        %v347 = vunpack.c.h.b16 %v281
        %v348 = vunpack.c.l.b16 %v282
        %v349 = vunpack.c.h.b16 %v282
        %v350 = vunpack.c.l.b16 %v283
        %v351 = vunpack.c.h.b16 %v283
        %v352 = vunpack.c.l.b16 %v284
        %v353 = vunpack.c.h.b16 %v284
        %v354 = vunpack.c.l.b16 %v285
        %v355 = vunpack.c.h.b16 %v285
        %v356 = vunpack.c.l.b16 %v286
        %v357 = vunpack.c.h.b16 %v286
        %v358 = vunpack.c.l.b16 %v287
        %v359 = vunpack.c.h.b16 %v287
        %v360 = vunpack.c.l.b16 %v288
        %v361 = vunpack.c.h.b16 %v288
        %v362 = vunpack.c.l.b16 %v289
        %v363 = vunpack.c.h.b16 %v289
        %v364 = vunpack.c.l.b16 %v290
        %v365 = vunpack.c.h.b16 %v290
        %v366 = vunpack.c.l.b16 %v291
        %v367 = vunpack.c.h.b16 %v291
        %v368 = vunpack.c.l.b16 %v292
        %v369 = vunpack.c.h.b16 %v292
        %v370 = vunpack.c.l.b16 %v293
        %v371 = vunpack.c.h.b16 %v293
        %v372 = vunpack.c.l.b16 %v294
        %v373 = vunpack.c.h.b16 %v294
        %v374 = vunpack.c.l.b16 %v295
        %v375 = vunpack.c.h.b16 %v295
        %v376 = vunpack.c.l.b16 %v296
        %v377 = vunpack.c.h.b16 %v296
        %v378 = vunpack.c.l.b16 %v297
        %v379 = vunpack.c.h.b16 %v297
        %v380 = vunpack.c.l.b16 %v298
        %v381 = vunpack.c.h.b16 %v298
        %v382 = vunpack.c.l.b16 %v299
        %v383 = vunpack.c.h.b16 %v299
        %v384 = vpack.c.b16 %v336, %v334
        %v385 = vpack.c.b16 %v337, %v335
        %v386 = vpack.c.b16 %v340, %v338
        %v387 = vpack.c.b16 %v341, %v339
        %v388 = vpack.c.b16 %v344, %v342
        %v389 = vpack.c.b16 %v345, %v343
        %v390 = vpack.c.b16 %v348, %v346
        %v391 = vpack.c.b16 %v349, %v347
        %v392 = vpack.c.b16 %v352, %v350
        %v393 = vpack.c.b16 %v353, %v351
        %v394 = vpack.c.b16 %v356, %v354
        %v395 = vpack.c.b16 %v357, %v355
        %v396 = vpack.c.b16 %v360, %v358
        %v397 = vpack.c.b16 %v361, %v359
        %v398 = vpack.c.b16 %v364, %v362
        %v399 = vpack.c.b16 %v365, %v363
        %v400 = vpack.c.b16 %v368, %v366
        %v401 = vpack.c.b16 %v369, %v367
        %v402 = vpack.c.b16 %v372, %v370
        %v403 = vpack.c.b16 %v373, %v371
        %v404 = vpack.c.b16 %v376, %v374
        %v405 = vpack.c.b16 %v377, %v375
        %v406 = vpack.c.b16 %v380, %v378
        %v407 = vpack.c.b16 %v381, %v379
        %v408 = vpack.c.b16 %v382, %v382
        %v409 = vpack.c.b16 %v383, %v383
        %vm434 = vcmask 588800
        %v436 = vsel %vm434, %v307, 0
        %vm438 = vcmask 1043456
        %v440 = vsel %vm438, %v408, 0
        %v443 = vsel %vm438, %v409, 0
        %445 = vmatprep.subr.bf16.mxu0 %v399
        %446 = vmatpush1.bf16.msra.mxu0 %v398
        %447 = vmatprep.subr.bf16.mxu0 %v397
        %448 = vmatpush1.bf16.msra.mxu0 %v396
        %449 = vmatprep.subr.bf16.mxu0 %v395
        %450 = vmatpush1.bf16.msra.mxu0 %v394
        %451 = vmatprep.subr.bf16.mxu0 %v393
        %452 = vmatpush1.bf16.msra.mxu0 %v392
        %453 = vmatprep.subr.bf16.mxu0 %v391
        %454 = vmatpush1.bf16.msra.mxu0 %v390
        %455 = vmatprep.subr.bf16.mxu0 %v389
        %456 = vmatpush1.bf16.msra.mxu0 %v388
        %457 = vmatprep.subr.bf16.mxu0 %v387
        %458 = vmatpush1.bf16.msra.mxu0 %v386
        %459 = vmatprep.subr.bf16.mxu0 %v385
        %460 = vmatpush1.bf16.msra.mxu0 %v384
        %461 = vmatprep.subr.bf16.mxu0 0
        %462 = vmatpush2.bf16.msra.mxu0 0
        %463 = vmatprep.subr.bf16.mxu0 0
        %464 = vmatpush2.bf16.msra.mxu0 0
        %465 = vmatprep.subr.bf16.mxu0 0
        %466 = vmatpush2.bf16.msra.mxu0 0
        %467 = vmatprep.subr.bf16.mxu0 %v443
        %468 = vmatpush2.bf16.msra.mxu0 %v440
        %469 = vmatprep.subr.bf16.mxu0 %v407
        %470 = vmatpush2.bf16.msra.mxu0 %v406
        %471 = vmatprep.subr.bf16.mxu0 %v405
        %472 = vmatpush2.bf16.msra.mxu0 %v404
        %473 = vmatprep.subr.bf16.mxu0 %v403
        %474 = vmatpush2.bf16.msra.mxu0 %v402
        %475 = vmatprep.subr.bf16.mxu0 %v401
        %476 = vmatpush2.bf16.msra.mxu0 %v400
        %477 = vmatprep.mubr.bf16.mxu0 %v436
        %478 = vmatmul.mubr.bf16.gmra.mxu0 %v306
        %v479 = vpop.f32.mrf.mxu0
        %v480 = vadd.f32 0.0, %v479
        %v481 = vpop.f32.mrf.mxu0
        %v482 = vadd.f32 0.0, %v481
        %v483 = vpop.f32.mrf.mxu0
        %v484 = vadd.f32 0.0, %v483
        %v485 = vpop.f32.mrf.mxu0
        %v486 = vadd.f32 0.0, %v485
        %487 = vdwg.mxu0
        %488 = vst [vmem:[%s269] sm:$0xff] %v480
        %489 = vst [vmem:[%s269 + $0x8] sm:$0xff] %v482
        %490 = vst [vmem:[%s269 + $0x10] sm:$0xff] %v484
        %491 = vst [vmem:[%s269 + $0x18] sm:$0xff] %v486
        %s492 = sand.u32 %s68, 1
        %s493 = sand.u32 %s68, 1
        %s494 = smul.addr %s493, 32
        %s495 = scalar_lea.vmem [#allocation3], %s494
        // Predicated region
        $region67: #{_lambda_.52} parent=61 // pred_check
          %p496 = pneg %p78
        $region68: #{_lambda_.52} parent=61 // pred_check_branch
          %498 = sbr.rel (%p496) target = $region70
        $region69: #{_lambda_.52} parent=61 // pred_region
          %s499 = smul.u32 2, %s13
          %s500 = smul.addr %s499, 8
          %s501 = scalar_lea.vmem %s2, %s500
          // Predicated region
          $region71: #{_lambda_.52} parent=69 // pred_check
            _
          $region72: #{_lambda_.52} parent=69 // pred_check_branch
            %503 = sbr.rel (0) target = $region74
          $region73: #{_lambda_.52} parent=69 // pred_region
            // Predicated region
            $region75: #{_lambda_.52} parent=73 // pred_check
              _
            $region76: #{_lambda_.52} parent=73 // pred_check_branch
              %505 = sbr.rel (0) target = $region78
            $region77: #{_lambda_.52} parent=73 // pred_region
              loop: start=0, step=1, limit=1
              $region79: #{_lambda_.52} parent=77 // loop_pre_header
                _
              $region80: #{_lambda_.52} parent=77 // loop_header
                %s507 = sphi 0, %s511
                %p508 = scmp.ge.s32.totalorder %s507, 1
                %s512 = sphi %s495, %s495
                %s513 = sphi %s501, %s501
              $region81: #{_lambda_.52} parent=77 // loop_header_branch
                %510 = sbr.rel (%p508) target = $region85
              $region82: #{_lambda_.52} parent=77 // loop_body
                %v514 = vld [vmem:[%s512] sm:$0xff]
                %515 = vst [vmem:[%s513] sm:$0xff] %v514
                %v516 = vld [vmem:[%s512 + $0x8] sm:$0xff]
                %517 = vst [vmem:[%s513 + $0x8] sm:$0xff] %v516
                %v518 = vld [vmem:[%s512 + $0x10] sm:$0xff]
                %519 = vst [vmem:[%s513 + $0x20] sm:$0xff] %v518
                %v520 = vld [vmem:[%s512 + $0x18] sm:$0xff]
                %521 = vst [vmem:[%s513 + $0x28] sm:$0xff] %v520
              $region83: #{_lambda_.52} parent=77 // loop_footer
                %s511 = sadd.s32 1, %s507
              $region84: #{_lambda_.52} parent=77 // loop_footer_branch
                %506 = sbr.rel target = $region80
              $region85: #{_lambda_.52} parent=77 // loop_exit
                _
            $region78: #{_lambda_.52} parent=73 // pred_fallthru
              _
            // Predicated region
            $region86: #{_lambda_.52} parent=73 // pred_check
              _
            $region87: #{_lambda_.52} parent=73 // pred_check_branch
              %523 = sbr.rel target = $region89
            $region88: #{_lambda_.52} parent=73 // pred_region
              _
            $region89: #{_lambda_.52} parent=73 // pred_fallthru
              _
          $region74: #{_lambda_.52} parent=69 // pred_fallthru
            _
          %524 = vnop
        $region70: #{_lambda_.52} parent=61 // pred_fallthru
          _
      $region62: #{_lambda_.52} parent=5 // pred_fallthru
        _
      %p525 = scmp.le.s32.totalorder 2, %s8
      // Predicated region
      $region90: #{_lambda_.52} parent=5 // pred_check
        %p526 = pneg %p525
      $region91: #{_lambda_.52} parent=5 // pred_check_branch
        %528 = sbr.rel (%p526) target = $region93
      $region92: #{_lambda_.52} parent=5 // pred_region
        %s529 = ssub.s32 %s8, 2
        // Predicated region
        $region94: #{_lambda_.52} parent=92 // pred_check
          %p530 = pneg %p84
        $region95: #{_lambda_.52} parent=92 // pred_check_branch
          %532 = sbr.rel (%p530) target = $region97
        $region96: #{_lambda_.52} parent=92 // pred_region
          %s533 = sand.u32 %s69, 1
          %s534 = sand.u32 %s69, 1
          %s535 = smul.addr %s534, 32
          %s536 = scalar_lea.vmem [#allocation3], %s535
        $region97: #{_lambda_.52} parent=92 // pred_fallthru
          _
      $region93: #{_lambda_.52} parent=5 // pred_fallthru
        _
    $region6: #{_lambda_.52} parent=1 // loop_footer
      %s12 = sadd.s32 1, %s8
    $region7: #{_lambda_.52} parent=1 // loop_footer_branch
      %7 = sbr.rel target = $region3
    $region8: #{_lambda_.52} parent=1 // loop_exit
      _

// kernel: _lambda_.53
$region0: #{_lambda_.53}
  #allocation0 [shape = 'u32[]', space=smem, size = 0x4, offset = 0x4, fixed_abs, tag = 'smem constant byte address 0x4 - core index']
  #allocation1 [shape = 'u32[144,128]{1,0:T(1,128)}', space=vmem, size = 0x12000, scoped, tag = 'internal scratch']
  %s0 = inlined_call_operand.vmem [shape: bf16[136,512], index: 0, kind: input, shape index: {}]
  %s1 = inlined_call_operand.vmem [shape: bf16[8,136], index: 1, kind: input, shape index: {}]
  %s2 = inlined_call_operand.vmem [shape: f32[8,512], index: 2, kind: output, shape index: {}]
  %s3 = sld [smem:[#allocation0]]
  $region79: #{_lambda_.53} parent=0
    _
  %s5 = ssub.s32 1, %s3
  %s6 = scalar_select 0, %s5, %s3
  $region1: #{_lambda_.53} parent=0
    #allocation2 [shape = 'u8[139264]{0}', space=vmem, size = 0x22000, scoped, tag = 'input window, operand 0']
    loop: start=0, step=1, limit=4
    $region2: #{_lambda_.53} parent=1 // loop_pre_header
      _
    $region3: #{_lambda_.53} parent=1 // loop_header
      %s8 = sphi 0, %s12
      %p9 = scmp.ge.s32.totalorder %s8, 4
      %s18 = sphi 0, %s20
      %s21 = sphi 0, %s18
      %s22 = sphi 0, %s21
      %s38 = sphi 0, %s22
      %s42 = sphi 0, %s42
      %s44 = sphi 0, %s42
      %s45 = sphi 0, %s44
      %s59 = sphi 0, %s45
      %s65 = sphi 0, %s67
      %s68 = sphi 0, %s65
      %s69 = sphi 0, %s68
      %s85 = sphi 0, %s69
    $region4: #{_lambda_.53} parent=1 // loop_header_branch
      %11 = sbr.rel (%p9) target = $region8
    $region5: #{_lambda_.53} parent=1 // loop_body
      %s13 = ssub.s32 %s8, 1
      %s14 = ssub.s32 %s8, 2
      %s15 = sadd.s32 %s8, 1
      %s16 = ssub.s32 %s8, %s15
      %p17 = scmp.eq.s32.totalorder %s16, 0
      %s19 = sadd.s32 %s18, 1
      %s20 = scalar_select %p17, %s18, %s19
      %p23 = pneg %p17
      %p24 = scmp.eq.s32.totalorder %s8, 1
      %p25 = por %p23, %p24
      %p26 = scmp.ne.s32.totalorder %s18, %s21
      %p27 = scmp.eq.s32.totalorder %s8, 0
      %p28 = por %p26, %p27
      %p29 = scmp.ne.s32.totalorder %s18, %s21
      %p30 = scmp.eq.s32.totalorder %s13, 1
      %p31 = por %p29, %p30
      %p32 = scmp.ne.s32.totalorder %s21, %s22
      %p33 = scmp.eq.s32.totalorder %s13, 0
      %p34 = por %p32, %p33
      %p35 = scmp.ne.s32.totalorder %s21, %s22
      %p36 = scmp.eq.s32.totalorder %s14, 1
      %p37 = por %p35, %p36
      %p39 = scmp.ne.s32.totalorder %s22, %s38
      %p40 = scmp.eq.s32.totalorder %s14, 0
      %p41 = por %p39, %p40
      %s43 = sadd.s32 %s42, 1
      %p46 = scmp.eq.s32.totalorder %s8, 1
      %p47 = scmp.ne.s32.totalorder %s42, %s44
      %p48 = scmp.eq.s32.totalorder %s8, 0
      %p49 = por %p47, %p48
      %p50 = scmp.ne.s32.totalorder %s42, %s44
      %p51 = scmp.eq.s32.totalorder %s13, 1
      %p52 = por %p50, %p51
      %p53 = scmp.ne.s32.totalorder %s44, %s45
      %p54 = scmp.eq.s32.totalorder %s13, 0
      %p55 = por %p53, %p54
      %p56 = scmp.ne.s32.totalorder %s44, %s45
      %p57 = scmp.eq.s32.totalorder %s14, 1
      %p58 = por %p56, %p57
      %p60 = scmp.ne.s32.totalorder %s45, %s59
      %p61 = scmp.eq.s32.totalorder %s14, 0
      %p62 = por %p60, %p61
      %s63 = ssub.s32 %s8, %s15
      %p64 = scmp.eq.s32.totalorder %s63, 0
      %s66 = sadd.s32 %s65, 1
      %s67 = scalar_select %p64, %s65, %s66
      %p70 = pneg %p64
      %p71 = scmp.eq.s32.totalorder %s8, 1
      %p72 = por %p70, %p71
      %p73 = scmp.ne.s32.totalorder %s65, %s68
      %p74 = scmp.eq.s32.totalorder %s8, 0
      %p75 = por %p73, %p74
      %p76 = scmp.ne.s32.totalorder %s65, %s68
      %p77 = scmp.eq.s32.totalorder %s13, 1
      %p78 = por %p76, %p77
      %p79 = scmp.ne.s32.totalorder %s68, %s69
      %p80 = scmp.eq.s32.totalorder %s13, 0
      %p81 = por %p79, %p80
      %p82 = scmp.ne.s32.totalorder %s68, %s69
      %p83 = scmp.eq.s32.totalorder %s14, 1
      %p84 = por %p82, %p83
      %p86 = scmp.ne.s32.totalorder %s69, %s85
      %p87 = scmp.eq.s32.totalorder %s14, 0
      %p88 = por %p86, %p87
      %p89 = scmp.le.s32.totalorder 1, %s8
      %p90 = scmp.lt.s32.totalorder %s8, 3
      %p91 = pnand %p89, %p90
      %p92 = pneg %p91
      // Predicated region
      $region9: #{_lambda_.53} parent=5 // pred_check
        _
      $region10: #{_lambda_.53} parent=5 // pred_check_branch
        %94 = sbr.rel (%p91) target = $region12
      $region11: #{_lambda_.53} parent=5 // pred_region
        %s95 = ssub.s32 %s8, 1
        // Predicated region
        $region13: #{_lambda_.53} parent=11 // pred_check
          %p96 = pneg %p55
        $region14: #{_lambda_.53} parent=11 // pred_check_branch
          %98 = sbr.rel (%p96) target = $region16
        $region15: #{_lambda_.53} parent=11 // pred_region
          _
        $region16: #{_lambda_.53} parent=11 // pred_fallthru
          _
      $region12: #{_lambda_.53} parent=5 // pred_fallthru
        _
      %p99 = scmp.lt.s32.totalorder %s8, 2
      // Predicated region
      $region17: #{_lambda_.53} parent=5 // pred_check
        %p100 = pneg %p99
      $region18: #{_lambda_.53} parent=5 // pred_check_branch
        %102 = sbr.rel (%p100) target = $region20
      $region19: #{_lambda_.53} parent=5 // pred_region
        // Predicated region
        $region21: #{_lambda_.53} parent=19 // pred_check
          %p103 = pneg %p28
        $region22: #{_lambda_.53} parent=19 // pred_check_branch
          %105 = sbr.rel (%p103) target = $region24
        $region23: #{_lambda_.53} parent=19 // pred_region
          %s106 = sand.u32 %s18, 1
          %s107 = sand.u32 %s18, 1
          %s108 = smul.addr %s107, 136
          %s109 = scalar_lea.vmem [#allocation2], %s108
          %s110 = smul.u32 2, %s8
          %s111 = smul.addr %s110, 4
          %s112 = scalar_lea.vmem %s0, %s111
          // Predicated region
          $region25: #{_lambda_.53} parent=23 // pred_check
            _
          $region26: #{_lambda_.53} parent=23 // pred_check_branch
            %114 = sbr.rel (0) target = $region28
          $region27: #{_lambda_.53} parent=23 // pred_region
            // Predicated region
            $region29: #{_lambda_.53} parent=27 // pred_check
              _
            $region30: #{_lambda_.53} parent=27 // pred_check_branch
              %116 = sbr.rel (0) target = $region32
            $region31: #{_lambda_.53} parent=27 // pred_region
              // Predicated region
              $region44: #{_lambda_.53} parent=31 // pred_check
                _
              $region45: #{_lambda_.53} parent=31 // pred_check_branch
                %164 = sbr.rel (0) target = $region47
              $region46: #{_lambda_.53} parent=31 // pred_region
                loop: start=0, step=1, limit=1
                $region48: #{_lambda_.53} parent=46 // loop_pre_header
                  _
                $region49: #{_lambda_.53} parent=46 // loop_header
                  %s166 = sphi 0, %s170
                  %p167 = scmp.ge.s32.totalorder %s166, 1
                  %s171 = sphi %s112, %s112
                  %s172 = sphi %s109, %s109
                $region50: #{_lambda_.53} parent=46 // loop_header_branch
                  %169 = sbr.rel (%p167) target = $region54
                $region51: #{_lambda_.53} parent=46 // loop_body
                  %v173 = vld [vmem:[%s171] sm:$0xff]
                  %174 = vst [vmem:[%s172] sm:$0xff] %v173
                  %v175 = vld [vmem:[%s171 + $0x10] sm:$0xff]
                  %176 = vst [vmem:[%s172 + $0x8] sm:$0xff] %v175
                  %v177 = vld [vmem:[%s171 + $0x20] sm:$0xff]
                  %178 = vst [vmem:[%s172 + $0x10] sm:$0xff] %v177
                  %v179 = vld [vmem:[%s171 + $0x30] sm:$0xff]
                  %180 = vst [vmem:[%s172 + $0x18] sm:$0xff] %v179
                  %v181 = vld [vmem:[%s171 + $0x40] sm:$0xff]
                  %182 = vst [vmem:[%s172 + $0x20] sm:$0xff] %v181
                  %v183 = vld [vmem:[%s171 + $0x50] sm:$0xff]
                  %184 = vst [vmem:[%s172 + $0x28] sm:$0xff] %v183
                  %v185 = vld [vmem:[%s171 + $0x60] sm:$0xff]
                  %186 = vst [vmem:[%s172 + $0x30] sm:$0xff] %v185
                  %v187 = vld [vmem:[%s171 + $0x70] sm:$0xff]
                  %188 = vst [vmem:[%s172 + $0x38] sm:$0xff] %v187
                  %v189 = vld [vmem:[%s171 + $0x80] sm:$0xff]
                  %190 = vst [vmem:[%s172 + $0x40] sm:$0xff] %v189
                  %v191 = vld [vmem:[%s171 + $0x90] sm:$0xff]
                  %192 = vst [vmem:[%s172 + $0x48] sm:$0xff] %v191
                  %v193 = vld [vmem:[%s171 + $0xa0] sm:$0xff]
                  %194 = vst [vmem:[%s172 + $0x50] sm:$0xff] %v193
                  %v195 = vld [vmem:[%s171 + $0xb0] sm:$0xff]
                  %196 = vst [vmem:[%s172 + $0x58] sm:$0xff] %v195
                  %v197 = vld [vmem:[%s171 + $0xc0] sm:$0xff]
                  %198 = vst [vmem:[%s172 + $0x60] sm:$0xff] %v197
                  %v199 = vld [vmem:[%s171 + $0xd0] sm:$0xff]
                  %200 = vst [vmem:[%s172 + $0x68] sm:$0xff] %v199
                  %v201 = vld [vmem:[%s171 + $0xe0] sm:$0xff]
                  %202 = vst [vmem:[%s172 + $0x70] sm:$0xff] %v201
                  %v203 = vld [vmem:[%s171 + $0xf0] sm:$0xff]
                  %204 = vst [vmem:[%s172 + $0x78] sm:$0xff] %v203
                  %v205 = vld [vmem:[%s171 + $0x100] sm:$0xff]
                  %206 = vst [vmem:[%s172 + $0x80] sm:$0xff] %v205
                $region52: #{_lambda_.53} parent=46 // loop_footer
                  %s170 = sadd.s32 1, %s166
                $region53: #{_lambda_.53} parent=46 // loop_footer_branch
                  %165 = sbr.rel target = $region49
                $region54: #{_lambda_.53} parent=46 // loop_exit
                  _
              $region47: #{_lambda_.53} parent=31 // pred_fallthru
                _
              // Predicated region
              $region55: #{_lambda_.53} parent=31 // pred_check
                _
              $region56: #{_lambda_.53} parent=31 // pred_check_branch
                %208 = sbr.rel target = $region58
              $region57: #{_lambda_.53} parent=31 // pred_region
                _
              $region58: #{_lambda_.53} parent=31 // pred_fallthru
                _
            $region32: #{_lambda_.53} parent=27 // pred_fallthru
              _
            // Predicated region
            $region33: #{_lambda_.53} parent=27 // pred_check
              _
            $region34: #{_lambda_.53} parent=27 // pred_check_branch
              %118 = sbr.rel target = $region36
            $region35: #{_lambda_.53} parent=27 // pred_region
              %s120 = ssub.s32 256, 1
              loop: start=0, step=1, limit=1
              $region37: #{_lambda_.53} parent=35 // loop_pre_header
                _
              $region38: #{_lambda_.53} parent=35 // loop_header
                %s122 = sphi 0, %s126
                %p123 = scmp.ge.s32.totalorder %s122, 1
                %s127 = sphi %s112, %s112
                %s128 = sphi %s109, %s109
              $region39: #{_lambda_.53} parent=35 // loop_header_branch
                %125 = sbr.rel (%p123) target = $region43
              $region40: #{_lambda_.53} parent=35 // loop_body
                %v129 = vld [vmem:[%s127] sm:%s120]
                %130 = vst [vmem:[%s128] sm:%s120] %v129
                %v131 = vld [vmem:[%s127 + $0x10] sm:%s120]
                %132 = vst [vmem:[%s128 + $0x8] sm:%s120] %v131
                %v133 = vld [vmem:[%s127 + $0x20] sm:%s120]
                %134 = vst [vmem:[%s128 + $0x10] sm:%s120] %v133
                %v135 = vld [vmem:[%s127 + $0x30] sm:%s120]
                %136 = vst [vmem:[%s128 + $0x18] sm:%s120] %v135
                %v137 = vld [vmem:[%s127 + $0x40] sm:%s120]
                %138 = vst [vmem:[%s128 + $0x20] sm:%s120] %v137
                %v139 = vld [vmem:[%s127 + $0x50] sm:%s120]
                %140 = vst [vmem:[%s128 + $0x28] sm:%s120] %v139
                %v141 = vld [vmem:[%s127 + $0x60] sm:%s120]
                %142 = vst [vmem:[%s128 + $0x30] sm:%s120] %v141
                %v143 = vld [vmem:[%s127 + $0x70] sm:%s120]
                %144 = vst [vmem:[%s128 + $0x38] sm:%s120] %v143
                %v145 = vld [vmem:[%s127 + $0x80] sm:%s120]
                %146 = vst [vmem:[%s128 + $0x40] sm:%s120] %v145
                %v147 = vld [vmem:[%s127 + $0x90] sm:%s120]
                %148 = vst [vmem:[%s128 + $0x48] sm:%s120] %v147
                %v149 = vld [vmem:[%s127 + $0xa0] sm:%s120]
                %150 = vst [vmem:[%s128 + $0x50] sm:%s120] %v149
                %v151 = vld [vmem:[%s127 + $0xb0] sm:%s120]
                %152 = vst [vmem:[%s128 + $0x58] sm:%s120] %v151
                %v153 = vld [vmem:[%s127 + $0xc0] sm:%s120]
                %154 = vst [vmem:[%s128 + $0x60] sm:%s120] %v153
                %v155 = vld [vmem:[%s127 + $0xd0] sm:%s120]
                %156 = vst [vmem:[%s128 + $0x68] sm:%s120] %v155
                %v157 = vld [vmem:[%s127 + $0xe0] sm:%s120]
                %158 = vst [vmem:[%s128 + $0x70] sm:%s120] %v157
                %v159 = vld [vmem:[%s127 + $0xf0] sm:%s120]
                %160 = vst [vmem:[%s128 + $0x78] sm:%s120] %v159
                %v161 = vld [vmem:[%s127 + $0x100] sm:%s120]
                %162 = vst [vmem:[%s128 + $0x80] sm:%s120] %v161
              $region41: #{_lambda_.53} parent=35 // loop_footer
                %s126 = sadd.s32 1, %s122
              $region42: #{_lambda_.53} parent=35 // loop_footer_branch
                %121 = sbr.rel target = $region38
              $region43: #{_lambda_.53} parent=35 // loop_exit
                _
            $region36: #{_lambda_.53} parent=27 // pred_fallthru
              _
          $region28: #{_lambda_.53} parent=23 // pred_fallthru
            _
          %209 = vnop
        $region24: #{_lambda_.53} parent=19 // pred_fallthru
          _
      $region20: #{_lambda_.53} parent=5 // pred_fallthru
        _
      %p210 = scmp.le.s32.totalorder 1, %s8
      %p211 = scmp.lt.s32.totalorder %s8, 3
      %p212 = pnand %p210, %p211
      %p213 = pneg %p212
      // Predicated region
      $region59: #{_lambda_.53} parent=5 // pred_check
        _
      $region60: #{_lambda_.53} parent=5 // pred_check_branch
        %215 = sbr.rel (%p212) target = $region62
      $region61: #{_lambda_.53} parent=5 // pred_region
        %s216 = ssub.s32 %s8, 1
        %s217 = sand.u32 %s21, 1
        %s218 = sand.u32 %s21, 1
        %s219 = smul.addr %s218, 136
        %s220 = scalar_lea.vmem [#allocation2], %s219
        // Predicated region
        $region63: #{_lambda_.53} parent=61 // pred_check
          %p221 = pneg %p34
        $region64: #{_lambda_.53} parent=61 // pred_check_branch
          %223 = sbr.rel (%p221) target = $region66
        $region65: #{_lambda_.53} parent=61 // pred_region
          _
        $region66: #{_lambda_.53} parent=61 // pred_fallthru
          _
        %s224 = sand.u32 %s21, 1
        %s225 = sand.u32 %s21, 1
        %s226 = smul.addr %s225, 136
        %s227 = scalar_lea.vmem [#allocation2], %s226
        %p228 = pneg %p34
        %p229 = pneg %p31
        %p230 = pneg %p55
        %p231 = pneg %p52
        %p232 = pneg %p81
        %p233 = pneg %p78
        %s234 = smul.u32 2, %s13
        %p235 = scmp.lt.s32.totalorder %s234, 3
        %s236 = scalar_select %p235, %s234, 3
        %s237 = smul.addr %s236, 8
        %s238 = scalar_lea.vmem %s2, %s237
        %s239 = smul.u32 2, %s13
        %s240 = smul.u32 2, %s13
        %p241 = scmp.lt.s32.totalorder %s240, 3
        %s242 = scalar_select %p241, %s240, 3
        %s243 = smul.addr %s242, 8
        %s244 = scalar_lea.vmem %s2, %s243
        %s245 = smul.u32 2, %s13
        %v247 = vld [vmem:[%s1] sm:$0xff]
        %v248 = vld [vmem:[%s220] sm:$0xff]
        %v249 = vld [vmem:[%s220 + $0x8] sm:$0xff]
        %v250 = vld [vmem:[%s220 + $0x10] sm:$0xff]
        %v251 = vld [vmem:[%s220 + $0x18] sm:$0xff]
        %v252 = vld [vmem:[%s220 + $0x20] sm:$0xff]
        %v253 = vld [vmem:[%s220 + $0x28] sm:$0xff]
        %v254 = vld [vmem:[%s220 + $0x30] sm:$0xff]
        %v255 = vld [vmem:[%s220 + $0x38] sm:$0xff]
        %v256 = vld [vmem:[%s220 + $0x40] sm:$0xff]
        %v257 = vld [vmem:[%s220 + $0x48] sm:$0xff]
        %v258 = vld [vmem:[%s220 + $0x50] sm:$0xff]
        %v259 = vld [vmem:[%s220 + $0x58] sm:$0xff]
        %v260 = vld [vmem:[%s220 + $0x60] sm:$0xff]
        %v261 = vld [vmem:[%s220 + $0x68] sm:$0xff]
        %v262 = vld [vmem:[%s220 + $0x70] sm:$0xff]
        %v263 = vld [vmem:[%s220 + $0x78] sm:$0xff]
        %v264 = vld [vmem:[%s220 + $0x80] sm:$0xff]
        %v266 = vunpack.c.l.b16 %v247
        %v267 = vunpack.c.h.b16 %v247
        %v268 = vpack.c.b16 %v266, %v266
        %v269 = vpack.c.b16 %v267, %v267
        %v288 = vunpack.c.l.b16 %v248
        %v289 = vunpack.c.h.b16 %v248
        %v290 = vunpack.c.l.b16 %v249
        %v291 = vunpack.c.h.b16 %v249
        %v292 = vunpack.c.l.b16 %v250
        %v293 = vunpack.c.h.b16 %v250
        %v294 = vunpack.c.l.b16 %v251
        %v295 = vunpack.c.h.b16 %v251
        %v296 = vunpack.c.l.b16 %v252
        %v297 = vunpack.c.h.b16 %v252
        %v298 = vunpack.c.l.b16 %v253
        %v299 = vunpack.c.h.b16 %v253
        %v300 = vunpack.c.l.b16 %v254
        %v301 = vunpack.c.h.b16 %v254
        %v302 = vunpack.c.l.b16 %v255
        %v303 = vunpack.c.h.b16 %v255
        %v304 = vunpack.c.l.b16 %v256
        %v305 = vunpack.c.h.b16 %v256
        %v306 = vunpack.c.l.b16 %v257
        %v307 = vunpack.c.h.b16 %v257
        %v308 = vunpack.c.l.b16 %v258
        %v309 = vunpack.c.h.b16 %v258
        %v310 = vunpack.c.l.b16 %v259
        %v311 = vunpack.c.h.b16 %v259
        %v312 = vunpack.c.l.b16 %v260
        %v313 = vunpack.c.h.b16 %v260
        %v314 = vunpack.c.l.b16 %v261
        %v315 = vunpack.c.h.b16 %v261
        %v316 = vunpack.c.l.b16 %v262
        %v317 = vunpack.c.h.b16 %v262
        %v318 = vunpack.c.l.b16 %v263
        %v319 = vunpack.c.h.b16 %v263
        %v320 = vunpack.c.l.b16 %v264
        %v321 = vunpack.c.h.b16 %v264
        %v322 = vpack.c.b16 %v290, %v288
        %v323 = vpack.c.b16 %v291, %v289
        %v324 = vpack.c.b16 %v294, %v292
        %v325 = vpack.c.b16 %v295, %v293
        %v326 = vpack.c.b16 %v298, %v296
        %v327 = vpack.c.b16 %v299, %v297
        %v328 = vpack.c.b16 %v302, %v300
        %v329 = vpack.c.b16 %v303, %v301
        %v330 = vpack.c.b16 %v306, %v304
        %v331 = vpack.c.b16 %v307, %v305
        %v332 = vpack.c.b16 %v310, %v308
        %v333 = vpack.c.b16 %v311, %v309
        %v334 = vpack.c.b16 %v314, %v312
        %v335 = vpack.c.b16 %v315, %v313
        %v336 = vpack.c.b16 %v318, %v316
        %v337 = vpack.c.b16 %v319, %v317
        %v338 = vpack.c.b16 %v320, %v320
        %v339 = vpack.c.b16 %v321, %v321
        %vm356 = vcmask 64512
        %v358 = vsel %vm356, %v269, 0
        %vm360 = vcmask 1043456
        %v362 = vsel %vm360, %v338, 0
        %v365 = vsel %vm360, %v339, 0
        %367 = vmatprep.subr.bf16.mxu0 %v337
        %368 = vmatpush1.bf16.msra.mxu0 %v336
        %369 = vmatprep.subr.bf16.mxu0 %v335
        %370 = vmatpush1.bf16.msra.mxu0 %v334
        %371 = vmatprep.subr.bf16.mxu0 %v333
        %372 = vmatpush1.bf16.msra.mxu0 %v332
        %373 = vmatprep.subr.bf16.mxu0 %v331
        %374 = vmatpush1.bf16.msra.mxu0 %v330
        %375 = vmatprep.subr.bf16.mxu0 %v329
        %376 = vmatpush1.bf16.msra.mxu0 %v328
        %377 = vmatprep.subr.bf16.mxu0 %v327
        %378 = vmatpush1.bf16.msra.mxu0 %v326
        %379 = vmatprep.subr.bf16.mxu0 %v325
        %380 = vmatpush1.bf16.msra.mxu0 %v324
        %381 = vmatprep.subr.bf16.mxu0 %v323
        %382 = vmatpush1.bf16.msra.mxu0 %v322
        %383 = vmatprep.subr.bf16.mxu0 0
        %384 = vmatpush2.bf16.msra.mxu0 0
        %385 = vmatprep.subr.bf16.mxu0 0
        %386 = vmatpush2.bf16.msra.mxu0 0
        %387 = vmatprep.subr.bf16.mxu0 0
        %388 = vmatpush2.bf16.msra.mxu0 0
        %389 = vmatprep.subr.bf16.mxu0 0
        %390 = vmatpush2.bf16.msra.mxu0 0
        %391 = vmatprep.subr.bf16.mxu0 0
        %392 = vmatpush2.bf16.msra.mxu0 0
        %393 = vmatprep.subr.bf16.mxu0 0
        %394 = vmatpush2.bf16.msra.mxu0 0
        %395 = vmatprep.subr.bf16.mxu0 0
        %396 = vmatpush2.bf16.msra.mxu0 0
        %397 = vmatprep.subr.bf16.mxu0 %v365
        %398 = vmatpush2.bf16.msra.mxu0 %v362
        %399 = vmatprep.mubr.bf16.mxu0 %v358
        %400 = vmatmul.mubr.bf16.gmra.mxu0 %v268
        %v401 = vpop.f32.mrf.mxu0
        %v402 = vadd.f32 0.0, %v401
        %v403 = vpop.f32.mrf.mxu0
        %v404 = vadd.f32 0.0, %v403
        %v405 = vpop.f32.mrf.mxu0
        %v406 = vpop.f32.mrf.mxu0
        %407 = vdwg.mxu0
        %408 = vst [vmem:[%s244] sm:$0xff] %v402
        %409 = vst [vmem:[%s244 + $0x8] sm:$0xff] %v404
        %s410 = smul.u32 2, %s13
        %p411 = scmp.lt.s32.totalorder %s410, 3
        %s412 = scalar_select %p411, %s410, 3
        %s413 = smul.addr %s412, 8
        %s414 = scalar_lea.vmem %s2, %s413
        // Predicated region
        $region67: #{_lambda_.53} parent=61 // pred_check
          %p415 = pneg %p78
        $region68: #{_lambda_.53} parent=61 // pred_check_branch
          %417 = sbr.rel (%p415) target = $region70
        $region69: #{_lambda_.53} parent=61 // pred_region
          %s418 = smul.u32 2, %s13
        $region70: #{_lambda_.53} parent=61 // pred_fallthru
          _
      $region62: #{_lambda_.53} parent=5 // pred_fallthru
        _
      %p419 = scmp.le.s32.totalorder 2, %s8
      // Predicated region
      $region71: #{_lambda_.53} parent=5 // pred_check
        %p420 = pneg %p419
      $region72: #{_lambda_.53} parent=5 // pred_check_branch
        %422 = sbr.rel (%p420) target = $region74
      $region73: #{_lambda_.53} parent=5 // pred_region
        %s423 = ssub.s32 %s8, 2
        // Predicated region
        $region75: #{_lambda_.53} parent=73 // pred_check
          %p424 = pneg %p84
        $region76: #{_lambda_.53} parent=73 // pred_check_branch
          %426 = sbr.rel (%p424) target = $region78
        $region77: #{_lambda_.53} parent=73 // pred_region
          %s427 = smul.u32 2, %s14
          %p428 = scmp.lt.s32.totalorder %s427, 3
          %s429 = scalar_select %p428, %s427, 3
          %s430 = smul.addr %s429, 8
          %s431 = scalar_lea.vmem %s2, %s430
        $region78: #{_lambda_.53} parent=73 // pred_fallthru
          _
      $region74: #{_lambda_.53} parent=5 // pred_fallthru
        _
    $region6: #{_lambda_.53} parent=1 // loop_footer
      %s12 = sadd.s32 1, %s8
    $region7: #{_lambda_.53} parent=1 // loop_footer_branch
      %7 = sbr.rel target = $region3
    $region8: #{_lambda_.53} parent=1 // loop_exit
      _

// kernel: _lambda_.48
$region0: #{_lambda_.48}
  #allocation0 [shape = 'u32[]', space=smem, size = 0x4, offset = 0x4, fixed_abs, tag = 'smem constant byte address 0x4 - core index']
  #allocation1 [shape = 'u32[144,128]{1,0:T(1,128)}', space=vmem, size = 0x12000, scoped, tag = 'internal scratch']
  %s0 = inlined_call_operand.vmem [shape: f32[9,4,512], index: 0, kind: input, shape index: {}]
  %s1 = inlined_call_operand.vmem [shape: f32[1,512], index: 1, kind: input, shape index: {}]
  %s2 = inlined_call_operand.vmem [shape: f32[4,512], index: 2, kind: output, shape index: {0}]
  %s3 = inlined_call_operand.vmem [shape: f32[4,512], index: 3, kind: output, shape index: {1}]
  %4 = xla_tuple %s2, %s3
  %s5 = sld [smem:[#allocation0]]
  $region87: #{_lambda_.48} parent=0
    _
  %s7 = ssub.s32 1, %s5
  %s8 = scalar_select 0, %s7, %s5
  $region1: #{_lambda_.48} parent=0
    #allocation2 [shape = 'u8[73728]{0}', space=vmem, size = 0x12000, scoped, tag = 'input window, operand 0']
    loop: start=0, step=1, limit=4
    $region2: #{_lambda_.48} parent=1 // loop_pre_header
      _
    $region3: #{_lambda_.48} parent=1 // loop_header
      %s10 = sphi 0, %s14
      %p11 = scmp.ge.s32.totalorder %s10, 4
      %s20 = sphi 0, %s22
      %s23 = sphi 0, %s20
      %s24 = sphi 0, %s23
      %s40 = sphi 0, %s24
      %s46 = sphi 0, %s48
      %s49 = sphi 0, %s46
      %s50 = sphi 0, %s49
      %s66 = sphi 0, %s50
      %s72 = sphi 0, %s74
      %s75 = sphi 0, %s72
      %s76 = sphi 0, %s75
      %s92 = sphi 0, %s76
      %s98 = sphi 0, %s100
      %s101 = sphi 0, %s98
      %s102 = sphi 0, %s101
      %s118 = sphi 0, %s102
    $region4: #{_lambda_.48} parent=1 // loop_header_branch
      %13 = sbr.rel (%p11) target = $region8
    $region5: #{_lambda_.48} parent=1 // loop_body
      %s15 = ssub.s32 %s10, 1
      %s16 = ssub.s32 %s10, 2
      %s17 = sadd.s32 %s10, 1
      %s18 = ssub.s32 %s10, %s17
      %p19 = scmp.eq.s32.totalorder %s18, 0
      %s21 = sadd.s32 %s20, 1
      %s22 = scalar_select %p19, %s20, %s21
      %p25 = pneg %p19
      %p26 = scmp.eq.s32.totalorder %s10, 1
      %p27 = por %p25, %p26
      %p28 = scmp.ne.s32.totalorder %s20, %s23
      %p29 = scmp.eq.s32.totalorder %s10, 0
      %p30 = por %p28, %p29
      %p31 = scmp.ne.s32.totalorder %s20, %s23
      %p32 = scmp.eq.s32.totalorder %s15, 1
      %p33 = por %p31, %p32
      %p34 = scmp.ne.s32.totalorder %s23, %s24
      %p35 = scmp.eq.s32.totalorder %s15, 0
      %p36 = por %p34, %p35
      %p37 = scmp.ne.s32.totalorder %s23, %s24
      %p38 = scmp.eq.s32.totalorder %s16, 1
      %p39 = por %p37, %p38
      %p41 = scmp.ne.s32.totalorder %s24, %s40
      %p42 = scmp.eq.s32.totalorder %s16, 0
      %p43 = por %p41, %p42
      %s44 = ssub.s32 %s10, %s17
      %p45 = scmp.eq.s32.totalorder %s44, 0
      %s47 = sadd.s32 %s46, 1
      %s48 = scalar_select %p45, %s46, %s47
      %p51 = pneg %p45
      %p52 = scmp.eq.s32.totalorder %s10, 1
      %p53 = por %p51, %p52
      %p54 = scmp.ne.s32.totalorder %s46, %s49
      %p55 = scmp.eq.s32.totalorder %s10, 0
      %p56 = por %p54, %p55
      %p57 = scmp.ne.s32.totalorder %s46, %s49
      %p58 = scmp.eq.s32.totalorder %s15, 1
      %p59 = por %p57, %p58
      %p60 = scmp.ne.s32.totalorder %s49, %s50
      %p61 = scmp.eq.s32.totalorder %s15, 0
      %p62 = por %p60, %p61
      %p63 = scmp.ne.s32.totalorder %s49, %s50
      %p64 = scmp.eq.s32.totalorder %s16, 1
      %p65 = por %p63, %p64
      %p67 = scmp.ne.s32.totalorder %s50, %s66
      %p68 = scmp.eq.s32.totalorder %s16, 0
      %p69 = por %p67, %p68
      %s70 = ssub.s32 %s10, %s17
      %p71 = scmp.eq.s32.totalorder %s70, 0
      %s73 = sadd.s32 %s72, 1
      %s74 = scalar_select %p71, %s72, %s73
      %p77 = pneg %p71
      %p78 = scmp.eq.s32.totalorder %s10, 1
      %p79 = por %p77, %p78
      %p80 = scmp.ne.s32.totalorder %s72, %s75
      %p81 = scmp.eq.s32.totalorder %s10, 0
      %p82 = por %p80, %p81
      %p83 = scmp.ne.s32.totalorder %s72, %s75
      %p84 = scmp.eq.s32.totalorder %s15, 1
      %p85 = por %p83, %p84
      %p86 = scmp.ne.s32.totalorder %s75, %s76
      %p87 = scmp.eq.s32.totalorder %s15, 0
      %p88 = por %p86, %p87
      %p89 = scmp.ne.s32.totalorder %s75, %s76
      %p90 = scmp.eq.s32.totalorder %s16, 1
      %p91 = por %p89, %p90
      %p93 = scmp.ne.s32.totalorder %s76, %s92
      %p94 = scmp.eq.s32.totalorder %s16, 0
      %p95 = por %p93, %p94
      %s96 = ssub.s32 %s10, %s17
      %p97 = scmp.eq.s32.totalorder %s96, 0
      %s99 = sadd.s32 %s98, 1
      %s100 = scalar_select %p97, %s98, %s99
      %p103 = pneg %p97
      %p104 = scmp.eq.s32.totalorder %s10, 1
      %p105 = por %p103, %p104
      %p106 = scmp.ne.s32.totalorder %s98, %s101
      %p107 = scmp.eq.s32.totalorder %s10, 0
      %p108 = por %p106, %p107
      %p109 = scmp.ne.s32.totalorder %s98, %s101
      %p110 = scmp.eq.s32.totalorder %s15, 1
      %p111 = por %p109, %p110
      %p112 = scmp.ne.s32.totalorder %s101, %s102
      %p113 = scmp.eq.s32.totalorder %s15, 0
      %p114 = por %p112, %p113
      %p115 = scmp.ne.s32.totalorder %s101, %s102
      %p116 = scmp.eq.s32.totalorder %s16, 1
      %p117 = por %p115, %p116
      %p119 = scmp.ne.s32.totalorder %s102, %s118
      %p120 = scmp.eq.s32.totalorder %s16, 0
      %p121 = por %p119, %p120
      %p122 = scmp.le.s32.totalorder 1, %s10
      %p123 = scmp.lt.s32.totalorder %s10, 3
      %p124 = pnand %p122, %p123
      %p125 = pneg %p124
      // Predicated region
      $region9: #{_lambda_.48} parent=5 // pred_check
        _
      $region10: #{_lambda_.48} parent=5 // pred_check_branch
        %127 = sbr.rel (%p124) target = $region12
      $region11: #{_lambda_.48} parent=5 // pred_region
        %s128 = ssub.s32 %s10, 1
      $region12: #{_lambda_.48} parent=5 // pred_fallthru
        _
      %p129 = scmp.lt.s32.totalorder %s10, 2
      // Predicated region
      $region13: #{_lambda_.48} parent=5 // pred_check
        %p130 = pneg %p129
      $region14: #{_lambda_.48} parent=5 // pred_check_branch
        %132 = sbr.rel (%p130) target = $region16
      $region15: #{_lambda_.48} parent=5 // pred_region
        // Predicated region
        $region17: #{_lambda_.48} parent=15 // pred_check
          %p133 = pneg %p30
        $region18: #{_lambda_.48} parent=15 // pred_check_branch
          %135 = sbr.rel (%p133) target = $region20
        $region19: #{_lambda_.48} parent=15 // pred_region
          %s136 = sand.u32 %s20, 1
          %s137 = sand.u32 %s20, 1
          %s138 = smul.addr %s137, 72
          %s139 = scalar_lea.vmem [#allocation2], %s138
          %s140 = smul.u32 2, %s10
          %s141 = smul.addr %s140, 4
          %s142 = scalar_lea.vmem %s0, %s141
          // Predicated region
          $region21: #{_lambda_.48} parent=19 // pred_check
            _
          $region22: #{_lambda_.48} parent=19 // pred_check_branch
            %144 = sbr.rel (0) target = $region24
          $region23: #{_lambda_.48} parent=19 // pred_region
            // Predicated region
            $region25: #{_lambda_.48} parent=23 // pred_check
              _
            $region26: #{_lambda_.48} parent=23 // pred_check_branch
              %146 = sbr.rel (0) target = $region28
            $region27: #{_lambda_.48} parent=23 // pred_region
              // Predicated region
              $region40: #{_lambda_.48} parent=27 // pred_check
                _
              $region41: #{_lambda_.48} parent=27 // pred_check_branch
                %178 = sbr.rel (0) target = $region43
              $region42: #{_lambda_.48} parent=27 // pred_region
                loop: start=0, step=1, limit=1
                $region44: #{_lambda_.48} parent=42 // loop_pre_header
                  _
                $region45: #{_lambda_.48} parent=42 // loop_header
                  %s180 = sphi 0, %s184
                  %p181 = scmp.ge.s32.totalorder %s180, 1
                  %s185 = sphi %s142, %s142
                  %s186 = sphi %s139, %s139
                $region46: #{_lambda_.48} parent=42 // loop_header_branch
                  %183 = sbr.rel (%p181) target = $region50
                $region47: #{_lambda_.48} parent=42 // loop_body
                  %v187 = vld [vmem:[%s185] sm:$0xff]
                  %188 = vst [vmem:[%s186] sm:$0xff] %v187
                  %v189 = vld [vmem:[%s185 + $0x10] sm:$0xff]
                  %190 = vst [vmem:[%s186 + $0x8] sm:$0xff] %v189
                  %v191 = vld [vmem:[%s185 + $0x20] sm:$0xff]
                  %192 = vst [vmem:[%s186 + $0x10] sm:$0xff] %v191
                  %v193 = vld [vmem:[%s185 + $0x30] sm:$0xff]
                  %194 = vst [vmem:[%s186 + $0x18] sm:$0xff] %v193
                  %v195 = vld [vmem:[%s185 + $0x40] sm:$0xff]
                  %196 = vst [vmem:[%s186 + $0x20] sm:$0xff] %v195
                  %v197 = vld [vmem:[%s185 + $0x50] sm:$0xff]
                  %198 = vst [vmem:[%s186 + $0x28] sm:$0xff] %v197
                  %v199 = vld [vmem:[%s185 + $0x60] sm:$0xff]
                  %200 = vst [vmem:[%s186 + $0x30] sm:$0xff] %v199
                  %v201 = vld [vmem:[%s185 + $0x70] sm:$0xff]
                  %202 = vst [vmem:[%s186 + $0x38] sm:$0xff] %v201
                  %v203 = vld [vmem:[%s185 + $0x80] sm:$0xff]
                  %204 = vst [vmem:[%s186 + $0x40] sm:$0xff] %v203
                $region48: #{_lambda_.48} parent=42 // loop_footer
                  %s184 = sadd.s32 1, %s180
                $region49: #{_lambda_.48} parent=42 // loop_footer_branch
                  %179 = sbr.rel target = $region45
                $region50: #{_lambda_.48} parent=42 // loop_exit
                  _
              $region43: #{_lambda_.48} parent=27 // pred_fallthru
                _
              // Predicated region
              $region51: #{_lambda_.48} parent=27 // pred_check
                _
              $region52: #{_lambda_.48} parent=27 // pred_check_branch
                %206 = sbr.rel target = $region54
              $region53: #{_lambda_.48} parent=27 // pred_region
                _
              $region54: #{_lambda_.48} parent=27 // pred_fallthru
                _
            $region28: #{_lambda_.48} parent=23 // pred_fallthru
              _
            // Predicated region
            $region29: #{_lambda_.48} parent=23 // pred_check
              _
            $region30: #{_lambda_.48} parent=23 // pred_check_branch
              %148 = sbr.rel target = $region32
            $region31: #{_lambda_.48} parent=23 // pred_region
              %s150 = ssub.s32 256, 1
              loop: start=0, step=1, limit=1
              $region33: #{_lambda_.48} parent=31 // loop_pre_header
                _
              $region34: #{_lambda_.48} parent=31 // loop_header
                %s152 = sphi 0, %s156
                %p153 = scmp.ge.s32.totalorder %s152, 1
                %s157 = sphi %s142, %s142
                %s158 = sphi %s139, %s139
              $region35: #{_lambda_.48} parent=31 // loop_header_branch
                %155 = sbr.rel (%p153) target = $region39
              $region36: #{_lambda_.48} parent=31 // loop_body
                %v159 = vld [vmem:[%s157] sm:%s150]
                %160 = vst [vmem:[%s158] sm:%s150] %v159
                %v161 = vld [vmem:[%s157 + $0x10] sm:%s150]
                %162 = vst [vmem:[%s158 + $0x8] sm:%s150] %v161
                %v163 = vld [vmem:[%s157 + $0x20] sm:%s150]
                %164 = vst [vmem:[%s158 + $0x10] sm:%s150] %v163
                %v165 = vld [vmem:[%s157 + $0x30] sm:%s150]
                %166 = vst [vmem:[%s158 + $0x18] sm:%s150] %v165
                %v167 = vld [vmem:[%s157 + $0x40] sm:%s150]
                %168 = vst [vmem:[%s158 + $0x20] sm:%s150] %v167
                %v169 = vld [vmem:[%s157 + $0x50] sm:%s150]
                %170 = vst [vmem:[%s158 + $0x28] sm:%s150] %v169
                %v171 = vld [vmem:[%s157 + $0x60] sm:%s150]
                %172 = vst [vmem:[%s158 + $0x30] sm:%s150] %v171
                %v173 = vld [vmem:[%s157 + $0x70] sm:%s150]
                %174 = vst [vmem:[%s158 + $0x38] sm:%s150] %v173
                %v175 = vld [vmem:[%s157 + $0x80] sm:%s150]
                %176 = vst [vmem:[%s158 + $0x40] sm:%s150] %v175
              $region37: #{_lambda_.48} parent=31 // loop_footer
                %s156 = sadd.s32 1, %s152
              $region38: #{_lambda_.48} parent=31 // loop_footer_branch
                %151 = sbr.rel target = $region34
              $region39: #{_lambda_.48} parent=31 // loop_exit
                _
            $region32: #{_lambda_.48} parent=23 // pred_fallthru
              _
          $region24: #{_lambda_.48} parent=19 // pred_fallthru
            _
          %207 = vnop
        $region20: #{_lambda_.48} parent=15 // pred_fallthru
          _
        // Predicated region
        $region55: #{_lambda_.48} parent=15 // pred_check
          %p208 = pneg %p56
        $region56: #{_lambda_.48} parent=15 // pred_check_branch
          %210 = sbr.rel (%p208) target = $region58
        $region57: #{_lambda_.48} parent=15 // pred_region
          %s211 = smul.u32 2, %s10
          %p212 = scmp.lt.s32.totalorder %s211, 3
          %s213 = scalar_select %p212, %s211, 3
          %s214 = scalar_lea.vmem %s1, %s213
          %s215 = smul.u32 2, %s10
        $region58: #{_lambda_.48} parent=15 // pred_fallthru
          _
      $region16: #{_lambda_.48} parent=5 // pred_fallthru
        _
      %p216 = scmp.le.s32.totalorder 1, %s10
      %p217 = scmp.lt.s32.totalorder %s10, 3
      %p218 = pnand %p216, %p217
      %p219 = pneg %p218
      // Predicated region
      $region59: #{_lambda_.48} parent=5 // pred_check
        _
      $region60: #{_lambda_.48} parent=5 // pred_check_branch
        %221 = sbr.rel (%p218) target = $region62
      $region61: #{_lambda_.48} parent=5 // pred_region
        %s222 = ssub.s32 %s10, 1
        %s223 = sand.u32 %s23, 1
        %s224 = sand.u32 %s23, 1
        %s225 = smul.addr %s224, 72
        %s226 = scalar_lea.vmem [#allocation2], %s225
        // Predicated region
        $region63: #{_lambda_.48} parent=61 // pred_check
          %p227 = pneg %p36
        $region64: #{_lambda_.48} parent=61 // pred_check_branch
          %229 = sbr.rel (%p227) target = $region66
        $region65: #{_lambda_.48} parent=61 // pred_region
          _
        $region66: #{_lambda_.48} parent=61 // pred_fallthru
          _
        %s230 = sand.u32 %s23, 1
        %s231 = sand.u32 %s23, 1
        %s232 = smul.addr %s231, 72
        %s233 = scalar_lea.vmem [#allocation2], %s232
        %p234 = pneg %p36
        %p235 = pneg %p33
        %s236 = smul.u32 2, %s15
        %p237 = scmp.lt.s32.totalorder %s236, 3
        %s238 = scalar_select %p237, %s236, 3
        %s239 = scalar_lea.vmem %s1, %s238
        %p240 = pneg %p62
        %p241 = pneg %p59
        %p242 = pneg %p88
        %p243 = pneg %p85
        %s244 = smul.u32 2, %s15
        %p245 = scmp.lt.s32.totalorder %s244, 3
        %s246 = scalar_select %p245, %s244, 3
        %s247 = smul.addr %s246, 4
        %s248 = scalar_lea.vmem %s2, %s247
        %p249 = pneg %p114
        %p250 = pneg %p111
        %s251 = smul.u32 2, %s15
        %p252 = scmp.lt.s32.totalorder %s251, 3
        %s253 = scalar_select %p252, %s251, 3
        %s254 = smul.addr %s253, 4
        %s255 = scalar_lea.vmem %s3, %s254
        %s256 = smul.u32 2, %s15
        %s257 = smul.u32 2, %s15
        %p258 = scmp.lt.s32.totalorder %s257, 3
        %s259 = scalar_select %p258, %s257, 3
        %s260 = scalar_lea.vmem %s1, %s259
        %s261 = smul.u32 2, %s15
        %s262 = smul.u32 2, %s15
        %p263 = scmp.lt.s32.totalorder %s262, 3
        %s264 = scalar_select %p263, %s262, 3
        %s265 = smul.addr %s264, 4
        %s266 = scalar_lea.vmem %s2, %s265
        %s267 = smul.u32 2, %s15
        %s268 = smul.u32 2, %s15
        %p269 = scmp.lt.s32.totalorder %s268, 3
        %s270 = scalar_select %p269, %s268, 3
        %s271 = smul.addr %s270, 4
        %s272 = scalar_lea.vmem %s3, %s271
        %s273 = smul.u32 2, %s15
        %v274 = vld [vmem:[%s226] sm:$0xff]
        %v275 = vld [vmem:[%s226 + $0x8] sm:$0xff]
        %v276 = vld [vmem:[%s226 + $0x10] sm:$0xff]
        %v277 = vld [vmem:[%s226 + $0x18] sm:$0xff]
        %v278 = vld [vmem:[%s226 + $0x20] sm:$0xff]
        %v279 = vld [vmem:[%s226 + $0x28] sm:$0xff]
        %v280 = vld [vmem:[%s226 + $0x30] sm:$0xff]
        %v281 = vld [vmem:[%s226 + $0x38] sm:$0xff]
        %v282 = vld [vmem:[%s226 + $0x40] sm:$0xff]
        %v283 = vmax.f32 %v274, %v278
        %v284 = vmax.f32 %v275, %v279
        %v285 = vmax.f32 %v276, %v280
        %v286 = vmax.f32 %v277, %v281
        %v287 = vmax.f32 %v283, %v282
        %v288 = vmax.f32 %v287, %v284
        %v289 = vmax.f32 %v285, %v286
        %v290 = vmax.f32 %v288, %v289
        %291 = vst [vmem:[%s266] sm:$0xff] %v290
        %vm292 = vweird.f32 %v274
        %vm293 = vweird.f32 %v275
        %vm294 = vweird.f32 %v276
        %vm295 = vweird.f32 %v277
        %vm296 = vweird.f32 %v278
        %vm297 = vweird.f32 %v279
        %vm298 = vweird.f32 %v280
        %vm299 = vweird.f32 %v281
        %vm300 = vweird.f32 %v282
        %vm301 = vmxor %vm292, 1
        %vm302 = vmxor %vm293, 1
        %vm303 = vmxor %vm294, 1
        %vm304 = vmxor %vm295, 1
        %vm305 = vmxor %vm296, 1
        %vm306 = vmxor %vm297, 1
        %vm307 = vmxor %vm298, 1
        %vm308 = vmxor %vm299, 1
        %vm309 = vmxor %vm300, 1
        %v310 = vsel %vm301, %v274, 0.0
        %v311 = vsel %vm302, %v275, 0.0
        %v312 = vsel %vm303, %v276, 0.0
        %v313 = vsel %vm304, %v277, 0.0
        %v314 = vsel %vm305, %v278, 0.0
        %v315 = vsel %vm306, %v279, 0.0
        %v316 = vsel %vm307, %v280, 0.0
        %v317 = vsel %vm308, %v281, 0.0
        %v318 = vsel %vm309, %v282, 0.0
        %v328 = vcombine.high %v310, %v310
        %v329 = vcombine.high %v311, %v311
        %v330 = vcombine.high %v312, %v312
        %v331 = vcombine.high %v313, %v313
        %v332 = vcombine.high %v314, %v314
        %v333 = vcombine.high %v315, %v315
        %v334 = vcombine.high %v316, %v316
        %v335 = vcombine.high %v317, %v317
        %v336 = vcombine.high %v318, %v318
        %vm346 = vcmask 1043456
        %v347 = vsel %vm346, %v310, 0.0
        %v348 = vsel %vm346, %v311, 0.0
        %v349 = vadd.f32 %v347, %v348
        %v350 = vsel %vm346, %v312, 0.0
        %v351 = vadd.f32 %v349, %v350
        %v352 = vsel %vm346, %v313, 0.0
        %v353 = vadd.f32 %v351, %v352
        %v354 = vsel %vm346, %v314, 0.0
        %v355 = vadd.f32 %v353, %v354
        %v356 = vsel %vm346, %v315, 0.0
        %v357 = vadd.f32 %v355, %v356
        %v358 = vsel %vm346, %v316, 0.0
        %v359 = vadd.f32 %v357, %v358
        %v360 = vsel %vm346, %v317, 0.0
        %v361 = vadd.f32 %v359, %v360
        %v362 = vsel %vm346, %v318, 0.0
        %v363 = vadd.f32 %v361, %v362
        %v364 = vsel %vm346, %v328, 0.0
        %v365 = vsel %vm346, %v329, 0.0
        %v366 = vadd.f32 %v364, %v365
        %v367 = vsel %vm346, %v330, 0.0
        %v368 = vadd.f32 %v366, %v367
        %v369 = vsel %vm346, %v331, 0.0
        %v370 = vadd.f32 %v368, %v369
        %v371 = vsel %vm346, %v332, 0.0
        %v372 = vadd.f32 %v370, %v371
        %v373 = vsel %vm346, %v333, 0.0
        %v374 = vadd.f32 %v372, %v373
        %v375 = vsel %vm346, %v334, 0.0
        %v376 = vadd.f32 %v374, %v375
        %v377 = vsel %vm346, %v335, 0.0
        %v378 = vadd.f32 %v376, %v377
        %v379 = vsel %vm346, %v336, 0.0
        %v380 = vadd.f32 %v378, %v379
        %v381 = vld [vmem:[%s260] sm:$0x3]
        %v383 = vlaneseq
        %v384 = vshrl.u32 %v383, 7
        %v385 = vsub.s32 0, %v384
        %v386 = vrot.slane %v381, %v385
        %v387 = vlaneseq
        %v388 = vshrl.u32 %v387, 7
        %v389 = vsub.s32 1, %v388
        %v390 = vrot.slane %v381, %v389
        %v393 = vmul.f32 %v363, %v386
        %v394 = vmul.f32 %v380, %v390
        %v397 = vcombine.low %v393, %v394
        %399 = vst [vmem:[%s272] sm:$0xff] %v397
        %s400 = smul.u32 2, %s15
        %p401 = scmp.lt.s32.totalorder %s400, 3
        %s402 = scalar_select %p401, %s400, 3
        %s403 = smul.addr %s402, 4
        %s404 = scalar_lea.vmem %s2, %s403
        %s405 = smul.u32 2, %s15
        %p406 = scmp.lt.s32.totalorder %s405, 3
        %s407 = scalar_select %p406, %s405, 3
        %s408 = smul.addr %s407, 4
        %s409 = scalar_lea.vmem %s3, %s408
        // Predicated region
        $region67: #{_lambda_.48} parent=61 // pred_check
          %p410 = pneg %p85
        $region68: #{_lambda_.48} parent=61 // pred_check_branch
          %412 = sbr.rel (%p410) target = $region70
        $region69: #{_lambda_.48} parent=61 // pred_region
          %s413 = smul.u32 2, %s15
        $region70: #{_lambda_.48} parent=61 // pred_fallthru
          _
        // Predicated region
        $region71: #{_lambda_.48} parent=61 // pred_check
          %p414 = pneg %p111
        $region72: #{_lambda_.48} parent=61 // pred_check_branch
          %416 = sbr.rel (%p414) target = $region74
        $region73: #{_lambda_.48} parent=61 // pred_region
          %s417 = smul.u32 2, %s15
        $region74: #{_lambda_.48} parent=61 // pred_fallthru
          _
      $region62: #{_lambda_.48} parent=5 // pred_fallthru
        _
      %p418 = scmp.le.s32.totalorder 2, %s10
      // Predicated region
      $region75: #{_lambda_.48} parent=5 // pred_check
        %p419 = pneg %p418
      $region76: #{_lambda_.48} parent=5 // pred_check_branch
        %421 = sbr.rel (%p419) target = $region78
      $region77: #{_lambda_.48} parent=5 // pred_region
        %s422 = ssub.s32 %s10, 2
        // Predicated region
        $region79: #{_lambda_.48} parent=77 // pred_check
          %p423 = pneg %p91
        $region80: #{_lambda_.48} parent=77 // pred_check_branch
          %425 = sbr.rel (%p423) target = $region82
        $region81: #{_lambda_.48} parent=77 // pred_region
          %s426 = smul.u32 2, %s16
          %p427 = scmp.lt.s32.totalorder %s426, 3
          %s428 = scalar_select %p427, %s426, 3
          %s429 = smul.addr %s428, 4
          %s430 = scalar_lea.vmem %s2, %s429
        $region82: #{_lambda_.48} parent=77 // pred_fallthru
          _
        // Predicated region
        $region83: #{_lambda_.48} parent=77 // pred_check
          %p431 = pneg %p117
        $region84: #{_lambda_.48} parent=77 // pred_check_branch
          %433 = sbr.rel (%p431) target = $region86
        $region85: #{_lambda_.48} parent=77 // pred_region
          %s434 = smul.u32 2, %s16
          %p435 = scmp.lt.s32.totalorder %s434, 3
          %s436 = scalar_select %p435, %s434, 3
          %s437 = smul.addr %s436, 4
          %s438 = scalar_lea.vmem %s3, %s437
        $region86: #{_lambda_.48} parent=77 // pred_fallthru
          _
      $region78: #{_lambda_.48} parent=5 // pred_fallthru
        _
    $region6: #{_lambda_.48} parent=1 // loop_footer
      %s14 = sadd.s32 1, %s10
    $region7: #{_lambda_.48} parent=1 // loop_footer_branch
      %9 = sbr.rel target = $region3
    $region8: #{_lambda_.48} parent=1 // loop_exit
      _

// kernel: _lambda_.59
$region0: #{_lambda_.59}
  #allocation0 [shape = 'u32[]', space=smem, size = 0x4, offset = 0x4, fixed_abs, tag = 'smem constant byte address 0x4 - core index']
  #allocation1 [shape = 'u32[144,128]{1,0:T(1,128)}', space=vmem, size = 0x12000, scoped, tag = 'internal scratch']
  %s0 = inlined_call_operand.vmem [shape: bf16[20,512], index: 0, kind: input, shape index: {}]
  %s1 = inlined_call_operand.vmem [shape: bf16[16,20], index: 1, kind: input, shape index: {}]
  %s2 = inlined_call_operand.vmem [shape: f32[16,512], index: 2, kind: output, shape index: {}]
  %s3 = sld [smem:[#allocation0]]
  $region98: #{_lambda_.59} parent=0
    _
  %s5 = ssub.s32 1, %s3
  %s6 = scalar_select 0, %s5, %s3
  $region1: #{_lambda_.59} parent=0
    #allocation2 [shape = 'u8[24576]{0}', space=vmem, size = 0x6000, scoped, tag = 'input window, operand 0']
    #allocation3 [shape = 'u8[32768]{0}', space=vmem, size = 0x8000, scoped, tag = 'output window, operand 0']
    loop: start=0, step=1, limit=4
    $region2: #{_lambda_.59} parent=1 // loop_pre_header
      _
    $region3: #{_lambda_.59} parent=1 // loop_header
      %s8 = sphi 0, %s12
      %p9 = scmp.ge.s32.totalorder %s8, 4
      %s18 = sphi 0, %s20
      %s21 = sphi 0, %s18
      %s22 = sphi 0, %s21
      %s38 = sphi 0, %s22
      %s42 = sphi 0, %s42
      %s44 = sphi 0, %s42
      %s45 = sphi 0, %s44
      %s59 = sphi 0, %s45
      %s65 = sphi 0, %s67
      %s68 = sphi 0, %s65
      %s69 = sphi 0, %s68
      %s85 = sphi 0, %s69
    $region4: #{_lambda_.59} parent=1 // loop_header_branch
      %11 = sbr.rel (%p9) target = $region8
    $region5: #{_lambda_.59} parent=1 // loop_body
      %s13 = ssub.s32 %s8, 1
      %s14 = ssub.s32 %s8, 2
      %s15 = sadd.s32 %s8, 1
      %s16 = ssub.s32 %s8, %s15
      %p17 = scmp.eq.s32.totalorder %s16, 0
      %s19 = sadd.s32 %s18, 1
      %s20 = scalar_select %p17, %s18, %s19
      %p23 = pneg %p17
      %p24 = scmp.eq.s32.totalorder %s8, 1
      %p25 = por %p23, %p24
      %p26 = scmp.ne.s32.totalorder %s18, %s21
      %p27 = scmp.eq.s32.totalorder %s8, 0
      %p28 = por %p26, %p27
      %p29 = scmp.ne.s32.totalorder %s18, %s21
      %p30 = scmp.eq.s32.totalorder %s13, 1
      %p31 = por %p29, %p30
      %p32 = scmp.ne.s32.totalorder %s21, %s22
      %p33 = scmp.eq.s32.totalorder %s13, 0
      %p34 = por %p32, %p33
      %p35 = scmp.ne.s32.totalorder %s21, %s22
      %p36 = scmp.eq.s32.totalorder %s14, 1
      %p37 = por %p35, %p36
      %p39 = scmp.ne.s32.totalorder %s22, %s38
      %p40 = scmp.eq.s32.totalorder %s14, 0
      %p41 = por %p39, %p40
      %s43 = sadd.s32 %s42, 1
      %p46 = scmp.eq.s32.totalorder %s8, 1
      %p47 = scmp.ne.s32.totalorder %s42, %s44
      %p48 = scmp.eq.s32.totalorder %s8, 0
      %p49 = por %p47, %p48
      %p50 = scmp.ne.s32.totalorder %s42, %s44
      %p51 = scmp.eq.s32.totalorder %s13, 1
      %p52 = por %p50, %p51
      %p53 = scmp.ne.s32.totalorder %s44, %s45
      %p54 = scmp.eq.s32.totalorder %s13, 0
      %p55 = por %p53, %p54
      %p56 = scmp.ne.s32.totalorder %s44, %s45
      %p57 = scmp.eq.s32.totalorder %s14, 1
      %p58 = por %p56, %p57
      %p60 = scmp.ne.s32.totalorder %s45, %s59
      %p61 = scmp.eq.s32.totalorder %s14, 0
      %p62 = por %p60, %p61
      %s63 = ssub.s32 %s8, %s15
      %p64 = scmp.eq.s32.totalorder %s63, 0
      %s66 = sadd.s32 %s65, 1
      %s67 = scalar_select %p64, %s65, %s66
      %p70 = pneg %p64
      %p71 = scmp.eq.s32.totalorder %s8, 1
      %p72 = por %p70, %p71
      %p73 = scmp.ne.s32.totalorder %s65, %s68
      %p74 = scmp.eq.s32.totalorder %s8, 0
      %p75 = por %p73, %p74
      %p76 = scmp.ne.s32.totalorder %s65, %s68
      %p77 = scmp.eq.s32.totalorder %s13, 1
      %p78 = por %p76, %p77
      %p79 = scmp.ne.s32.totalorder %s68, %s69
      %p80 = scmp.eq.s32.totalorder %s13, 0
      %p81 = por %p79, %p80
      %p82 = scmp.ne.s32.totalorder %s68, %s69
      %p83 = scmp.eq.s32.totalorder %s14, 1
      %p84 = por %p82, %p83
      %p86 = scmp.ne.s32.totalorder %s69, %s85
      %p87 = scmp.eq.s32.totalorder %s14, 0
      %p88 = por %p86, %p87
      %p89 = scmp.le.s32.totalorder 1, %s8
      %p90 = scmp.lt.s32.totalorder %s8, 3
      %p91 = pnand %p89, %p90
      %p92 = pneg %p91
      // Predicated region
      $region9: #{_lambda_.59} parent=5 // pred_check
        _
      $region10: #{_lambda_.59} parent=5 // pred_check_branch
        %94 = sbr.rel (%p91) target = $region12
      $region11: #{_lambda_.59} parent=5 // pred_region
        %s95 = ssub.s32 %s8, 1
        // Predicated region
        $region13: #{_lambda_.59} parent=11 // pred_check
          %p96 = pneg %p55
        $region14: #{_lambda_.59} parent=11 // pred_check_branch
          %98 = sbr.rel (%p96) target = $region16
        $region15: #{_lambda_.59} parent=11 // pred_region
          _
        $region16: #{_lambda_.59} parent=11 // pred_fallthru
          _
      $region12: #{_lambda_.59} parent=5 // pred_fallthru
        _
      %p99 = scmp.lt.s32.totalorder %s8, 2
      // Predicated region
      $region17: #{_lambda_.59} parent=5 // pred_check
        %p100 = pneg %p99
      $region18: #{_lambda_.59} parent=5 // pred_check_branch
        %102 = sbr.rel (%p100) target = $region20
      $region19: #{_lambda_.59} parent=5 // pred_region
        // Predicated region
        $region21: #{_lambda_.59} parent=19 // pred_check
          %p103 = pneg %p28
        $region22: #{_lambda_.59} parent=19 // pred_check_branch
          %105 = sbr.rel (%p103) target = $region24
        $region23: #{_lambda_.59} parent=19 // pred_region
          %s106 = sand.u32 %s18, 1
          %s107 = sand.u32 %s18, 1
          %s108 = smul.addr %s107, 24
          %s109 = scalar_lea.vmem [#allocation2], %s108
          %s110 = smul.u32 2, %s8
          %s111 = smul.addr %s110, 4
          %s112 = scalar_lea.vmem %s0, %s111
          // Predicated region
          $region25: #{_lambda_.59} parent=23 // pred_check
            _
          $region26: #{_lambda_.59} parent=23 // pred_check_branch
            %114 = sbr.rel (0) target = $region28
          $region27: #{_lambda_.59} parent=23 // pred_region
            // Predicated region
            $region29: #{_lambda_.59} parent=27 // pred_check
              _
            $region30: #{_lambda_.59} parent=27 // pred_check_branch
              %116 = sbr.rel (0) target = $region32
            $region31: #{_lambda_.59} parent=27 // pred_region
              // Predicated region
              $region44: #{_lambda_.59} parent=31 // pred_check
                _
              $region45: #{_lambda_.59} parent=31 // pred_check_branch
                %136 = sbr.rel (0) target = $region47
              $region46: #{_lambda_.59} parent=31 // pred_region
                loop: start=0, step=1, limit=1
                $region48: #{_lambda_.59} parent=46 // loop_pre_header
                  _
                $region49: #{_lambda_.59} parent=46 // loop_header
                  %s138 = sphi 0, %s142
                  %p139 = scmp.ge.s32.totalorder %s138, 1
                  %s143 = sphi %s112, %s112
                  %s144 = sphi %s109, %s109
                $region50: #{_lambda_.59} parent=46 // loop_header_branch
                  %141 = sbr.rel (%p139) target = $region54
                $region51: #{_lambda_.59} parent=46 // loop_body
                  %v145 = vld [vmem:[%s143] sm:$0xff]
                  %146 = vst [vmem:[%s144] sm:$0xff] %v145
                  %v147 = vld [vmem:[%s143 + $0x10] sm:$0xff]
                  %148 = vst [vmem:[%s144 + $0x8] sm:$0xff] %v147
                  %v149 = vld [vmem:[%s143 + $0x20] sm:$0xff]
                  %150 = vst [vmem:[%s144 + $0x10] sm:$0xff] %v149
                $region52: #{_lambda_.59} parent=46 // loop_footer
                  %s142 = sadd.s32 1, %s138
                $region53: #{_lambda_.59} parent=46 // loop_footer_branch
                  %137 = sbr.rel target = $region49
                $region54: #{_lambda_.59} parent=46 // loop_exit
                  _
              $region47: #{_lambda_.59} parent=31 // pred_fallthru
                _
              // Predicated region
              $region55: #{_lambda_.59} parent=31 // pred_check
                _
              $region56: #{_lambda_.59} parent=31 // pred_check_branch
                %152 = sbr.rel target = $region58
              $region57: #{_lambda_.59} parent=31 // pred_region
                _
              $region58: #{_lambda_.59} parent=31 // pred_fallthru
                _
            $region32: #{_lambda_.59} parent=27 // pred_fallthru
              _
            // Predicated region
            $region33: #{_lambda_.59} parent=27 // pred_check
              _
            $region34: #{_lambda_.59} parent=27 // pred_check_branch
              %118 = sbr.rel target = $region36
            $region35: #{_lambda_.59} parent=27 // pred_region
              %s120 = ssub.s32 256, 1
              loop: start=0, step=1, limit=1
              $region37: #{_lambda_.59} parent=35 // loop_pre_header
                _
              $region38: #{_lambda_.59} parent=35 // loop_header
                %s122 = sphi 0, %s126
                %p123 = scmp.ge.s32.totalorder %s122, 1
                %s127 = sphi %s112, %s112
                %s128 = sphi %s109, %s109
              $region39: #{_lambda_.59} parent=35 // loop_header_branch
                %125 = sbr.rel (%p123) target = $region43
              $region40: #{_lambda_.59} parent=35 // loop_body
                %v129 = vld [vmem:[%s127] sm:%s120]
                %130 = vst [vmem:[%s128] sm:%s120] %v129
                %v131 = vld [vmem:[%s127 + $0x10] sm:%s120]
                %132 = vst [vmem:[%s128 + $0x8] sm:%s120] %v131
                %v133 = vld [vmem:[%s127 + $0x20] sm:%s120]
                %134 = vst [vmem:[%s128 + $0x10] sm:%s120] %v133
              $region41: #{_lambda_.59} parent=35 // loop_footer
                %s126 = sadd.s32 1, %s122
              $region42: #{_lambda_.59} parent=35 // loop_footer_branch
                %121 = sbr.rel target = $region38
              $region43: #{_lambda_.59} parent=35 // loop_exit
                _
            $region36: #{_lambda_.59} parent=27 // pred_fallthru
              _
          $region28: #{_lambda_.59} parent=23 // pred_fallthru
            _
          %153 = vnop
        $region24: #{_lambda_.59} parent=19 // pred_fallthru
          _
      $region20: #{_lambda_.59} parent=5 // pred_fallthru
        _
      %p154 = scmp.le.s32.totalorder 1, %s8
      %p155 = scmp.lt.s32.totalorder %s8, 3
      %p156 = pnand %p154, %p155
      %p157 = pneg %p156
      // Predicated region
      $region59: #{_lambda_.59} parent=5 // pred_check
        _
      $region60: #{_lambda_.59} parent=5 // pred_check_branch
        %159 = sbr.rel (%p156) target = $region62
      $region61: #{_lambda_.59} parent=5 // pred_region
        %s160 = ssub.s32 %s8, 1
        %s161 = sand.u32 %s21, 1
        %s162 = sand.u32 %s21, 1
        %s163 = smul.addr %s162, 24
        %s164 = scalar_lea.vmem [#allocation2], %s163
        // Predicated region
        $region63: #{_lambda_.59} parent=61 // pred_check
          %p165 = pneg %p34
        $region64: #{_lambda_.59} parent=61 // pred_check_branch
          %167 = sbr.rel (%p165) target = $region66
        $region65: #{_lambda_.59} parent=61 // pred_region
          _
        $region66: #{_lambda_.59} parent=61 // pred_fallthru
          _
        %s168 = sand.u32 %s21, 1
        %s169 = sand.u32 %s21, 1
        %s170 = smul.addr %s169, 24
        %s171 = scalar_lea.vmem [#allocation2], %s170
        %p172 = pneg %p34
        %p173 = pneg %p31
        %p174 = pneg %p55
        %p175 = pneg %p52
        %p176 = pneg %p81
        %p177 = pneg %p78
        %s178 = sand.u32 %s68, 1
        %s179 = sand.u32 %s68, 1
        %s180 = smul.addr %s179, 32
        %s181 = scalar_lea.vmem [#allocation3], %s180
        %s182 = smul.u32 2, %s13
        %s183 = smul.u32 2, %s13
        %v185 = vld [vmem:[%s1] sm:$0xf]
        %v186 = vld [vmem:[%s1 + $0x4] sm:$0xf]
        %v187 = vld [vmem:[%s164] sm:$0xff]
        %v188 = vld [vmem:[%s164 + $0x8] sm:$0xff]
        %v189 = vld [vmem:[%s164 + $0x10] sm:$0x33]
        %v190 = vmax.bf16 %v187, 0
        %v191 = vmax.bf16 %v188, 0
        %v192 = vmax.bf16 %v189, 0
        %v195 = vunpack.c.l.b16 %v185
        %v196 = vunpack.c.l.b16 %v186
        %v197 = vpack.c.b16 %v196, %v195
        %v201 = vunpack.c.l.b16 %v190
        %v202 = vunpack.c.h.b16 %v190
        %v203 = vunpack.c.l.b16 %v191
        %v204 = vunpack.c.h.b16 %v191
        %v205 = vunpack.c.l.b16 %v192
        %v206 = vunpack.c.h.b16 %v192
        %v207 = vpack.c.b16 %v203, %v201
        %v208 = vpack.c.b16 %v204, %v202
        %v209 = vpack.c.b16 %v205, %v205
        %v210 = vpack.c.b16 %v206, %v206
        %vm213 = vcmask 162816
        %v215 = vsel %vm213, %v197, 0
        %vm217 = vcmask 1041408
        %v219 = vsel %vm217, %v209, 0
        %v222 = vsel %vm217, %v210, 0
        %224 = vmatprep.subr.bf16.mxu0 0
        %225 = vmatpush1.bf16.msra.mxu0 0
        %226 = vmatprep.subr.bf16.mxu0 0
        %227 = vmatpush1.bf16.msra.mxu0 0
        %228 = vmatprep.subr.bf16.mxu0 0
        %229 = vmatpush1.bf16.msra.mxu0 0
        %230 = vmatprep.subr.bf16.mxu0 0
        %231 = vmatpush1.bf16.msra.mxu0 0
        %232 = vmatprep.subr.bf16.mxu0 0
        %233 = vmatpush1.bf16.msra.mxu0 0
        %234 = vmatprep.subr.bf16.mxu0 0
        %235 = vmatpush1.bf16.msra.mxu0 0
        %236 = vmatprep.subr.bf16.mxu0 %v222
        %237 = vmatpush1.bf16.msra.mxu0 %v219
        %238 = vmatprep.subr.bf16.mxu0 %v208
        %239 = vmatpush1.bf16.msra.mxu0 %v207
        %240 = vmatprep.subr.bf16.mxu0 0
        %241 = vmatpush2.bf16.msra.mxu0 0
        %242 = vmatprep.subr.bf16.mxu0 0
        %243 = vmatpush2.bf16.msra.mxu0 0
        %244 = vmatprep.subr.bf16.mxu0 0
        %245 = vmatpush2.bf16.msra.mxu0 0
        %246 = vmatprep.subr.bf16.mxu0 0
        %247 = vmatpush2.bf16.msra.mxu0 0
        %248 = vmatprep.subr.bf16.mxu0 0
        %249 = vmatpush2.bf16.msra.mxu0 0
        %250 = vmatprep.subr.bf16.mxu0 0
        %251 = vmatpush2.bf16.msra.mxu0 0
        %252 = vmatprep.subr.bf16.mxu0 0
        %253 = vmatpush2.bf16.msra.mxu0 0
        %254 = vmatprep.subr.bf16.mxu0 0
        %255 = vmatpush2.bf16.msra.mxu0 0
        %256 = vmatprep.mubr.bf16.mxu0 0
        %257 = vmatmul.mubr.bf16.gmra.mxu0 %v215
        %v258 = vpop.f32.mrf.mxu0
        %v259 = vadd.f32 0.0, %v258
        %v260 = vpop.f32.mrf.mxu0
        %v261 = vadd.f32 0.0, %v260
        %v262 = vpop.f32.mrf.mxu0
        %v263 = vadd.f32 0.0, %v262
        %v264 = vpop.f32.mrf.mxu0
        %v265 = vadd.f32 0.0, %v264
        %266 = vdwg.mxu0
        %267 = vst [vmem:[%s181] sm:$0xff] %v259
        %268 = vst [vmem:[%s181 + $0x8] sm:$0xff] %v261
        %269 = vst [vmem:[%s181 + $0x10] sm:$0xff] %v263
        %270 = vst [vmem:[%s181 + $0x18] sm:$0xff] %v265
        %s271 = sand.u32 %s68, 1
        %s272 = sand.u32 %s68, 1
        %s273 = smul.addr %s272, 32
        %s274 = scalar_lea.vmem [#allocation3], %s273
        // Predicated region
        $region67: #{_lambda_.59} parent=61 // pred_check
          %p275 = pneg %p78
        $region68: #{_lambda_.59} parent=61 // pred_check_branch
          %277 = sbr.rel (%p275) target = $region70
        $region69: #{_lambda_.59} parent=61 // pred_region
          %s278 = smul.u32 2, %s13
          %s279 = smul.addr %s278, 8
          %s280 = scalar_lea.vmem %s2, %s279
          // Predicated region
          $region71: #{_lambda_.59} parent=69 // pred_check
            _
          $region72: #{_lambda_.59} parent=69 // pred_check_branch
            %282 = sbr.rel (0) target = $region74
          $region73: #{_lambda_.59} parent=69 // pred_region
            // Predicated region
            $region75: #{_lambda_.59} parent=73 // pred_check
              _
            $region76: #{_lambda_.59} parent=73 // pred_check_branch
              %284 = sbr.rel (0) target = $region78
            $region77: #{_lambda_.59} parent=73 // pred_region
              loop: start=0, step=1, limit=1
              $region79: #{_lambda_.59} parent=77 // loop_pre_header
                _
              $region80: #{_lambda_.59} parent=77 // loop_header
                %s286 = sphi 0, %s290
                %p287 = scmp.ge.s32.totalorder %s286, 1
                %s291 = sphi %s274, %s274
                %s292 = sphi %s280, %s280
              $region81: #{_lambda_.59} parent=77 // loop_header_branch
                %289 = sbr.rel (%p287) target = $region85
              $region82: #{_lambda_.59} parent=77 // loop_body
                %v293 = vld [vmem:[%s291] sm:$0xff]
                %294 = vst [vmem:[%s292] sm:$0xff] %v293
                %v295 = vld [vmem:[%s291 + $0x8] sm:$0xff]
                %296 = vst [vmem:[%s292 + $0x8] sm:$0xff] %v295
                %v297 = vld [vmem:[%s291 + $0x10] sm:$0xff]
                %298 = vst [vmem:[%s292 + $0x20] sm:$0xff] %v297
                %v299 = vld [vmem:[%s291 + $0x18] sm:$0xff]
                %300 = vst [vmem:[%s292 + $0x28] sm:$0xff] %v299
              $region83: #{_lambda_.59} parent=77 // loop_footer
                %s290 = sadd.s32 1, %s286
              $region84: #{_lambda_.59} parent=77 // loop_footer_branch
                %285 = sbr.rel target = $region80
              $region85: #{_lambda_.59} parent=77 // loop_exit
                _
            $region78: #{_lambda_.59} parent=73 // pred_fallthru
              _
            // Predicated region
            $region86: #{_lambda_.59} parent=73 // pred_check
              _
            $region87: #{_lambda_.59} parent=73 // pred_check_branch
              %302 = sbr.rel target = $region89
            $region88: #{_lambda_.59} parent=73 // pred_region
              _
            $region89: #{_lambda_.59} parent=73 // pred_fallthru
              _
          $region74: #{_lambda_.59} parent=69 // pred_fallthru
            _
          %303 = vnop
        $region70: #{_lambda_.59} parent=61 // pred_fallthru
          _
      $region62: #{_lambda_.59} parent=5 // pred_fallthru
        _
      %p304 = scmp.le.s32.totalorder 2, %s8
      // Predicated region
      $region90: #{_lambda_.59} parent=5 // pred_check
        %p305 = pneg %p304
      $region91: #{_lambda_.59} parent=5 // pred_check_branch
        %307 = sbr.rel (%p305) target = $region93
      $region92: #{_lambda_.59} parent=5 // pred_region
        %s308 = ssub.s32 %s8, 2
        // Predicated region
        $region94: #{_lambda_.59} parent=92 // pred_check
          %p309 = pneg %p84
        $region95: #{_lambda_.59} parent=92 // pred_check_branch
          %311 = sbr.rel (%p309) target = $region97
        $region96: #{_lambda_.59} parent=92 // pred_region
          %s312 = sand.u32 %s69, 1
          %s313 = sand.u32 %s69, 1
          %s314 = smul.addr %s313, 32
          %s315 = scalar_lea.vmem [#allocation3], %s314
        $region97: #{_lambda_.59} parent=92 // pred_fallthru
          _
      $region93: #{_lambda_.59} parent=5 // pred_fallthru
        _
    $region6: #{_lambda_.59} parent=1 // loop_footer
      %s12 = sadd.s32 1, %s8
    $region7: #{_lambda_.59} parent=1 // loop_footer_branch
      %7 = sbr.rel target = $region3
    $region8: #{_lambda_.59} parent=1 // loop_exit
      _

// kernel: _lambda_.66
$region0: #{_lambda_.66}
  #allocation0 [shape = 'u32[]', space=smem, size = 0x4, offset = 0x4, fixed_abs, tag = 'smem constant byte address 0x4 - core index']
  #allocation1 [shape = 'u32[144,128]{1,0:T(1,128)}', space=vmem, size = 0x12000, scoped, tag = 'internal scratch']
  %s0 = inlined_call_operand.vmem [shape: bf16[400,128], index: 0, kind: input, shape index: {}]
  %s1 = inlined_call_operand.vmem [shape: bf16[40,400], index: 1, kind: input, shape index: {}]
  %s2 = inlined_call_operand.vmem [shape: f32[40,128], index: 2, kind: output, shape index: {}]
  %s3 = sld [smem:[#allocation0]]
  $region18: #{_lambda_.66} parent=0
    _
  %s5 = ssub.s32 1, %s3
  %s6 = scalar_select 0, %s5, %s3
  // Predicated region
  $region2: #{_lambda_.66} parent=0 // pred_check
    _
  $region3: #{_lambda_.66} parent=0 // pred_check_branch
    %8 = sbr.rel (0) target = $region5
  $region4: #{_lambda_.66} parent=0 // pred_region
    _
  $region5: #{_lambda_.66} parent=0 // pred_fallthru
    _
  // Predicated region
  $region6: #{_lambda_.66} parent=0 // pred_check
    _
  $region7: #{_lambda_.66} parent=0 // pred_check_branch
    %10 = sbr.rel (0) target = $region9
  $region8: #{_lambda_.66} parent=0 // pred_region
    _
  $region9: #{_lambda_.66} parent=0 // pred_fallthru
    _
  %v12 = vld [vmem:[%s1] sm:$0xff]
  %v13 = vld [vmem:[%s1 + $0x8] sm:$0xff]
  %v14 = vld [vmem:[%s1 + $0x10] sm:$0xff]
  %v15 = vld [vmem:[%s1 + $0x18] sm:$0xff]
  %v16 = vld [vmem:[%s1 + $0x20] sm:$0xff]
  %v17 = vld [vmem:[%s1 + $0x28] sm:$0xff]
  %v18 = vld [vmem:[%s1 + $0x30] sm:$0xff]
  %v19 = vld [vmem:[%s1 + $0x38] sm:$0xff]
  %v20 = vld [vmem:[%s1 + $0x40] sm:$0xff]
  %v21 = vld [vmem:[%s1 + $0x48] sm:$0xff]
  %v22 = vld [vmem:[%s0] sm:$0xf]
  %v23 = vld [vmem:[%s0 + $0x4] sm:$0xf]
  %v24 = vld [vmem:[%s0 + $0x8] sm:$0xf]
  %v25 = vld [vmem:[%s0 + $0xc] sm:$0xf]
  %v26 = vld [vmem:[%s0 + $0x10] sm:$0xf]
  %v27 = vld [vmem:[%s0 + $0x14] sm:$0xf]
  %v28 = vld [vmem:[%s0 + $0x18] sm:$0xf]
  %v29 = vld [vmem:[%s0 + $0x1c] sm:$0xf]
  %v30 = vld [vmem:[%s0 + $0x20] sm:$0xf]
  %v31 = vld [vmem:[%s0 + $0x24] sm:$0xf]
  %v32 = vld [vmem:[%s0 + $0x28] sm:$0xf]
  %v33 = vld [vmem:[%s0 + $0x2c] sm:$0xf]
  %v34 = vld [vmem:[%s0 + $0x30] sm:$0xf]
  %v35 = vld [vmem:[%s0 + $0x34] sm:$0xf]
  %v36 = vld [vmem:[%s0 + $0x38] sm:$0xf]
  %v37 = vld [vmem:[%s0 + $0x3c] sm:$0xf]
  %v38 = vld [vmem:[%s0 + $0x40] sm:$0xf]
  %v39 = vld [vmem:[%s0 + $0x44] sm:$0xf]
  %v40 = vld [vmem:[%s0 + $0x48] sm:$0xf]
  %v41 = vld [vmem:[%s0 + $0x4c] sm:$0xf]
  %v42 = vld [vmem:[%s0 + $0x50] sm:$0xf]
  %v43 = vld [vmem:[%s0 + $0x54] sm:$0xf]
  %v44 = vld [vmem:[%s0 + $0x58] sm:$0xf]
  %v45 = vld [vmem:[%s0 + $0x5c] sm:$0xf]
  %v46 = vld [vmem:[%s0 + $0x60] sm:$0xf]
  %v47 = vld [vmem:[%s0 + $0x64] sm:$0xf]
  %v48 = vld [vmem:[%s0 + $0x68] sm:$0xf]
  %v49 = vld [vmem:[%s0 + $0x6c] sm:$0xf]
  %v50 = vld [vmem:[%s0 + $0x70] sm:$0xf]
  %v51 = vld [vmem:[%s0 + $0x74] sm:$0xf]
  %v52 = vld [vmem:[%s0 + $0x78] sm:$0xf]
  %v53 = vld [vmem:[%s0 + $0x7c] sm:$0xf]
  %v54 = vld [vmem:[%s0 + $0x80] sm:$0xf]
  %v55 = vld [vmem:[%s0 + $0x84] sm:$0xf]
  %v56 = vld [vmem:[%s0 + $0x88] sm:$0xf]
  %v57 = vld [vmem:[%s0 + $0x8c] sm:$0xf]
  %v58 = vld [vmem:[%s0 + $0x90] sm:$0xf]
  %v59 = vld [vmem:[%s0 + $0x94] sm:$0xf]
  %v60 = vld [vmem:[%s0 + $0x98] sm:$0xf]
  %v61 = vld [vmem:[%s0 + $0x9c] sm:$0xf]
  %v62 = vld [vmem:[%s0 + $0xa0] sm:$0xf]
  %v63 = vld [vmem:[%s0 + $0xa4] sm:$0xf]
  %v64 = vld [vmem:[%s0 + $0xa8] sm:$0xf]
  %v65 = vld [vmem:[%s0 + $0xac] sm:$0xf]
  %v66 = vld [vmem:[%s0 + $0xb0] sm:$0xf]
  %v67 = vld [vmem:[%s0 + $0xb4] sm:$0xf]
  %v68 = vld [vmem:[%s0 + $0xb8] sm:$0xf]
  %v69 = vld [vmem:[%s0 + $0xbc] sm:$0xf]
  %v70 = vld [vmem:[%s0 + $0xc0] sm:$0xf]
  %v71 = vld [vmem:[%s0 + $0xc4] sm:$0xf]
  %v82 = vunpack.c.l.b16 %v12
  %v83 = vunpack.c.h.b16 %v12
  %v84 = vunpack.c.l.b16 %v13
  %v85 = vunpack.c.h.b16 %v13
  %v86 = vunpack.c.l.b16 %v14
  %v87 = vunpack.c.h.b16 %v14
  %v88 = vunpack.c.l.b16 %v15
  %v89 = vunpack.c.h.b16 %v15
  %v90 = vunpack.c.l.b16 %v16
  %v91 = vunpack.c.h.b16 %v16
  %v92 = vunpack.c.l.b16 %v17
  %v93 = vunpack.c.h.b16 %v17
  %v94 = vunpack.c.l.b16 %v18
  %v95 = vunpack.c.h.b16 %v18
  %v96 = vunpack.c.l.b16 %v19
  %v97 = vunpack.c.h.b16 %v19
  %v98 = vunpack.c.l.b16 %v20
  %v99 = vunpack.c.h.b16 %v20
  %v100 = vunpack.c.l.b16 %v21
  %v101 = vunpack.c.h.b16 %v21
  %v102 = vpack.c.b16 %v86, %v82
  %v103 = vpack.c.b16 %v87, %v83
  %v104 = vpack.c.b16 %v88, %v84
  %v105 = vpack.c.b16 %v89, %v85
  %v106 = vpack.c.b16 %v94, %v90
  %v107 = vpack.c.b16 %v95, %v91
  %v108 = vpack.c.b16 %v96, %v92
  %v109 = vpack.c.b16 %v97, %v93
  %v110 = vpack.c.b16 %v98, %v98
  %v111 = vpack.c.b16 %v99, %v99
  %v112 = vpack.c.b16 %v100, %v100
  %v113 = vpack.c.b16 %v101, %v101
  %v173 = vunpack.c.l.b16 %v22
  %v174 = vunpack.c.l.b16 %v23
  %v175 = vunpack.c.l.b16 %v24
  %v176 = vunpack.c.l.b16 %v25
  %v177 = vunpack.c.l.b16 %v26
  %v178 = vunpack.c.l.b16 %v27
  %v179 = vunpack.c.l.b16 %v28
  %v180 = vunpack.c.l.b16 %v29
  %v181 = vunpack.c.l.b16 %v30
  %v182 = vunpack.c.l.b16 %v31
  %v183 = vunpack.c.l.b16 %v32
  %v184 = vunpack.c.l.b16 %v33
  %v185 = vunpack.c.l.b16 %v34
  %v186 = vunpack.c.l.b16 %v35
  %v187 = vunpack.c.l.b16 %v36
  %v188 = vunpack.c.l.b16 %v37
  %v189 = vunpack.c.l.b16 %v38
  %v190 = vunpack.c.l.b16 %v39
  %v191 = vunpack.c.l.b16 %v40
  %v192 = vunpack.c.l.b16 %v41
  %v193 = vunpack.c.l.b16 %v42
  %v194 = vunpack.c.l.b16 %v43
  %v195 = vunpack.c.l.b16 %v44
  %v196 = vunpack.c.l.b16 %v45
  %v197 = vunpack.c.l.b16 %v46
  %v198 = vunpack.c.l.b16 %v47
  %v199 = vunpack.c.l.b16 %v48
  %v200 = vunpack.c.l.b16 %v49
  %v201 = vunpack.c.l.b16 %v50
  %v202 = vunpack.c.l.b16 %v51
  %v203 = vunpack.c.l.b16 %v52
  %v204 = vunpack.c.l.b16 %v53
  %v205 = vunpack.c.l.b16 %v54
  %v206 = vunpack.c.l.b16 %v55
  %v207 = vunpack.c.l.b16 %v56
  %v208 = vunpack.c.l.b16 %v57
  %v209 = vunpack.c.l.b16 %v58
  %v210 = vunpack.c.l.b16 %v59
  %v211 = vunpack.c.l.b16 %v60
  %v212 = vunpack.c.l.b16 %v61
  %v213 = vunpack.c.l.b16 %v62
  %v214 = vunpack.c.l.b16 %v63
  %v215 = vunpack.c.l.b16 %v64
  %v216 = vunpack.c.l.b16 %v65
  %v217 = vunpack.c.l.b16 %v66
  %v218 = vunpack.c.l.b16 %v67
  %v219 = vunpack.c.l.b16 %v68
  %v220 = vunpack.c.l.b16 %v69
  %v221 = vunpack.c.l.b16 %v70
  %v222 = vunpack.c.l.b16 %v71
  %v223 = vpack.c.b16 %v174, %v173
  %v224 = vpack.c.b16 %v176, %v175
  %v225 = vpack.c.b16 %v178, %v177
  %v226 = vpack.c.b16 %v180, %v179
  %v227 = vpack.c.b16 %v182, %v181
  %v228 = vpack.c.b16 %v184, %v183
  %v229 = vpack.c.b16 %v186, %v185
  %v230 = vpack.c.b16 %v188, %v187
  %v231 = vpack.c.b16 %v190, %v189
  %v232 = vpack.c.b16 %v192, %v191
  %v233 = vpack.c.b16 %v194, %v193
  %v234 = vpack.c.b16 %v196, %v195
  %v235 = vpack.c.b16 %v198, %v197
  %v236 = vpack.c.b16 %v200, %v199
  %v237 = vpack.c.b16 %v202, %v201
  %v238 = vpack.c.b16 %v204, %v203
  %v239 = vpack.c.b16 %v206, %v205
  %v240 = vpack.c.b16 %v208, %v207
  %v241 = vpack.c.b16 %v210, %v209
  %v242 = vpack.c.b16 %v212, %v211
  %v243 = vpack.c.b16 %v214, %v213
  %v244 = vpack.c.b16 %v216, %v215
  %v245 = vpack.c.b16 %v218, %v217
  %v246 = vpack.c.b16 %v220, %v219
  %v247 = vpack.c.b16 %v222, %v221
  %vm273 = vcmask 130048
  %v275 = vsel %vm273, %v105, 0
  %v278 = vsel %vm273, %v109, 0
  %v281 = vsel %vm273, %v113, 0
  %283 = vmatprep.subr.bf16.mxu0 0
  %284 = vmatpush1.bf16.msra.mxu0 %v230
  %285 = vmatprep.subr.bf16.mxu0 0
  %286 = vmatpush1.bf16.msra.mxu0 %v229
  %287 = vmatprep.subr.bf16.mxu0 0
  %288 = vmatpush1.bf16.msra.mxu0 %v228
  %289 = vmatprep.subr.bf16.mxu0 0
  %290 = vmatpush1.bf16.msra.mxu0 %v227
  %291 = vmatprep.subr.bf16.mxu0 0
  %292 = vmatpush1.bf16.msra.mxu0 %v226
  %293 = vmatprep.subr.bf16.mxu0 0
  %294 = vmatpush1.bf16.msra.mxu0 %v225
  %295 = vmatprep.subr.bf16.mxu0 0
  %296 = vmatpush1.bf16.msra.mxu0 %v224
  %297 = vmatprep.subr.bf16.mxu0 0
  %298 = vmatpush1.bf16.msra.mxu0 %v223
  %299 = vmatprep.subr.bf16.mxu0 0
  %300 = vmatpush2.bf16.msra.mxu0 %v238
  %301 = vmatprep.subr.bf16.mxu0 0
  %302 = vmatpush2.bf16.msra.mxu0 %v237
  %303 = vmatprep.subr.bf16.mxu0 0
  %304 = vmatpush2.bf16.msra.mxu0 %v236
  %305 = vmatprep.subr.bf16.mxu0 0
  %306 = vmatpush2.bf16.msra.mxu0 %v235
  %307 = vmatprep.subr.bf16.mxu0 0
  %308 = vmatpush2.bf16.msra.mxu0 %v234
  %309 = vmatprep.subr.bf16.mxu0 0
  %310 = vmatpush2.bf16.msra.mxu0 %v233
  %311 = vmatprep.subr.bf16.mxu0 0
  %312 = vmatpush2.bf16.msra.mxu0 %v232
  %313 = vmatprep.subr.bf16.mxu0 0
  %314 = vmatpush2.bf16.msra.mxu0 %v231
  %315 = vmatprep.mubr.bf16.mxu0 %v103
  %316 = vmatmul.mubr.bf16.gmra.mxu0 %v102
  %v317 = vpop.f32.mrf.mxu0
  %v318 = vadd.f32 0.0, %v317
  %v319 = vpop.f32.mrf.mxu0
  %v320 = vpop.f32.mrf.mxu0
  %v321 = vadd.f32 0.0, %v320
  %v322 = vpop.f32.mrf.mxu0
  %323 = vmatprep.mubr.bf16.mxu0 %v107
  %324 = vmatmul.mubr.bf16.gmra.mxu0 %v106
  %v325 = vpop.f32.mrf.mxu0
  %v326 = vadd.f32 0.0, %v325
  %v327 = vpop.f32.mrf.mxu0
  %v328 = vpop.f32.mrf.mxu0
  %v329 = vadd.f32 0.0, %v328
  %v330 = vpop.f32.mrf.mxu0
  %331 = vmatprep.mubr.bf16.mxu0 %v111
  %332 = vmatmul.mubr.bf16.gmra.mxu0 %v110
  %v333 = vpop.f32.mrf.mxu0
  %v334 = vadd.f32 0.0, %v333
  %v335 = vpop.f32.mrf.mxu0
  %v336 = vpop.f32.mrf.mxu0
  %v337 = vpop.f32.mrf.mxu0
  %338 = vdwg.mxu0
  %339 = vmatprep.subr.bf16.mxu0 0
  %340 = vmatpush1.bf16.msra.mxu0 %v246
  %341 = vmatprep.subr.bf16.mxu0 0
  %342 = vmatpush1.bf16.msra.mxu0 %v245
  %343 = vmatprep.subr.bf16.mxu0 0
  %344 = vmatpush1.bf16.msra.mxu0 %v244
  %345 = vmatprep.subr.bf16.mxu0 0
  %346 = vmatpush1.bf16.msra.mxu0 %v243
  %347 = vmatprep.subr.bf16.mxu0 0
  %348 = vmatpush1.bf16.msra.mxu0 %v242
  %349 = vmatprep.subr.bf16.mxu0 0
  %350 = vmatpush1.bf16.msra.mxu0 %v241
  %351 = vmatprep.subr.bf16.mxu0 0
  %352 = vmatpush1.bf16.msra.mxu0 %v240
  %353 = vmatprep.subr.bf16.mxu0 0
  %354 = vmatpush1.bf16.msra.mxu0 %v239
  %355 = vmatprep.subr.bf16.mxu0 0
  %356 = vmatpush2.bf16.msra.mxu0 0
  %357 = vmatprep.subr.bf16.mxu0 0
  %358 = vmatpush2.bf16.msra.mxu0 0
  %359 = vmatprep.subr.bf16.mxu0 0
  %360 = vmatpush2.bf16.msra.mxu0 0
  %361 = vmatprep.subr.bf16.mxu0 0
  %362 = vmatpush2.bf16.msra.mxu0 0
  %363 = vmatprep.subr.bf16.mxu0 0
  %364 = vmatpush2.bf16.msra.mxu0 0
  %365 = vmatprep.subr.bf16.mxu0 0
  %366 = vmatpush2.bf16.msra.mxu0 0
  %367 = vmatprep.subr.bf16.mxu0 0
  %368 = vmatpush2.bf16.msra.mxu0 0
  %369 = vmatprep.subr.bf16.mxu0 0
  %370 = vmatpush2.bf16.msra.mxu0 %v247
  %371 = vmatprep.mubr.bf16.mxu0 %v275
  %372 = vmatmul.mubr.bf16.gmra.mxu0 %v104
  %v373 = vpop.f32.mrf.mxu0
  %v374 = vadd.f32 %v318, %v373
  %v375 = vpop.f32.mrf.mxu0
  %v376 = vpop.f32.mrf.mxu0
  %v377 = vadd.f32 %v321, %v376
  %v378 = vpop.f32.mrf.mxu0
  %379 = vmatprep.mubr.bf16.mxu0 %v278
  %380 = vmatmul.mubr.bf16.gmra.mxu0 %v108
  %v381 = vpop.f32.mrf.mxu0
  %v382 = vadd.f32 %v326, %v381
  %v383 = vpop.f32.mrf.mxu0
  %v384 = vpop.f32.mrf.mxu0
  %v385 = vadd.f32 %v329, %v384
  %v386 = vpop.f32.mrf.mxu0
  %387 = vmatprep.mubr.bf16.mxu0 %v281
  %388 = vmatmul.mubr.bf16.gmra.mxu0 %v112
  %v389 = vpop.f32.mrf.mxu0
  %v390 = vadd.f32 %v334, %v389
  %v391 = vpop.f32.mrf.mxu0
  %v392 = vpop.f32.mrf.mxu0
  %v393 = vpop.f32.mrf.mxu0
  %394 = vdwg.mxu0
  %395 = vst [vmem:[%s2] sm:$0xff] %v374
  %396 = vst [vmem:[%s2 + $0x8] sm:$0xff] %v377
  %397 = vst [vmem:[%s2 + $0x10] sm:$0xff] %v382
  %398 = vst [vmem:[%s2 + $0x18] sm:$0xff] %v385
  %399 = vst [vmem:[%s2 + $0x20] sm:$0xff] %v390
  // Predicated region
  $region10: #{_lambda_.66} parent=0 // pred_check
    _
  $region11: #{_lambda_.66} parent=0 // pred_check_branch
    %401 = sbr.rel (0) target = $region13
  $region12: #{_lambda_.66} parent=0 // pred_region
    _
  $region13: #{_lambda_.66} parent=0 // pred_fallthru
    _
  // Predicated region
  $region14: #{_lambda_.66} parent=0 // pred_check
    _
  $region15: #{_lambda_.66} parent=0 // pred_check_branch
    %403 = sbr.rel (0) target = $region17
  $region16: #{_lambda_.66} parent=0 // pred_region
    _
  $region17: #{_lambda_.66} parent=0 // pred_fallthru
    _

// kernel: _lambda_.67
$region0: #{_lambda_.67}
  #allocation0 [shape = 'u32[]', space=smem, size = 0x4, offset = 0x4, fixed_abs, tag = 'smem constant byte address 0x4 - core index']
  #allocation1 [shape = 'u32[144,128]{1,0:T(1,128)}', space=vmem, size = 0x12000, scoped, tag = 'internal scratch']
  %s0 = inlined_call_operand.vmem [shape: bf16[272,128], index: 0, kind: input, shape index: {}]
  %s1 = inlined_call_operand.vmem [shape: bf16[16,272], index: 1, kind: input, shape index: {}]
  %s2 = inlined_call_operand.vmem [shape: f32[16,128], index: 2, kind: output, shape index: {}]
  %s3 = sld [smem:[#allocation0]]
  $region18: #{_lambda_.67} parent=0
    _
  %s5 = ssub.s32 1, %s3
  %s6 = scalar_select 0, %s5, %s3
  // Predicated region
  $region2: #{_lambda_.67} parent=0 // pred_check
    _
  $region3: #{_lambda_.67} parent=0 // pred_check_branch
    %8 = sbr.rel (0) target = $region5
  $region4: #{_lambda_.67} parent=0 // pred_region
    _
  $region5: #{_lambda_.67} parent=0 // pred_fallthru
    _
  // Predicated region
  $region6: #{_lambda_.67} parent=0 // pred_check
    _
  $region7: #{_lambda_.67} parent=0 // pred_check_branch
    %10 = sbr.rel (0) target = $region9
  $region8: #{_lambda_.67} parent=0 // pred_region
    _
  $region9: #{_lambda_.67} parent=0 // pred_fallthru
    _
  %v12 = vld [vmem:[%s1] sm:$0xff]
  %v13 = vld [vmem:[%s1 + $0x8] sm:$0xf]
  %v14 = vld [vmem:[%s1 + $0xc] sm:$0xff]
  %v15 = vld [vmem:[%s1 + $0x14] sm:$0xf]
  %v16 = vld [vmem:[%s0] sm:$0xf]
  %v17 = vld [vmem:[%s0 + $0x4] sm:$0xf]
  %v18 = vld [vmem:[%s0 + $0x8] sm:$0xf]
  %v19 = vld [vmem:[%s0 + $0xc] sm:$0xf]
  %v20 = vld [vmem:[%s0 + $0x10] sm:$0xf]
  %v21 = vld [vmem:[%s0 + $0x14] sm:$0xf]
  %v22 = vld [vmem:[%s0 + $0x18] sm:$0xf]
  %v23 = vld [vmem:[%s0 + $0x1c] sm:$0xf]
  %v24 = vld [vmem:[%s0 + $0x20] sm:$0xf]
  %v25 = vld [vmem:[%s0 + $0x24] sm:$0xf]
  %v26 = vld [vmem:[%s0 + $0x28] sm:$0xf]
  %v27 = vld [vmem:[%s0 + $0x2c] sm:$0xf]
  %v28 = vld [vmem:[%s0 + $0x30] sm:$0xf]
  %v29 = vld [vmem:[%s0 + $0x34] sm:$0xf]
  %v30 = vld [vmem:[%s0 + $0x38] sm:$0xf]
  %v31 = vld [vmem:[%s0 + $0x3c] sm:$0xf]
  %v32 = vld [vmem:[%s0 + $0x40] sm:$0xf]
  %v33 = vld [vmem:[%s0 + $0x44] sm:$0xf]
  %v34 = vld [vmem:[%s0 + $0x48] sm:$0xf]
  %v35 = vld [vmem:[%s0 + $0x4c] sm:$0xf]
  %v36 = vld [vmem:[%s0 + $0x50] sm:$0xf]
  %v37 = vld [vmem:[%s0 + $0x54] sm:$0xf]
  %v38 = vld [vmem:[%s0 + $0x58] sm:$0xf]
  %v39 = vld [vmem:[%s0 + $0x5c] sm:$0xf]
  %v40 = vld [vmem:[%s0 + $0x60] sm:$0xf]
  %v41 = vld [vmem:[%s0 + $0x64] sm:$0xf]
  %v42 = vld [vmem:[%s0 + $0x68] sm:$0xf]
  %v43 = vld [vmem:[%s0 + $0x6c] sm:$0xf]
  %v44 = vld [vmem:[%s0 + $0x70] sm:$0xf]
  %v45 = vld [vmem:[%s0 + $0x74] sm:$0xf]
  %v46 = vld [vmem:[%s0 + $0x78] sm:$0xf]
  %v47 = vld [vmem:[%s0 + $0x7c] sm:$0xf]
  %v48 = vld [vmem:[%s0 + $0x80] sm:$0xf]
  %v49 = vld [vmem:[%s0 + $0x84] sm:$0xf]
  %v54 = vunpack.c.l.b16 %v12
  %v55 = vunpack.c.h.b16 %v12
  %v56 = vunpack.c.l.b16 %v13
  %v57 = vunpack.c.l.b16 %v14
  %v58 = vunpack.c.h.b16 %v14
  %v59 = vunpack.c.l.b16 %v15
  %v60 = vpack.c.b16 %v57, %v54
  %v61 = vpack.c.b16 %v58, %v55
  %v62 = vpack.c.b16 %v59, %v56
  %v99 = vunpack.c.l.b16 %v16
  %v100 = vunpack.c.l.b16 %v17
  %v101 = vunpack.c.l.b16 %v18
  %v102 = vunpack.c.l.b16 %v19
  %v103 = vunpack.c.l.b16 %v20
  %v104 = vunpack.c.l.b16 %v21
  %v105 = vunpack.c.l.b16 %v22
  %v106 = vunpack.c.l.b16 %v23
  %v107 = vunpack.c.l.b16 %v24
  %v108 = vunpack.c.l.b16 %v25
  %v109 = vunpack.c.l.b16 %v26
  %v110 = vunpack.c.l.b16 %v27
  %v111 = vunpack.c.l.b16 %v28
  %v112 = vunpack.c.l.b16 %v29
  %v113 = vunpack.c.l.b16 %v30
  %v114 = vunpack.c.l.b16 %v31
  %v115 = vunpack.c.l.b16 %v32
  %v116 = vunpack.c.l.b16 %v33
  %v117 = vunpack.c.l.b16 %v34
  %v118 = vunpack.c.l.b16 %v35
  %v119 = vunpack.c.l.b16 %v36
  %v120 = vunpack.c.l.b16 %v37
  %v121 = vunpack.c.l.b16 %v38
  %v122 = vunpack.c.l.b16 %v39
  %v123 = vunpack.c.l.b16 %v40
  %v124 = vunpack.c.l.b16 %v41
  %v125 = vunpack.c.l.b16 %v42
  %v126 = vunpack.c.l.b16 %v43
  %v127 = vunpack.c.l.b16 %v44
  %v128 = vunpack.c.l.b16 %v45
  %v129 = vunpack.c.l.b16 %v46
  %v130 = vunpack.c.l.b16 %v47
  %v131 = vunpack.c.l.b16 %v48
  %v132 = vunpack.c.l.b16 %v49
  %v133 = vpack.c.b16 %v100, %v99
  %v134 = vpack.c.b16 %v102, %v101
  %v135 = vpack.c.b16 %v104, %v103
  %v136 = vpack.c.b16 %v106, %v105
  %v137 = vpack.c.b16 %v108, %v107
  %v138 = vpack.c.b16 %v110, %v109
  %v139 = vpack.c.b16 %v112, %v111
  %v140 = vpack.c.b16 %v114, %v113
  %v141 = vpack.c.b16 %v116, %v115
  %v142 = vpack.c.b16 %v118, %v117
  %v143 = vpack.c.b16 %v120, %v119
  %v144 = vpack.c.b16 %v122, %v121
  %v145 = vpack.c.b16 %v124, %v123
  %v146 = vpack.c.b16 %v126, %v125
  %v147 = vpack.c.b16 %v128, %v127
  %v148 = vpack.c.b16 %v130, %v129
  %v149 = vpack.c.b16 %v132, %v131
  %vm167 = vcmask 130048
  %v169 = vsel %vm167, %v62, 0
  %171 = vmatprep.subr.bf16.mxu0 0
  %172 = vmatpush1.bf16.msra.mxu0 %v140
  %173 = vmatprep.subr.bf16.mxu0 0
  %174 = vmatpush1.bf16.msra.mxu0 %v139
  %175 = vmatprep.subr.bf16.mxu0 0
  %176 = vmatpush1.bf16.msra.mxu0 %v138
  %177 = vmatprep.subr.bf16.mxu0 0
  %178 = vmatpush1.bf16.msra.mxu0 %v137
  %179 = vmatprep.subr.bf16.mxu0 0
  %180 = vmatpush1.bf16.msra.mxu0 %v136
  %181 = vmatprep.subr.bf16.mxu0 0
  %182 = vmatpush1.bf16.msra.mxu0 %v135
  %183 = vmatprep.subr.bf16.mxu0 0
  %184 = vmatpush1.bf16.msra.mxu0 %v134
  %185 = vmatprep.subr.bf16.mxu0 0
  %186 = vmatpush1.bf16.msra.mxu0 %v133
  %187 = vmatprep.subr.bf16.mxu0 0
  %188 = vmatpush2.bf16.msra.mxu0 %v148
  %189 = vmatprep.subr.bf16.mxu0 0
  %190 = vmatpush2.bf16.msra.mxu0 %v147
  %191 = vmatprep.subr.bf16.mxu0 0
  %192 = vmatpush2.bf16.msra.mxu0 %v146
  %193 = vmatprep.subr.bf16.mxu0 0
  %194 = vmatpush2.bf16.msra.mxu0 %v145
  %195 = vmatprep.subr.bf16.mxu0 0
  %196 = vmatpush2.bf16.msra.mxu0 %v144
  %197 = vmatprep.subr.bf16.mxu0 0
  %198 = vmatpush2.bf16.msra.mxu0 %v143
  %199 = vmatprep.subr.bf16.mxu0 0
  %200 = vmatpush2.bf16.msra.mxu0 %v142
  %201 = vmatprep.subr.bf16.mxu0 0
  %202 = vmatpush2.bf16.msra.mxu0 %v141
  %203 = vmatprep.mubr.bf16.mxu0 %v61
  %204 = vmatmul.mubr.bf16.gmra.mxu0 %v60
  %v205 = vpop.f32.mrf.mxu0
  %v206 = vadd.f32 0.0, %v205
  %v207 = vpop.f32.mrf.mxu0
  %v208 = vpop.f32.mrf.mxu0
  %v209 = vadd.f32 0.0, %v208
  %v210 = vpop.f32.mrf.mxu0
  %211 = vdwg.mxu0
  %212 = vmatprep.subr.bf16.mxu0 0
  %213 = vmatpush1.bf16.msra.mxu0 0
  %214 = vmatprep.subr.bf16.mxu0 0
  %215 = vmatpush1.bf16.msra.mxu0 0
  %216 = vmatprep.subr.bf16.mxu0 0
  %217 = vmatpush1.bf16.msra.mxu0 0
  %218 = vmatprep.subr.bf16.mxu0 0
  %219 = vmatpush1.bf16.msra.mxu0 0
  %220 = vmatprep.subr.bf16.mxu0 0
  %221 = vmatpush1.bf16.msra.mxu0 0
  %222 = vmatprep.subr.bf16.mxu0 0
  %223 = vmatpush1.bf16.msra.mxu0 0
  %224 = vmatprep.subr.bf16.mxu0 0
  %225 = vmatpush1.bf16.msra.mxu0 0
  %226 = vmatprep.subr.bf16.mxu0 0
  %227 = vmatpush1.bf16.msra.mxu0 %v149
  %228 = vmatprep.subr.bf16.mxu0 0
  %229 = vmatpush2.bf16.msra.mxu0 0
  %230 = vmatprep.subr.bf16.mxu0 0
  %231 = vmatpush2.bf16.msra.mxu0 0
  %232 = vmatprep.subr.bf16.mxu0 0
  %233 = vmatpush2.bf16.msra.mxu0 0
  %234 = vmatprep.subr.bf16.mxu0 0
  %235 = vmatpush2.bf16.msra.mxu0 0
  %236 = vmatprep.subr.bf16.mxu0 0
  %237 = vmatpush2.bf16.msra.mxu0 0
  %238 = vmatprep.subr.bf16.mxu0 0
  %239 = vmatpush2.bf16.msra.mxu0 0
  %240 = vmatprep.subr.bf16.mxu0 0
  %241 = vmatpush2.bf16.msra.mxu0 0
  %242 = vmatprep.subr.bf16.mxu0 0
  %243 = vmatpush2.bf16.msra.mxu0 0
  %244 = vmatprep.mubr.bf16.mxu0 0
  %245 = vmatmul.mubr.bf16.gmra.mxu0 %v169
  %v246 = vpop.f32.mrf.mxu0
  %v247 = vadd.f32 %v206, %v246
  %v248 = vpop.f32.mrf.mxu0
  %v249 = vpop.f32.mrf.mxu0
  %v250 = vadd.f32 %v209, %v249
  %v251 = vpop.f32.mrf.mxu0
  %252 = vdwg.mxu0
  %253 = vst [vmem:[%s2] sm:$0xff] %v247
  %254 = vst [vmem:[%s2 + $0x8] sm:$0xff] %v250
  // Predicated region
  $region10: #{_lambda_.67} parent=0 // pred_check
    _
  $region11: #{_lambda_.67} parent=0 // pred_check_branch
    %256 = sbr.rel (0) target = $region13
  $region12: #{_lambda_.67} parent=0 // pred_region
    _
  $region13: #{_lambda_.67} parent=0 // pred_fallthru
    _
  // Predicated region
  $region14: #{_lambda_.67} parent=0 // pred_check
    _
  $region15: #{_lambda_.67} parent=0 // pred_check_branch
    %258 = sbr.rel (0) target = $region17
  $region16: #{_lambda_.67} parent=0 // pred_region
    _
  $region17: #{_lambda_.67} parent=0 // pred_fallthru
    _

// kernel: _lambda_.62
$region0: #{_lambda_.62}
  #allocation0 [shape = 'u32[]', space=smem, size = 0x4, offset = 0x4, fixed_abs, tag = 'smem constant byte address 0x4 - core index']
  #allocation1 [shape = 'u32[144,128]{1,0:T(1,128)}', space=vmem, size = 0x12000, scoped, tag = 'internal scratch']
  %s0 = inlined_call_operand.vmem [shape: f32[9,8,128], index: 0, kind: input, shape index: {}]
  %s1 = inlined_call_operand.vmem [shape: f32[1,128], index: 1, kind: input, shape index: {}]
  %s2 = inlined_call_operand.vmem [shape: f32[8,128], index: 2, kind: output, shape index: {0}]
  %s3 = inlined_call_operand.vmem [shape: f32[8,128], index: 3, kind: output, shape index: {1}]
  %4 = xla_tuple %s2, %s3
  %s5 = sld [smem:[#allocation0]]
  $region26: #{_lambda_.62} parent=0
    _
  %s7 = ssub.s32 1, %s5
  %s8 = scalar_select 0, %s7, %s5
  // Predicated region
  $region2: #{_lambda_.62} parent=0 // pred_check
    _
  $region3: #{_lambda_.62} parent=0 // pred_check_branch
    %10 = sbr.rel (0) target = $region5
  $region4: #{_lambda_.62} parent=0 // pred_region
    _
  $region5: #{_lambda_.62} parent=0 // pred_fallthru
    _
  // Predicated region
  $region6: #{_lambda_.62} parent=0 // pred_check
    _
  $region7: #{_lambda_.62} parent=0 // pred_check_branch
    %12 = sbr.rel (0) target = $region9
  $region8: #{_lambda_.62} parent=0 // pred_region
    _
  $region9: #{_lambda_.62} parent=0 // pred_fallthru
    _
  %v13 = vld [vmem:[%s0] sm:$0xff]
  %v14 = vld [vmem:[%s0 + $0x8] sm:$0xff]
  %v15 = vld [vmem:[%s0 + $0x10] sm:$0xff]
  %v16 = vld [vmem:[%s0 + $0x18] sm:$0xff]
  %v17 = vld [vmem:[%s0 + $0x20] sm:$0xff]
  %v18 = vld [vmem:[%s0 + $0x28] sm:$0xff]
  %v19 = vld [vmem:[%s0 + $0x30] sm:$0xff]
  %v20 = vld [vmem:[%s0 + $0x38] sm:$0xff]
  %v21 = vld [vmem:[%s0 + $0x40] sm:$0xff]
  %v22 = vmax.f32 %v13, %v17
  %v23 = vmax.f32 %v14, %v18
  %v24 = vmax.f32 %v15, %v19
  %v25 = vmax.f32 %v16, %v20
  %v26 = vmax.f32 %v22, %v21
  %v27 = vmax.f32 %v26, %v23
  %v28 = vmax.f32 %v24, %v25
  %v29 = vmax.f32 %v27, %v28
  %30 = vst [vmem:[%s2] sm:$0xff] %v29
  %vm31 = vweird.f32 %v13
  %vm32 = vweird.f32 %v14
  %vm33 = vweird.f32 %v15
  %vm34 = vweird.f32 %v16
  %vm35 = vweird.f32 %v17
  %vm36 = vweird.f32 %v18
  %vm37 = vweird.f32 %v19
  %vm38 = vweird.f32 %v20
  %vm39 = vweird.f32 %v21
  %vm40 = vmxor %vm31, 1
  %vm41 = vmxor %vm32, 1
  %vm42 = vmxor %vm33, 1
  %vm43 = vmxor %vm34, 1
  %vm44 = vmxor %vm35, 1
  %vm45 = vmxor %vm36, 1
  %vm46 = vmxor %vm37, 1
  %vm47 = vmxor %vm38, 1
  %vm48 = vmxor %vm39, 1
  %v49 = vsel %vm40, %v13, 0.0
  %v50 = vsel %vm41, %v14, 0.0
  %v51 = vsel %vm42, %v15, 0.0
  %v52 = vsel %vm43, %v16, 0.0
  %v53 = vsel %vm44, %v17, 0.0
  %v54 = vsel %vm45, %v18, 0.0
  %v55 = vsel %vm46, %v19, 0.0
  %v56 = vsel %vm47, %v20, 0.0
  %v57 = vsel %vm48, %v21, 0.0
  %v58 = vadd.f32 %v49, %v50
  %v59 = vadd.f32 %v58, %v51
  %v60 = vadd.f32 %v59, %v52
  %v61 = vadd.f32 %v60, %v53
  %v62 = vadd.f32 %v61, %v54
  %v63 = vadd.f32 %v62, %v55
  %v64 = vadd.f32 %v63, %v56
  %v65 = vadd.f32 %v64, %v57
  %v66 = vld [vmem:[%s1] sm:$0x1]
  %v68 = vlaneseq
  %v69 = vshrl.u32 %v68, 7
  %v70 = vsub.s32 0, %v69
  %v71 = vrot.slane %v66, %v70
  %v73 = vmul.f32 %v65, %v71
  %74 = vst [vmem:[%s3] sm:$0xff] %v73
  // Predicated region
  $region10: #{_lambda_.62} parent=0 // pred_check
    _
  $region11: #{_lambda_.62} parent=0 // pred_check_branch
    %76 = sbr.rel (0) target = $region13
  $region12: #{_lambda_.62} parent=0 // pred_region
    _
  $region13: #{_lambda_.62} parent=0 // pred_fallthru
    _
  // Predicated region
  $region14: #{_lambda_.62} parent=0 // pred_check
    _
  $region15: #{_lambda_.62} parent=0 // pred_check_branch
    %78 = sbr.rel (0) target = $region17
  $region16: #{_lambda_.62} parent=0 // pred_region
    _
  $region17: #{_lambda_.62} parent=0 // pred_fallthru
    _
  // Predicated region
  $region18: #{_lambda_.62} parent=0 // pred_check
    _
  $region19: #{_lambda_.62} parent=0 // pred_check_branch
    %80 = sbr.rel (0) target = $region21
  $region20: #{_lambda_.62} parent=0 // pred_region
    _
  $region21: #{_lambda_.62} parent=0 // pred_fallthru
    _
  // Predicated region
  $region22: #{_lambda_.62} parent=0 // pred_check
    _
  $region23: #{_lambda_.62} parent=0 // pred_check_branch
    %82 = sbr.rel (0) target = $region25
  $region24: #{_lambda_.62} parent=0 // pred_region
    _
  $region25: #{_lambda_.62} parent=0 // pred_fallthru
    _

// kernel: _lambda_.70
$region0: #{_lambda_.70}
  #allocation0 [shape = 'u32[]', space=smem, size = 0x4, offset = 0x4, fixed_abs, tag = 'smem constant byte address 0x4 - core index']
  #allocation1 [shape = 'u32[144,128]{1,0:T(1,128)}', space=vmem, size = 0x12000, scoped, tag = 'internal scratch']
  %s0 = inlined_call_operand.vmem [shape: bf16[400,128], index: 0, kind: input, shape index: {}]
  %s1 = inlined_call_operand.vmem [shape: bf16[32,400], index: 1, kind: input, shape index: {}]
  %s2 = inlined_call_operand.vmem [shape: f32[32,128], index: 2, kind: output, shape index: {}]
  %s3 = sld [smem:[#allocation0]]
  $region18: #{_lambda_.70} parent=0
    _
  %s5 = ssub.s32 1, %s3
  %s6 = scalar_select 0, %s5, %s3
  // Predicated region
  $region2: #{_lambda_.70} parent=0 // pred_check
    _
  $region3: #{_lambda_.70} parent=0 // pred_check_branch
    %8 = sbr.rel (0) target = $region5
  $region4: #{_lambda_.70} parent=0 // pred_region
    _
  $region5: #{_lambda_.70} parent=0 // pred_fallthru
    _
  // Predicated region
  $region6: #{_lambda_.70} parent=0 // pred_check
    _
  $region7: #{_lambda_.70} parent=0 // pred_check_branch
    %10 = sbr.rel (0) target = $region9
  $region8: #{_lambda_.70} parent=0 // pred_region
    _
  $region9: #{_lambda_.70} parent=0 // pred_fallthru
    _
  %v12 = vld [vmem:[%s1] sm:$0xff]
  %v13 = vld [vmem:[%s1 + $0x8] sm:$0xff]
  %v14 = vld [vmem:[%s1 + $0x10] sm:$0xff]
  %v15 = vld [vmem:[%s1 + $0x18] sm:$0xff]
  %v16 = vld [vmem:[%s1 + $0x20] sm:$0xff]
  %v17 = vld [vmem:[%s1 + $0x28] sm:$0xff]
  %v18 = vld [vmem:[%s1 + $0x30] sm:$0xff]
  %v19 = vld [vmem:[%s1 + $0x38] sm:$0xff]
  %v20 = vld [vmem:[%s0] sm:$0xf]
  %v21 = vld [vmem:[%s0 + $0x4] sm:$0xf]
  %v22 = vld [vmem:[%s0 + $0x8] sm:$0xf]
  %v23 = vld [vmem:[%s0 + $0xc] sm:$0xf]
  %v24 = vld [vmem:[%s0 + $0x10] sm:$0xf]
  %v25 = vld [vmem:[%s0 + $0x14] sm:$0xf]
  %v26 = vld [vmem:[%s0 + $0x18] sm:$0xf]
  %v27 = vld [vmem:[%s0 + $0x1c] sm:$0xf]
  %v28 = vld [vmem:[%s0 + $0x20] sm:$0xf]
  %v29 = vld [vmem:[%s0 + $0x24] sm:$0xf]
  %v30 = vld [vmem:[%s0 + $0x28] sm:$0xf]
  %v31 = vld [vmem:[%s0 + $0x2c] sm:$0xf]
  %v32 = vld [vmem:[%s0 + $0x30] sm:$0xf]
  %v33 = vld [vmem:[%s0 + $0x34] sm:$0xf]
  %v34 = vld [vmem:[%s0 + $0x38] sm:$0xf]
  %v35 = vld [vmem:[%s0 + $0x3c] sm:$0xf]
  %v36 = vld [vmem:[%s0 + $0x40] sm:$0xf]
  %v37 = vld [vmem:[%s0 + $0x44] sm:$0xf]
  %v38 = vld [vmem:[%s0 + $0x48] sm:$0xf]
  %v39 = vld [vmem:[%s0 + $0x4c] sm:$0xf]
  %v40 = vld [vmem:[%s0 + $0x50] sm:$0xf]
  %v41 = vld [vmem:[%s0 + $0x54] sm:$0xf]
  %v42 = vld [vmem:[%s0 + $0x58] sm:$0xf]
  %v43 = vld [vmem:[%s0 + $0x5c] sm:$0xf]
  %v44 = vld [vmem:[%s0 + $0x60] sm:$0xf]
  %v45 = vld [vmem:[%s0 + $0x64] sm:$0xf]
  %v46 = vld [vmem:[%s0 + $0x68] sm:$0xf]
  %v47 = vld [vmem:[%s0 + $0x6c] sm:$0xf]
  %v48 = vld [vmem:[%s0 + $0x70] sm:$0xf]
  %v49 = vld [vmem:[%s0 + $0x74] sm:$0xf]
  %v50 = vld [vmem:[%s0 + $0x78] sm:$0xf]
  %v51 = vld [vmem:[%s0 + $0x7c] sm:$0xf]
  %v52 = vld [vmem:[%s0 + $0x80] sm:$0xf]
  %v53 = vld [vmem:[%s0 + $0x84] sm:$0xf]
  %v54 = vld [vmem:[%s0 + $0x88] sm:$0xf]
  %v55 = vld [vmem:[%s0 + $0x8c] sm:$0xf]
  %v56 = vld [vmem:[%s0 + $0x90] sm:$0xf]
  %v57 = vld [vmem:[%s0 + $0x94] sm:$0xf]
  %v58 = vld [vmem:[%s0 + $0x98] sm:$0xf]
  %v59 = vld [vmem:[%s0 + $0x9c] sm:$0xf]
  %v60 = vld [vmem:[%s0 + $0xa0] sm:$0xf]
  %v61 = vld [vmem:[%s0 + $0xa4] sm:$0xf]
  %v62 = vld [vmem:[%s0 + $0xa8] sm:$0xf]
  %v63 = vld [vmem:[%s0 + $0xac] sm:$0xf]
  %v64 = vld [vmem:[%s0 + $0xb0] sm:$0xf]
  %v65 = vld [vmem:[%s0 + $0xb4] sm:$0xf]
  %v66 = vld [vmem:[%s0 + $0xb8] sm:$0xf]
  %v67 = vld [vmem:[%s0 + $0xbc] sm:$0xf]
  %v68 = vld [vmem:[%s0 + $0xc0] sm:$0xf]
  %v69 = vld [vmem:[%s0 + $0xc4] sm:$0xf]
  %v78 = vunpack.c.l.b16 %v12
  %v79 = vunpack.c.h.b16 %v12
  %v80 = vunpack.c.l.b16 %v13
  %v81 = vunpack.c.h.b16 %v13
  %v82 = vunpack.c.l.b16 %v14
  %v83 = vunpack.c.h.b16 %v14
  %v84 = vunpack.c.l.b16 %v15
  %v85 = vunpack.c.h.b16 %v15
  %v86 = vunpack.c.l.b16 %v16
  %v87 = vunpack.c.h.b16 %v16
  %v88 = vunpack.c.l.b16 %v17
  %v89 = vunpack.c.h.b16 %v17
  %v90 = vunpack.c.l.b16 %v18
  %v91 = vunpack.c.h.b16 %v18
  %v92 = vunpack.c.l.b16 %v19
  %v93 = vunpack.c.h.b16 %v19
  %v94 = vpack.c.b16 %v82, %v78
  %v95 = vpack.c.b16 %v83, %v79
  %v96 = vpack.c.b16 %v84, %v80
  %v97 = vpack.c.b16 %v85, %v81
  %v98 = vpack.c.b16 %v90, %v86
  %v99 = vpack.c.b16 %v91, %v87
  %v100 = vpack.c.b16 %v92, %v88
  %v101 = vpack.c.b16 %v93, %v89
  %v158 = vunpack.c.l.b16 %v20
  %v159 = vunpack.c.l.b16 %v21
  %v160 = vunpack.c.l.b16 %v22
  %v161 = vunpack.c.l.b16 %v23
  %v162 = vunpack.c.l.b16 %v24
  %v163 = vunpack.c.l.b16 %v25
  %v164 = vunpack.c.l.b16 %v26
  %v165 = vunpack.c.l.b16 %v27
  %v166 = vunpack.c.l.b16 %v28
  %v167 = vunpack.c.l.b16 %v29
  %v168 = vunpack.c.l.b16 %v30
  %v169 = vunpack.c.l.b16 %v31
  %v170 = vunpack.c.l.b16 %v32
  %v171 = vunpack.c.l.b16 %v33
  %v172 = vunpack.c.l.b16 %v34
  %v173 = vunpack.c.l.b16 %v35
  %v174 = vunpack.c.l.b16 %v36
  %v175 = vunpack.c.l.b16 %v37
  %v176 = vunpack.c.l.b16 %v38
  %v177 = vunpack.c.l.b16 %v39
  %v178 = vunpack.c.l.b16 %v40
  %v179 = vunpack.c.l.b16 %v41
  %v180 = vunpack.c.l.b16 %v42
  %v181 = vunpack.c.l.b16 %v43
  %v182 = vunpack.c.l.b16 %v44
  %v183 = vunpack.c.l.b16 %v45
  %v184 = vunpack.c.l.b16 %v46
  %v185 = vunpack.c.l.b16 %v47
  %v186 = vunpack.c.l.b16 %v48
  %v187 = vunpack.c.l.b16 %v49
  %v188 = vunpack.c.l.b16 %v50
  %v189 = vunpack.c.l.b16 %v51
  %v190 = vunpack.c.l.b16 %v52
  %v191 = vunpack.c.l.b16 %v53
  %v192 = vunpack.c.l.b16 %v54
  %v193 = vunpack.c.l.b16 %v55
  %v194 = vunpack.c.l.b16 %v56
  %v195 = vunpack.c.l.b16 %v57
  %v196 = vunpack.c.l.b16 %v58
  %v197 = vunpack.c.l.b16 %v59
  %v198 = vunpack.c.l.b16 %v60
  %v199 = vunpack.c.l.b16 %v61
  %v200 = vunpack.c.l.b16 %v62
  %v201 = vunpack.c.l.b16 %v63
  %v202 = vunpack.c.l.b16 %v64
  %v203 = vunpack.c.l.b16 %v65
  %v204 = vunpack.c.l.b16 %v66
  %v205 = vunpack.c.l.b16 %v67
  %v206 = vunpack.c.l.b16 %v68
  %v207 = vunpack.c.l.b16 %v69
  %v208 = vpack.c.b16 %v159, %v158
  %v209 = vpack.c.b16 %v161, %v160
  %v210 = vpack.c.b16 %v163, %v162
  %v211 = vpack.c.b16 %v165, %v164
  %v212 = vpack.c.b16 %v167, %v166
  %v213 = vpack.c.b16 %v169, %v168
  %v214 = vpack.c.b16 %v171, %v170
  %v215 = vpack.c.b16 %v173, %v172
  %v216 = vpack.c.b16 %v175, %v174
  %v217 = vpack.c.b16 %v177, %v176
  %v218 = vpack.c.b16 %v179, %v178
  %v219 = vpack.c.b16 %v181, %v180
  %v220 = vpack.c.b16 %v183, %v182
  %v221 = vpack.c.b16 %v185, %v184
  %v222 = vpack.c.b16 %v187, %v186
  %v223 = vpack.c.b16 %v189, %v188
  %v224 = vpack.c.b16 %v191, %v190
  %v225 = vpack.c.b16 %v193, %v192
  %v226 = vpack.c.b16 %v195, %v194
  %v227 = vpack.c.b16 %v197, %v196
  %v228 = vpack.c.b16 %v199, %v198
  %v229 = vpack.c.b16 %v201, %v200
  %v230 = vpack.c.b16 %v203, %v202
  %v231 = vpack.c.b16 %v205, %v204
  %v232 = vpack.c.b16 %v207, %v206
  %vm258 = vcmask 130048
  %v260 = vsel %vm258, %v97, 0
  %v263 = vsel %vm258, %v101, 0
  %265 = vmatprep.subr.bf16.mxu0 0
  %266 = vmatpush1.bf16.msra.mxu0 %v215
  %267 = vmatprep.subr.bf16.mxu0 0
  %268 = vmatpush1.bf16.msra.mxu0 %v214
  %269 = vmatprep.subr.bf16.mxu0 0
  %270 = vmatpush1.bf16.msra.mxu0 %v213
  %271 = vmatprep.subr.bf16.mxu0 0
  %272 = vmatpush1.bf16.msra.mxu0 %v212
  %273 = vmatprep.subr.bf16.mxu0 0
  %274 = vmatpush1.bf16.msra.mxu0 %v211
  %275 = vmatprep.subr.bf16.mxu0 0
  %276 = vmatpush1.bf16.msra.mxu0 %v210
  %277 = vmatprep.subr.bf16.mxu0 0
  %278 = vmatpush1.bf16.msra.mxu0 %v209
  %279 = vmatprep.subr.bf16.mxu0 0
  %280 = vmatpush1.bf16.msra.mxu0 %v208
  %281 = vmatprep.subr.bf16.mxu0 0
  %282 = vmatpush2.bf16.msra.mxu0 %v223
  %283 = vmatprep.subr.bf16.mxu0 0
  %284 = vmatpush2.bf16.msra.mxu0 %v222
  %285 = vmatprep.subr.bf16.mxu0 0
  %286 = vmatpush2.bf16.msra.mxu0 %v221
  %287 = vmatprep.subr.bf16.mxu0 0
  %288 = vmatpush2.bf16.msra.mxu0 %v220
  %289 = vmatprep.subr.bf16.mxu0 0
  %290 = vmatpush2.bf16.msra.mxu0 %v219
  %291 = vmatprep.subr.bf16.mxu0 0
  %292 = vmatpush2.bf16.msra.mxu0 %v218
  %293 = vmatprep.subr.bf16.mxu0 0
  %294 = vmatpush2.bf16.msra.mxu0 %v217
  %295 = vmatprep.subr.bf16.mxu0 0
  %296 = vmatpush2.bf16.msra.mxu0 %v216
  %297 = vmatprep.mubr.bf16.mxu0 %v95
  %298 = vmatmul.mubr.bf16.gmra.mxu0 %v94
  %v299 = vpop.f32.mrf.mxu0
  %v300 = vadd.f32 0.0, %v299
  %v301 = vpop.f32.mrf.mxu0
  %v302 = vpop.f32.mrf.mxu0
  %v303 = vadd.f32 0.0, %v302
  %v304 = vpop.f32.mrf.mxu0
  %305 = vmatprep.mubr.bf16.mxu0 %v99
  %306 = vmatmul.mubr.bf16.gmra.mxu0 %v98
  %v307 = vpop.f32.mrf.mxu0
  %v308 = vadd.f32 0.0, %v307
  %v309 = vpop.f32.mrf.mxu0
  %v310 = vpop.f32.mrf.mxu0
  %v311 = vadd.f32 0.0, %v310
  %v312 = vpop.f32.mrf.mxu0
  %313 = vdwg.mxu0
  %314 = vmatprep.subr.bf16.mxu0 0
  %315 = vmatpush1.bf16.msra.mxu0 %v231
  %316 = vmatprep.subr.bf16.mxu0 0
  %317 = vmatpush1.bf16.msra.mxu0 %v230
  %318 = vmatprep.subr.bf16.mxu0 0
  %319 = vmatpush1.bf16.msra.mxu0 %v229
  %320 = vmatprep.subr.bf16.mxu0 0
  %321 = vmatpush1.bf16.msra.mxu0 %v228
  %322 = vmatprep.subr.bf16.mxu0 0
  %323 = vmatpush1.bf16.msra.mxu0 %v227
  %324 = vmatprep.subr.bf16.mxu0 0
  %325 = vmatpush1.bf16.msra.mxu0 %v226
  %326 = vmatprep.subr.bf16.mxu0 0
  %327 = vmatpush1.bf16.msra.mxu0 %v225
  %328 = vmatprep.subr.bf16.mxu0 0
  %329 = vmatpush1.bf16.msra.mxu0 %v224
  %330 = vmatprep.subr.bf16.mxu0 0
  %331 = vmatpush2.bf16.msra.mxu0 0
  %332 = vmatprep.subr.bf16.mxu0 0
  %333 = vmatpush2.bf16.msra.mxu0 0
  %334 = vmatprep.subr.bf16.mxu0 0
  %335 = vmatpush2.bf16.msra.mxu0 0
  %336 = vmatprep.subr.bf16.mxu0 0
  %337 = vmatpush2.bf16.msra.mxu0 0
  %338 = vmatprep.subr.bf16.mxu0 0
  %339 = vmatpush2.bf16.msra.mxu0 0
  %340 = vmatprep.subr.bf16.mxu0 0
  %341 = vmatpush2.bf16.msra.mxu0 0
  %342 = vmatprep.subr.bf16.mxu0 0
  %343 = vmatpush2.bf16.msra.mxu0 0
  %344 = vmatprep.subr.bf16.mxu0 0
  %345 = vmatpush2.bf16.msra.mxu0 %v232
  %346 = vmatprep.mubr.bf16.mxu0 %v260
  %347 = vmatmul.mubr.bf16.gmra.mxu0 %v96
  %v348 = vpop.f32.mrf.mxu0
  %v349 = vadd.f32 %v300, %v348
  %v350 = vpop.f32.mrf.mxu0
  %v351 = vpop.f32.mrf.mxu0
  %v352 = vadd.f32 %v303, %v351
  %v353 = vpop.f32.mrf.mxu0
  %354 = vmatprep.mubr.bf16.mxu0 %v263
  %355 = vmatmul.mubr.bf16.gmra.mxu0 %v100
  %v356 = vpop.f32.mrf.mxu0
  %v357 = vadd.f32 %v308, %v356
  %v358 = vpop.f32.mrf.mxu0
  %v359 = vpop.f32.mrf.mxu0
  %v360 = vadd.f32 %v311, %v359
  %v361 = vpop.f32.mrf.mxu0
  %362 = vdwg.mxu0
  %363 = vst [vmem:[%s2] sm:$0xff] %v349
  %364 = vst [vmem:[%s2 + $0x8] sm:$0xff] %v352
  %365 = vst [vmem:[%s2 + $0x10] sm:$0xff] %v357
  %366 = vst [vmem:[%s2 + $0x18] sm:$0xff] %v360
  // Predicated region
  $region10: #{_lambda_.70} parent=0 // pred_check
    _
  $region11: #{_lambda_.70} parent=0 // pred_check_branch
    %368 = sbr.rel (0) target = $region13
  $region12: #{_lambda_.70} parent=0 // pred_region
    _
  $region13: #{_lambda_.70} parent=0 // pred_fallthru
    _
  // Predicated region
  $region14: #{_lambda_.70} parent=0 // pred_check
    _
  $region15: #{_lambda_.70} parent=0 // pred_check_branch
    %370 = sbr.rel (0) target = $region17
  $region16: #{_lambda_.70} parent=0 // pred_region
    _
  $region17: #{_lambda_.70} parent=0 // pred_fallthru
    _

// kernel: _lambda_.73
$region0: #{_lambda_.73}
  #allocation0 [shape = 'u32[]', space=smem, size = 0x4, offset = 0x4, fixed_abs, tag = 'smem constant byte address 0x4 - core index']
  #allocation1 [shape = 'u32[144,128]{1,0:T(1,128)}', space=vmem, size = 0x12000, scoped, tag = 'internal scratch']
  %s0 = inlined_call_operand.vmem [shape: bf16[32,128], index: 0, kind: input, shape index: {}]
  %s1 = inlined_call_operand.vmem [shape: bf16[32,32], index: 1, kind: input, shape index: {}]
  %s2 = inlined_call_operand.vmem [shape: f32[32,128], index: 2, kind: output, shape index: {}]
  %s3 = sld [smem:[#allocation0]]
  $region18: #{_lambda_.73} parent=0
    _
  %s5 = ssub.s32 1, %s3
  %s6 = scalar_select 0, %s5, %s3
  // Predicated region
  $region2: #{_lambda_.73} parent=0 // pred_check
    _
  $region3: #{_lambda_.73} parent=0 // pred_check_branch
    %8 = sbr.rel (0) target = $region5
  $region4: #{_lambda_.73} parent=0 // pred_region
    _
  $region5: #{_lambda_.73} parent=0 // pred_fallthru
    _
  // Predicated region
  $region6: #{_lambda_.73} parent=0 // pred_check
    _
  $region7: #{_lambda_.73} parent=0 // pred_check_branch
    %10 = sbr.rel (0) target = $region9
  $region8: #{_lambda_.73} parent=0 // pred_region
    _
  $region9: #{_lambda_.73} parent=0 // pred_fallthru
    _
  %v12 = vld [vmem:[%s1] sm:$0xf]
  %v13 = vld [vmem:[%s1 + $0x4] sm:$0xf]
  %v14 = vld [vmem:[%s1 + $0x8] sm:$0xf]
  %v15 = vld [vmem:[%s1 + $0xc] sm:$0xf]
  %v16 = vld [vmem:[%s0] sm:$0xf]
  %v17 = vld [vmem:[%s0 + $0x4] sm:$0xf]
  %v18 = vld [vmem:[%s0 + $0x8] sm:$0xf]
  %v19 = vld [vmem:[%s0 + $0xc] sm:$0xf]
  %v20 = vmax.bf16 %v16, 0
  %v21 = vmax.bf16 %v17, 0
  %v22 = vmax.bf16 %v18, 0
  %v23 = vmax.bf16 %v19, 0
  %v28 = vunpack.c.l.b16 %v12
  %v29 = vunpack.c.l.b16 %v13
  %v30 = vunpack.c.l.b16 %v14
  %v31 = vunpack.c.l.b16 %v15
  %v32 = vpack.c.b16 %v29, %v28
  %v33 = vpack.c.b16 %v31, %v30
  %v38 = vunpack.c.l.b16 %v20
  %v39 = vunpack.c.l.b16 %v21
  %v40 = vunpack.c.l.b16 %v22
  %v41 = vunpack.c.l.b16 %v23
  %v42 = vpack.c.b16 %v39, %v38
  %v43 = vpack.c.b16 %v41, %v40
  %vm46 = vcmask 261120
  %v48 = vsel %vm46, %v32, 0
  %v51 = vsel %vm46, %v33, 0
  %53 = vmatprep.subr.bf16.mxu0 0
  %54 = vmatpush1.bf16.msra.mxu0 0
  %55 = vmatprep.subr.bf16.mxu0 0
  %56 = vmatpush1.bf16.msra.mxu0 0
  %57 = vmatprep.subr.bf16.mxu0 0
  %58 = vmatpush1.bf16.msra.mxu0 0
  %59 = vmatprep.subr.bf16.mxu0 0
  %60 = vmatpush1.bf16.msra.mxu0 0
  %61 = vmatprep.subr.bf16.mxu0 0
  %62 = vmatpush1.bf16.msra.mxu0 0
  %63 = vmatprep.subr.bf16.mxu0 0
  %64 = vmatpush1.bf16.msra.mxu0 0
  %65 = vmatprep.subr.bf16.mxu0 0
  %66 = vmatpush1.bf16.msra.mxu0 %v43
  %67 = vmatprep.subr.bf16.mxu0 0
  %68 = vmatpush1.bf16.msra.mxu0 %v42
  %69 = vmatprep.subr.bf16.mxu0 0
  %70 = vmatpush2.bf16.msra.mxu0 0
  %71 = vmatprep.subr.bf16.mxu0 0
  %72 = vmatpush2.bf16.msra.mxu0 0
  %73 = vmatprep.subr.bf16.mxu0 0
  %74 = vmatpush2.bf16.msra.mxu0 0
  %75 = vmatprep.subr.bf16.mxu0 0
  %76 = vmatpush2.bf16.msra.mxu0 0
  %77 = vmatprep.subr.bf16.mxu0 0
  %78 = vmatpush2.bf16.msra.mxu0 0
  %79 = vmatprep.subr.bf16.mxu0 0
  %80 = vmatpush2.bf16.msra.mxu0 0
  %81 = vmatprep.subr.bf16.mxu0 0
  %82 = vmatpush2.bf16.msra.mxu0 0
  %83 = vmatprep.subr.bf16.mxu0 0
  %84 = vmatpush2.bf16.msra.mxu0 0
  %85 = vmatprep.mubr.bf16.mxu0 0
  %86 = vmatmul.mubr.bf16.gmra.mxu0 %v48
  %v87 = vpop.f32.mrf.mxu0
  %v88 = vadd.f32 0.0, %v87
  %v89 = vpop.f32.mrf.mxu0
  %v90 = vpop.f32.mrf.mxu0
  %v91 = vadd.f32 0.0, %v90
  %v92 = vpop.f32.mrf.mxu0
  %93 = vmatprep.mubr.bf16.mxu0 0
  %94 = vmatmul.mubr.bf16.gmra.mxu0 %v51
  %v95 = vpop.f32.mrf.mxu0
  %v96 = vadd.f32 0.0, %v95
  %v97 = vpop.f32.mrf.mxu0
  %v98 = vpop.f32.mrf.mxu0
  %v99 = vadd.f32 0.0, %v98
  %v100 = vpop.f32.mrf.mxu0
  %101 = vdwg.mxu0
  %102 = vst [vmem:[%s2] sm:$0xff] %v88
  %103 = vst [vmem:[%s2 + $0x8] sm:$0xff] %v91
  %104 = vst [vmem:[%s2 + $0x10] sm:$0xff] %v96
  %105 = vst [vmem:[%s2 + $0x18] sm:$0xff] %v99
  // Predicated region
  $region10: #{_lambda_.73} parent=0 // pred_check
    _
  $region11: #{_lambda_.73} parent=0 // pred_check_branch
    %107 = sbr.rel (0) target = $region13
  $region12: #{_lambda_.73} parent=0 // pred_region
    _
  $region13: #{_lambda_.73} parent=0 // pred_fallthru
    _
  // Predicated region
  $region14: #{_lambda_.73} parent=0 // pred_check
    _
  $region15: #{_lambda_.73} parent=0 // pred_check_branch
    %109 = sbr.rel (0) target = $region17
  $region16: #{_lambda_.73} parent=0 // pred_region
    _
  $region17: #{_lambda_.73} parent=0 // pred_fallthru
    _

// kernel: _lambda_.80
$region0: #{_lambda_.80}
  #allocation0 [shape = 'u32[]', space=smem, size = 0x4, offset = 0x4, fixed_abs, tag = 'smem constant byte address 0x4 - core index']
  #allocation1 [shape = 'u32[144,128]{1,0:T(1,128)}', space=vmem, size = 0x12000, scoped, tag = 'internal scratch']
  %s0 = inlined_call_operand.vmem [shape: bf16[800,128], index: 0, kind: input, shape index: {}]
  %s1 = inlined_call_operand.vmem [shape: bf16[80,800], index: 1, kind: input, shape index: {}]
  %s2 = inlined_call_operand.vmem [shape: f32[80,128], index: 2, kind: output, shape index: {}]
  %s3 = sld [smem:[#allocation0]]
  $region18: #{_lambda_.80} parent=0
    _
  %s5 = ssub.s32 1, %s3
  %s6 = scalar_select 0, %s5, %s3
  // Predicated region
  $region2: #{_lambda_.80} parent=0 // pred_check
    _
  $region3: #{_lambda_.80} parent=0 // pred_check_branch
    %8 = sbr.rel (0) target = $region5
  $region4: #{_lambda_.80} parent=0 // pred_region
    _
  $region5: #{_lambda_.80} parent=0 // pred_fallthru
    _
  // Predicated region
  $region6: #{_lambda_.80} parent=0 // pred_check
    _
  $region7: #{_lambda_.80} parent=0 // pred_check_branch
    %10 = sbr.rel (0) target = $region9
  $region8: #{_lambda_.80} parent=0 // pred_region
    _
  $region9: #{_lambda_.80} parent=0 // pred_fallthru
    _
  %v12 = vld [vmem:[%s1] sm:$0xff]
  %v13 = vld [vmem:[%s1 + $0x8] sm:$0xff]
  %v14 = vld [vmem:[%s1 + $0x10] sm:$0xff]
  %v15 = vld [vmem:[%s1 + $0x18] sm:$0xf]
  %v16 = vld [vmem:[%s1 + $0x1c] sm:$0xff]
  %v17 = vld [vmem:[%s1 + $0x24] sm:$0xff]
  %v18 = vld [vmem:[%s1 + $0x2c] sm:$0xff]
  %v19 = vld [vmem:[%s1 + $0x34] sm:$0xf]
  %v20 = vld [vmem:[%s1 + $0x38] sm:$0xff]
  %v21 = vld [vmem:[%s1 + $0x40] sm:$0xff]
  %v22 = vld [vmem:[%s1 + $0x48] sm:$0xff]
  %v23 = vld [vmem:[%s1 + $0x50] sm:$0xf]
  %v24 = vld [vmem:[%s1 + $0x54] sm:$0xff]
  %v25 = vld [vmem:[%s1 + $0x5c] sm:$0xff]
  %v26 = vld [vmem:[%s1 + $0x64] sm:$0xff]
  %v27 = vld [vmem:[%s1 + $0x6c] sm:$0xf]
  %v28 = vld [vmem:[%s1 + $0x70] sm:$0xff]
  %v29 = vld [vmem:[%s1 + $0x78] sm:$0xff]
  %v30 = vld [vmem:[%s1 + $0x80] sm:$0xff]
  %v31 = vld [vmem:[%s1 + $0x88] sm:$0xf]
  %v32 = vld [vmem:[%s1 + $0x8c] sm:$0xff]
  %v33 = vld [vmem:[%s1 + $0x94] sm:$0xff]
  %v34 = vld [vmem:[%s1 + $0x9c] sm:$0xff]
  %v35 = vld [vmem:[%s1 + $0xa4] sm:$0xf]
  %v36 = vld [vmem:[%s1 + $0xa8] sm:$0xff]
  %v37 = vld [vmem:[%s1 + $0xb0] sm:$0xff]
  %v38 = vld [vmem:[%s1 + $0xb8] sm:$0xff]
  %v39 = vld [vmem:[%s1 + $0xc0] sm:$0xf]
  %v40 = vld [vmem:[%s1 + $0xc4] sm:$0xff]
  %v41 = vld [vmem:[%s1 + $0xcc] sm:$0xff]
  %v42 = vld [vmem:[%s1 + $0xd4] sm:$0xff]
  %v43 = vld [vmem:[%s1 + $0xdc] sm:$0xf]
  %v44 = vld [vmem:[%s1 + $0xe0] sm:$0xff]
  %v45 = vld [vmem:[%s1 + $0xe8] sm:$0xff]
  %v46 = vld [vmem:[%s1 + $0xf0] sm:$0xff]
  %v47 = vld [vmem:[%s1 + $0xf8] sm:$0xf]
  %v48 = vld [vmem:[%s1 + $0xfc] sm:$0xff]
  %v49 = vld [vmem:[%s1 + $0x104] sm:$0xff]
  %v50 = vld [vmem:[%s1 + $0x10c] sm:$0xff]
  %v51 = vld [vmem:[%s1 + $0x114] sm:$0xf]
  %v52 = vld [vmem:[%s0] sm:$0xf]
  %v53 = vld [vmem:[%s0 + $0x4] sm:$0xf]
  %v54 = vld [vmem:[%s0 + $0x8] sm:$0xf]
  %v55 = vld [vmem:[%s0 + $0xc] sm:$0xf]
  %v56 = vld [vmem:[%s0 + $0x10] sm:$0xf]
  %v57 = vld [vmem:[%s0 + $0x14] sm:$0xf]
  %v58 = vld [vmem:[%s0 + $0x18] sm:$0xf]
  %v59 = vld [vmem:[%s0 + $0x1c] sm:$0xf]
  %v60 = vld [vmem:[%s0 + $0x20] sm:$0xf]
  %v61 = vld [vmem:[%s0 + $0x24] sm:$0xf]
  %v62 = vld [vmem:[%s0 + $0x28] sm:$0xf]
  %v63 = vld [vmem:[%s0 + $0x2c] sm:$0xf]
  %v64 = vld [vmem:[%s0 + $0x30] sm:$0xf]
  %v65 = vld [vmem:[%s0 + $0x34] sm:$0xf]
  %v66 = vld [vmem:[%s0 + $0x38] sm:$0xf]
  %v67 = vld [vmem:[%s0 + $0x3c] sm:$0xf]
  %v68 = vld [vmem:[%s0 + $0x40] sm:$0xf]
  %v69 = vld [vmem:[%s0 + $0x44] sm:$0xf]
  %v70 = vld [vmem:[%s0 + $0x48] sm:$0xf]
  %v71 = vld [vmem:[%s0 + $0x4c] sm:$0xf]
  %v72 = vld [vmem:[%s0 + $0x50] sm:$0xf]
  %v73 = vld [vmem:[%s0 + $0x54] sm:$0xf]
  %v74 = vld [vmem:[%s0 + $0x58] sm:$0xf]
  %v75 = vld [vmem:[%s0 + $0x5c] sm:$0xf]
  %v76 = vld [vmem:[%s0 + $0x60] sm:$0xf]
  %v77 = vld [vmem:[%s0 + $0x64] sm:$0xf]
  %v78 = vld [vmem:[%s0 + $0x68] sm:$0xf]
  %v79 = vld [vmem:[%s0 + $0x6c] sm:$0xf]
  %v80 = vld [vmem:[%s0 + $0x70] sm:$0xf]
  %v81 = vld [vmem:[%s0 + $0x74] sm:$0xf]
  %v82 = vld [vmem:[%s0 + $0x78] sm:$0xf]
  %v83 = vld [vmem:[%s0 + $0x7c] sm:$0xf]
  %v84 = vld [vmem:[%s0 + $0x80] sm:$0xf]
  %v85 = vld [vmem:[%s0 + $0x84] sm:$0xf]
  %v86 = vld [vmem:[%s0 + $0x88] sm:$0xf]
  %v87 = vld [vmem:[%s0 + $0x8c] sm:$0xf]
  %v88 = vld [vmem:[%s0 + $0x90] sm:$0xf]
  %v89 = vld [vmem:[%s0 + $0x94] sm:$0xf]
  %v90 = vld [vmem:[%s0 + $0x98] sm:$0xf]
  %v91 = vld [vmem:[%s0 + $0x9c] sm:$0xf]
  %v92 = vld [vmem:[%s0 + $0xa0] sm:$0xf]
  %v93 = vld [vmem:[%s0 + $0xa4] sm:$0xf]
  %v94 = vld [vmem:[%s0 + $0xa8] sm:$0xf]
  %v95 = vld [vmem:[%s0 + $0xac] sm:$0xf]
  %v96 = vld [vmem:[%s0 + $0xb0] sm:$0xf]
  %v97 = vld [vmem:[%s0 + $0xb4] sm:$0xf]
  %v98 = vld [vmem:[%s0 + $0xb8] sm:$0xf]
  %v99 = vld [vmem:[%s0 + $0xbc] sm:$0xf]
  %v100 = vld [vmem:[%s0 + $0xc0] sm:$0xf]
  %v101 = vld [vmem:[%s0 + $0xc4] sm:$0xf]
  %v102 = vld [vmem:[%s0 + $0xc8] sm:$0xf]
  %v103 = vld [vmem:[%s0 + $0xcc] sm:$0xf]
  %v104 = vld [vmem:[%s0 + $0xd0] sm:$0xf]
  %v105 = vld [vmem:[%s0 + $0xd4] sm:$0xf]
  %v106 = vld [vmem:[%s0 + $0xd8] sm:$0xf]
  %v107 = vld [vmem:[%s0 + $0xdc] sm:$0xf]
  %v108 = vld [vmem:[%s0 + $0xe0] sm:$0xf]
  %v109 = vld [vmem:[%s0 + $0xe4] sm:$0xf]
  %v110 = vld [vmem:[%s0 + $0xe8] sm:$0xf]
  %v111 = vld [vmem:[%s0 + $0xec] sm:$0xf]
  %v112 = vld [vmem:[%s0 + $0xf0] sm:$0xf]
  %v113 = vld [vmem:[%s0 + $0xf4] sm:$0xf]
  %v114 = vld [vmem:[%s0 + $0xf8] sm:$0xf]
  %v115 = vld [vmem:[%s0 + $0xfc] sm:$0xf]
  %v116 = vld [vmem:[%s0 + $0x100] sm:$0xf]
  %v117 = vld [vmem:[%s0 + $0x104] sm:$0xf]
  %v118 = vld [vmem:[%s0 + $0x108] sm:$0xf]
  %v119 = vld [vmem:[%s0 + $0x10c] sm:$0xf]
  %v120 = vld [vmem:[%s0 + $0x110] sm:$0xf]
  %v121 = vld [vmem:[%s0 + $0x114] sm:$0xf]
  %v122 = vld [vmem:[%s0 + $0x118] sm:$0xf]
  %v123 = vld [vmem:[%s0 + $0x11c] sm:$0xf]
  %v124 = vld [vmem:[%s0 + $0x120] sm:$0xf]
  %v125 = vld [vmem:[%s0 + $0x124] sm:$0xf]
  %v126 = vld [vmem:[%s0 + $0x128] sm:$0xf]
  %v127 = vld [vmem:[%s0 + $0x12c] sm:$0xf]
  %v128 = vld [vmem:[%s0 + $0x130] sm:$0xf]
  %v129 = vld [vmem:[%s0 + $0x134] sm:$0xf]
  %v130 = vld [vmem:[%s0 + $0x138] sm:$0xf]
  %v131 = vld [vmem:[%s0 + $0x13c] sm:$0xf]
  %v132 = vld [vmem:[%s0 + $0x140] sm:$0xf]
  %v133 = vld [vmem:[%s0 + $0x144] sm:$0xf]
  %v134 = vld [vmem:[%s0 + $0x148] sm:$0xf]
  %v135 = vld [vmem:[%s0 + $0x14c] sm:$0xf]
  %v136 = vld [vmem:[%s0 + $0x150] sm:$0xf]
  %v137 = vld [vmem:[%s0 + $0x154] sm:$0xf]
  %v138 = vld [vmem:[%s0 + $0x158] sm:$0xf]
  %v139 = vld [vmem:[%s0 + $0x15c] sm:$0xf]
  %v140 = vld [vmem:[%s0 + $0x160] sm:$0xf]
  %v141 = vld [vmem:[%s0 + $0x164] sm:$0xf]
  %v142 = vld [vmem:[%s0 + $0x168] sm:$0xf]
  %v143 = vld [vmem:[%s0 + $0x16c] sm:$0xf]
  %v144 = vld [vmem:[%s0 + $0x170] sm:$0xf]
  %v145 = vld [vmem:[%s0 + $0x174] sm:$0xf]
  %v146 = vld [vmem:[%s0 + $0x178] sm:$0xf]
  %v147 = vld [vmem:[%s0 + $0x17c] sm:$0xf]
  %v148 = vld [vmem:[%s0 + $0x180] sm:$0xf]
  %v149 = vld [vmem:[%s0 + $0x184] sm:$0xf]
  %v150 = vld [vmem:[%s0 + $0x188] sm:$0xf]
  %v151 = vld [vmem:[%s0 + $0x18c] sm:$0xf]
  %v192 = vunpack.c.l.b16 %v12
  %v193 = vunpack.c.h.b16 %v12
  %v194 = vunpack.c.l.b16 %v13
  %v195 = vunpack.c.h.b16 %v13
  %v196 = vunpack.c.l.b16 %v14
  %v197 = vunpack.c.h.b16 %v14
  %v198 = vunpack.c.l.b16 %v15
  %v199 = vunpack.c.l.b16 %v16
  %v200 = vunpack.c.h.b16 %v16
  %v201 = vunpack.c.l.b16 %v17
  %v202 = vunpack.c.h.b16 %v17
  %v203 = vunpack.c.l.b16 %v18
  %v204 = vunpack.c.h.b16 %v18
  %v205 = vunpack.c.l.b16 %v19
  %v206 = vunpack.c.l.b16 %v20
  %v207 = vunpack.c.h.b16 %v20
  %v208 = vunpack.c.l.b16 %v21
  %v209 = vunpack.c.h.b16 %v21
  %v210 = vunpack.c.l.b16 %v22
  %v211 = vunpack.c.h.b16 %v22
  %v212 = vunpack.c.l.b16 %v23
  %v213 = vunpack.c.l.b16 %v24
  %v214 = vunpack.c.h.b16 %v24
  %v215 = vunpack.c.l.b16 %v25
  %v216 = vunpack.c.h.b16 %v25
  %v217 = vunpack.c.l.b16 %v26
  %v218 = vunpack.c.h.b16 %v26
  %v219 = vunpack.c.l.b16 %v27
  %v220 = vunpack.c.l.b16 %v28
  %v221 = vunpack.c.h.b16 %v28
  %v222 = vunpack.c.l.b16 %v29
  %v223 = vunpack.c.h.b16 %v29
  %v224 = vunpack.c.l.b16 %v30
  %v225 = vunpack.c.h.b16 %v30
  %v226 = vunpack.c.l.b16 %v31
  %v227 = vunpack.c.l.b16 %v32
  %v228 = vunpack.c.h.b16 %v32
  %v229 = vunpack.c.l.b16 %v33
  %v230 = vunpack.c.h.b16 %v33
  %v231 = vunpack.c.l.b16 %v34
  %v232 = vunpack.c.h.b16 %v34
  %v233 = vunpack.c.l.b16 %v35
  %v234 = vunpack.c.l.b16 %v36
  %v235 = vunpack.c.h.b16 %v36
  %v236 = vunpack.c.l.b16 %v37
  %v237 = vunpack.c.h.b16 %v37
  %v238 = vunpack.c.l.b16 %v38
  %v239 = vunpack.c.h.b16 %v38
  %v240 = vunpack.c.l.b16 %v39
  %v241 = vunpack.c.l.b16 %v40
  %v242 = vunpack.c.h.b16 %v40
  %v243 = vunpack.c.l.b16 %v41
  %v244 = vunpack.c.h.b16 %v41
  %v245 = vunpack.c.l.b16 %v42
  %v246 = vunpack.c.h.b16 %v42
  %v247 = vunpack.c.l.b16 %v43
  %v248 = vunpack.c.l.b16 %v44
  %v249 = vunpack.c.h.b16 %v44
  %v250 = vunpack.c.l.b16 %v45
  %v251 = vunpack.c.h.b16 %v45
  %v252 = vunpack.c.l.b16 %v46
  %v253 = vunpack.c.h.b16 %v46
  %v254 = vunpack.c.l.b16 %v47
  %v255 = vunpack.c.l.b16 %v48
  %v256 = vunpack.c.h.b16 %v48
  %v257 = vunpack.c.l.b16 %v49
  %v258 = vunpack.c.h.b16 %v49
  %v259 = vunpack.c.l.b16 %v50
  %v260 = vunpack.c.h.b16 %v50
  %v261 = vunpack.c.l.b16 %v51
  %v262 = vpack.c.b16 %v199, %v192
  %v263 = vpack.c.b16 %v200, %v193
  %v264 = vpack.c.b16 %v201, %v194
  %v265 = vpack.c.b16 %v202, %v195
  %v266 = vpack.c.b16 %v203, %v196
  %v267 = vpack.c.b16 %v204, %v197
  %v268 = vpack.c.b16 %v205, %v198
  %v269 = vpack.c.b16 %v213, %v206
  %v270 = vpack.c.b16 %v214, %v207
  %v271 = vpack.c.b16 %v215, %v208
  %v272 = vpack.c.b16 %v216, %v209
  %v273 = vpack.c.b16 %v217, %v210
  %v274 = vpack.c.b16 %v218, %v211
  %v275 = vpack.c.b16 %v219, %v212
  %v276 = vpack.c.b16 %v227, %v220
  %v277 = vpack.c.b16 %v228, %v221
  %v278 = vpack.c.b16 %v229, %v222
  %v279 = vpack.c.b16 %v230, %v223
  %v280 = vpack.c.b16 %v231, %v224
  %v281 = vpack.c.b16 %v232, %v225
  %v282 = vpack.c.b16 %v233, %v226
  %v283 = vpack.c.b16 %v241, %v234
  %v284 = vpack.c.b16 %v242, %v235
  %v285 = vpack.c.b16 %v243, %v236
  %v286 = vpack.c.b16 %v244, %v237
  %v287 = vpack.c.b16 %v245, %v238
  %v288 = vpack.c.b16 %v246, %v239
  %v289 = vpack.c.b16 %v247, %v240
  %v290 = vpack.c.b16 %v255, %v248
  %v291 = vpack.c.b16 %v256, %v249
  %v292 = vpack.c.b16 %v257, %v250
  %v293 = vpack.c.b16 %v258, %v251
  %v294 = vpack.c.b16 %v259, %v252
  %v295 = vpack.c.b16 %v260, %v253
  %v296 = vpack.c.b16 %v261, %v254
  %v427 = vunpack.c.l.b16 %v52
  %v428 = vunpack.c.l.b16 %v53
  %v429 = vunpack.c.l.b16 %v54
  %v430 = vunpack.c.l.b16 %v55
  %v431 = vunpack.c.l.b16 %v56
  %v432 = vunpack.c.l.b16 %v57
  %v433 = vunpack.c.l.b16 %v58
  %v434 = vunpack.c.l.b16 %v59
  %v435 = vunpack.c.l.b16 %v60
  %v436 = vunpack.c.l.b16 %v61
  %v437 = vunpack.c.l.b16 %v62
  %v438 = vunpack.c.l.b16 %v63
  %v439 = vunpack.c.l.b16 %v64
  %v440 = vunpack.c.l.b16 %v65
  %v441 = vunpack.c.l.b16 %v66
  %v442 = vunpack.c.l.b16 %v67
  %v443 = vunpack.c.l.b16 %v68
  %v444 = vunpack.c.l.b16 %v69
  %v445 = vunpack.c.l.b16 %v70
  %v446 = vunpack.c.l.b16 %v71
  %v447 = vunpack.c.l.b16 %v72
  %v448 = vunpack.c.l.b16 %v73
  %v449 = vunpack.c.l.b16 %v74
  %v450 = vunpack.c.l.b16 %v75
  %v451 = vunpack.c.l.b16 %v76
  %v452 = vunpack.c.l.b16 %v77
  %v453 = vunpack.c.l.b16 %v78
  %v454 = vunpack.c.l.b16 %v79
  %v455 = vunpack.c.l.b16 %v80
  %v456 = vunpack.c.l.b16 %v81
  %v457 = vunpack.c.l.b16 %v82
  %v458 = vunpack.c.l.b16 %v83
  %v459 = vunpack.c.l.b16 %v84
  %v460 = vunpack.c.l.b16 %v85
  %v461 = vunpack.c.l.b16 %v86
  %v462 = vunpack.c.l.b16 %v87
  %v463 = vunpack.c.l.b16 %v88
  %v464 = vunpack.c.l.b16 %v89
  %v465 = vunpack.c.l.b16 %v90
  %v466 = vunpack.c.l.b16 %v91
  %v467 = vunpack.c.l.b16 %v92
  %v468 = vunpack.c.l.b16 %v93
  %v469 = vunpack.c.l.b16 %v94
  %v470 = vunpack.c.l.b16 %v95
  %v471 = vunpack.c.l.b16 %v96
  %v472 = vunpack.c.l.b16 %v97
  %v473 = vunpack.c.l.b16 %v98
  %v474 = vunpack.c.l.b16 %v99
  %v475 = vunpack.c.l.b16 %v100
  %v476 = vunpack.c.l.b16 %v101
  %v477 = vunpack.c.l.b16 %v102
  %v478 = vunpack.c.l.b16 %v103
  %v479 = vunpack.c.l.b16 %v104
  %v480 = vunpack.c.l.b16 %v105
  %v481 = vunpack.c.l.b16 %v106
  %v482 = vunpack.c.l.b16 %v107
  %v483 = vunpack.c.l.b16 %v108
  %v484 = vunpack.c.l.b16 %v109
  %v485 = vunpack.c.l.b16 %v110
  %v486 = vunpack.c.l.b16 %v111
  %v487 = vunpack.c.l.b16 %v112
  %v488 = vunpack.c.l.b16 %v113
  %v489 = vunpack.c.l.b16 %v114
  %v490 = vunpack.c.l.b16 %v115
  %v491 = vunpack.c.l.b16 %v116
  %v492 = vunpack.c.l.b16 %v117
  %v493 = vunpack.c.l.b16 %v118
  %v494 = vunpack.c.l.b16 %v119
  %v495 = vunpack.c.l.b16 %v120
  %v496 = vunpack.c.l.b16 %v121
  %v497 = vunpack.c.l.b16 %v122
  %v498 = vunpack.c.l.b16 %v123
  %v499 = vunpack.c.l.b16 %v124
  %v500 = vunpack.c.l.b16 %v125
  %v501 = vunpack.c.l.b16 %v126
  %v502 = vunpack.c.l.b16 %v127
  %v503 = vunpack.c.l.b16 %v128
  %v504 = vunpack.c.l.b16 %v129
  %v505 = vunpack.c.l.b16 %v130
  %v506 = vunpack.c.l.b16 %v131
  %v507 = vunpack.c.l.b16 %v132
  %v508 = vunpack.c.l.b16 %v133
  %v509 = vunpack.c.l.b16 %v134
  %v510 = vunpack.c.l.b16 %v135
  %v511 = vunpack.c.l.b16 %v136
  %v512 = vunpack.c.l.b16 %v137
  %v513 = vunpack.c.l.b16 %v138
  %v514 = vunpack.c.l.b16 %v139
  %v515 = vunpack.c.l.b16 %v140
  %v516 = vunpack.c.l.b16 %v141
  %v517 = vunpack.c.l.b16 %v142
  %v518 = vunpack.c.l.b16 %v143
  %v519 = vunpack.c.l.b16 %v144
  %v520 = vunpack.c.l.b16 %v145
  %v521 = vunpack.c.l.b16 %v146
  %v522 = vunpack.c.l.b16 %v147
  %v523 = vunpack.c.l.b16 %v148
  %v524 = vunpack.c.l.b16 %v149
  %v525 = vunpack.c.l.b16 %v150
  %v526 = vunpack.c.l.b16 %v151
  %v527 = vpack.c.b16 %v428, %v427
  %v528 = vpack.c.b16 %v430, %v429
  %v529 = vpack.c.b16 %v432, %v431
  %v530 = vpack.c.b16 %v434, %v433
  %v531 = vpack.c.b16 %v436, %v435
  %v532 = vpack.c.b16 %v438, %v437
  %v533 = vpack.c.b16 %v440, %v439
  %v534 = vpack.c.b16 %v442, %v441
  %v535 = vpack.c.b16 %v444, %v443
  %v536 = vpack.c.b16 %v446, %v445
  %v537 = vpack.c.b16 %v448, %v447
  %v538 = vpack.c.b16 %v450, %v449
  %v539 = vpack.c.b16 %v452, %v451
  %v540 = vpack.c.b16 %v454, %v453
  %v541 = vpack.c.b16 %v456, %v455
  %v542 = vpack.c.b16 %v458, %v457
  %v543 = vpack.c.b16 %v460, %v459
  %v544 = vpack.c.b16 %v462, %v461
  %v545 = vpack.c.b16 %v464, %v463
  %v546 = vpack.c.b16 %v466, %v465
  %v547 = vpack.c.b16 %v468, %v467
  %v548 = vpack.c.b16 %v470, %v469
  %v549 = vpack.c.b16 %v472, %v471
  %v550 = vpack.c.b16 %v474, %v473
  %v551 = vpack.c.b16 %v476, %v475
  %v552 = vpack.c.b16 %v478, %v477
  %v553 = vpack.c.b16 %v480, %v479
  %v554 = vpack.c.b16 %v482, %v481
  %v555 = vpack.c.b16 %v484, %v483
  %v556 = vpack.c.b16 %v486, %v485
  %v557 = vpack.c.b16 %v488, %v487
  %v558 = vpack.c.b16 %v490, %v489
  %v559 = vpack.c.b16 %v492, %v491
  %v560 = vpack.c.b16 %v494, %v493
  %v561 = vpack.c.b16 %v496, %v495
  %v562 = vpack.c.b16 %v498, %v497
  %v563 = vpack.c.b16 %v500, %v499
  %v564 = vpack.c.b16 %v502, %v501
  %v565 = vpack.c.b16 %v504, %v503
  %v566 = vpack.c.b16 %v506, %v505
  %v567 = vpack.c.b16 %v508, %v507
  %v568 = vpack.c.b16 %v510, %v509
  %v569 = vpack.c.b16 %v512, %v511
  %v570 = vpack.c.b16 %v514, %v513
  %v571 = vpack.c.b16 %v516, %v515
  %v572 = vpack.c.b16 %v518, %v517
  %v573 = vpack.c.b16 %v520, %v519
  %v574 = vpack.c.b16 %v522, %v521
  %v575 = vpack.c.b16 %v524, %v523
  %v576 = vpack.c.b16 %v526, %v525
  %vm627 = vcmask 261120
  %v629 = vsel %vm627, %v268, 0
  %v632 = vsel %vm627, %v275, 0
  %v635 = vsel %vm627, %v282, 0
  %v638 = vsel %vm627, %v289, 0
  %v641 = vsel %vm627, %v296, 0
  %643 = vmatprep.subr.bf16.mxu0 0
  %644 = vmatpush1.bf16.msra.mxu0 %v534
  %645 = vmatprep.subr.bf16.mxu0 0
  %646 = vmatpush1.bf16.msra.mxu0 %v533
  %647 = vmatprep.subr.bf16.mxu0 0
  %648 = vmatpush1.bf16.msra.mxu0 %v532
  %649 = vmatprep.subr.bf16.mxu0 0
  %650 = vmatpush1.bf16.msra.mxu0 %v531
  %651 = vmatprep.subr.bf16.mxu0 0
  %652 = vmatpush1.bf16.msra.mxu0 %v530
  %653 = vmatprep.subr.bf16.mxu0 0
  %654 = vmatpush1.bf16.msra.mxu0 %v529
  %655 = vmatprep.subr.bf16.mxu0 0
  %656 = vmatpush1.bf16.msra.mxu0 %v528
  %657 = vmatprep.subr.bf16.mxu0 0
  %658 = vmatpush1.bf16.msra.mxu0 %v527
  %659 = vmatprep.subr.bf16.mxu0 0
  %660 = vmatpush2.bf16.msra.mxu0 %v542
  %661 = vmatprep.subr.bf16.mxu0 0
  %662 = vmatpush2.bf16.msra.mxu0 %v541
  %663 = vmatprep.subr.bf16.mxu0 0
  %664 = vmatpush2.bf16.msra.mxu0 %v540
  %665 = vmatprep.subr.bf16.mxu0 0
  %666 = vmatpush2.bf16.msra.mxu0 %v539
  %667 = vmatprep.subr.bf16.mxu0 0
  %668 = vmatpush2.bf16.msra.mxu0 %v538
  %669 = vmatprep.subr.bf16.mxu0 0
  %670 = vmatpush2.bf16.msra.mxu0 %v537
  %671 = vmatprep.subr.bf16.mxu0 0
  %672 = vmatpush2.bf16.msra.mxu0 %v536
  %673 = vmatprep.subr.bf16.mxu0 0
  %674 = vmatpush2.bf16.msra.mxu0 %v535
  %675 = vmatprep.mubr.bf16.mxu0 %v263
  %676 = vmatmul.mubr.bf16.gmra.mxu0 %v262
  %v677 = vpop.f32.mrf.mxu0
  %v678 = vadd.f32 0.0, %v677
  %v679 = vpop.f32.mrf.mxu0
  %v680 = vpop.f32.mrf.mxu0
  %v681 = vadd.f32 0.0, %v680
  %v682 = vpop.f32.mrf.mxu0
  %683 = vmatprep.mubr.bf16.mxu0 %v270
  %684 = vmatmul.mubr.bf16.gmra.mxu0 %v269
  %v685 = vpop.f32.mrf.mxu0
  %v686 = vadd.f32 0.0, %v685
  %v687 = vpop.f32.mrf.mxu0
  %v688 = vpop.f32.mrf.mxu0
  %v689 = vadd.f32 0.0, %v688
  %v690 = vpop.f32.mrf.mxu0
  %691 = vmatprep.mubr.bf16.mxu0 %v277
  %692 = vmatmul.mubr.bf16.gmra.mxu0 %v276
  %v693 = vpop.f32.mrf.mxu0
  %v694 = vadd.f32 0.0, %v693
  %v695 = vpop.f32.mrf.mxu0
  %v696 = vpop.f32.mrf.mxu0
  %v697 = vadd.f32 0.0, %v696
  %v698 = vpop.f32.mrf.mxu0
  %699 = vmatprep.mubr.bf16.mxu0 %v284
  %700 = vmatmul.mubr.bf16.gmra.mxu0 %v283
  %v701 = vpop.f32.mrf.mxu0
  %v702 = vadd.f32 0.0, %v701
  %v703 = vpop.f32.mrf.mxu0
  %v704 = vpop.f32.mrf.mxu0
  %v705 = vadd.f32 0.0, %v704
  %v706 = vpop.f32.mrf.mxu0
  %707 = vmatprep.mubr.bf16.mxu0 %v291
  %708 = vmatmul.mubr.bf16.gmra.mxu0 %v290
  %v709 = vpop.f32.mrf.mxu0
  %v710 = vadd.f32 0.0, %v709
  %v711 = vpop.f32.mrf.mxu0
  %v712 = vpop.f32.mrf.mxu0
  %v713 = vadd.f32 0.0, %v712
  %v714 = vpop.f32.mrf.mxu0
  %715 = vdwg.mxu0
  %716 = vmatprep.subr.bf16.mxu0 0
  %717 = vmatpush1.bf16.msra.mxu0 %v550
  %718 = vmatprep.subr.bf16.mxu0 0
  %719 = vmatpush1.bf16.msra.mxu0 %v549
  %720 = vmatprep.subr.bf16.mxu0 0
  %721 = vmatpush1.bf16.msra.mxu0 %v548
  %722 = vmatprep.subr.bf16.mxu0 0
  %723 = vmatpush1.bf16.msra.mxu0 %v547
  %724 = vmatprep.subr.bf16.mxu0 0
  %725 = vmatpush1.bf16.msra.mxu0 %v546
  %726 = vmatprep.subr.bf16.mxu0 0
  %727 = vmatpush1.bf16.msra.mxu0 %v545
  %728 = vmatprep.subr.bf16.mxu0 0
  %729 = vmatpush1.bf16.msra.mxu0 %v544
  %730 = vmatprep.subr.bf16.mxu0 0
  %731 = vmatpush1.bf16.msra.mxu0 %v543
  %732 = vmatprep.subr.bf16.mxu0 0
  %733 = vmatpush2.bf16.msra.mxu0 %v558
  %734 = vmatprep.subr.bf16.mxu0 0
  %735 = vmatpush2.bf16.msra.mxu0 %v557
  %736 = vmatprep.subr.bf16.mxu0 0
  %737 = vmatpush2.bf16.msra.mxu0 %v556
  %738 = vmatprep.subr.bf16.mxu0 0
  %739 = vmatpush2.bf16.msra.mxu0 %v555
  %740 = vmatprep.subr.bf16.mxu0 0
  %741 = vmatpush2.bf16.msra.mxu0 %v554
  %742 = vmatprep.subr.bf16.mxu0 0
  %743 = vmatpush2.bf16.msra.mxu0 %v553
  %744 = vmatprep.subr.bf16.mxu0 0
  %745 = vmatpush2.bf16.msra.mxu0 %v552
  %746 = vmatprep.subr.bf16.mxu0 0
  %747 = vmatpush2.bf16.msra.mxu0 %v551
  %748 = vmatprep.mubr.bf16.mxu0 %v265
  %749 = vmatmul.mubr.bf16.gmra.mxu0 %v264
  %v750 = vpop.f32.mrf.mxu0
  %v751 = vadd.f32 %v678, %v750
  %v752 = vpop.f32.mrf.mxu0
  %v753 = vpop.f32.mrf.mxu0
  %v754 = vadd.f32 %v681, %v753
  %v755 = vpop.f32.mrf.mxu0
  %756 = vmatprep.mubr.bf16.mxu0 %v272
  %757 = vmatmul.mubr.bf16.gmra.mxu0 %v271
  %v758 = vpop.f32.mrf.mxu0
  %v759 = vadd.f32 %v686, %v758
  %v760 = vpop.f32.mrf.mxu0
  %v761 = vpop.f32.mrf.mxu0
  %v762 = vadd.f32 %v689, %v761
  %v763 = vpop.f32.mrf.mxu0
  %764 = vmatprep.mubr.bf16.mxu0 %v279
  %765 = vmatmul.mubr.bf16.gmra.mxu0 %v278
  %v766 = vpop.f32.mrf.mxu0
  %v767 = vadd.f32 %v694, %v766
  %v768 = vpop.f32.mrf.mxu0
  %v769 = vpop.f32.mrf.mxu0
  %v770 = vadd.f32 %v697, %v769
  %v771 = vpop.f32.mrf.mxu0
  %772 = vmatprep.mubr.bf16.mxu0 %v286
  %773 = vmatmul.mubr.bf16.gmra.mxu0 %v285
  %v774 = vpop.f32.mrf.mxu0
  %v775 = vadd.f32 %v702, %v774
  %v776 = vpop.f32.mrf.mxu0
  %v777 = vpop.f32.mrf.mxu0
  %v778 = vadd.f32 %v705, %v777
  %v779 = vpop.f32.mrf.mxu0
  %780 = vmatprep.mubr.bf16.mxu0 %v293
  %781 = vmatmul.mubr.bf16.gmra.mxu0 %v292
  %v782 = vpop.f32.mrf.mxu0
  %v783 = vadd.f32 %v710, %v782
  %v784 = vpop.f32.mrf.mxu0
  %v785 = vpop.f32.mrf.mxu0
  %v786 = vadd.f32 %v713, %v785
  %v787 = vpop.f32.mrf.mxu0
  %788 = vdwg.mxu0
  %789 = vmatprep.subr.bf16.mxu0 0
  %790 = vmatpush1.bf16.msra.mxu0 %v566
  %791 = vmatprep.subr.bf16.mxu0 0
  %792 = vmatpush1.bf16.msra.mxu0 %v565
  %793 = vmatprep.subr.bf16.mxu0 0
  %794 = vmatpush1.bf16.msra.mxu0 %v564
  %795 = vmatprep.subr.bf16.mxu0 0
  %796 = vmatpush1.bf16.msra.mxu0 %v563
  %797 = vmatprep.subr.bf16.mxu0 0
  %798 = vmatpush1.bf16.msra.mxu0 %v562
  %799 = vmatprep.subr.bf16.mxu0 0
  %800 = vmatpush1.bf16.msra.mxu0 %v561
  %801 = vmatprep.subr.bf16.mxu0 0
  %802 = vmatpush1.bf16.msra.mxu0 %v560
  %803 = vmatprep.subr.bf16.mxu0 0
  %804 = vmatpush1.bf16.msra.mxu0 %v559
  %805 = vmatprep.subr.bf16.mxu0 0
  %806 = vmatpush2.bf16.msra.mxu0 %v574
  %807 = vmatprep.subr.bf16.mxu0 0
  %808 = vmatpush2.bf16.msra.mxu0 %v573
  %809 = vmatprep.subr.bf16.mxu0 0
  %810 = vmatpush2.bf16.msra.mxu0 %v572
  %811 = vmatprep.subr.bf16.mxu0 0
  %812 = vmatpush2.bf16.msra.mxu0 %v571
  %813 = vmatprep.subr.bf16.mxu0 0
  %814 = vmatpush2.bf16.msra.mxu0 %v570
  %815 = vmatprep.subr.bf16.mxu0 0
  %816 = vmatpush2.bf16.msra.mxu0 %v569
  %817 = vmatprep.subr.bf16.mxu0 0
  %818 = vmatpush2.bf16.msra.mxu0 %v568
  %819 = vmatprep.subr.bf16.mxu0 0
  %820 = vmatpush2.bf16.msra.mxu0 %v567
  %821 = vmatprep.mubr.bf16.mxu0 %v267
  %822 = vmatmul.mubr.bf16.gmra.mxu0 %v266
  %v823 = vpop.f32.mrf.mxu0
  %v824 = vadd.f32 %v751, %v823
  %v825 = vpop.f32.mrf.mxu0
  %v826 = vpop.f32.mrf.mxu0
  %v827 = vadd.f32 %v754, %v826
  %v828 = vpop.f32.mrf.mxu0
  %829 = vmatprep.mubr.bf16.mxu0 %v274
  %830 = vmatmul.mubr.bf16.gmra.mxu0 %v273
  %v831 = vpop.f32.mrf.mxu0
  %v832 = vadd.f32 %v759, %v831
  %v833 = vpop.f32.mrf.mxu0
  %v834 = vpop.f32.mrf.mxu0
  %v835 = vadd.f32 %v762, %v834
  %v836 = vpop.f32.mrf.mxu0
  %837 = vmatprep.mubr.bf16.mxu0 %v281
  %838 = vmatmul.mubr.bf16.gmra.mxu0 %v280
  %v839 = vpop.f32.mrf.mxu0
  %v840 = vadd.f32 %v767, %v839
  %v841 = vpop.f32.mrf.mxu0
  %v842 = vpop.f32.mrf.mxu0
  %v843 = vadd.f32 %v770, %v842
  %v844 = vpop.f32.mrf.mxu0
  %845 = vmatprep.mubr.bf16.mxu0 %v288
  %846 = vmatmul.mubr.bf16.gmra.mxu0 %v287
  %v847 = vpop.f32.mrf.mxu0
  %v848 = vadd.f32 %v775, %v847
  %v849 = vpop.f32.mrf.mxu0
  %v850 = vpop.f32.mrf.mxu0
  %v851 = vadd.f32 %v778, %v850
  %v852 = vpop.f32.mrf.mxu0
  %853 = vmatprep.mubr.bf16.mxu0 %v295
  %854 = vmatmul.mubr.bf16.gmra.mxu0 %v294
  %v855 = vpop.f32.mrf.mxu0
  %v856 = vadd.f32 %v783, %v855
  %v857 = vpop.f32.mrf.mxu0
  %v858 = vpop.f32.mrf.mxu0
  %v859 = vadd.f32 %v786, %v858
  %v860 = vpop.f32.mrf.mxu0
  %861 = vdwg.mxu0
  %862 = vmatprep.subr.bf16.mxu0 0
  %863 = vmatpush1.bf16.msra.mxu0 0
  %864 = vmatprep.subr.bf16.mxu0 0
  %865 = vmatpush1.bf16.msra.mxu0 0
  %866 = vmatprep.subr.bf16.mxu0 0
  %867 = vmatpush1.bf16.msra.mxu0 0
  %868 = vmatprep.subr.bf16.mxu0 0
  %869 = vmatpush1.bf16.msra.mxu0 0
  %870 = vmatprep.subr.bf16.mxu0 0
  %871 = vmatpush1.bf16.msra.mxu0 0
  %872 = vmatprep.subr.bf16.mxu0 0
  %873 = vmatpush1.bf16.msra.mxu0 0
  %874 = vmatprep.subr.bf16.mxu0 0
  %875 = vmatpush1.bf16.msra.mxu0 %v576
  %876 = vmatprep.subr.bf16.mxu0 0
  %877 = vmatpush1.bf16.msra.mxu0 %v575
  %878 = vmatprep.subr.bf16.mxu0 0
  %879 = vmatpush2.bf16.msra.mxu0 0
  %880 = vmatprep.subr.bf16.mxu0 0
  %881 = vmatpush2.bf16.msra.mxu0 0
  %882 = vmatprep.subr.bf16.mxu0 0
  %883 = vmatpush2.bf16.msra.mxu0 0
  %884 = vmatprep.subr.bf16.mxu0 0
  %885 = vmatpush2.bf16.msra.mxu0 0
  %886 = vmatprep.subr.bf16.mxu0 0
  %887 = vmatpush2.bf16.msra.mxu0 0
  %888 = vmatprep.subr.bf16.mxu0 0
  %889 = vmatpush2.bf16.msra.mxu0 0
  %890 = vmatprep.subr.bf16.mxu0 0
  %891 = vmatpush2.bf16.msra.mxu0 0
  %892 = vmatprep.subr.bf16.mxu0 0
  %893 = vmatpush2.bf16.msra.mxu0 0
  %894 = vmatprep.mubr.bf16.mxu0 0
  %895 = vmatmul.mubr.bf16.gmra.mxu0 %v629
  %v896 = vpop.f32.mrf.mxu0
  %v897 = vadd.f32 %v824, %v896
  %v898 = vpop.f32.mrf.mxu0
  %v899 = vpop.f32.mrf.mxu0
  %v900 = vadd.f32 %v827, %v899
  %v901 = vpop.f32.mrf.mxu0
  %902 = vmatprep.mubr.bf16.mxu0 0
  %903 = vmatmul.mubr.bf16.gmra.mxu0 %v632
  %v904 = vpop.f32.mrf.mxu0
  %v905 = vadd.f32 %v832, %v904
  %v906 = vpop.f32.mrf.mxu0
  %v907 = vpop.f32.mrf.mxu0
  %v908 = vadd.f32 %v835, %v907
  %v909 = vpop.f32.mrf.mxu0
  %910 = vmatprep.mubr.bf16.mxu0 0
  %911 = vmatmul.mubr.bf16.gmra.mxu0 %v635
  %v912 = vpop.f32.mrf.mxu0
  %v913 = vadd.f32 %v840, %v912
  %v914 = vpop.f32.mrf.mxu0
  %v915 = vpop.f32.mrf.mxu0
  %v916 = vadd.f32 %v843, %v915
  %v917 = vpop.f32.mrf.mxu0
  %918 = vmatprep.mubr.bf16.mxu0 0
  %919 = vmatmul.mubr.bf16.gmra.mxu0 %v638
  %v920 = vpop.f32.mrf.mxu0
  %v921 = vadd.f32 %v848, %v920
  %v922 = vpop.f32.mrf.mxu0
  %v923 = vpop.f32.mrf.mxu0
  %v924 = vadd.f32 %v851, %v923
  %v925 = vpop.f32.mrf.mxu0
  %926 = vmatprep.mubr.bf16.mxu0 0
  %927 = vmatmul.mubr.bf16.gmra.mxu0 %v641
  %v928 = vpop.f32.mrf.mxu0
  %v929 = vadd.f32 %v856, %v928
  %v930 = vpop.f32.mrf.mxu0
  %v931 = vpop.f32.mrf.mxu0
  %v932 = vadd.f32 %v859, %v931
  %v933 = vpop.f32.mrf.mxu0
  %934 = vdwg.mxu0
  %935 = vst [vmem:[%s2] sm:$0xff] %v897
  %936 = vst [vmem:[%s2 + $0x8] sm:$0xff] %v900
  %937 = vst [vmem:[%s2 + $0x10] sm:$0xff] %v905
  %938 = vst [vmem:[%s2 + $0x18] sm:$0xff] %v908
  %939 = vst [vmem:[%s2 + $0x20] sm:$0xff] %v913
  %940 = vst [vmem:[%s2 + $0x28] sm:$0xff] %v916
  %941 = vst [vmem:[%s2 + $0x30] sm:$0xff] %v921
  %942 = vst [vmem:[%s2 + $0x38] sm:$0xff] %v924
  %943 = vst [vmem:[%s2 + $0x40] sm:$0xff] %v929
  %944 = vst [vmem:[%s2 + $0x48] sm:$0xff] %v932
  // Predicated region
  $region10: #{_lambda_.80} parent=0 // pred_check
    _
  $region11: #{_lambda_.80} parent=0 // pred_check_branch
    %946 = sbr.rel (0) target = $region13
  $region12: #{_lambda_.80} parent=0 // pred_region
    _
  $region13: #{_lambda_.80} parent=0 // pred_fallthru
    _
  // Predicated region
  $region14: #{_lambda_.80} parent=0 // pred_check
    _
  $region15: #{_lambda_.80} parent=0 // pred_check_branch
    %948 = sbr.rel (0) target = $region17
  $region16: #{_lambda_.80} parent=0 // pred_region
    _
  $region17: #{_lambda_.80} parent=0 // pred_fallthru
    _

// kernel: _lambda_.76
$region0: #{_lambda_.76}
  #allocation0 [shape = 'u32[]', space=smem, size = 0x4, offset = 0x4, fixed_abs, tag = 'smem constant byte address 0x4 - core index']
  #allocation1 [shape = 'u32[144,128]{1,0:T(1,128)}', space=vmem, size = 0x12000, scoped, tag = 'internal scratch']
  %s0 = inlined_call_operand.vmem [shape: f32[9,16,128], index: 0, kind: input, shape index: {}]
  %s1 = inlined_call_operand.vmem [shape: f32[1,128], index: 1, kind: input, shape index: {}]
  %s2 = inlined_call_operand.vmem [shape: f32[16,128], index: 2, kind: output, shape index: {0}]
  %s3 = inlined_call_operand.vmem [shape: f32[16,128], index: 3, kind: output, shape index: {1}]
  %4 = xla_tuple %s2, %s3
  %s5 = sld [smem:[#allocation0]]
  $region26: #{_lambda_.76} parent=0
    _
  %s7 = ssub.s32 1, %s5
  %s8 = scalar_select 0, %s7, %s5
  // Predicated region
  $region2: #{_lambda_.76} parent=0 // pred_check
    _
  $region3: #{_lambda_.76} parent=0 // pred_check_branch
    %10 = sbr.rel (0) target = $region5
  $region4: #{_lambda_.76} parent=0 // pred_region
    _
  $region5: #{_lambda_.76} parent=0 // pred_fallthru
    _
  // Predicated region
  $region6: #{_lambda_.76} parent=0 // pred_check
    _
  $region7: #{_lambda_.76} parent=0 // pred_check_branch
    %12 = sbr.rel (0) target = $region9
  $region8: #{_lambda_.76} parent=0 // pred_region
    _
  $region9: #{_lambda_.76} parent=0 // pred_fallthru
    _
  %v13 = vld [vmem:[%s0] sm:$0xff]
  %v14 = vld [vmem:[%s0 + $0x8] sm:$0xff]
  %v15 = vld [vmem:[%s0 + $0x10] sm:$0xff]
  %v16 = vld [vmem:[%s0 + $0x18] sm:$0xff]
  %v17 = vld [vmem:[%s0 + $0x20] sm:$0xff]
  %v18 = vld [vmem:[%s0 + $0x28] sm:$0xff]
  %v19 = vld [vmem:[%s0 + $0x30] sm:$0xff]
  %v20 = vld [vmem:[%s0 + $0x38] sm:$0xff]
  %v21 = vld [vmem:[%s0 + $0x40] sm:$0xff]
  %v22 = vld [vmem:[%s0 + $0x48] sm:$0xff]
  %v23 = vld [vmem:[%s0 + $0x50] sm:$0xff]
  %v24 = vld [vmem:[%s0 + $0x58] sm:$0xff]
  %v25 = vld [vmem:[%s0 + $0x60] sm:$0xff]
  %v26 = vld [vmem:[%s0 + $0x68] sm:$0xff]
  %v27 = vld [vmem:[%s0 + $0x70] sm:$0xff]
  %v28 = vld [vmem:[%s0 + $0x78] sm:$0xff]
  %v29 = vld [vmem:[%s0 + $0x80] sm:$0xff]
  %v30 = vld [vmem:[%s0 + $0x88] sm:$0xff]
  %v31 = vmax.f32 %v13, %v17
  %v32 = vmax.f32 %v15, %v19
  %v33 = vmax.f32 %v31, %v21
  %v34 = vmax.f32 %v32, %v23
  %v35 = vmax.f32 %v33, %v25
  %v36 = vmax.f32 %v34, %v27
  %v37 = vmax.f32 %v35, %v29
  %v38 = vmax.f32 %v37, %v36
  %v39 = vmax.f32 %v14, %v18
  %v40 = vmax.f32 %v16, %v20
  %v41 = vmax.f32 %v39, %v22
  %v42 = vmax.f32 %v40, %v24
  %v43 = vmax.f32 %v41, %v26
  %v44 = vmax.f32 %v42, %v28
  %v45 = vmax.f32 %v43, %v30
  %v46 = vmax.f32 %v45, %v44
  %47 = vst [vmem:[%s2] sm:$0xff] %v38
  %48 = vst [vmem:[%s2 + $0x8] sm:$0xff] %v46
  %vm49 = vweird.f32 %v13
  %vm50 = vweird.f32 %v14
  %vm51 = vweird.f32 %v15
  %vm52 = vweird.f32 %v16
  %vm53 = vweird.f32 %v17
  %vm54 = vweird.f32 %v18
  %vm55 = vweird.f32 %v19
  %vm56 = vweird.f32 %v20
  %vm57 = vweird.f32 %v21
  %vm58 = vweird.f32 %v22
  %vm59 = vweird.f32 %v23
  %vm60 = vweird.f32 %v24
  %vm61 = vweird.f32 %v25
  %vm62 = vweird.f32 %v26
  %vm63 = vweird.f32 %v27
  %vm64 = vweird.f32 %v28
  %vm65 = vweird.f32 %v29
  %vm66 = vweird.f32 %v30
  %vm67 = vmxor %vm49, 1
  %vm68 = vmxor %vm50, 1
  %vm69 = vmxor %vm51, 1
  %vm70 = vmxor %vm52, 1
  %vm71 = vmxor %vm53, 1
  %vm72 = vmxor %vm54, 1
  %vm73 = vmxor %vm55, 1
  %vm74 = vmxor %vm56, 1
  %vm75 = vmxor %vm57, 1
  %vm76 = vmxor %vm58, 1
  %vm77 = vmxor %vm59, 1
  %vm78 = vmxor %vm60, 1
  %vm79 = vmxor %vm61, 1
  %vm80 = vmxor %vm62, 1
  %vm81 = vmxor %vm63, 1
  %vm82 = vmxor %vm64, 1
  %vm83 = vmxor %vm65, 1
  %vm84 = vmxor %vm66, 1
  %v85 = vsel %vm67, %v13, 0.0
  %v86 = vsel %vm68, %v14, 0.0
  %v87 = vsel %vm69, %v15, 0.0
  %v88 = vsel %vm70, %v16, 0.0
  %v89 = vsel %vm71, %v17, 0.0
  %v90 = vsel %vm72, %v18, 0.0
  %v91 = vsel %vm73, %v19, 0.0
  %v92 = vsel %vm74, %v20, 0.0
  %v93 = vsel %vm75, %v21, 0.0
  %v94 = vsel %vm76, %v22, 0.0
  %v95 = vsel %vm77, %v23, 0.0
  %v96 = vsel %vm78, %v24, 0.0
  %v97 = vsel %vm79, %v25, 0.0
  %v98 = vsel %vm80, %v26, 0.0
  %v99 = vsel %vm81, %v27, 0.0
  %v100 = vsel %vm82, %v28, 0.0
  %v101 = vsel %vm83, %v29, 0.0
  %v102 = vsel %vm84, %v30, 0.0
  %v103 = vadd.f32 %v85, %v87
  %v104 = vadd.f32 %v103, %v89
  %v105 = vadd.f32 %v104, %v91
  %v106 = vadd.f32 %v105, %v93
  %v107 = vadd.f32 %v106, %v95
  %v108 = vadd.f32 %v107, %v97
  %v109 = vadd.f32 %v108, %v99
  %v110 = vadd.f32 %v109, %v101
  %v111 = vadd.f32 %v86, %v88
  %v112 = vadd.f32 %v111, %v90
  %v113 = vadd.f32 %v112, %v92
  %v114 = vadd.f32 %v113, %v94
  %v115 = vadd.f32 %v114, %v96
  %v116 = vadd.f32 %v115, %v98
  %v117 = vadd.f32 %v116, %v100
  %v118 = vadd.f32 %v117, %v102
  %v119 = vld [vmem:[%s1] sm:$0x1]
  %v121 = vlaneseq
  %v122 = vshrl.u32 %v121, 7
  %v123 = vsub.s32 0, %v122
  %v124 = vrot.slane %v119, %v123
  %v126 = vmul.f32 %v110, %v124
  %v127 = vmul.f32 %v118, %v124
  %128 = vst [vmem:[%s3] sm:$0xff] %v126
  %129 = vst [vmem:[%s3 + $0x8] sm:$0xff] %v127
  // Predicated region
  $region10: #{_lambda_.76} parent=0 // pred_check
    _
  $region11: #{_lambda_.76} parent=0 // pred_check_branch
    %131 = sbr.rel (0) target = $region13
  $region12: #{_lambda_.76} parent=0 // pred_region
    _
  $region13: #{_lambda_.76} parent=0 // pred_fallthru
    _
  // Predicated region
  $region14: #{_lambda_.76} parent=0 // pred_check
    _
  $region15: #{_lambda_.76} parent=0 // pred_check_branch
    %133 = sbr.rel (0) target = $region17
  $region16: #{_lambda_.76} parent=0 // pred_region
    _
  $region17: #{_lambda_.76} parent=0 // pred_fallthru
    _
  // Predicated region
  $region18: #{_lambda_.76} parent=0 // pred_check
    _
  $region19: #{_lambda_.76} parent=0 // pred_check_branch
    %135 = sbr.rel (0) target = $region21
  $region20: #{_lambda_.76} parent=0 // pred_region
    _
  $region21: #{_lambda_.76} parent=0 // pred_fallthru
    _
  // Predicated region
  $region22: #{_lambda_.76} parent=0 // pred_check
    _
  $region23: #{_lambda_.76} parent=0 // pred_check_branch
    %137 = sbr.rel (0) target = $region25
  $region24: #{_lambda_.76} parent=0 // pred_region
    _
  $region25: #{_lambda_.76} parent=0 // pred_fallthru
    _

// kernel: _lambda_.75
$region0: #{_lambda_.75}
  #allocation0 [shape = 'u32[]', space=smem, size = 0x4, offset = 0x4, fixed_abs, tag = 'smem constant byte address 0x4 - core index']
  #allocation1 [shape = 'u32[144,128]{1,0:T(1,128)}', space=vmem, size = 0x12000, scoped, tag = 'internal scratch']
  %s0 = inlined_call_operand.vmem [shape: bf16[544,128], index: 0, kind: input, shape index: {}]
  %s1 = inlined_call_operand.vmem [shape: bf16[32,544], index: 1, kind: input, shape index: {}]
  %s2 = inlined_call_operand.vmem [shape: f32[32,128], index: 2, kind: output, shape index: {}]
  %s3 = sld [smem:[#allocation0]]
  $region18: #{_lambda_.75} parent=0
    _
  %s5 = ssub.s32 1, %s3
  %s6 = scalar_select 0, %s5, %s3
  // Predicated region
  $region2: #{_lambda_.75} parent=0 // pred_check
    _
  $region3: #{_lambda_.75} parent=0 // pred_check_branch
    %8 = sbr.rel (0) target = $region5
  $region4: #{_lambda_.75} parent=0 // pred_region
    _
  $region5: #{_lambda_.75} parent=0 // pred_fallthru
    _
  // Predicated region
  $region6: #{_lambda_.75} parent=0 // pred_check
    _
  $region7: #{_lambda_.75} parent=0 // pred_check_branch
    %10 = sbr.rel (0) target = $region9
  $region8: #{_lambda_.75} parent=0 // pred_region
    _
  $region9: #{_lambda_.75} parent=0 // pred_fallthru
    _
  %v12 = vld [vmem:[%s1] sm:$0xff]
  %v13 = vld [vmem:[%s1 + $0x8] sm:$0xff]
  %v14 = vld [vmem:[%s1 + $0x10] sm:$0xf]
  %v15 = vld [vmem:[%s1 + $0x14] sm:$0xff]
  %v16 = vld [vmem:[%s1 + $0x1c] sm:$0xff]
  %v17 = vld [vmem:[%s1 + $0x24] sm:$0xf]
  %v18 = vld [vmem:[%s1 + $0x28] sm:$0xff]
  %v19 = vld [vmem:[%s1 + $0x30] sm:$0xff]
  %v20 = vld [vmem:[%s1 + $0x38] sm:$0xf]
  %v21 = vld [vmem:[%s1 + $0x3c] sm:$0xff]
  %v22 = vld [vmem:[%s1 + $0x44] sm:$0xff]
  %v23 = vld [vmem:[%s1 + $0x4c] sm:$0xf]
  %v24 = vld [vmem:[%s0] sm:$0xf]
  %v25 = vld [vmem:[%s0 + $0x4] sm:$0xf]
  %v26 = vld [vmem:[%s0 + $0x8] sm:$0xf]
  %v27 = vld [vmem:[%s0 + $0xc] sm:$0xf]
  %v28 = vld [vmem:[%s0 + $0x10] sm:$0xf]
  %v29 = vld [vmem:[%s0 + $0x14] sm:$0xf]
  %v30 = vld [vmem:[%s0 + $0x18] sm:$0xf]
  %v31 = vld [vmem:[%s0 + $0x1c] sm:$0xf]
  %v32 = vld [vmem:[%s0 + $0x20] sm:$0xf]
  %v33 = vld [vmem:[%s0 + $0x24] sm:$0xf]
  %v34 = vld [vmem:[%s0 + $0x28] sm:$0xf]
  %v35 = vld [vmem:[%s0 + $0x2c] sm:$0xf]
  %v36 = vld [vmem:[%s0 + $0x30] sm:$0xf]
  %v37 = vld [vmem:[%s0 + $0x34] sm:$0xf]
  %v38 = vld [vmem:[%s0 + $0x38] sm:$0xf]
  %v39 = vld [vmem:[%s0 + $0x3c] sm:$0xf]
  %v40 = vld [vmem:[%s0 + $0x40] sm:$0xf]
  %v41 = vld [vmem:[%s0 + $0x44] sm:$0xf]
  %v42 = vld [vmem:[%s0 + $0x48] sm:$0xf]
  %v43 = vld [vmem:[%s0 + $0x4c] sm:$0xf]
  %v44 = vld [vmem:[%s0 + $0x50] sm:$0xf]
  %v45 = vld [vmem:[%s0 + $0x54] sm:$0xf]
  %v46 = vld [vmem:[%s0 + $0x58] sm:$0xf]
  %v47 = vld [vmem:[%s0 + $0x5c] sm:$0xf]
  %v48 = vld [vmem:[%s0 + $0x60] sm:$0xf]
  %v49 = vld [vmem:[%s0 + $0x64] sm:$0xf]
  %v50 = vld [vmem:[%s0 + $0x68] sm:$0xf]
  %v51 = vld [vmem:[%s0 + $0x6c] sm:$0xf]
  %v52 = vld [vmem:[%s0 + $0x70] sm:$0xf]
  %v53 = vld [vmem:[%s0 + $0x74] sm:$0xf]
  %v54 = vld [vmem:[%s0 + $0x78] sm:$0xf]
  %v55 = vld [vmem:[%s0 + $0x7c] sm:$0xf]
  %v56 = vld [vmem:[%s0 + $0x80] sm:$0xf]
  %v57 = vld [vmem:[%s0 + $0x84] sm:$0xf]
  %v58 = vld [vmem:[%s0 + $0x88] sm:$0xf]
  %v59 = vld [vmem:[%s0 + $0x8c] sm:$0xf]
  %v60 = vld [vmem:[%s0 + $0x90] sm:$0xf]
  %v61 = vld [vmem:[%s0 + $0x94] sm:$0xf]
  %v62 = vld [vmem:[%s0 + $0x98] sm:$0xf]
  %v63 = vld [vmem:[%s0 + $0x9c] sm:$0xf]
  %v64 = vld [vmem:[%s0 + $0xa0] sm:$0xf]
  %v65 = vld [vmem:[%s0 + $0xa4] sm:$0xf]
  %v66 = vld [vmem:[%s0 + $0xa8] sm:$0xf]
  %v67 = vld [vmem:[%s0 + $0xac] sm:$0xf]
  %v68 = vld [vmem:[%s0 + $0xb0] sm:$0xf]
  %v69 = vld [vmem:[%s0 + $0xb4] sm:$0xf]
  %v70 = vld [vmem:[%s0 + $0xb8] sm:$0xf]
  %v71 = vld [vmem:[%s0 + $0xbc] sm:$0xf]
  %v72 = vld [vmem:[%s0 + $0xc0] sm:$0xf]
  %v73 = vld [vmem:[%s0 + $0xc4] sm:$0xf]
  %v74 = vld [vmem:[%s0 + $0xc8] sm:$0xf]
  %v75 = vld [vmem:[%s0 + $0xcc] sm:$0xf]
  %v76 = vld [vmem:[%s0 + $0xd0] sm:$0xf]
  %v77 = vld [vmem:[%s0 + $0xd4] sm:$0xf]
  %v78 = vld [vmem:[%s0 + $0xd8] sm:$0xf]
  %v79 = vld [vmem:[%s0 + $0xdc] sm:$0xf]
  %v80 = vld [vmem:[%s0 + $0xe0] sm:$0xf]
  %v81 = vld [vmem:[%s0 + $0xe4] sm:$0xf]
  %v82 = vld [vmem:[%s0 + $0xe8] sm:$0xf]
  %v83 = vld [vmem:[%s0 + $0xec] sm:$0xf]
  %v84 = vld [vmem:[%s0 + $0xf0] sm:$0xf]
  %v85 = vld [vmem:[%s0 + $0xf4] sm:$0xf]
  %v86 = vld [vmem:[%s0 + $0xf8] sm:$0xf]
  %v87 = vld [vmem:[%s0 + $0xfc] sm:$0xf]
  %v88 = vld [vmem:[%s0 + $0x100] sm:$0xf]
  %v89 = vld [vmem:[%s0 + $0x104] sm:$0xf]
  %v90 = vld [vmem:[%s0 + $0x108] sm:$0xf]
  %v91 = vld [vmem:[%s0 + $0x10c] sm:$0xf]
  %v104 = vunpack.c.l.b16 %v12
  %v105 = vunpack.c.h.b16 %v12
  %v106 = vunpack.c.l.b16 %v13
  %v107 = vunpack.c.h.b16 %v13
  %v108 = vunpack.c.l.b16 %v14
  %v109 = vunpack.c.l.b16 %v15
  %v110 = vunpack.c.h.b16 %v15
  %v111 = vunpack.c.l.b16 %v16
  %v112 = vunpack.c.h.b16 %v16
  %v113 = vunpack.c.l.b16 %v17
  %v114 = vunpack.c.l.b16 %v18
  %v115 = vunpack.c.h.b16 %v18
  %v116 = vunpack.c.l.b16 %v19
  %v117 = vunpack.c.h.b16 %v19
  %v118 = vunpack.c.l.b16 %v20
  %v119 = vunpack.c.l.b16 %v21
  %v120 = vunpack.c.h.b16 %v21
  %v121 = vunpack.c.l.b16 %v22
  %v122 = vunpack.c.h.b16 %v22
  %v123 = vunpack.c.l.b16 %v23
  %v124 = vpack.c.b16 %v109, %v104
  %v125 = vpack.c.b16 %v110, %v105
  %v126 = vpack.c.b16 %v111, %v106
  %v127 = vpack.c.b16 %v112, %v107
  %v128 = vpack.c.b16 %v113, %v108
  %v129 = vpack.c.b16 %v119, %v114
  %v130 = vpack.c.b16 %v120, %v115
  %v131 = vpack.c.b16 %v121, %v116
  %v132 = vpack.c.b16 %v122, %v117
  %v133 = vpack.c.b16 %v123, %v118
  %v210 = vunpack.c.l.b16 %v24
  %v211 = vunpack.c.l.b16 %v25
  %v212 = vunpack.c.l.b16 %v26
  %v213 = vunpack.c.l.b16 %v27
  %v214 = vunpack.c.l.b16 %v28
  %v215 = vunpack.c.l.b16 %v29
  %v216 = vunpack.c.l.b16 %v30
  %v217 = vunpack.c.l.b16 %v31
  %v218 = vunpack.c.l.b16 %v32
  %v219 = vunpack.c.l.b16 %v33
  %v220 = vunpack.c.l.b16 %v34
  %v221 = vunpack.c.l.b16 %v35
  %v222 = vunpack.c.l.b16 %v36
  %v223 = vunpack.c.l.b16 %v37
  %v224 = vunpack.c.l.b16 %v38
  %v225 = vunpack.c.l.b16 %v39
  %v226 = vunpack.c.l.b16 %v40
  %v227 = vunpack.c.l.b16 %v41
  %v228 = vunpack.c.l.b16 %v42
  %v229 = vunpack.c.l.b16 %v43
  %v230 = vunpack.c.l.b16 %v44
  %v231 = vunpack.c.l.b16 %v45
  %v232 = vunpack.c.l.b16 %v46
  %v233 = vunpack.c.l.b16 %v47
  %v234 = vunpack.c.l.b16 %v48
  %v235 = vunpack.c.l.b16 %v49
  %v236 = vunpack.c.l.b16 %v50
  %v237 = vunpack.c.l.b16 %v51
  %v238 = vunpack.c.l.b16 %v52
  %v239 = vunpack.c.l.b16 %v53
  %v240 = vunpack.c.l.b16 %v54
  %v241 = vunpack.c.l.b16 %v55
  %v242 = vunpack.c.l.b16 %v56
  %v243 = vunpack.c.l.b16 %v57
  %v244 = vunpack.c.l.b16 %v58
  %v245 = vunpack.c.l.b16 %v59
  %v246 = vunpack.c.l.b16 %v60
  %v247 = vunpack.c.l.b16 %v61
  %v248 = vunpack.c.l.b16 %v62
  %v249 = vunpack.c.l.b16 %v63
  %v250 = vunpack.c.l.b16 %v64
  %v251 = vunpack.c.l.b16 %v65
  %v252 = vunpack.c.l.b16 %v66
  %v253 = vunpack.c.l.b16 %v67
  %v254 = vunpack.c.l.b16 %v68
  %v255 = vunpack.c.l.b16 %v69
  %v256 = vunpack.c.l.b16 %v70
  %v257 = vunpack.c.l.b16 %v71
  %v258 = vunpack.c.l.b16 %v72
  %v259 = vunpack.c.l.b16 %v73
  %v260 = vunpack.c.l.b16 %v74
  %v261 = vunpack.c.l.b16 %v75
  %v262 = vunpack.c.l.b16 %v76
  %v263 = vunpack.c.l.b16 %v77
  %v264 = vunpack.c.l.b16 %v78
  %v265 = vunpack.c.l.b16 %v79
  %v266 = vunpack.c.l.b16 %v80
  %v267 = vunpack.c.l.b16 %v81
  %v268 = vunpack.c.l.b16 %v82
  %v269 = vunpack.c.l.b16 %v83
  %v270 = vunpack.c.l.b16 %v84
  %v271 = vunpack.c.l.b16 %v85
  %v272 = vunpack.c.l.b16 %v86
  %v273 = vunpack.c.l.b16 %v87
  %v274 = vunpack.c.l.b16 %v88
  %v275 = vunpack.c.l.b16 %v89
  %v276 = vunpack.c.l.b16 %v90
  %v277 = vunpack.c.l.b16 %v91
  %v278 = vpack.c.b16 %v211, %v210
  %v279 = vpack.c.b16 %v213, %v212
  %v280 = vpack.c.b16 %v215, %v214
  %v281 = vpack.c.b16 %v217, %v216
  %v282 = vpack.c.b16 %v219, %v218
  %v283 = vpack.c.b16 %v221, %v220
  %v284 = vpack.c.b16 %v223, %v222
  %v285 = vpack.c.b16 %v225, %v224
  %v286 = vpack.c.b16 %v227, %v226
  %v287 = vpack.c.b16 %v229, %v228
  %v288 = vpack.c.b16 %v231, %v230
  %v289 = vpack.c.b16 %v233, %v232
  %v290 = vpack.c.b16 %v235, %v234
  %v291 = vpack.c.b16 %v237, %v236
  %v292 = vpack.c.b16 %v239, %v238
  %v293 = vpack.c.b16 %v241, %v240
  %v294 = vpack.c.b16 %v243, %v242
  %v295 = vpack.c.b16 %v245, %v244
  %v296 = vpack.c.b16 %v247, %v246
  %v297 = vpack.c.b16 %v249, %v248
  %v298 = vpack.c.b16 %v251, %v250
  %v299 = vpack.c.b16 %v253, %v252
  %v300 = vpack.c.b16 %v255, %v254
  %v301 = vpack.c.b16 %v257, %v256
  %v302 = vpack.c.b16 %v259, %v258
  %v303 = vpack.c.b16 %v261, %v260
  %v304 = vpack.c.b16 %v263, %v262
  %v305 = vpack.c.b16 %v265, %v264
  %v306 = vpack.c.b16 %v267, %v266
  %v307 = vpack.c.b16 %v269, %v268
  %v308 = vpack.c.b16 %v271, %v270
  %v309 = vpack.c.b16 %v273, %v272
  %v310 = vpack.c.b16 %v275, %v274
  %v311 = vpack.c.b16 %v277, %v276
  %vm346 = vcmask 261120
  %v348 = vsel %vm346, %v128, 0
  %v351 = vsel %vm346, %v133, 0
  %353 = vmatprep.subr.bf16.mxu0 0
  %354 = vmatpush1.bf16.msra.mxu0 %v285
  %355 = vmatprep.subr.bf16.mxu0 0
  %356 = vmatpush1.bf16.msra.mxu0 %v284
  %357 = vmatprep.subr.bf16.mxu0 0
  %358 = vmatpush1.bf16.msra.mxu0 %v283
  %359 = vmatprep.subr.bf16.mxu0 0
  %360 = vmatpush1.bf16.msra.mxu0 %v282
  %361 = vmatprep.subr.bf16.mxu0 0
  %362 = vmatpush1.bf16.msra.mxu0 %v281
  %363 = vmatprep.subr.bf16.mxu0 0
  %364 = vmatpush1.bf16.msra.mxu0 %v280
  %365 = vmatprep.subr.bf16.mxu0 0
  %366 = vmatpush1.bf16.msra.mxu0 %v279
  %367 = vmatprep.subr.bf16.mxu0 0
  %368 = vmatpush1.bf16.msra.mxu0 %v278
  %369 = vmatprep.subr.bf16.mxu0 0
  %370 = vmatpush2.bf16.msra.mxu0 %v293
  %371 = vmatprep.subr.bf16.mxu0 0
  %372 = vmatpush2.bf16.msra.mxu0 %v292
  %373 = vmatprep.subr.bf16.mxu0 0
  %374 = vmatpush2.bf16.msra.mxu0 %v291
  %375 = vmatprep.subr.bf16.mxu0 0
  %376 = vmatpush2.bf16.msra.mxu0 %v290
  %377 = vmatprep.subr.bf16.mxu0 0
  %378 = vmatpush2.bf16.msra.mxu0 %v289
  %379 = vmatprep.subr.bf16.mxu0 0
  %380 = vmatpush2.bf16.msra.mxu0 %v288
  %381 = vmatprep.subr.bf16.mxu0 0
  %382 = vmatpush2.bf16.msra.mxu0 %v287
  %383 = vmatprep.subr.bf16.mxu0 0
  %384 = vmatpush2.bf16.msra.mxu0 %v286
  %385 = vmatprep.mubr.bf16.mxu0 %v125
  %386 = vmatmul.mubr.bf16.gmra.mxu0 %v124
  %v387 = vpop.f32.mrf.mxu0
  %v388 = vadd.f32 0.0, %v387
  %v389 = vpop.f32.mrf.mxu0
  %v390 = vpop.f32.mrf.mxu0
  %v391 = vadd.f32 0.0, %v390
  %v392 = vpop.f32.mrf.mxu0
  %393 = vmatprep.mubr.bf16.mxu0 %v130
  %394 = vmatmul.mubr.bf16.gmra.mxu0 %v129
  %v395 = vpop.f32.mrf.mxu0
  %v396 = vadd.f32 0.0, %v395
  %v397 = vpop.f32.mrf.mxu0
  %v398 = vpop.f32.mrf.mxu0
  %v399 = vadd.f32 0.0, %v398
  %v400 = vpop.f32.mrf.mxu0
  %401 = vdwg.mxu0
  %402 = vmatprep.subr.bf16.mxu0 0
  %403 = vmatpush1.bf16.msra.mxu0 %v301
  %404 = vmatprep.subr.bf16.mxu0 0
  %405 = vmatpush1.bf16.msra.mxu0 %v300
  %406 = vmatprep.subr.bf16.mxu0 0
  %407 = vmatpush1.bf16.msra.mxu0 %v299
  %408 = vmatprep.subr.bf16.mxu0 0
  %409 = vmatpush1.bf16.msra.mxu0 %v298
  %410 = vmatprep.subr.bf16.mxu0 0
  %411 = vmatpush1.bf16.msra.mxu0 %v297
  %412 = vmatprep.subr.bf16.mxu0 0
  %413 = vmatpush1.bf16.msra.mxu0 %v296
  %414 = vmatprep.subr.bf16.mxu0 0
  %415 = vmatpush1.bf16.msra.mxu0 %v295
  %416 = vmatprep.subr.bf16.mxu0 0
  %417 = vmatpush1.bf16.msra.mxu0 %v294
  %418 = vmatprep.subr.bf16.mxu0 0
  %419 = vmatpush2.bf16.msra.mxu0 %v309
  %420 = vmatprep.subr.bf16.mxu0 0
  %421 = vmatpush2.bf16.msra.mxu0 %v308
  %422 = vmatprep.subr.bf16.mxu0 0
  %423 = vmatpush2.bf16.msra.mxu0 %v307
  %424 = vmatprep.subr.bf16.mxu0 0
  %425 = vmatpush2.bf16.msra.mxu0 %v306
  %426 = vmatprep.subr.bf16.mxu0 0
  %427 = vmatpush2.bf16.msra.mxu0 %v305
  %428 = vmatprep.subr.bf16.mxu0 0
  %429 = vmatpush2.bf16.msra.mxu0 %v304
  %430 = vmatprep.subr.bf16.mxu0 0
  %431 = vmatpush2.bf16.msra.mxu0 %v303
  %432 = vmatprep.subr.bf16.mxu0 0
  %433 = vmatpush2.bf16.msra.mxu0 %v302
  %434 = vmatprep.mubr.bf16.mxu0 %v127
  %435 = vmatmul.mubr.bf16.gmra.mxu0 %v126
  %v436 = vpop.f32.mrf.mxu0
  %v437 = vadd.f32 %v388, %v436
  %v438 = vpop.f32.mrf.mxu0
  %v439 = vpop.f32.mrf.mxu0
  %v440 = vadd.f32 %v391, %v439
  %v441 = vpop.f32.mrf.mxu0
  %442 = vmatprep.mubr.bf16.mxu0 %v132
  %443 = vmatmul.mubr.bf16.gmra.mxu0 %v131
  %v444 = vpop.f32.mrf.mxu0
  %v445 = vadd.f32 %v396, %v444
  %v446 = vpop.f32.mrf.mxu0
  %v447 = vpop.f32.mrf.mxu0
  %v448 = vadd.f32 %v399, %v447
  %v449 = vpop.f32.mrf.mxu0
  %450 = vdwg.mxu0
  %451 = vmatprep.subr.bf16.mxu0 0
  %452 = vmatpush1.bf16.msra.mxu0 0
  %453 = vmatprep.subr.bf16.mxu0 0
  %454 = vmatpush1.bf16.msra.mxu0 0
  %455 = vmatprep.subr.bf16.mxu0 0
  %456 = vmatpush1.bf16.msra.mxu0 0
  %457 = vmatprep.subr.bf16.mxu0 0
  %458 = vmatpush1.bf16.msra.mxu0 0
  %459 = vmatprep.subr.bf16.mxu0 0
  %460 = vmatpush1.bf16.msra.mxu0 0
  %461 = vmatprep.subr.bf16.mxu0 0
  %462 = vmatpush1.bf16.msra.mxu0 0
  %463 = vmatprep.subr.bf16.mxu0 0
  %464 = vmatpush1.bf16.msra.mxu0 %v311
  %465 = vmatprep.subr.bf16.mxu0 0
  %466 = vmatpush1.bf16.msra.mxu0 %v310
  %467 = vmatprep.subr.bf16.mxu0 0
  %468 = vmatpush2.bf16.msra.mxu0 0
  %469 = vmatprep.subr.bf16.mxu0 0
  %470 = vmatpush2.bf16.msra.mxu0 0
  %471 = vmatprep.subr.bf16.mxu0 0
  %472 = vmatpush2.bf16.msra.mxu0 0
  %473 = vmatprep.subr.bf16.mxu0 0
  %474 = vmatpush2.bf16.msra.mxu0 0
  %475 = vmatprep.subr.bf16.mxu0 0
  %476 = vmatpush2.bf16.msra.mxu0 0
  %477 = vmatprep.subr.bf16.mxu0 0
  %478 = vmatpush2.bf16.msra.mxu0 0
  %479 = vmatprep.subr.bf16.mxu0 0
  %480 = vmatpush2.bf16.msra.mxu0 0
  %481 = vmatprep.subr.bf16.mxu0 0
  %482 = vmatpush2.bf16.msra.mxu0 0
  %483 = vmatprep.mubr.bf16.mxu0 0
  %484 = vmatmul.mubr.bf16.gmra.mxu0 %v348
  %v485 = vpop.f32.mrf.mxu0
  %v486 = vadd.f32 %v437, %v485
  %v487 = vpop.f32.mrf.mxu0
  %v488 = vpop.f32.mrf.mxu0
  %v489 = vadd.f32 %v440, %v488
  %v490 = vpop.f32.mrf.mxu0
  %491 = vmatprep.mubr.bf16.mxu0 0
  %492 = vmatmul.mubr.bf16.gmra.mxu0 %v351
  %v493 = vpop.f32.mrf.mxu0
  %v494 = vadd.f32 %v445, %v493
  %v495 = vpop.f32.mrf.mxu0
  %v496 = vpop.f32.mrf.mxu0
  %v497 = vadd.f32 %v448, %v496
  %v498 = vpop.f32.mrf.mxu0
  %499 = vdwg.mxu0
  %500 = vst [vmem:[%s2] sm:$0xff] %v486
  %501 = vst [vmem:[%s2 + $0x8] sm:$0xff] %v489
  %502 = vst [vmem:[%s2 + $0x10] sm:$0xff] %v494
  %503 = vst [vmem:[%s2 + $0x18] sm:$0xff] %v497
  // Predicated region
  $region10: #{_lambda_.75} parent=0 // pred_check
    _
  $region11: #{_lambda_.75} parent=0 // pred_check_branch
    %505 = sbr.rel (0) target = $region13
  $region12: #{_lambda_.75} parent=0 // pred_region
    _
  $region13: #{_lambda_.75} parent=0 // pred_fallthru
    _
  // Predicated region
  $region14: #{_lambda_.75} parent=0 // pred_check
    _
  $region15: #{_lambda_.75} parent=0 // pred_check_branch
    %507 = sbr.rel (0) target = $region17
  $region16: #{_lambda_.75} parent=0 // pred_region
    _
  $region17: #{_lambda_.75} parent=0 // pred_fallthru
    _

// kernel: _lambda_.87
$region0: #{_lambda_.87}
  #allocation0 [shape = 'u32[]', space=smem, size = 0x4, offset = 0x4, fixed_abs, tag = 'smem constant byte address 0x4 - core index']
  #allocation1 [shape = 'u32[144,128]{1,0:T(1,128)}', space=vmem, size = 0x12000, scoped, tag = 'internal scratch']
  %s0 = inlined_call_operand.vmem [shape: f32[2,32,16], index: 0, kind: input, shape index: {}]
  %s1 = inlined_call_operand.vmem [shape: f32[32,10], index: 1, kind: input, shape index: {}]
  %s2 = inlined_call_operand.vmem [shape: f32[1,10], index: 2, kind: input, shape index: {}]
  %s3 = inlined_call_operand.hbm [shape: f32[2,10], index: 3, kind: output, shape index: {}]
  %s4 = sld [smem:[#allocation0]]
  $region22: #{_lambda_.87} parent=0
    _
  %s6 = ssub.s32 1, %s4
  %s7 = scalar_select 0, %s6, %s4
  $region1: #{_lambda_.87} parent=0
    #allocation2 [shape = 'u8[1024]{0}', space=vmem, size = 0x400, scoped, tag = 'output window, operand 0, single buffered']
    #allocation3 [shape = 's32[1]{0}', space=sflag, size = 0x4, scoped, tag = 'scoped memory for _lambda_.87']
    %8 = vsyncpa [#allocation3], 0
    // Predicated region
    $region2: #{_lambda_.87} parent=1 // pred_check
      _
    $region3: #{_lambda_.87} parent=1 // pred_check_branch
      %10 = sbr.rel (0) target = $region5
    $region4: #{_lambda_.87} parent=1 // pred_region
      _
    $region5: #{_lambda_.87} parent=1 // pred_fallthru
      _
    // Predicated region
    $region6: #{_lambda_.87} parent=1 // pred_check
      _
    $region7: #{_lambda_.87} parent=1 // pred_check_branch
      %12 = sbr.rel (0) target = $region9
    $region8: #{_lambda_.87} parent=1 // pred_region
      _
    $region9: #{_lambda_.87} parent=1 // pred_fallthru
      _
    // Predicated region
    $region10: #{_lambda_.87} parent=1 // pred_check
      _
    $region11: #{_lambda_.87} parent=1 // pred_check_branch
      %14 = sbr.rel (0) target = $region13
    $region12: #{_lambda_.87} parent=1 // pred_region
      _
    $region13: #{_lambda_.87} parent=1 // pred_fallthru
      _
    %v15 = vld [vmem:[%s0] sm:$0xff]
    %v16 = vld [vmem:[%s0 + $0x8] sm:$0xff]
    %v17 = vld [vmem:[%s0 + $0x10] sm:$0xff]
    %v18 = vld [vmem:[%s0 + $0x18] sm:$0xff]
    %v19 = vld [vmem:[%s0 + $0x20] sm:$0xff]
    %v20 = vld [vmem:[%s0 + $0x28] sm:$0xff]
    %v21 = vld [vmem:[%s0 + $0x30] sm:$0xff]
    %v22 = vld [vmem:[%s0 + $0x38] sm:$0xff]
    %vm23 = vcmask 130048
    %v24 = vsel %vm23, %v15, 0.0
    %25 = vadd.xlane.f32.xlu0 %v24
    %v26 = vpop.xlane.xlu0 %25
    %v27 = vsel %vm23, %v16, 0.0
    %28 = vadd.xlane.f32.xlu0 %v27
    %v29 = vpop.xlane.xlu0 %28
    %v30 = vsel %vm23, %v17, 0.0
    %31 = vadd.xlane.f32.xlu0 %v30
    %v32 = vpop.xlane.xlu0 %31
    %v33 = vsel %vm23, %v18, 0.0
    %34 = vadd.xlane.f32.xlu0 %v33
    %v35 = vpop.xlane.xlu0 %34
    %v36 = vsel %vm23, %v19, 0.0
    %37 = vadd.xlane.f32.xlu0 %v36
    %v38 = vpop.xlane.xlu0 %37
    %v39 = vsel %vm23, %v20, 0.0
    %40 = vadd.xlane.f32.xlu0 %v39
    %v41 = vpop.xlane.xlu0 %40
    %v42 = vsel %vm23, %v21, 0.0
    %43 = vadd.xlane.f32.xlu0 %v42
    %v44 = vpop.xlane.xlu0 %43
    %v45 = vsel %vm23, %v22, 0.0
    %46 = vadd.xlane.f32.xlu0 %v45
    %v47 = vpop.xlane.xlu0 %46
    %v48 = vrcp.pop 16.0
    %v49 = vmul.f32 %v26, %v48
    %v50 = vmul.f32 %v29, %v48
    %v51 = vmul.f32 %v32, %v48
    %v52 = vmul.f32 %v35, %v48
    %v53 = vmul.f32 %v38, %v48
    %v54 = vmul.f32 %v41, %v48
    %v55 = vmul.f32 %v44, %v48
    %v56 = vmul.f32 %v47, %v48
    %v57 = vld [vmem:[%s1] sm:$0xff]
    %v58 = vld [vmem:[%s1 + $0x8] sm:$0xff]
    %v59 = vld [vmem:[%s1 + $0x10] sm:$0xff]
    %v60 = vld [vmem:[%s1 + $0x18] sm:$0xff]
    %v61 = vld [vmem:[%s2] sm:$0x1]
    %v63 = vlaneseq
    %v64 = vshrl.u32 %v63, 7
    %v65 = vsub.s32 0, %v64
    %v66 = vrot.slane %v61, %v65
    %v76 = vlaneseq
    %v77 = vand.u32 %v76, 127
    %v78 = vlaneseq
    %v79 = vshrl.u32 %v78, 7
    %v80 = vsub.s32 %v77, %v79
    %v81 = vrot.slane %v49, %v80
    %v82 = vadd.s32 %v77, 4294967288
    %v83 = vlaneseq
    %v84 = vshrl.u32 %v83, 7
    %v85 = vsub.s32 %v82, %v84
    %v86 = vrot.slane %v50, %v85
    %vm87 = vcmask 130112
    %v88 = vsel %vm87, %v86, %v81
    %v89 = vadd.s32 %v77, 4294967280
    %v90 = vlaneseq
    %v91 = vshrl.u32 %v90, 7
    %v92 = vsub.s32 %v89, %v91
    %v93 = vrot.slane %v51, %v92
    %vm94 = vcmask 195712
    %v95 = vsel %vm94, %v93, %v88
    %v96 = vadd.s32 %v77, 4294967272
    %v97 = vlaneseq
    %v98 = vshrl.u32 %v97, 7
    %v99 = vsub.s32 %v96, %v98
    %v100 = vrot.slane %v52, %v99
    %vm101 = vcmask 261312
    %v102 = vsel %vm101, %v100, %v95
    %v103 = vlaneseq
    %v104 = vshrl.u32 %v103, 7
    %v105 = vsub.s32 %v77, %v104
    %v106 = vrot.slane %v53, %v105
    %v107 = vlaneseq
    %v108 = vshrl.u32 %v107, 7
    %v109 = vsub.s32 %v82, %v108
    %v110 = vrot.slane %v54, %v109
    %v111 = vsel %vm87, %v110, %v106
    %v112 = vlaneseq
    %v113 = vshrl.u32 %v112, 7
    %v114 = vsub.s32 %v89, %v113
    %v115 = vrot.slane %v55, %v114
    %v116 = vsel %vm94, %v115, %v111
    %v117 = vlaneseq
    %v118 = vshrl.u32 %v117, 7
    %v119 = vsub.s32 %v96, %v118
    %v120 = vrot.slane %v56, %v119
    %v121 = vsel %vm101, %v120, %v116
    %vm122 = vcmask 1041409
    %v123 = vsel %vm122, %v121, %v102
    %vm124 = vcmask 261120
    %v125 = vsel %vm124, %v123, 0
    %127 = vmatprep.subr.mxu0 0.0
    %128 = vmatpush1.msra.mxu0 0.0
    %129 = vmatprep.subr.mxu0 0.0
    %130 = vmatpush1.msra.mxu0 0.0
    %131 = vmatprep.subr.mxu0 0.0
    %132 = vmatpush1.msra.mxu0 0.0
    %133 = vmatprep.subr.mxu0 0.0
    %134 = vmatpush1.msra.mxu0 0.0
    %135 = vmatprep.subr.mxu0 0.0
    %136 = vmatpush1.msra.mxu0 0.0
    %137 = vmatprep.subr.mxu0 0.0
    %138 = vmatpush1.msra.mxu0 0.0
    %139 = vmatprep.subr.mxu0 0.0
    %140 = vmatpush1.msra.mxu0 0.0
    %141 = vmatprep.subr.mxu0 0.0
    %142 = vmatpush1.msra.mxu0 0.0
    %143 = vmatprep.subr.mxu0 0.0
    %144 = vmatpush1.msra.mxu0 0.0
    %145 = vmatprep.subr.mxu0 0.0
    %146 = vmatpush1.msra.mxu0 0.0
    %147 = vmatprep.subr.mxu0 0.0
    %148 = vmatpush1.msra.mxu0 0.0
    %149 = vmatprep.subr.mxu0 0.0
    %150 = vmatpush1.msra.mxu0 0.0
    %151 = vmatprep.subr.mxu0 0.0
    %152 = vmatpush1.msra.mxu0 %v60
    %153 = vmatprep.subr.mxu0 0.0
    %154 = vmatpush1.msra.mxu0 %v59
    %155 = vmatprep.subr.mxu0 0.0
    %156 = vmatpush1.msra.mxu0 %v58
    %157 = vmatprep.subr.mxu0 0.0
    %158 = vmatpush1.msra.mxu0 %v57
    %159 = vmatprep.subr.mxu0 0.0
    %160 = vmatpush2.msra.mxu0 0.0
    %161 = vmatprep.subr.mxu0 0.0
    %162 = vmatpush2.msra.mxu0 0.0
    %163 = vmatprep.subr.mxu0 0.0
    %164 = vmatpush2.msra.mxu0 0.0
    %165 = vmatprep.subr.mxu0 0.0
    %166 = vmatpush2.msra.mxu0 0.0
    %167 = vmatprep.subr.mxu0 0.0
    %168 = vmatpush2.msra.mxu0 0.0
    %169 = vmatprep.subr.mxu0 0.0
    %170 = vmatpush2.msra.mxu0 0.0
    %171 = vmatprep.subr.mxu0 0.0
    %172 = vmatpush2.msra.mxu0 0.0
    %173 = vmatprep.subr.mxu0 0.0
    %174 = vmatpush2.msra.mxu0 0.0
    %175 = vmatprep.subr.mxu0 0.0
    %176 = vmatpush2.msra.mxu0 0.0
    %177 = vmatprep.subr.mxu0 0.0
    %178 = vmatpush2.msra.mxu0 0.0
    %179 = vmatprep.subr.mxu0 0.0
    %180 = vmatpush2.msra.mxu0 0.0
    %181 = vmatprep.subr.mxu0 0.0
    %182 = vmatpush2.msra.mxu0 0.0
    %183 = vmatprep.subr.mxu0 0.0
    %184 = vmatpush2.msra.mxu0 0.0
    %185 = vmatprep.subr.mxu0 0.0
    %186 = vmatpush2.msra.mxu0 0.0
    %187 = vmatprep.subr.mxu0 0.0
    %188 = vmatpush2.msra.mxu0 0.0
    %189 = vmatprep.subr.mxu0 0.0
    %190 = vmatpush2.msra.mxu0 0.0
    %191 = vmatprep.mubr.f32.mxu0 0.0
    %192 = vmatmul.mubr.f32.gmra.mxu0 %v125
    %v193 = vpop.f32.mrf.mxu0
    %v194 = vadd.f32 %v66, %v193
    %v195 = vpop.f32.mrf.mxu0
    %196 = vdwg.mxu0
    %vm197 = vcmask 74752
    %198 = vst.msk [vmem:[#allocation2] sm:$0x3] %vm197, %v194
    // Predicated region
    $region14: #{_lambda_.87} parent=1 // pred_check
      _
    $region15: #{_lambda_.87} parent=1 // pred_check_branch
      %200 = sbr.rel (0) target = $region17
    $region16: #{_lambda_.87} parent=1 // pred_region
      %s202 = ssub.s32 32, 32
      %203 = vsyncadd [#allocation3], %s202
      %s205 = sshll.u32 [#allocation2], 4
      %s206 = int_to_ptr.vmem [resolvable:$true] %s205
      %208 = dma.vmem_to_hbm [thread:$0]  %s206, 32, %s3, [#allocation3]
    $region17: #{_lambda_.87} parent=1 // pred_fallthru
      _
    // Predicated region
    $region18: #{_lambda_.87} parent=1 // pred_check
      _
    $region19: #{_lambda_.87} parent=1 // pred_check_branch
      %210 = sbr.rel (0) target = $region21
    $region20: #{_lambda_.87} parent=1 // pred_region
      %211 = dma.done [#allocation3], 32
    $region21: #{_lambda_.87} parent=1 // pred_fallthru
      _
    %212 = vsyncpa [#allocation3], 1

// kernel: _lambda_.84
$region0: #{_lambda_.84}
  #allocation0 [shape = 'u32[]', space=smem, size = 0x4, offset = 0x4, fixed_abs, tag = 'smem constant byte address 0x4 - core index']
  #allocation1 [shape = 'u32[144,128]{1,0:T(1,128)}', space=vmem, size = 0x12000, scoped, tag = 'internal scratch']
  %s0 = inlined_call_operand.vmem [shape: bf16[800,128], index: 0, kind: input, shape index: {}]
  %s1 = inlined_call_operand.vmem [shape: bf16[64,800], index: 1, kind: input, shape index: {}]
  %s2 = inlined_call_operand.vmem [shape: f32[64,128], index: 2, kind: output, shape index: {}]
  %s3 = sld [smem:[#allocation0]]
  $region18: #{_lambda_.84} parent=0
    _
  %s5 = ssub.s32 1, %s3
  %s6 = scalar_select 0, %s5, %s3
  // Predicated region
  $region2: #{_lambda_.84} parent=0 // pred_check
    _
  $region3: #{_lambda_.84} parent=0 // pred_check_branch
    %8 = sbr.rel (0) target = $region5
  $region4: #{_lambda_.84} parent=0 // pred_region
    _
  $region5: #{_lambda_.84} parent=0 // pred_fallthru
    _
  // Predicated region
  $region6: #{_lambda_.84} parent=0 // pred_check
    _
  $region7: #{_lambda_.84} parent=0 // pred_check_branch
    %10 = sbr.rel (0) target = $region9
  $region8: #{_lambda_.84} parent=0 // pred_region
    _
  $region9: #{_lambda_.84} parent=0 // pred_fallthru
    _
  %v12 = vld [vmem:[%s1] sm:$0xff]
  %v13 = vld [vmem:[%s1 + $0x8] sm:$0xff]
  %v14 = vld [vmem:[%s1 + $0x10] sm:$0xff]
  %v15 = vld [vmem:[%s1 + $0x18] sm:$0xf]
  %v16 = vld [vmem:[%s1 + $0x1c] sm:$0xff]
  %v17 = vld [vmem:[%s1 + $0x24] sm:$0xff]
  %v18 = vld [vmem:[%s1 + $0x2c] sm:$0xff]
  %v19 = vld [vmem:[%s1 + $0x34] sm:$0xf]
  %v20 = vld [vmem:[%s1 + $0x38] sm:$0xff]
  %v21 = vld [vmem:[%s1 + $0x40] sm:$0xff]
  %v22 = vld [vmem:[%s1 + $0x48] sm:$0xff]
  %v23 = vld [vmem:[%s1 + $0x50] sm:$0xf]
  %v24 = vld [vmem:[%s1 + $0x54] sm:$0xff]
  %v25 = vld [vmem:[%s1 + $0x5c] sm:$0xff]
  %v26 = vld [vmem:[%s1 + $0x64] sm:$0xff]
  %v27 = vld [vmem:[%s1 + $0x6c] sm:$0xf]
  %v28 = vld [vmem:[%s1 + $0x70] sm:$0xff]
  %v29 = vld [vmem:[%s1 + $0x78] sm:$0xff]
  %v30 = vld [vmem:[%s1 + $0x80] sm:$0xff]
  %v31 = vld [vmem:[%s1 + $0x88] sm:$0xf]
  %v32 = vld [vmem:[%s1 + $0x8c] sm:$0xff]
  %v33 = vld [vmem:[%s1 + $0x94] sm:$0xff]
  %v34 = vld [vmem:[%s1 + $0x9c] sm:$0xff]
  %v35 = vld [vmem:[%s1 + $0xa4] sm:$0xf]
  %v36 = vld [vmem:[%s1 + $0xa8] sm:$0xff]
  %v37 = vld [vmem:[%s1 + $0xb0] sm:$0xff]
  %v38 = vld [vmem:[%s1 + $0xb8] sm:$0xff]
  %v39 = vld [vmem:[%s1 + $0xc0] sm:$0xf]
  %v40 = vld [vmem:[%s1 + $0xc4] sm:$0xff]
  %v41 = vld [vmem:[%s1 + $0xcc] sm:$0xff]
  %v42 = vld [vmem:[%s1 + $0xd4] sm:$0xff]
  %v43 = vld [vmem:[%s1 + $0xdc] sm:$0xf]
  %v44 = vld [vmem:[%s0] sm:$0xf]
  %v45 = vld [vmem:[%s0 + $0x4] sm:$0xf]
  %v46 = vld [vmem:[%s0 + $0x8] sm:$0xf]
  %v47 = vld [vmem:[%s0 + $0xc] sm:$0xf]
  %v48 = vld [vmem:[%s0 + $0x10] sm:$0xf]
  %v49 = vld [vmem:[%s0 + $0x14] sm:$0xf]
  %v50 = vld [vmem:[%s0 + $0x18] sm:$0xf]
  %v51 = vld [vmem:[%s0 + $0x1c] sm:$0xf]
  %v52 = vld [vmem:[%s0 + $0x20] sm:$0xf]
  %v53 = vld [vmem:[%s0 + $0x24] sm:$0xf]
  %v54 = vld [vmem:[%s0 + $0x28] sm:$0xf]
  %v55 = vld [vmem:[%s0 + $0x2c] sm:$0xf]
  %v56 = vld [vmem:[%s0 + $0x30] sm:$0xf]
  %v57 = vld [vmem:[%s0 + $0x34] sm:$0xf]
  %v58 = vld [vmem:[%s0 + $0x38] sm:$0xf]
  %v59 = vld [vmem:[%s0 + $0x3c] sm:$0xf]
  %v60 = vld [vmem:[%s0 + $0x40] sm:$0xf]
  %v61 = vld [vmem:[%s0 + $0x44] sm:$0xf]
  %v62 = vld [vmem:[%s0 + $0x48] sm:$0xf]
  %v63 = vld [vmem:[%s0 + $0x4c] sm:$0xf]
  %v64 = vld [vmem:[%s0 + $0x50] sm:$0xf]
  %v65 = vld [vmem:[%s0 + $0x54] sm:$0xf]
  %v66 = vld [vmem:[%s0 + $0x58] sm:$0xf]
  %v67 = vld [vmem:[%s0 + $0x5c] sm:$0xf]
  %v68 = vld [vmem:[%s0 + $0x60] sm:$0xf]
  %v69 = vld [vmem:[%s0 + $0x64] sm:$0xf]
  %v70 = vld [vmem:[%s0 + $0x68] sm:$0xf]
  %v71 = vld [vmem:[%s0 + $0x6c] sm:$0xf]
  %v72 = vld [vmem:[%s0 + $0x70] sm:$0xf]
  %v73 = vld [vmem:[%s0 + $0x74] sm:$0xf]
  %v74 = vld [vmem:[%s0 + $0x78] sm:$0xf]
  %v75 = vld [vmem:[%s0 + $0x7c] sm:$0xf]
  %v76 = vld [vmem:[%s0 + $0x80] sm:$0xf]
  %v77 = vld [vmem:[%s0 + $0x84] sm:$0xf]
  %v78 = vld [vmem:[%s0 + $0x88] sm:$0xf]
  %v79 = vld [vmem:[%s0 + $0x8c] sm:$0xf]
  %v80 = vld [vmem:[%s0 + $0x90] sm:$0xf]
  %v81 = vld [vmem:[%s0 + $0x94] sm:$0xf]
  %v82 = vld [vmem:[%s0 + $0x98] sm:$0xf]
  %v83 = vld [vmem:[%s0 + $0x9c] sm:$0xf]
  %v84 = vld [vmem:[%s0 + $0xa0] sm:$0xf]
  %v85 = vld [vmem:[%s0 + $0xa4] sm:$0xf]
  %v86 = vld [vmem:[%s0 + $0xa8] sm:$0xf]
  %v87 = vld [vmem:[%s0 + $0xac] sm:$0xf]
  %v88 = vld [vmem:[%s0 + $0xb0] sm:$0xf]
  %v89 = vld [vmem:[%s0 + $0xb4] sm:$0xf]
  %v90 = vld [vmem:[%s0 + $0xb8] sm:$0xf]
  %v91 = vld [vmem:[%s0 + $0xbc] sm:$0xf]
  %v92 = vld [vmem:[%s0 + $0xc0] sm:$0xf]
  %v93 = vld [vmem:[%s0 + $0xc4] sm:$0xf]
  %v94 = vld [vmem:[%s0 + $0xc8] sm:$0xf]
  %v95 = vld [vmem:[%s0 + $0xcc] sm:$0xf]
  %v96 = vld [vmem:[%s0 + $0xd0] sm:$0xf]
  %v97 = vld [vmem:[%s0 + $0xd4] sm:$0xf]
  %v98 = vld [vmem:[%s0 + $0xd8] sm:$0xf]
  %v99 = vld [vmem:[%s0 + $0xdc] sm:$0xf]
  %v100 = vld [vmem:[%s0 + $0xe0] sm:$0xf]
  %v101 = vld [vmem:[%s0 + $0xe4] sm:$0xf]
  %v102 = vld [vmem:[%s0 + $0xe8] sm:$0xf]
  %v103 = vld [vmem:[%s0 + $0xec] sm:$0xf]
  %v104 = vld [vmem:[%s0 + $0xf0] sm:$0xf]
  %v105 = vld [vmem:[%s0 + $0xf4] sm:$0xf]
  %v106 = vld [vmem:[%s0 + $0xf8] sm:$0xf]
  %v107 = vld [vmem:[%s0 + $0xfc] sm:$0xf]
  %v108 = vld [vmem:[%s0 + $0x100] sm:$0xf]
  %v109 = vld [vmem:[%s0 + $0x104] sm:$0xf]
  %v110 = vld [vmem:[%s0 + $0x108] sm:$0xf]
  %v111 = vld [vmem:[%s0 + $0x10c] sm:$0xf]
  %v112 = vld [vmem:[%s0 + $0x110] sm:$0xf]
  %v113 = vld [vmem:[%s0 + $0x114] sm:$0xf]
  %v114 = vld [vmem:[%s0 + $0x118] sm:$0xf]
  %v115 = vld [vmem:[%s0 + $0x11c] sm:$0xf]
  %v116 = vld [vmem:[%s0 + $0x120] sm:$0xf]
  %v117 = vld [vmem:[%s0 + $0x124] sm:$0xf]
  %v118 = vld [vmem:[%s0 + $0x128] sm:$0xf]
  %v119 = vld [vmem:[%s0 + $0x12c] sm:$0xf]
  %v120 = vld [vmem:[%s0 + $0x130] sm:$0xf]
  %v121 = vld [vmem:[%s0 + $0x134] sm:$0xf]
  %v122 = vld [vmem:[%s0 + $0x138] sm:$0xf]
  %v123 = vld [vmem:[%s0 + $0x13c] sm:$0xf]
  %v124 = vld [vmem:[%s0 + $0x140] sm:$0xf]
  %v125 = vld [vmem:[%s0 + $0x144] sm:$0xf]
  %v126 = vld [vmem:[%s0 + $0x148] sm:$0xf]
  %v127 = vld [vmem:[%s0 + $0x14c] sm:$0xf]
  %v128 = vld [vmem:[%s0 + $0x150] sm:$0xf]
  %v129 = vld [vmem:[%s0 + $0x154] sm:$0xf]
  %v130 = vld [vmem:[%s0 + $0x158] sm:$0xf]
  %v131 = vld [vmem:[%s0 + $0x15c] sm:$0xf]
  %v132 = vld [vmem:[%s0 + $0x160] sm:$0xf]
  %v133 = vld [vmem:[%s0 + $0x164] sm:$0xf]
  %v134 = vld [vmem:[%s0 + $0x168] sm:$0xf]
  %v135 = vld [vmem:[%s0 + $0x16c] sm:$0xf]
  %v136 = vld [vmem:[%s0 + $0x170] sm:$0xf]
  %v137 = vld [vmem:[%s0 + $0x174] sm:$0xf]
  %v138 = vld [vmem:[%s0 + $0x178] sm:$0xf]
  %v139 = vld [vmem:[%s0 + $0x17c] sm:$0xf]
  %v140 = vld [vmem:[%s0 + $0x180] sm:$0xf]
  %v141 = vld [vmem:[%s0 + $0x184] sm:$0xf]
  %v142 = vld [vmem:[%s0 + $0x188] sm:$0xf]
  %v143 = vld [vmem:[%s0 + $0x18c] sm:$0xf]
  %v176 = vunpack.c.l.b16 %v12
  %v177 = vunpack.c.h.b16 %v12
  %v178 = vunpack.c.l.b16 %v13
  %v179 = vunpack.c.h.b16 %v13
  %v180 = vunpack.c.l.b16 %v14
  %v181 = vunpack.c.h.b16 %v14
  %v182 = vunpack.c.l.b16 %v15
  %v183 = vunpack.c.l.b16 %v16
  %v184 = vunpack.c.h.b16 %v16
  %v185 = vunpack.c.l.b16 %v17
  %v186 = vunpack.c.h.b16 %v17
  %v187 = vunpack.c.l.b16 %v18
  %v188 = vunpack.c.h.b16 %v18
  %v189 = vunpack.c.l.b16 %v19
  %v190 = vunpack.c.l.b16 %v20
  %v191 = vunpack.c.h.b16 %v20
  %v192 = vunpack.c.l.b16 %v21
  %v193 = vunpack.c.h.b16 %v21
  %v194 = vunpack.c.l.b16 %v22
  %v195 = vunpack.c.h.b16 %v22
  %v196 = vunpack.c.l.b16 %v23
  %v197 = vunpack.c.l.b16 %v24
  %v198 = vunpack.c.h.b16 %v24
  %v199 = vunpack.c.l.b16 %v25
  %v200 = vunpack.c.h.b16 %v25
  %v201 = vunpack.c.l.b16 %v26
  %v202 = vunpack.c.h.b16 %v26
  %v203 = vunpack.c.l.b16 %v27
  %v204 = vunpack.c.l.b16 %v28
  %v205 = vunpack.c.h.b16 %v28
  %v206 = vunpack.c.l.b16 %v29
  %v207 = vunpack.c.h.b16 %v29
  %v208 = vunpack.c.l.b16 %v30
  %v209 = vunpack.c.h.b16 %v30
  %v210 = vunpack.c.l.b16 %v31
  %v211 = vunpack.c.l.b16 %v32
  %v212 = vunpack.c.h.b16 %v32
  %v213 = vunpack.c.l.b16 %v33
  %v214 = vunpack.c.h.b16 %v33
  %v215 = vunpack.c.l.b16 %v34
  %v216 = vunpack.c.h.b16 %v34
  %v217 = vunpack.c.l.b16 %v35
  %v218 = vunpack.c.l.b16 %v36
  %v219 = vunpack.c.h.b16 %v36
  %v220 = vunpack.c.l.b16 %v37
  %v221 = vunpack.c.h.b16 %v37
  %v222 = vunpack.c.l.b16 %v38
  %v223 = vunpack.c.h.b16 %v38
  %v224 = vunpack.c.l.b16 %v39
  %v225 = vunpack.c.l.b16 %v40
  %v226 = vunpack.c.h.b16 %v40
  %v227 = vunpack.c.l.b16 %v41
  %v228 = vunpack.c.h.b16 %v41
  %v229 = vunpack.c.l.b16 %v42
  %v230 = vunpack.c.h.b16 %v42
  %v231 = vunpack.c.l.b16 %v43
  %v232 = vpack.c.b16 %v183, %v176
  %v233 = vpack.c.b16 %v184, %v177
  %v234 = vpack.c.b16 %v185, %v178
  %v235 = vpack.c.b16 %v186, %v179
  %v236 = vpack.c.b16 %v187, %v180
  %v237 = vpack.c.b16 %v188, %v181
  %v238 = vpack.c.b16 %v189, %v182
  %v239 = vpack.c.b16 %v197, %v190
  %v240 = vpack.c.b16 %v198, %v191
  %v241 = vpack.c.b16 %v199, %v192
  %v242 = vpack.c.b16 %v200, %v193
  %v243 = vpack.c.b16 %v201, %v194
  %v244 = vpack.c.b16 %v202, %v195
  %v245 = vpack.c.b16 %v203, %v196
  %v246 = vpack.c.b16 %v211, %v204
  %v247 = vpack.c.b16 %v212, %v205
  %v248 = vpack.c.b16 %v213, %v206
  %v249 = vpack.c.b16 %v214, %v207
  %v250 = vpack.c.b16 %v215, %v208
  %v251 = vpack.c.b16 %v216, %v209
  %v252 = vpack.c.b16 %v217, %v210
  %v253 = vpack.c.b16 %v225, %v218
  %v254 = vpack.c.b16 %v226, %v219
  %v255 = vpack.c.b16 %v227, %v220
  %v256 = vpack.c.b16 %v228, %v221
  %v257 = vpack.c.b16 %v229, %v222
  %v258 = vpack.c.b16 %v230, %v223
  %v259 = vpack.c.b16 %v231, %v224
  %v384 = vunpack.c.l.b16 %v44
  %v385 = vunpack.c.l.b16 %v45
  %v386 = vunpack.c.l.b16 %v46
  %v387 = vunpack.c.l.b16 %v47
  %v388 = vunpack.c.l.b16 %v48
  %v389 = vunpack.c.l.b16 %v49
  %v390 = vunpack.c.l.b16 %v50
  %v391 = vunpack.c.l.b16 %v51
  %v392 = vunpack.c.l.b16 %v52
  %v393 = vunpack.c.l.b16 %v53
  %v394 = vunpack.c.l.b16 %v54
  %v395 = vunpack.c.l.b16 %v55
  %v396 = vunpack.c.l.b16 %v56
  %v397 = vunpack.c.l.b16 %v57
  %v398 = vunpack.c.l.b16 %v58
  %v399 = vunpack.c.l.b16 %v59
  %v400 = vunpack.c.l.b16 %v60
  %v401 = vunpack.c.l.b16 %v61
  %v402 = vunpack.c.l.b16 %v62
  %v403 = vunpack.c.l.b16 %v63
  %v404 = vunpack.c.l.b16 %v64
  %v405 = vunpack.c.l.b16 %v65
  %v406 = vunpack.c.l.b16 %v66
  %v407 = vunpack.c.l.b16 %v67
  %v408 = vunpack.c.l.b16 %v68
  %v409 = vunpack.c.l.b16 %v69
  %v410 = vunpack.c.l.b16 %v70
  %v411 = vunpack.c.l.b16 %v71
  %v412 = vunpack.c.l.b16 %v72
  %v413 = vunpack.c.l.b16 %v73
  %v414 = vunpack.c.l.b16 %v74
  %v415 = vunpack.c.l.b16 %v75
  %v416 = vunpack.c.l.b16 %v76
  %v417 = vunpack.c.l.b16 %v77
  %v418 = vunpack.c.l.b16 %v78
  %v419 = vunpack.c.l.b16 %v79
  %v420 = vunpack.c.l.b16 %v80
  %v421 = vunpack.c.l.b16 %v81
  %v422 = vunpack.c.l.b16 %v82
  %v423 = vunpack.c.l.b16 %v83
  %v424 = vunpack.c.l.b16 %v84
  %v425 = vunpack.c.l.b16 %v85
  %v426 = vunpack.c.l.b16 %v86
  %v427 = vunpack.c.l.b16 %v87
  %v428 = vunpack.c.l.b16 %v88
  %v429 = vunpack.c.l.b16 %v89
  %v430 = vunpack.c.l.b16 %v90
  %v431 = vunpack.c.l.b16 %v91
  %v432 = vunpack.c.l.b16 %v92
  %v433 = vunpack.c.l.b16 %v93
  %v434 = vunpack.c.l.b16 %v94
  %v435 = vunpack.c.l.b16 %v95
  %v436 = vunpack.c.l.b16 %v96
  %v437 = vunpack.c.l.b16 %v97
  %v438 = vunpack.c.l.b16 %v98
  %v439 = vunpack.c.l.b16 %v99
  %v440 = vunpack.c.l.b16 %v100
  %v441 = vunpack.c.l.b16 %v101
  %v442 = vunpack.c.l.b16 %v102
  %v443 = vunpack.c.l.b16 %v103
  %v444 = vunpack.c.l.b16 %v104
  %v445 = vunpack.c.l.b16 %v105
  %v446 = vunpack.c.l.b16 %v106
  %v447 = vunpack.c.l.b16 %v107
  %v448 = vunpack.c.l.b16 %v108
  %v449 = vunpack.c.l.b16 %v109
  %v450 = vunpack.c.l.b16 %v110
  %v451 = vunpack.c.l.b16 %v111
  %v452 = vunpack.c.l.b16 %v112
  %v453 = vunpack.c.l.b16 %v113
  %v454 = vunpack.c.l.b16 %v114
  %v455 = vunpack.c.l.b16 %v115
  %v456 = vunpack.c.l.b16 %v116
  %v457 = vunpack.c.l.b16 %v117
  %v458 = vunpack.c.l.b16 %v118
  %v459 = vunpack.c.l.b16 %v119
  %v460 = vunpack.c.l.b16 %v120
  %v461 = vunpack.c.l.b16 %v121
  %v462 = vunpack.c.l.b16 %v122
  %v463 = vunpack.c.l.b16 %v123
  %v464 = vunpack.c.l.b16 %v124
  %v465 = vunpack.c.l.b16 %v125
  %v466 = vunpack.c.l.b16 %v126
  %v467 = vunpack.c.l.b16 %v127
  %v468 = vunpack.c.l.b16 %v128
  %v469 = vunpack.c.l.b16 %v129
  %v470 = vunpack.c.l.b16 %v130
  %v471 = vunpack.c.l.b16 %v131
  %v472 = vunpack.c.l.b16 %v132
  %v473 = vunpack.c.l.b16 %v133
  %v474 = vunpack.c.l.b16 %v134
  %v475 = vunpack.c.l.b16 %v135
  %v476 = vunpack.c.l.b16 %v136
  %v477 = vunpack.c.l.b16 %v137
  %v478 = vunpack.c.l.b16 %v138
  %v479 = vunpack.c.l.b16 %v139
  %v480 = vunpack.c.l.b16 %v140
  %v481 = vunpack.c.l.b16 %v141
  %v482 = vunpack.c.l.b16 %v142
  %v483 = vunpack.c.l.b16 %v143
  %v484 = vpack.c.b16 %v385, %v384
  %v485 = vpack.c.b16 %v387, %v386
  %v486 = vpack.c.b16 %v389, %v388
  %v487 = vpack.c.b16 %v391, %v390
  %v488 = vpack.c.b16 %v393, %v392
  %v489 = vpack.c.b16 %v395, %v394
  %v490 = vpack.c.b16 %v397, %v396
  %v491 = vpack.c.b16 %v399, %v398
  %v492 = vpack.c.b16 %v401, %v400
  %v493 = vpack.c.b16 %v403, %v402
  %v494 = vpack.c.b16 %v405, %v404
  %v495 = vpack.c.b16 %v407, %v406
  %v496 = vpack.c.b16 %v409, %v408
  %v497 = vpack.c.b16 %v411, %v410
  %v498 = vpack.c.b16 %v413, %v412
  %v499 = vpack.c.b16 %v415, %v414
  %v500 = vpack.c.b16 %v417, %v416
  %v501 = vpack.c.b16 %v419, %v418
  %v502 = vpack.c.b16 %v421, %v420
  %v503 = vpack.c.b16 %v423, %v422
  %v504 = vpack.c.b16 %v425, %v424
  %v505 = vpack.c.b16 %v427, %v426
  %v506 = vpack.c.b16 %v429, %v428
  %v507 = vpack.c.b16 %v431, %v430
  %v508 = vpack.c.b16 %v433, %v432
  %v509 = vpack.c.b16 %v435, %v434
  %v510 = vpack.c.b16 %v437, %v436
  %v511 = vpack.c.b16 %v439, %v438
  %v512 = vpack.c.b16 %v441, %v440
  %v513 = vpack.c.b16 %v443, %v442
  %v514 = vpack.c.b16 %v445, %v444
  %v515 = vpack.c.b16 %v447, %v446
  %v516 = vpack.c.b16 %v449, %v448
  %v517 = vpack.c.b16 %v451, %v450
  %v518 = vpack.c.b16 %v453, %v452
  %v519 = vpack.c.b16 %v455, %v454
  %v520 = vpack.c.b16 %v457, %v456
  %v521 = vpack.c.b16 %v459, %v458
  %v522 = vpack.c.b16 %v461, %v460
  %v523 = vpack.c.b16 %v463, %v462
  %v524 = vpack.c.b16 %v465, %v464
  %v525 = vpack.c.b16 %v467, %v466
  %v526 = vpack.c.b16 %v469, %v468
  %v527 = vpack.c.b16 %v471, %v470
  %v528 = vpack.c.b16 %v473, %v472
  %v529 = vpack.c.b16 %v475, %v474
  %v530 = vpack.c.b16 %v477, %v476
  %v531 = vpack.c.b16 %v479, %v478
  %v532 = vpack.c.b16 %v481, %v480
  %v533 = vpack.c.b16 %v483, %v482
  %vm584 = vcmask 261120
  %v586 = vsel %vm584, %v238, 0
  %v589 = vsel %vm584, %v245, 0
  %v592 = vsel %vm584, %v252, 0
  %v595 = vsel %vm584, %v259, 0
  %597 = vmatprep.subr.bf16.mxu0 0
  %598 = vmatpush1.bf16.msra.mxu0 %v491
  %599 = vmatprep.subr.bf16.mxu0 0
  %600 = vmatpush1.bf16.msra.mxu0 %v490
  %601 = vmatprep.subr.bf16.mxu0 0
  %602 = vmatpush1.bf16.msra.mxu0 %v489
  %603 = vmatprep.subr.bf16.mxu0 0
  %604 = vmatpush1.bf16.msra.mxu0 %v488
  %605 = vmatprep.subr.bf16.mxu0 0
  %606 = vmatpush1.bf16.msra.mxu0 %v487
  %607 = vmatprep.subr.bf16.mxu0 0
  %608 = vmatpush1.bf16.msra.mxu0 %v486
  %609 = vmatprep.subr.bf16.mxu0 0
  %610 = vmatpush1.bf16.msra.mxu0 %v485
  %611 = vmatprep.subr.bf16.mxu0 0
  %612 = vmatpush1.bf16.msra.mxu0 %v484
  %613 = vmatprep.subr.bf16.mxu0 0
  %614 = vmatpush2.bf16.msra.mxu0 %v499
  %615 = vmatprep.subr.bf16.mxu0 0
  %616 = vmatpush2.bf16.msra.mxu0 %v498
  %617 = vmatprep.subr.bf16.mxu0 0
  %618 = vmatpush2.bf16.msra.mxu0 %v497
  %619 = vmatprep.subr.bf16.mxu0 0
  %620 = vmatpush2.bf16.msra.mxu0 %v496
  %621 = vmatprep.subr.bf16.mxu0 0
  %622 = vmatpush2.bf16.msra.mxu0 %v495
  %623 = vmatprep.subr.bf16.mxu0 0
  %624 = vmatpush2.bf16.msra.mxu0 %v494
  %625 = vmatprep.subr.bf16.mxu0 0
  %626 = vmatpush2.bf16.msra.mxu0 %v493
  %627 = vmatprep.subr.bf16.mxu0 0
  %628 = vmatpush2.bf16.msra.mxu0 %v492
  %629 = vmatprep.mubr.bf16.mxu0 %v233
  %630 = vmatmul.mubr.bf16.gmra.mxu0 %v232
  %v631 = vpop.f32.mrf.mxu0
  %v632 = vadd.f32 0.0, %v631
  %v633 = vpop.f32.mrf.mxu0
  %v634 = vpop.f32.mrf.mxu0
  %v635 = vadd.f32 0.0, %v634
  %v636 = vpop.f32.mrf.mxu0
  %637 = vmatprep.mubr.bf16.mxu0 %v240
  %638 = vmatmul.mubr.bf16.gmra.mxu0 %v239
  %v639 = vpop.f32.mrf.mxu0
  %v640 = vadd.f32 0.0, %v639
  %v641 = vpop.f32.mrf.mxu0
  %v642 = vpop.f32.mrf.mxu0
  %v643 = vadd.f32 0.0, %v642
  %v644 = vpop.f32.mrf.mxu0
  %645 = vmatprep.mubr.bf16.mxu0 %v247
  %646 = vmatmul.mubr.bf16.gmra.mxu0 %v246
  %v647 = vpop.f32.mrf.mxu0
  %v648 = vadd.f32 0.0, %v647
  %v649 = vpop.f32.mrf.mxu0
  %v650 = vpop.f32.mrf.mxu0
  %v651 = vadd.f32 0.0, %v650
  %v652 = vpop.f32.mrf.mxu0
  %653 = vmatprep.mubr.bf16.mxu0 %v254
  %654 = vmatmul.mubr.bf16.gmra.mxu0 %v253
  %v655 = vpop.f32.mrf.mxu0
  %v656 = vadd.f32 0.0, %v655
  %v657 = vpop.f32.mrf.mxu0
  %v658 = vpop.f32.mrf.mxu0
  %v659 = vadd.f32 0.0, %v658
  %v660 = vpop.f32.mrf.mxu0
  %661 = vdwg.mxu0
  %662 = vmatprep.subr.bf16.mxu0 0
  %663 = vmatpush1.bf16.msra.mxu0 %v507
  %664 = vmatprep.subr.bf16.mxu0 0
  %665 = vmatpush1.bf16.msra.mxu0 %v506
  %666 = vmatprep.subr.bf16.mxu0 0
  %667 = vmatpush1.bf16.msra.mxu0 %v505
  %668 = vmatprep.subr.bf16.mxu0 0
  %669 = vmatpush1.bf16.msra.mxu0 %v504
  %670 = vmatprep.subr.bf16.mxu0 0
  %671 = vmatpush1.bf16.msra.mxu0 %v503
  %672 = vmatprep.subr.bf16.mxu0 0
  %673 = vmatpush1.bf16.msra.mxu0 %v502
  %674 = vmatprep.subr.bf16.mxu0 0
  %675 = vmatpush1.bf16.msra.mxu0 %v501
  %676 = vmatprep.subr.bf16.mxu0 0
  %677 = vmatpush1.bf16.msra.mxu0 %v500
  %678 = vmatprep.subr.bf16.mxu0 0
  %679 = vmatpush2.bf16.msra.mxu0 %v515
  %680 = vmatprep.subr.bf16.mxu0 0
  %681 = vmatpush2.bf16.msra.mxu0 %v514
  %682 = vmatprep.subr.bf16.mxu0 0
  %683 = vmatpush2.bf16.msra.mxu0 %v513
  %684 = vmatprep.subr.bf16.mxu0 0
  %685 = vmatpush2.bf16.msra.mxu0 %v512
  %686 = vmatprep.subr.bf16.mxu0 0
  %687 = vmatpush2.bf16.msra.mxu0 %v511
  %688 = vmatprep.subr.bf16.mxu0 0
  %689 = vmatpush2.bf16.msra.mxu0 %v510
  %690 = vmatprep.subr.bf16.mxu0 0
  %691 = vmatpush2.bf16.msra.mxu0 %v509
  %692 = vmatprep.subr.bf16.mxu0 0
  %693 = vmatpush2.bf16.msra.mxu0 %v508
  %694 = vmatprep.mubr.bf16.mxu0 %v235
  %695 = vmatmul.mubr.bf16.gmra.mxu0 %v234
  %v696 = vpop.f32.mrf.mxu0
  %v697 = vadd.f32 %v632, %v696
  %v698 = vpop.f32.mrf.mxu0
  %v699 = vpop.f32.mrf.mxu0
  %v700 = vadd.f32 %v635, %v699
  %v701 = vpop.f32.mrf.mxu0
  %702 = vmatprep.mubr.bf16.mxu0 %v242
  %703 = vmatmul.mubr.bf16.gmra.mxu0 %v241
  %v704 = vpop.f32.mrf.mxu0
  %v705 = vadd.f32 %v640, %v704
  %v706 = vpop.f32.mrf.mxu0
  %v707 = vpop.f32.mrf.mxu0
  %v708 = vadd.f32 %v643, %v707
  %v709 = vpop.f32.mrf.mxu0
  %710 = vmatprep.mubr.bf16.mxu0 %v249
  %711 = vmatmul.mubr.bf16.gmra.mxu0 %v248
  %v712 = vpop.f32.mrf.mxu0
  %v713 = vadd.f32 %v648, %v712
  %v714 = vpop.f32.mrf.mxu0
  %v715 = vpop.f32.mrf.mxu0
  %v716 = vadd.f32 %v651, %v715
  %v717 = vpop.f32.mrf.mxu0
  %718 = vmatprep.mubr.bf16.mxu0 %v256
  %719 = vmatmul.mubr.bf16.gmra.mxu0 %v255
  %v720 = vpop.f32.mrf.mxu0
  %v721 = vadd.f32 %v656, %v720
  %v722 = vpop.f32.mrf.mxu0
  %v723 = vpop.f32.mrf.mxu0
  %v724 = vadd.f32 %v659, %v723
  %v725 = vpop.f32.mrf.mxu0
  %726 = vdwg.mxu0
  %727 = vmatprep.subr.bf16.mxu0 0
  %728 = vmatpush1.bf16.msra.mxu0 %v523
  %729 = vmatprep.subr.bf16.mxu0 0
  %730 = vmatpush1.bf16.msra.mxu0 %v522
  %731 = vmatprep.subr.bf16.mxu0 0
  %732 = vmatpush1.bf16.msra.mxu0 %v521
  %733 = vmatprep.subr.bf16.mxu0 0
  %734 = vmatpush1.bf16.msra.mxu0 %v520
  %735 = vmatprep.subr.bf16.mxu0 0
  %736 = vmatpush1.bf16.msra.mxu0 %v519
  %737 = vmatprep.subr.bf16.mxu0 0
  %738 = vmatpush1.bf16.msra.mxu0 %v518
  %739 = vmatprep.subr.bf16.mxu0 0
  %740 = vmatpush1.bf16.msra.mxu0 %v517
  %741 = vmatprep.subr.bf16.mxu0 0
  %742 = vmatpush1.bf16.msra.mxu0 %v516
  %743 = vmatprep.subr.bf16.mxu0 0
  %744 = vmatpush2.bf16.msra.mxu0 %v531
  %745 = vmatprep.subr.bf16.mxu0 0
  %746 = vmatpush2.bf16.msra.mxu0 %v530
  %747 = vmatprep.subr.bf16.mxu0 0
  %748 = vmatpush2.bf16.msra.mxu0 %v529
  %749 = vmatprep.subr.bf16.mxu0 0
  %750 = vmatpush2.bf16.msra.mxu0 %v528
  %751 = vmatprep.subr.bf16.mxu0 0
  %752 = vmatpush2.bf16.msra.mxu0 %v527
  %753 = vmatprep.subr.bf16.mxu0 0
  %754 = vmatpush2.bf16.msra.mxu0 %v526
  %755 = vmatprep.subr.bf16.mxu0 0
  %756 = vmatpush2.bf16.msra.mxu0 %v525
  %757 = vmatprep.subr.bf16.mxu0 0
  %758 = vmatpush2.bf16.msra.mxu0 %v524
  %759 = vmatprep.mubr.bf16.mxu0 %v237
  %760 = vmatmul.mubr.bf16.gmra.mxu0 %v236
  %v761 = vpop.f32.mrf.mxu0
  %v762 = vadd.f32 %v697, %v761
  %v763 = vpop.f32.mrf.mxu0
  %v764 = vpop.f32.mrf.mxu0
  %v765 = vadd.f32 %v700, %v764
  %v766 = vpop.f32.mrf.mxu0
  %767 = vmatprep.mubr.bf16.mxu0 %v244
  %768 = vmatmul.mubr.bf16.gmra.mxu0 %v243
  %v769 = vpop.f32.mrf.mxu0
  %v770 = vadd.f32 %v705, %v769
  %v771 = vpop.f32.mrf.mxu0
  %v772 = vpop.f32.mrf.mxu0
  %v773 = vadd.f32 %v708, %v772
  %v774 = vpop.f32.mrf.mxu0
  %775 = vmatprep.mubr.bf16.mxu0 %v251
  %776 = vmatmul.mubr.bf16.gmra.mxu0 %v250
  %v777 = vpop.f32.mrf.mxu0
  %v778 = vadd.f32 %v713, %v777
  %v779 = vpop.f32.mrf.mxu0
  %v780 = vpop.f32.mrf.mxu0
  %v781 = vadd.f32 %v716, %v780
  %v782 = vpop.f32.mrf.mxu0
  %783 = vmatprep.mubr.bf16.mxu0 %v258
  %784 = vmatmul.mubr.bf16.gmra.mxu0 %v257
  %v785 = vpop.f32.mrf.mxu0
  %v786 = vadd.f32 %v721, %v785
  %v787 = vpop.f32.mrf.mxu0
  %v788 = vpop.f32.mrf.mxu0
  %v789 = vadd.f32 %v724, %v788
  %v790 = vpop.f32.mrf.mxu0
  %791 = vdwg.mxu0
  %792 = vmatprep.subr.bf16.mxu0 0
  %793 = vmatpush1.bf16.msra.mxu0 0
  %794 = vmatprep.subr.bf16.mxu0 0
  %795 = vmatpush1.bf16.msra.mxu0 0
  %796 = vmatprep.subr.bf16.mxu0 0
  %797 = vmatpush1.bf16.msra.mxu0 0
  %798 = vmatprep.subr.bf16.mxu0 0
  %799 = vmatpush1.bf16.msra.mxu0 0
  %800 = vmatprep.subr.bf16.mxu0 0
  %801 = vmatpush1.bf16.msra.mxu0 0
  %802 = vmatprep.subr.bf16.mxu0 0
  %803 = vmatpush1.bf16.msra.mxu0 0
  %804 = vmatprep.subr.bf16.mxu0 0
  %805 = vmatpush1.bf16.msra.mxu0 %v533
  %806 = vmatprep.subr.bf16.mxu0 0
  %807 = vmatpush1.bf16.msra.mxu0 %v532
  %808 = vmatprep.subr.bf16.mxu0 0
  %809 = vmatpush2.bf16.msra.mxu0 0
  %810 = vmatprep.subr.bf16.mxu0 0
  %811 = vmatpush2.bf16.msra.mxu0 0
  %812 = vmatprep.subr.bf16.mxu0 0
  %813 = vmatpush2.bf16.msra.mxu0 0
  %814 = vmatprep.subr.bf16.mxu0 0
  %815 = vmatpush2.bf16.msra.mxu0 0
  %816 = vmatprep.subr.bf16.mxu0 0
  %817 = vmatpush2.bf16.msra.mxu0 0
  %818 = vmatprep.subr.bf16.mxu0 0
  %819 = vmatpush2.bf16.msra.mxu0 0
  %820 = vmatprep.subr.bf16.mxu0 0
  %821 = vmatpush2.bf16.msra.mxu0 0
  %822 = vmatprep.subr.bf16.mxu0 0
  %823 = vmatpush2.bf16.msra.mxu0 0
  %824 = vmatprep.mubr.bf16.mxu0 0
  %825 = vmatmul.mubr.bf16.gmra.mxu0 %v586
  %v826 = vpop.f32.mrf.mxu0
  %v827 = vadd.f32 %v762, %v826
  %v828 = vpop.f32.mrf.mxu0
  %v829 = vpop.f32.mrf.mxu0
  %v830 = vadd.f32 %v765, %v829
  %v831 = vpop.f32.mrf.mxu0
  %832 = vmatprep.mubr.bf16.mxu0 0
  %833 = vmatmul.mubr.bf16.gmra.mxu0 %v589
  %v834 = vpop.f32.mrf.mxu0
  %v835 = vadd.f32 %v770, %v834
  %v836 = vpop.f32.mrf.mxu0
  %v837 = vpop.f32.mrf.mxu0
  %v838 = vadd.f32 %v773, %v837
  %v839 = vpop.f32.mrf.mxu0
  %840 = vmatprep.mubr.bf16.mxu0 0
  %841 = vmatmul.mubr.bf16.gmra.mxu0 %v592
  %v842 = vpop.f32.mrf.mxu0
  %v843 = vadd.f32 %v778, %v842
  %v844 = vpop.f32.mrf.mxu0
  %v845 = vpop.f32.mrf.mxu0
  %v846 = vadd.f32 %v781, %v845
  %v847 = vpop.f32.mrf.mxu0
  %848 = vmatprep.mubr.bf16.mxu0 0
  %849 = vmatmul.mubr.bf16.gmra.mxu0 %v595
  %v850 = vpop.f32.mrf.mxu0
  %v851 = vadd.f32 %v786, %v850
  %v852 = vpop.f32.mrf.mxu0
  %v853 = vpop.f32.mrf.mxu0
  %v854 = vadd.f32 %v789, %v853
  %v855 = vpop.f32.mrf.mxu0
  %856 = vdwg.mxu0
  %857 = vst [vmem:[%s2] sm:$0xff] %v827
  %858 = vst [vmem:[%s2 + $0x8] sm:$0xff] %v830
  %859 = vst [vmem:[%s2 + $0x10] sm:$0xff] %v835
  %860 = vst [vmem:[%s2 + $0x18] sm:$0xff] %v838
  %861 = vst [vmem:[%s2 + $0x20] sm:$0xff] %v843
  %862 = vst [vmem:[%s2 + $0x28] sm:$0xff] %v846
  %863 = vst [vmem:[%s2 + $0x30] sm:$0xff] %v851
  %864 = vst [vmem:[%s2 + $0x38] sm:$0xff] %v854
  // Predicated region
  $region10: #{_lambda_.84} parent=0 // pred_check
    _
  $region11: #{_lambda_.84} parent=0 // pred_check_branch
    %866 = sbr.rel (0) target = $region13
  $region12: #{_lambda_.84} parent=0 // pred_region
    _
  $region13: #{_lambda_.84} parent=0 // pred_fallthru
    _
  // Predicated region
  $region14: #{_lambda_.84} parent=0 // pred_check
    _
  $region15: #{_lambda_.84} parent=0 // pred_check_branch
    %868 = sbr.rel (0) target = $region17
  $region16: #{_lambda_.84} parent=0 // pred_region
    _
  $region17: #{_lambda_.84} parent=0 // pred_fallthru
    _

</llo_original>
